<compile_context>
chip_gen: v7x
topology: tpu7x:2x2x1
jax: 0.10.0
libtpu: 0.0.40
codegen_flags: <defaults>
</compile_context>

<pallas_src>
import functools

import jax
import jax.numpy as jnp
from jax import lax
from jax.experimental import pallas as pl
from jax.experimental.pallas import tpu as pltpu

# ----------------------------- configuration --------------------------------
INPUT_DIM = 1
HIDDEN_DIM = 16          # channels: 2, 4, 8, 16
LATENT_DIM = 8
INPUT_SHAPE = (12, 16, 16)   # (T, H, W)
KERNEL_SIZE = 3
STRIDE = 1               # kernels below assume stride == 1 (shape-preserving convs)
PADDING = 1
DEC_PAD = KERNEL_SIZE - 1 - PADDING   # ConvTranspose3d(s=1) == conv w/ flipped kernel
APPLY_SIGMOID = False
BN_EPS = 1e-5
LRELU_SLOPE = 0.01
POOL_WIN = 12            # MaxPool3d kernel (3,2,2) -> 12 taps


def _calc_latent_spatial(input_shape):
    t, h, w = input_shape
    for _ in range(4):
        # conv k=3, s=1, p=1 preserves dims; pool k=(3,2,2), s=(1,2,2):
        t = (t - 3) // 1 + 1          # = t - 2   (fixed: was t - 1 before)
        h = (h - 2) // 2 + 1
        w = (w - 2) // 2 + 1
    return t, h, w


TL, HL, WL = _calc_latent_spatial(INPUT_SHAPE)          # (4, 1, 1)
FLATTEN_DIM = HIDDEN_DIM * TL * HL * WL                 # 64


# ----------------------------- Pallas kernels -------------------------------
def _make_conv_bn_act_kernel(pre_lrelu, post_lrelu):
    """Fused: (Cout,K)@(K,M) matmul + bias + BatchNorm3d(batch stats) +
    optional LeakyReLU before/after the norm (matches the nn.Sequential order)."""
    def kernel(p_ref, w_ref, b_ref, g_ref, beta_ref, o_ref):
        # Lane-dense M output; bf16 inputs, f32 accumulation on the MXU.
        x = jnp.dot(w_ref[...], p_ref[...], preferred_element_type=jnp.float32)
        x = x + b_ref[...]
        if pre_lrelu:
            x = jnp.where(x > 0, x, LRELU_SLOPE * x)
        mean = jnp.mean(x, axis=1, keepdims=True)
        xc = x - mean
        var = jnp.mean(xc * xc, axis=1, keepdims=True)          # biased variance
        y = xc * lax.rsqrt(var + BN_EPS)
        y = y * g_ref[...] + beta_ref[...]
        if post_lrelu:
            y = jnp.where(y > 0, y, LRELU_SLOPE * y)
        o_ref[...] = y
    return kernel


def _pool_kernel(v_ref, base_ref, mv_ref, mi_ref, *, offs):
    """12-tap max + argmax.  PyTorch-style flat (T,H,W) indices are reconstructed
    in-kernel as base(t,h,w) + static per-tap offset (no int index planes in HBM)."""
    best_v = v_ref[0]
    best_off = jnp.full(best_v.shape, offs[0], jnp.int32)
    for k in range(1, POOL_WIN):
        vk = v_ref[k]
        cond = vk > best_v
        best_v = jnp.where(cond, vk, best_v)
        best_off = jnp.where(cond, jnp.int32(offs[k]), best_off)
    mv_ref[...] = best_v
    mi_ref[...] = base_ref[...] + best_off


def _latent_kernel(x_ref, wmu_ref, bmu_ref, wlv_ref, blv_ref, eps_ref,
                   wd_ref, bd_ref, mu_ref, lv_ref, z_ref, d_ref):
    """Fused fc_mu + fc_logvar + clamp + reparameterize + fc_decoder."""
    x = x_ref[...]
    mu = jnp.dot(x, wmu_ref[...], preferred_element_type=jnp.float32) + bmu_ref[...]
    lv = jnp.dot(x, wlv_ref[...], preferred_element_type=jnp.float32) + blv_ref[...]
    lv = jnp.clip(lv, -10.0, 10.0)                    # torch.clamp(logvar, -10, 10)
    std = jnp.sqrt(jnp.maximum(jnp.exp(lv), 1e-6))
    z = eps_ref[...] * std + mu
    d = jnp.dot(z, wd_ref[...], preferred_element_type=jnp.float32) + bd_ref[...]
    mu_ref[...] = mu
    lv_ref[...] = lv
    z_ref[...] = z
    d_ref[...] = d


# ----------------------------- stage wrappers --------------------------------
def _im2col_cm(x_cm, pad):
    """Channel-major im2col for a stride-1 k=3 conv.  x_cm: (Cin, B, T, H, W).
    Returns patches (Cin*27, B*To*Ho*Wo) -- contiguous reshape, no transposes."""
    C, B, T, H, W = x_cm.shape
    xp = jnp.pad(x_cm, ((0, 0), (0, 0), (pad, pad), (pad, pad), (pad, pad)))
    To = T + 2 * pad - KERNEL_SIZE + 1
    Ho = H + 2 * pad - KERNEL_SIZE + 1
    Wo = W + 2 * pad - KERNEL_SIZE + 1
    taps = []
    for kt in range(KERNEL_SIZE):
        for kh in range(KERNEL_SIZE):
            for kw in range(KERNEL_SIZE):
                taps.append(xp[:, :, kt:kt + To, kh:kh + Ho, kw:kw + Wo])
    patches = jnp.stack(taps, axis=1)                 # (C, 27, B, To, Ho, Wo)
    return patches.reshape(C * 27, B * To * Ho * Wo), (To, Ho, Wo)


def conv_bn_act_stage(x_cm, w, b, g, beta, *, pad, pre_lrelu, post_lrelu):
    """One fused pallas_call per conv stage; whole activation (<400 KB) lives in
    a single VMEM block (full-array blocks, grid of 1)."""
    B = x_cm.shape[1]
    patches, (To, Ho, Wo) = _im2col_cm(x_cm, pad)
    patches = patches.astype(jnp.bfloat16)            # bf16 MXU inputs, f32 acc
    K, M = patches.shape
    Cout = w.shape[0]
    y = pl.pallas_call(
        _make_conv_bn_act_kernel(pre_lrelu, post_lrelu),
        out_shape=jax.ShapeDtypeStruct((Cout, M), jnp.float32),
        grid=(1,),
        in_specs=[
            pl.BlockSpec((K, M), lambda i: (0, 0)),
            pl.BlockSpec((Cout, K), lambda i: (0, 0)),
            pl.BlockSpec((Cout, 1), lambda i: (0, 0)),
            pl.BlockSpec((Cout, 1), lambda i: (0, 0)),
            pl.BlockSpec((Cout, 1), lambda i: (0, 0)),
        ],
        out_specs=pl.BlockSpec((Cout, M), lambda i: (0, 0)),
        compiler_params=pltpu.CompilerParams(dimension_semantics=("arbitrary",)),
    )(patches, w, b, g, beta)
    return y.reshape(Cout, B, To, Ho, Wo)


def maxpool3d_with_indices(x_cm):
    """MaxPool3d kernel=(3,2,2), stride=(1,2,2), padding=0, return_indices=True,
    on a channel-major (C,B,T,H,W) tensor.  Indices are into the flat (T,H,W)
    plane of the pool input, per (channel, batch) -- PyTorch semantics."""
    C, B, T, H, W = x_cm.shape
    Tp, Hp, Wp = T - 2, (H - 2) // 2 + 1, (W - 2) // 2 + 1
    S = Tp * Hp * Wp
    taps, offs = [], []
    for kt in range(3):
        for kh in range(2):
            for kw in range(2):
                taps.append(x_cm[:, :, kt:kt + Tp, kh:kh + 2 * Hp:2, kw:kw + 2 * Wp:2])
                offs.append(kt * H * W + kh * W + kw)
    vals = jnp.stack(taps, axis=0).reshape(POOL_WIN, C * B, S)
    t = jnp.arange(Tp, dtype=jnp.int32)
    h = jnp.arange(Hp, dtype=jnp.int32)
    w = jnp.arange(Wp, dtype=jnp.int32)
    base = (t[:, None, None] * (H * W) + 2 * h[None, :, None] * W
            + 2 * w[None, None, :]).reshape(1, S)
    mv, mi = pl.pallas_call(
        functools.partial(_pool_kernel, offs=tuple(offs)),
        out_shape=(jax.ShapeDtypeStruct((C * B, S), jnp.float32),
                   jax.ShapeDtypeStruct((C * B, S), jnp.int32)),
    )(vals, base)
    return mv.reshape(C, B, Tp, Hp, Wp), mi.reshape(C, B, Tp, Hp, Wp)


def maxunpool3d(x_cm, idx_cm):
    """MaxUnpool3d kernel=(3,2,2), stride=(1,2,2): scatter pooled values back."""
    # TODO(synk): data-dependent scatter has no clean Pallas TPU equivalent; kept as XLA scatter.
    C, B, Tp, Hp, Wp = x_cm.shape
    T, H, W = Tp + 2, 2 * Hp, 2 * Wp
    CB = C * B
    flat_v = x_cm.reshape(CB, -1)
    flat_i = idx_cm.reshape(CB, -1)
    out = jnp.zeros((CB, T * H * W), x_cm.dtype)
    out = out.at[jnp.arange(CB)[:, None], flat_i].set(flat_v)
    return out.reshape(C, B, T, H, W)


def latent_block(flat, eps, p):
    B = flat.shape[0]
    return pl.pallas_call(
        _latent_kernel,
        out_shape=(jax.ShapeDtypeStruct((B, LATENT_DIM), jnp.float32),
                   jax.ShapeDtypeStruct((B, LATENT_DIM), jnp.float32),
                   jax.ShapeDtypeStruct((B, LATENT_DIM), jnp.float32),
                   jax.ShapeDtypeStruct((B, FLATTEN_DIM), jnp.float32)),
    )(flat, p["mu_w"], p["mu_b"], p["lv_w"], p["lv_b"], eps, p["dec_w"], p["dec_b"])


# ----------------------------- parameters -----------------------------------
def init_raw_params(key):
    """Parameters in PyTorch layouts (Conv3d: (Cout,Cin,k,k,k); ConvTranspose3d:
    (Cin,Cout,k,k,k); Linear: (out,in))."""
    p = {}
    kiter = [key]

    def nxt():
        kiter[0], sub = jax.random.split(kiter[0])
        return sub

    scale = 0.1
    ech = [INPUT_DIM, HIDDEN_DIM // 8, HIDDEN_DIM // 4, HIDDEN_DIM // 2, HIDDEN_DIM]
    for i in range(4):
        cin, cout = ech[i], ech[i + 1]
        p[f"e{i+1}_w"] = scale * jax.random.normal(nxt(), (cout, cin, 3, 3, 3), jnp.float32)
        p[f"e{i+1}_b"] = scale * jax.random.normal(nxt(), (cout,), jnp.float32)
        p[f"e{i+1}_g"] = jnp.ones((cout,), jnp.float32)
        p[f"e{i+1}_beta"] = jnp.zeros((cout,), jnp.float32)

    dch = [HIDDEN_DIM, HIDDEN_DIM // 2, HIDDEN_DIM // 4, HIDDEN_DIM // 8, INPUT_DIM]
    for i in range(4):
        cin, cout = dch[i], dch[i + 1]
        name = 4 - i
        p[f"d{name}_w"] = scale * jax.random.normal(nxt(), (cin, cout, 3, 3, 3), jnp.float32)
        p[f"d{name}_b"] = scale * jax.random.normal(nxt(), (cout,), jnp.float32)
        p[f"d{name}_g"] = jnp.ones((cout,), jnp.float32)
        p[f"d{name}_beta"] = jnp.zeros((cout,), jnp.float32)

    p["mu_w"] = scale * jax.random.normal(nxt(), (LATENT_DIM, FLATTEN_DIM), jnp.float32)
    p["mu_b"] = scale * jax.random.normal(nxt(), (LATENT_DIM,), jnp.float32)
    p["lv_w"] = scale * jax.random.normal(nxt(), (LATENT_DIM, FLATTEN_DIM), jnp.float32)
    p["lv_b"] = scale * jax.random.normal(nxt(), (LATENT_DIM,), jnp.float32)
    p["dec_w"] = scale * jax.random.normal(nxt(), (FLATTEN_DIM, LATENT_DIM), jnp.float32)
    p["dec_b"] = scale * jax.random.normal(nxt(), (FLATTEN_DIM,), jnp.float32)
    return p


def prepare_params(raw):
    """One-time conversion to kernel-ready layouts: conv weights flattened to
    (Cout, Cin*27) bf16 (decoder weights pre-flipped / pre-transposed), linear
    weights pre-transposed to (in, out), vectors reshaped for in-kernel broadcast."""
    p = {}
    for i in range(1, 5):
        w = raw[f"e{i}_w"]                                  # (Cout, Cin, 3,3,3)
        cout = w.shape[0]
        p[f"e{i}_w"] = w.reshape(cout, -1).astype(jnp.bfloat16)
        p[f"e{i}_b"] = raw[f"e{i}_b"].reshape(cout, 1)
        p[f"e{i}_g"] = raw[f"e{i}_g"].reshape(cout, 1)
        p[f"e{i}_beta"] = raw[f"e{i}_beta"].reshape(cout, 1)
    for i in range(1, 5):
        wt = raw[f"d{i}_w"]                                 # (Cin, Cout, 3,3,3)
        w = jnp.flip(wt, axis=(2, 3, 4)).transpose(1, 0, 2, 3, 4)
        cout = w.shape[0]
        p[f"d{i}_w"] = w.reshape(cout, -1).astype(jnp.bfloat16)
        p[f"d{i}_b"] = raw[f"d{i}_b"].reshape(cout, 1)
        p[f"d{i}_g"] = raw[f"d{i}_g"].reshape(cout, 1)
        p[f"d{i}_beta"] = raw[f"d{i}_beta"].reshape(cout, 1)
    p["mu_w"] = raw["mu_w"].T                               # (FLATTEN, LATENT)
    p["mu_b"] = raw["mu_b"].reshape(1, LATENT_DIM)
    p["lv_w"] = raw["lv_w"].T
    p["lv_b"] = raw["lv_b"].reshape(1, LATENT_DIM)
    p["dec_w"] = raw["dec_w"].T                             # (LATENT, FLATTEN)
    p["dec_b"] = raw["dec_b"].reshape(1, FLATTEN_DIM)
    return p


# ----------------------------- forward ---------------------------------------
@jax.jit
def vae_forward(params, x, eps_key):
    B = x.shape[0]
    h = x.transpose(1, 0, 2, 3, 4)          # NCDHW -> channel-major (C,B,T,H,W)

    # ---- encoder ----
    h = conv_bn_act_stage(h, params["e1_w"], params["e1_b"], params["e1_g"],
                          params["e1_beta"], pad=PADDING, pre_lrelu=True, post_lrelu=False)
    h, idx1 = maxpool3d_with_indices(h)
    h = conv_bn_act_stage(h, params["e2_w"], params["e2_b"], params["e2_g"],
                          params["e2_beta"], pad=PADDING, pre_lrelu=True, post_lrelu=False)
    h, idx2 = maxpool3d_with_indices(h)
    h = conv_bn_act_stage(h, params["e3_w"], params["e3_b"], params["e3_g"],
                          params["e3_beta"], pad=PADDING, pre_lrelu=False, post_lrelu=True)
    h, idx3 = maxpool3d_with_indices(h)
    h = conv_bn_act_stage(h, params["e4_w"], params["e4_b"], params["e4_g"],
                          params["e4_beta"], pad=PADDING, pre_lrelu=False, post_lrelu=False)
    h, idx4 = maxpool3d_with_indices(h)

    # ---- bottleneck (single fused kernel) ----
    flat = h.transpose(1, 0, 2, 3, 4).reshape(B, FLATTEN_DIM)   # torch flatten order
    eps = jax.random.normal(eps_key, (B, LATENT_DIM), jnp.float32)
    mu, logvar, z, d = latent_block(flat, eps, params)
    d = d.reshape(B, HIDDEN_DIM, TL, HL, WL).transpose(1, 0, 2, 3, 4)

    # ---- decoder ----
    d = maxunpool3d(d, idx4)
    d = conv_bn_act_stage(d, params["d4_w"], params["d4_b"], params["d4_g"],
                          params["d4_beta"], pad=DEC_PAD, pre_lrelu=False, post_lrelu=True)
    d = maxunpool3d(d, idx3)
    d = conv_bn_act_stage(d, params["d3_w"], params["d3_b"], params["d3_g"],
                          params["d3_beta"], pad=DEC_PAD, pre_lrelu=False, post_lrelu=True)
    d = maxunpool3d(d, idx2)
    d = conv_bn_act_stage(d, params["d2_w"], params["d2_b"], params["d2_g"],
                          params["d2_beta"], pad=DEC_PAD, pre_lrelu=False, post_lrelu=True)
    d = maxunpool3d(d, idx1)
    d = conv_bn_act_stage(d, params["d1_w"], params["d1_b"], params["d1_g"],
                          params["d1_beta"], pad=DEC_PAD, pre_lrelu=False, post_lrelu=False)

    if APPLY_SIGMOID:
        d = jax.nn.sigmoid(d)
    decoded = d.transpose(1, 0, 2, 3, 4)    # back to NCDHW
    return decoded, mu, logvar, z


# ----------------------------- main ------------------------------------------
if __name__ == "__main__":
    key = jax.random.PRNGKey(0)
    pkey, xkey, ekey = jax.random.split(key, 3)
    params = prepare_params(init_raw_params(pkey))

    B = 2
    T, H, W = INPUT_SHAPE
    x = jax.random.normal(xkey, (B, INPUT_DIM, T, H, W), jnp.float32)

    decoded, mu, logvar, z = vae_forward(params, x, ekey)
    jax.block_until_ready((decoded, mu, logvar, z))

    assert decoded.shape == (B, INPUT_DIM, T, H, W)
    assert mu.shape == (B, LATENT_DIM)
    assert logvar.shape == (B, LATENT_DIM)
    assert z.shape == (B, LATENT_DIM)
    print("KERNEL_OK")
</pallas_src>

<mosaic_0001>
module attributes {stable_mosaic.version = 11 : i64} {
  func.func @kernel(%arg0: i32, %arg1: memref<27x6144xbf16, #tpu.memory_space<vmem>>, %arg2: memref<2x27xbf16, #tpu.memory_space<vmem>>, %arg3: memref<2x1xf32, #tpu.memory_space<vmem>>, %arg4: memref<2x1xf32, #tpu.memory_space<vmem>>, %arg5: memref<2x1xf32, #tpu.memory_space<vmem>>, %arg6: memref<2x6144xf32, #tpu.memory_space<vmem>>) attributes {dimension_semantics = [#tpu.dimension_semantics<arbitrary>], iteration_bounds = array<i64: 1>, scalar_prefetch = 0 : i64, scratch_operands = 0 : i64, tpu.core_type = #tpu.core_type<tc>, window_params = [{pipeline_mode = #tpu.pipeline_mode<synchronous>, transform_indices = @transform_0, window_bounds = array<i64: 27, 6144>}, {pipeline_mode = #tpu.pipeline_mode<synchronous>, transform_indices = @transform_1, window_bounds = array<i64: 2, 27>}, {pipeline_mode = #tpu.pipeline_mode<synchronous>, transform_indices = @transform_2, window_bounds = array<i64: 2, 1>}, {pipeline_mode = #tpu.pipeline_mode<synchronous>, transform_indices = @transform_3, window_bounds = array<i64: 2, 1>}, {pipeline_mode = #tpu.pipeline_mode<synchronous>, transform_indices = @transform_4, window_bounds = array<i64: 2, 1>}, {pipeline_mode = #tpu.pipeline_mode<synchronous>, transform_indices = @transform_5, window_bounds = array<i64: 2, 6144>}]} {
    %c0 = arith.constant 0 : index
    %c0_0 = arith.constant 0 : index
    %0 = vector.load %arg2[%c0, %c0_0] : memref<2x27xbf16, #tpu.memory_space<vmem>>, vector<2x27xbf16>
    %c0_1 = arith.constant 0 : index
    %c0_2 = arith.constant 0 : index
    %1 = vector.load %arg1[%c0_1, %c0_2] : memref<27x6144xbf16, #tpu.memory_space<vmem>>, vector<27x6144xbf16>
    %cst = arith.constant dense<0.000000e+00> : vector<2x6144xf32>
    %2 = tpu.matmul %0, %1, %cst {dimension_numbers = #tpu.dot_dimension_numbers<[1], [0], [0], [1], [0, 0, 1, 1], [], []>} : vector<2x27xbf16>, vector<27x6144xbf16>, vector<2x6144xf32> -> vector<2x6144xf32>
    %c0_3 = arith.constant 0 : index
    %c0_4 = arith.constant 0 : index
    %3 = vector.load %arg3[%c0_3, %c0_4] : memref<2x1xf32, #tpu.memory_space<vmem>>, vector<2x1xf32>
    %4 = vector.broadcast %3 : vector<2x1xf32> to vector<2x6144xf32>
    %5 = arith.addf %2, %4 : vector<2x6144xf32>
    %cst_5 = arith.constant 0.000000e+00 : f32
    %6 = vector.broadcast %cst_5 : f32 to vector<2x6144xf32>
    %7 = arith.cmpf ogt, %5, %6 : vector<2x6144xf32>
    %cst_6 = arith.constant 0.00999999977 : f32
    %8 = vector.broadcast %cst_6 : f32 to vector<2x6144xf32>
    %9 = arith.mulf %8, %5 : vector<2x6144xf32>
    %10 = arith.select %7, %5, %9 : vector<2x6144xi1>, vector<2x6144xf32>
    %cst_7 = arith.constant dense<0.000000e+00> : vector<2xf32>
    %11 = vector.multi_reduction <add>, %10, %cst_7 [1] : vector<2x6144xf32> to vector<2xf32>
    %12 = vector.shape_cast %11 : vector<2xf32> to vector<2x1xf32>
    %cst_8 = arith.constant 6.144000e+03 : f32
    %13 = vector.broadcast %cst_8 : f32 to vector<2x1xf32>
    %14 = arith.divf %12, %13 : vector<2x1xf32>
    %15 = vector.broadcast %14 : vector<2x1xf32> to vector<2x6144xf32>
    %16 = arith.subf %10, %15 : vector<2x6144xf32>
    %17 = arith.mulf %16, %16 : vector<2x6144xf32>
    %cst_9 = arith.constant dense<0.000000e+00> : vector<2xf32>
    %18 = vector.multi_reduction <add>, %17, %cst_9 [1] : vector<2x6144xf32> to vector<2xf32>
    %19 = vector.shape_cast %18 : vector<2xf32> to vector<2x1xf32>
    %cst_10 = arith.constant 6.144000e+03 : f32
    %20 = vector.broadcast %cst_10 : f32 to vector<2x1xf32>
    %21 = arith.divf %19, %20 : vector<2x1xf32>
    %cst_11 = arith.constant 9.99999974E-6 : f32
    %22 = vector.broadcast %cst_11 : f32 to vector<2x1xf32>
    %23 = arith.addf %21, %22 : vector<2x1xf32>
    %24 = math.rsqrt %23 : vector<2x1xf32>
    %25 = vector.broadcast %24 : vector<2x1xf32> to vector<2x6144xf32>
    %26 = arith.mulf %16, %25 : vector<2x6144xf32>
    %c0_12 = arith.constant 0 : index
    %c0_13 = arith.constant 0 : index
    %27 = vector.load %arg4[%c0_12, %c0_13] : memref<2x1xf32, #tpu.memory_space<vmem>>, vector<2x1xf32>
    %28 = vector.broadcast %27 : vector<2x1xf32> to vector<2x6144xf32>
    %29 = arith.mulf %26, %28 : vector<2x6144xf32>
    %c0_14 = arith.constant 0 : index
    %c0_15 = arith.constant 0 : index
    %30 = vector.load %arg5[%c0_14, %c0_15] : memref<2x1xf32, #tpu.memory_space<vmem>>, vector<2x1xf32>
    %31 = vector.broadcast %30 : vector<2x1xf32> to vector<2x6144xf32>
    %32 = arith.addf %29, %31 : vector<2x6144xf32>
    %c0_16 = arith.constant 0 : index
    %c0_17 = arith.constant 0 : index
    %33 = vector.load %arg6[%c0_16, %c0_17] : memref<2x6144xf32, #tpu.memory_space<vmem>>, vector<2x6144xf32>
    tpu.vector_store %arg6[%c0_16, %c0_17], %32 {strides = array<i32>} : memref<2x6144xf32, #tpu.memory_space<vmem>>, vector<2x6144xf32>,
    return
  }
  func.func @transform_0(%arg0: i32) -> (i32, i32) {
    %c0_i32 = arith.constant 0 : i32
    %c0_i32_0 = arith.constant 0 : i32
    %c0_i32_1 = arith.constant 0 : i32
    return %c0_i32, %c0_i32_0 : i32, i32
  }
  func.func @transform_1(%arg0: i32) -> (i32, i32) {
    %c0_i32 = arith.constant 0 : i32
    %c0_i32_0 = arith.constant 0 : i32
    %c0_i32_1 = arith.constant 0 : i32
    return %c0_i32, %c0_i32_0 : i32, i32
  }
  func.func @transform_2(%arg0: i32) -> (i32, i32) {
    %c0_i32 = arith.constant 0 : i32
    %c0_i32_0 = arith.constant 0 : i32
    %c0_i32_1 = arith.constant 0 : i32
    return %c0_i32, %c0_i32_0 : i32, i32
  }
  func.func @transform_3(%arg0: i32) -> (i32, i32) {
    %c0_i32 = arith.constant 0 : i32
    %c0_i32_0 = arith.constant 0 : i32
    %c0_i32_1 = arith.constant 0 : i32
    return %c0_i32, %c0_i32_0 : i32, i32
  }
  func.func @transform_4(%arg0: i32) -> (i32, i32) {
    %c0_i32 = arith.constant 0 : i32
    %c0_i32_0 = arith.constant 0 : i32
    %c0_i32_1 = arith.constant 0 : i32
    return %c0_i32, %c0_i32_0 : i32, i32
  }
  func.func @transform_5(%arg0: i32) -> (i32, i32) {
    %c0_i32 = arith.constant 0 : i32
    %c0_i32_0 = arith.constant 0 : i32
    %c0_i32_1 = arith.constant 0 : i32
    return %c0_i32, %c0_i32_0 : i32, i32
  }
}

module attributes {stable_mosaic.version = 11 : i64} {
  func.func @_pool_kernel(%arg0: memref<12x4x640xf32, #tpu.memory_space<vmem>>, %arg1: memref<1x640xi32, #tpu.memory_space<vmem>>, %arg2: memref<4x640xf32, #tpu.memory_space<vmem>>, %arg3: memref<4x640xi32, #tpu.memory_space<vmem>>) attributes {dimension_semantics = [], scalar_prefetch = 0 : i64, scratch_operands = 0 : i64, tpu.core_type = #tpu.core_type<tc>} {
    %c0 = arith.constant 0 : index
    %c0_0 = arith.constant 0 : index
    %c0_1 = arith.constant 0 : index
    %0 = vector.load %arg0[%c0, %c0_0, %c0_1] : memref<12x4x640xf32, #tpu.memory_space<vmem>>, vector<1x4x640xf32>
    %1 = vector.shape_cast %0 : vector<1x4x640xf32> to vector<4x640xf32>
    %c0_i32 = arith.constant 0 : i32
    %2 = vector.broadcast %c0_i32 : i32 to vector<4x640xi32>
    %c1 = arith.constant 1 : index
    %c0_2 = arith.constant 0 : index
    %c0_3 = arith.constant 0 : index
    %3 = vector.load %arg0[%c1, %c0_2, %c0_3] : memref<12x4x640xf32, #tpu.memory_space<vmem>>, vector<1x4x640xf32>
    %4 = vector.shape_cast %3 : vector<1x4x640xf32> to vector<4x640xf32>
    %5 = arith.cmpf ogt, %4, %1 : vector<4x640xf32>
    %6 = arith.select %5, %4, %1 : vector<4x640xi1>, vector<4x640xf32>
    %c1_i32 = arith.constant 1 : i32
    %7 = vector.broadcast %c1_i32 : i32 to vector<4x640xi32>
    %8 = arith.select %5, %7, %2 : vector<4x640xi1>, vector<4x640xi32>
    %c2 = arith.constant 2 : index
    %c0_4 = arith.constant 0 : index
    %c0_5 = arith.constant 0 : index
    %9 = vector.load %arg0[%c2, %c0_4, %c0_5] : memref<12x4x640xf32, #tpu.memory_space<vmem>>, vector<1x4x640xf32>
    %10 = vector.shape_cast %9 : vector<1x4x640xf32> to vector<4x640xf32>
    %11 = arith.cmpf ogt, %10, %6 : vector<4x640xf32>
    %12 = arith.select %11, %10, %6 : vector<4x640xi1>, vector<4x640xf32>
    %c16_i32 = arith.constant 16 : i32
    %13 = vector.broadcast %c16_i32 : i32 to vector<4x640xi32>
    %14 = arith.select %11, %13, %8 : vector<4x640xi1>, vector<4x640xi32>
    %c3 = arith.constant 3 : index
    %c0_6 = arith.constant 0 : index
    %c0_7 = arith.constant 0 : index
    %15 = vector.load %arg0[%c3, %c0_6, %c0_7] : memref<12x4x640xf32, #tpu.memory_space<vmem>>, vector<1x4x640xf32>
    %16 = vector.shape_cast %15 : vector<1x4x640xf32> to vector<4x640xf32>
    %17 = arith.cmpf ogt, %16, %12 : vector<4x640xf32>
    %18 = arith.select %17, %16, %12 : vector<4x640xi1>, vector<4x640xf32>
    %c17_i32 = arith.constant 17 : i32
    %19 = vector.broadcast %c17_i32 : i32 to vector<4x640xi32>
    %20 = arith.select %17, %19, %14 : vector<4x640xi1>, vector<4x640xi32>
    %c4 = arith.constant 4 : index
    %c0_8 = arith.constant 0 : index
    %c0_9 = arith.constant 0 : index
    %21 = vector.load %arg0[%c4, %c0_8, %c0_9] : memref<12x4x640xf32, #tpu.memory_space<vmem>>, vector<1x4x640xf32>
    %22 = vector.shape_cast %21 : vector<1x4x640xf32> to vector<4x640xf32>
    %23 = arith.cmpf ogt, %22, %18 : vector<4x640xf32>
    %24 = arith.select %23, %22, %18 : vector<4x640xi1>, vector<4x640xf32>
    %c256_i32 = arith.constant 256 : i32
    %25 = vector.broadcast %c256_i32 : i32 to vector<4x640xi32>
    %26 = arith.select %23, %25, %20 : vector<4x640xi1>, vector<4x640xi32>
    %c5 = arith.constant 5 : index
    %c0_10 = arith.constant 0 : index
    %c0_11 = arith.constant 0 : index
    %27 = vector.load %arg0[%c5, %c0_10, %c0_11] : memref<12x4x640xf32, #tpu.memory_space<vmem>>, vector<1x4x640xf32>
    %28 = vector.shape_cast %27 : vector<1x4x640xf32> to vector<4x640xf32>
    %29 = arith.cmpf ogt, %28, %24 : vector<4x640xf32>
    %30 = arith.select %29, %28, %24 : vector<4x640xi1>, vector<4x640xf32>
    %c257_i32 = arith.constant 257 : i32
    %31 = vector.broadcast %c257_i32 : i32 to vector<4x640xi32>
    %32 = arith.select %29, %31, %26 : vector<4x640xi1>, vector<4x640xi32>
    %c6 = arith.constant 6 : index
    %c0_12 = arith.constant 0 : index
    %c0_13 = arith.constant 0 : index
    %33 = vector.load %arg0[%c6, %c0_12, %c0_13] : memref<12x4x640xf32, #tpu.memory_space<vmem>>, vector<1x4x640xf32>
    %34 = vector.shape_cast %33 : vector<1x4x640xf32> to vector<4x640xf32>
    %35 = arith.cmpf ogt, %34, %30 : vector<4x640xf32>
    %36 = arith.select %35, %34, %30 : vector<4x640xi1>, vector<4x640xf32>
    %c272_i32 = arith.constant 272 : i32
    %37 = vector.broadcast %c272_i32 : i32 to vector<4x640xi32>
    %38 = arith.select %35, %37, %32 : vector<4x640xi1>, vector<4x640xi32>
    %c7 = arith.constant 7 : index
    %c0_14 = arith.constant 0 : index
    %c0_15 = arith.constant 0 : index
    %39 = vector.load %arg0[%c7, %c0_14, %c0_15] : memref<12x4x640xf32, #tpu.memory_space<vmem>>, vector<1x4x640xf32>
    %40 = vector.shape_cast %39 : vector<1x4x640xf32> to vector<4x640xf32>
    %41 = arith.cmpf ogt, %40, %36 : vector<4x640xf32>
    %42 = arith.select %41, %40, %36 : vector<4x640xi1>, vector<4x640xf32>
    %c273_i32 = arith.constant 273 : i32
    %43 = vector.broadcast %c273_i32 : i32 to vector<4x640xi32>
    %44 = arith.select %41, %43, %38 : vector<4x640xi1>, vector<4x640xi32>
    %c8 = arith.constant 8 : index
    %c0_16 = arith.constant 0 : index
    %c0_17 = arith.constant 0 : index
    %45 = vector.load %arg0[%c8, %c0_16, %c0_17] : memref<12x4x640xf32, #tpu.memory_space<vmem>>, vector<1x4x640xf32>
    %46 = vector.shape_cast %45 : vector<1x4x640xf32> to vector<4x640xf32>
    %47 = arith.cmpf ogt, %46, %42 : vector<4x640xf32>
    %48 = arith.select %47, %46, %42 : vector<4x640xi1>, vector<4x640xf32>
    %c512_i32 = arith.constant 512 : i32
    %49 = vector.broadcast %c512_i32 : i32 to vector<4x640xi32>
    %50 = arith.select %47, %49, %44 : vector<4x640xi1>, vector<4x640xi32>
    %c9 = arith.constant 9 : index
    %c0_18 = arith.constant 0 : index
    %c0_19 = arith.constant 0 : index
    %51 = vector.load %arg0[%c9, %c0_18, %c0_19] : memref<12x4x640xf32, #tpu.memory_space<vmem>>, vector<1x4x640xf32>
    %52 = vector.shape_cast %51 : vector<1x4x640xf32> to vector<4x640xf32>
    %53 = arith.cmpf ogt, %52, %48 : vector<4x640xf32>
    %54 = arith.select %53, %52, %48 : vector<4x640xi1>, vector<4x640xf32>
    %c513_i32 = arith.constant 513 : i32
    %55 = vector.broadcast %c513_i32 : i32 to vector<4x640xi32>
    %56 = arith.select %53, %55, %50 : vector<4x640xi1>, vector<4x640xi32>
    %c10 = arith.constant 10 : index
    %c0_20 = arith.constant 0 : index
    %c0_21 = arith.constant 0 : index
    %57 = vector.load %arg0[%c10, %c0_20, %c0_21] : memref<12x4x640xf32, #tpu.memory_space<vmem>>, vector<1x4x640xf32>
    %58 = vector.shape_cast %57 : vector<1x4x640xf32> to vector<4x640xf32>
    %59 = arith.cmpf ogt, %58, %54 : vector<4x640xf32>
    %60 = arith.select %59, %58, %54 : vector<4x640xi1>, vector<4x640xf32>
    %c528_i32 = arith.constant 528 : i32
    %61 = vector.broadcast %c528_i32 : i32 to vector<4x640xi32>
    %62 = arith.select %59, %61, %56 : vector<4x640xi1>, vector<4x640xi32>
    %c11 = arith.constant 11 : index
    %c0_22 = arith.constant 0 : index
    %c0_23 = arith.constant 0 : index
    %63 = vector.load %arg0[%c11, %c0_22, %c0_23] : memref<12x4x640xf32, #tpu.memory_space<vmem>>, vector<1x4x640xf32>
    %64 = vector.shape_cast %63 : vector<1x4x640xf32> to vector<4x640xf32>
    %65 = arith.cmpf ogt, %64, %60 : vector<4x640xf32>
    %66 = arith.select %65, %64, %60 : vector<4x640xi1>, vector<4x640xf32>
    %c529_i32 = arith.constant 529 : i32
    %67 = vector.broadcast %c529_i32 : i32 to vector<4x640xi32>
    %68 = arith.select %65, %67, %62 : vector<4x640xi1>, vector<4x640xi32>
    %c0_24 = arith.constant 0 : index
    %c0_25 = arith.constant 0 : index
    %69 = vector.load %arg2[%c0_24, %c0_25] : memref<4x640xf32, #tpu.memory_space<vmem>>, vector<4x640xf32>
    tpu.vector_store %arg2[%c0_24, %c0_25], %66 {strides = array<i32>} : memref<4x640xf32, #tpu.memory_space<vmem>>, vector<4x640xf32>,
    %c0_26 = arith.constant 0 : index
    %c0_27 = arith.constant 0 : index
    %70 = vector.load %arg1[%c0_26, %c0_27] : memref<1x640xi32, #tpu.memory_space<vmem>>, vector<1x640xi32>
    %71 = vector.broadcast %70 : vector<1x640xi32> to vector<4x640xi32>
    %72 = arith.addi %71, %68 : vector<4x640xi32>
    %c0_28 = arith.constant 0 : index
    %c0_29 = arith.constant 0 : index
    %73 = vector.load %arg3[%c0_28, %c0_29] : memref<4x640xi32, #tpu.memory_space<vmem>>, vector<4x640xi32>
    tpu.vector_store %arg3[%c0_28, %c0_29], %72 {strides = array<i32>} : memref<4x640xi32, #tpu.memory_space<vmem>>, vector<4x640xi32>,
    return
  }
}

module attributes {stable_mosaic.version = 11 : i64} {
  func.func @kernel(%arg0: i32, %arg1: memref<54x1280xbf16, #tpu.memory_space<vmem>>, %arg2: memref<4x54xbf16, #tpu.memory_space<vmem>>, %arg3: memref<4x1xf32, #tpu.memory_space<vmem>>, %arg4: memref<4x1xf32, #tpu.memory_space<vmem>>, %arg5: memref<4x1xf32, #tpu.memory_space<vmem>>, %arg6: memref<4x1280xf32, #tpu.memory_space<vmem>>) attributes {dimension_semantics = [#tpu.dimension_semantics<arbitrary>], iteration_bounds = array<i64: 1>, scalar_prefetch = 0 : i64, scratch_operands = 0 : i64, tpu.core_type = #tpu.core_type<tc>, window_params = [{pipeline_mode = #tpu.pipeline_mode<synchronous>, transform_indices = @transform_0, window_bounds = array<i64: 54, 1280>}, {pipeline_mode = #tpu.pipeline_mode<synchronous>, transform_indices = @transform_1, window_bounds = array<i64: 4, 54>}, {pipeline_mode = #tpu.pipeline_mode<synchronous>, transform_indices = @transform_2, window_bounds = array<i64: 4, 1>}, {pipeline_mode = #tpu.pipeline_mode<synchronous>, transform_indices = @transform_3, window_bounds = array<i64: 4, 1>}, {pipeline_mode = #tpu.pipeline_mode<synchronous>, transform_indices = @transform_4, window_bounds = array<i64: 4, 1>}, {pipeline_mode = #tpu.pipeline_mode<synchronous>, transform_indices = @transform_5, window_bounds = array<i64: 4, 1280>}]} {
    %c0 = arith.constant 0 : index
    %c0_0 = arith.constant 0 : index
    %0 = vector.load %arg2[%c0, %c0_0] : memref<4x54xbf16, #tpu.memory_space<vmem>>, vector<4x54xbf16>
    %c0_1 = arith.constant 0 : index
    %c0_2 = arith.constant 0 : index
    %1 = vector.load %arg1[%c0_1, %c0_2] : memref<54x1280xbf16, #tpu.memory_space<vmem>>, vector<54x1280xbf16>
    %cst = arith.constant dense<0.000000e+00> : vector<4x1280xf32>
    %2 = tpu.matmul %0, %1, %cst {dimension_numbers = #tpu.dot_dimension_numbers<[1], [0], [0], [1], [0, 0, 1, 1], [], []>} : vector<4x54xbf16>, vector<54x1280xbf16>, vector<4x1280xf32> -> vector<4x1280xf32>
    %c0_3 = arith.constant 0 : index
    %c0_4 = arith.constant 0 : index
    %3 = vector.load %arg3[%c0_3, %c0_4] : memref<4x1xf32, #tpu.memory_space<vmem>>, vector<4x1xf32>
    %4 = vector.broadcast %3 : vector<4x1xf32> to vector<4x1280xf32>
    %5 = arith.addf %2, %4 : vector<4x1280xf32>
    %cst_5 = arith.constant 0.000000e+00 : f32
    %6 = vector.broadcast %cst_5 : f32 to vector<4x1280xf32>
    %7 = arith.cmpf ogt, %5, %6 : vector<4x1280xf32>
    %cst_6 = arith.constant 0.00999999977 : f32
    %8 = vector.broadcast %cst_6 : f32 to vector<4x1280xf32>
    %9 = arith.mulf %8, %5 : vector<4x1280xf32>
    %10 = arith.select %7, %5, %9 : vector<4x1280xi1>, vector<4x1280xf32>
    %cst_7 = arith.constant dense<0.000000e+00> : vector<4xf32>
    %11 = vector.multi_reduction <add>, %10, %cst_7 [1] : vector<4x1280xf32> to vector<4xf32>
    %12 = vector.shape_cast %11 : vector<4xf32> to vector<4x1xf32>
    %cst_8 = arith.constant 1.280000e+03 : f32
    %13 = vector.broadcast %cst_8 : f32 to vector<4x1xf32>
    %14 = arith.divf %12, %13 : vector<4x1xf32>
    %15 = vector.broadcast %14 : vector<4x1xf32> to vector<4x1280xf32>
    %16 = arith.subf %10, %15 : vector<4x1280xf32>
    %17 = arith.mulf %16, %16 : vector<4x1280xf32>
    %cst_9 = arith.constant dense<0.000000e+00> : vector<4xf32>
    %18 = vector.multi_reduction <add>, %17, %cst_9 [1] : vector<4x1280xf32> to vector<4xf32>
    %19 = vector.shape_cast %18 : vector<4xf32> to vector<4x1xf32>
    %cst_10 = arith.constant 1.280000e+03 : f32
    %20 = vector.broadcast %cst_10 : f32 to vector<4x1xf32>
    %21 = arith.divf %19, %20 : vector<4x1xf32>
    %cst_11 = arith.constant 9.99999974E-6 : f32
    %22 = vector.broadcast %cst_11 : f32 to vector<4x1xf32>
    %23 = arith.addf %21, %22 : vector<4x1xf32>
    %24 = math.rsqrt %23 : vector<4x1xf32>
    %25 = vector.broadcast %24 : vector<4x1xf32> to vector<4x1280xf32>
    %26 = arith.mulf %16, %25 : vector<4x1280xf32>
    %c0_12 = arith.constant 0 : index
    %c0_13 = arith.constant 0 : index
    %27 = vector.load %arg4[%c0_12, %c0_13] : memref<4x1xf32, #tpu.memory_space<vmem>>, vector<4x1xf32>
    %28 = vector.broadcast %27 : vector<4x1xf32> to vector<4x1280xf32>
    %29 = arith.mulf %26, %28 : vector<4x1280xf32>
    %c0_14 = arith.constant 0 : index
    %c0_15 = arith.constant 0 : index
    %30 = vector.load %arg5[%c0_14, %c0_15] : memref<4x1xf32, #tpu.memory_space<vmem>>, vector<4x1xf32>
    %31 = vector.broadcast %30 : vector<4x1xf32> to vector<4x1280xf32>
    %32 = arith.addf %29, %31 : vector<4x1280xf32>
    %c0_16 = arith.constant 0 : index
    %c0_17 = arith.constant 0 : index
    %33 = vector.load %arg6[%c0_16, %c0_17] : memref<4x1280xf32, #tpu.memory_space<vmem>>, vector<4x1280xf32>
    tpu.vector_store %arg6[%c0_16, %c0_17], %32 {strides = array<i32>} : memref<4x1280xf32, #tpu.memory_space<vmem>>, vector<4x1280xf32>,
    return
  }
  func.func @transform_0(%arg0: i32) -> (i32, i32) {
    %c0_i32 = arith.constant 0 : i32
    %c0_i32_0 = arith.constant 0 : i32
    %c0_i32_1 = arith.constant 0 : i32
    return %c0_i32, %c0_i32_0 : i32, i32
  }
  func.func @transform_1(%arg0: i32) -> (i32, i32) {
    %c0_i32 = arith.constant 0 : i32
    %c0_i32_0 = arith.constant 0 : i32
    %c0_i32_1 = arith.constant 0 : i32
    return %c0_i32, %c0_i32_0 : i32, i32
  }
  func.func @transform_2(%arg0: i32) -> (i32, i32) {
    %c0_i32 = arith.constant 0 : i32
    %c0_i32_0 = arith.constant 0 : i32
    %c0_i32_1 = arith.constant 0 : i32
    return %c0_i32, %c0_i32_0 : i32, i32
  }
  func.func @transform_3(%arg0: i32) -> (i32, i32) {
    %c0_i32 = arith.constant 0 : i32
    %c0_i32_0 = arith.constant 0 : i32
    %c0_i32_1 = arith.constant 0 : i32
    return %c0_i32, %c0_i32_0 : i32, i32
  }
  func.func @transform_4(%arg0: i32) -> (i32, i32) {
    %c0_i32 = arith.constant 0 : i32
    %c0_i32_0 = arith.constant 0 : i32
    %c0_i32_1 = arith.constant 0 : i32
    return %c0_i32, %c0_i32_0 : i32, i32
  }
  func.func @transform_5(%arg0: i32) -> (i32, i32) {
    %c0_i32 = arith.constant 0 : i32
    %c0_i32_0 = arith.constant 0 : i32
    %c0_i32_1 = arith.constant 0 : i32
    return %c0_i32, %c0_i32_0 : i32, i32
  }
}

module attributes {stable_mosaic.version = 11 : i64} {
  func.func @_pool_kernel(%arg0: memref<12x8x128xf32, #tpu.memory_space<vmem>>, %arg1: memref<1x128xi32, #tpu.memory_space<vmem>>, %arg2: memref<8x128xf32, #tpu.memory_space<vmem>>, %arg3: memref<8x128xi32, #tpu.memory_space<vmem>>) attributes {dimension_semantics = [], scalar_prefetch = 0 : i64, scratch_operands = 0 : i64, tpu.core_type = #tpu.core_type<tc>} {
    %c0 = arith.constant 0 : index
    %c0_0 = arith.constant 0 : index
    %c0_1 = arith.constant 0 : index
    %0 = vector.load %arg0[%c0, %c0_0, %c0_1] : memref<12x8x128xf32, #tpu.memory_space<vmem>>, vector<1x8x128xf32>
    %1 = vector.shape_cast %0 : vector<1x8x128xf32> to vector<8x128xf32>
    %c0_i32 = arith.constant 0 : i32
    %2 = vector.broadcast %c0_i32 : i32 to vector<8x128xi32>
    %c1 = arith.constant 1 : index
    %c0_2 = arith.constant 0 : index
    %c0_3 = arith.constant 0 : index
    %3 = vector.load %arg0[%c1, %c0_2, %c0_3] : memref<12x8x128xf32, #tpu.memory_space<vmem>>, vector<1x8x128xf32>
    %4 = vector.shape_cast %3 : vector<1x8x128xf32> to vector<8x128xf32>
    %5 = arith.cmpf ogt, %4, %1 : vector<8x128xf32>
    %6 = arith.select %5, %4, %1 : vector<8x128xi1>, vector<8x128xf32>
    %c1_i32 = arith.constant 1 : i32
    %7 = vector.broadcast %c1_i32 : i32 to vector<8x128xi32>
    %8 = arith.select %5, %7, %2 : vector<8x128xi1>, vector<8x128xi32>
    %c2 = arith.constant 2 : index
    %c0_4 = arith.constant 0 : index
    %c0_5 = arith.constant 0 : index
    %9 = vector.load %arg0[%c2, %c0_4, %c0_5] : memref<12x8x128xf32, #tpu.memory_space<vmem>>, vector<1x8x128xf32>
    %10 = vector.shape_cast %9 : vector<1x8x128xf32> to vector<8x128xf32>
    %11 = arith.cmpf ogt, %10, %6 : vector<8x128xf32>
    %12 = arith.select %11, %10, %6 : vector<8x128xi1>, vector<8x128xf32>
    %c8_i32 = arith.constant 8 : i32
    %13 = vector.broadcast %c8_i32 : i32 to vector<8x128xi32>
    %14 = arith.select %11, %13, %8 : vector<8x128xi1>, vector<8x128xi32>
    %c3 = arith.constant 3 : index
    %c0_6 = arith.constant 0 : index
    %c0_7 = arith.constant 0 : index
    %15 = vector.load %arg0[%c3, %c0_6, %c0_7] : memref<12x8x128xf32, #tpu.memory_space<vmem>>, vector<1x8x128xf32>
    %16 = vector.shape_cast %15 : vector<1x8x128xf32> to vector<8x128xf32>
    %17 = arith.cmpf ogt, %16, %12 : vector<8x128xf32>
    %18 = arith.select %17, %16, %12 : vector<8x128xi1>, vector<8x128xf32>
    %c9_i32 = arith.constant 9 : i32
    %19 = vector.broadcast %c9_i32 : i32 to vector<8x128xi32>
    %20 = arith.select %17, %19, %14 : vector<8x128xi1>, vector<8x128xi32>
    %c4 = arith.constant 4 : index
    %c0_8 = arith.constant 0 : index
    %c0_9 = arith.constant 0 : index
    %21 = vector.load %arg0[%c4, %c0_8, %c0_9] : memref<12x8x128xf32, #tpu.memory_space<vmem>>, vector<1x8x128xf32>
    %22 = vector.shape_cast %21 : vector<1x8x128xf32> to vector<8x128xf32>
    %23 = arith.cmpf ogt, %22, %18 : vector<8x128xf32>
    %24 = arith.select %23, %22, %18 : vector<8x128xi1>, vector<8x128xf32>
    %c64_i32 = arith.constant 64 : i32
    %25 = vector.broadcast %c64_i32 : i32 to vector<8x128xi32>
    %26 = arith.select %23, %25, %20 : vector<8x128xi1>, vector<8x128xi32>
    %c5 = arith.constant 5 : index
    %c0_10 = arith.constant 0 : index
    %c0_11 = arith.constant 0 : index
    %27 = vector.load %arg0[%c5, %c0_10, %c0_11] : memref<12x8x128xf32, #tpu.memory_space<vmem>>, vector<1x8x128xf32>
    %28 = vector.shape_cast %27 : vector<1x8x128xf32> to vector<8x128xf32>
    %29 = arith.cmpf ogt, %28, %24 : vector<8x128xf32>
    %30 = arith.select %29, %28, %24 : vector<8x128xi1>, vector<8x128xf32>
    %c65_i32 = arith.constant 65 : i32
    %31 = vector.broadcast %c65_i32 : i32 to vector<8x128xi32>
    %32 = arith.select %29, %31, %26 : vector<8x128xi1>, vector<8x128xi32>
    %c6 = arith.constant 6 : index
    %c0_12 = arith.constant 0 : index
    %c0_13 = arith.constant 0 : index
    %33 = vector.load %arg0[%c6, %c0_12, %c0_13] : memref<12x8x128xf32, #tpu.memory_space<vmem>>, vector<1x8x128xf32>
    %34 = vector.shape_cast %33 : vector<1x8x128xf32> to vector<8x128xf32>
    %35 = arith.cmpf ogt, %34, %30 : vector<8x128xf32>
    %36 = arith.select %35, %34, %30 : vector<8x128xi1>, vector<8x128xf32>
    %c72_i32 = arith.constant 72 : i32
    %37 = vector.broadcast %c72_i32 : i32 to vector<8x128xi32>
    %38 = arith.select %35, %37, %32 : vector<8x128xi1>, vector<8x128xi32>
    %c7 = arith.constant 7 : index
    %c0_14 = arith.constant 0 : index
    %c0_15 = arith.constant 0 : index
    %39 = vector.load %arg0[%c7, %c0_14, %c0_15] : memref<12x8x128xf32, #tpu.memory_space<vmem>>, vector<1x8x128xf32>
    %40 = vector.shape_cast %39 : vector<1x8x128xf32> to vector<8x128xf32>
    %41 = arith.cmpf ogt, %40, %36 : vector<8x128xf32>
    %42 = arith.select %41, %40, %36 : vector<8x128xi1>, vector<8x128xf32>
    %c73_i32 = arith.constant 73 : i32
    %43 = vector.broadcast %c73_i32 : i32 to vector<8x128xi32>
    %44 = arith.select %41, %43, %38 : vector<8x128xi1>, vector<8x128xi32>
    %c8 = arith.constant 8 : index
    %c0_16 = arith.constant 0 : index
    %c0_17 = arith.constant 0 : index
    %45 = vector.load %arg0[%c8, %c0_16, %c0_17] : memref<12x8x128xf32, #tpu.memory_space<vmem>>, vector<1x8x128xf32>
    %46 = vector.shape_cast %45 : vector<1x8x128xf32> to vector<8x128xf32>
    %47 = arith.cmpf ogt, %46, %42 : vector<8x128xf32>
    %48 = arith.select %47, %46, %42 : vector<8x128xi1>, vector<8x128xf32>
    %c128_i32 = arith.constant 128 : i32
    %49 = vector.broadcast %c128_i32 : i32 to vector<8x128xi32>
    %50 = arith.select %47, %49, %44 : vector<8x128xi1>, vector<8x128xi32>
    %c9 = arith.constant 9 : index
    %c0_18 = arith.constant 0 : index
    %c0_19 = arith.constant 0 : index
    %51 = vector.load %arg0[%c9, %c0_18, %c0_19] : memref<12x8x128xf32, #tpu.memory_space<vmem>>, vector<1x8x128xf32>
    %52 = vector.shape_cast %51 : vector<1x8x128xf32> to vector<8x128xf32>
    %53 = arith.cmpf ogt, %52, %48 : vector<8x128xf32>
    %54 = arith.select %53, %52, %48 : vector<8x128xi1>, vector<8x128xf32>
    %c129_i32 = arith.constant 129 : i32
    %55 = vector.broadcast %c129_i32 : i32 to vector<8x128xi32>
    %56 = arith.select %53, %55, %50 : vector<8x128xi1>, vector<8x128xi32>
    %c10 = arith.constant 10 : index
    %c0_20 = arith.constant 0 : index
    %c0_21 = arith.constant 0 : index
    %57 = vector.load %arg0[%c10, %c0_20, %c0_21] : memref<12x8x128xf32, #tpu.memory_space<vmem>>, vector<1x8x128xf32>
    %58 = vector.shape_cast %57 : vector<1x8x128xf32> to vector<8x128xf32>
    %59 = arith.cmpf ogt, %58, %54 : vector<8x128xf32>
    %60 = arith.select %59, %58, %54 : vector<8x128xi1>, vector<8x128xf32>
    %c136_i32 = arith.constant 136 : i32
    %61 = vector.broadcast %c136_i32 : i32 to vector<8x128xi32>
    %62 = arith.select %59, %61, %56 : vector<8x128xi1>, vector<8x128xi32>
    %c11 = arith.constant 11 : index
    %c0_22 = arith.constant 0 : index
    %c0_23 = arith.constant 0 : index
    %63 = vector.load %arg0[%c11, %c0_22, %c0_23] : memref<12x8x128xf32, #tpu.memory_space<vmem>>, vector<1x8x128xf32>
    %64 = vector.shape_cast %63 : vector<1x8x128xf32> to vector<8x128xf32>
    %65 = arith.cmpf ogt, %64, %60 : vector<8x128xf32>
    %66 = arith.select %65, %64, %60 : vector<8x128xi1>, vector<8x128xf32>
    %c137_i32 = arith.constant 137 : i32
    %67 = vector.broadcast %c137_i32 : i32 to vector<8x128xi32>
    %68 = arith.select %65, %67, %62 : vector<8x128xi1>, vector<8x128xi32>
    %c0_24 = arith.constant 0 : index
    %c0_25 = arith.constant 0 : index
    %69 = vector.load %arg2[%c0_24, %c0_25] : memref<8x128xf32, #tpu.memory_space<vmem>>, vector<8x128xf32>
    tpu.vector_store %arg2[%c0_24, %c0_25], %66 {strides = array<i32>} : memref<8x128xf32, #tpu.memory_space<vmem>>, vector<8x128xf32>,
    %c0_26 = arith.constant 0 : index
    %c0_27 = arith.constant 0 : index
    %70 = vector.load %arg1[%c0_26, %c0_27] : memref<1x128xi32, #tpu.memory_space<vmem>>, vector<1x128xi32>
    %71 = vector.broadcast %70 : vector<1x128xi32> to vector<8x128xi32>
    %72 = arith.addi %71, %68 : vector<8x128xi32>
    %c0_28 = arith.constant 0 : index
    %c0_29 = arith.constant 0 : index
    %73 = vector.load %arg3[%c0_28, %c0_29] : memref<8x128xi32, #tpu.memory_space<vmem>>, vector<8x128xi32>
    tpu.vector_store %arg3[%c0_28, %c0_29], %72 {strides = array<i32>} : memref<8x128xi32, #tpu.memory_space<vmem>>, vector<8x128xi32>,
    return
  }
}

module attributes {stable_mosaic.version = 11 : i64} {
  func.func @kernel(%arg0: i32, %arg1: memref<108x256xbf16, #tpu.memory_space<vmem>>, %arg2: memref<8x108xbf16, #tpu.memory_space<vmem>>, %arg3: memref<8x1xf32, #tpu.memory_space<vmem>>, %arg4: memref<8x1xf32, #tpu.memory_space<vmem>>, %arg5: memref<8x1xf32, #tpu.memory_space<vmem>>, %arg6: memref<8x256xf32, #tpu.memory_space<vmem>>) attributes {dimension_semantics = [#tpu.dimension_semantics<arbitrary>], iteration_bounds = array<i64: 1>, scalar_prefetch = 0 : i64, scratch_operands = 0 : i64, tpu.core_type = #tpu.core_type<tc>, window_params = [{pipeline_mode = #tpu.pipeline_mode<synchronous>, transform_indices = @transform_0, window_bounds = array<i64: 108, 256>}, {pipeline_mode = #tpu.pipeline_mode<synchronous>, transform_indices = @transform_1, window_bounds = array<i64: 8, 108>}, {pipeline_mode = #tpu.pipeline_mode<synchronous>, transform_indices = @transform_2, window_bounds = array<i64: 8, 1>}, {pipeline_mode = #tpu.pipeline_mode<synchronous>, transform_indices = @transform_3, window_bounds = array<i64: 8, 1>}, {pipeline_mode = #tpu.pipeline_mode<synchronous>, transform_indices = @transform_4, window_bounds = array<i64: 8, 1>}, {pipeline_mode = #tpu.pipeline_mode<synchronous>, transform_indices = @transform_5, window_bounds = array<i64: 8, 256>}]} {
    %c0 = arith.constant 0 : index
    %c0_0 = arith.constant 0 : index
    %0 = vector.load %arg2[%c0, %c0_0] : memref<8x108xbf16, #tpu.memory_space<vmem>>, vector<8x108xbf16>
    %c0_1 = arith.constant 0 : index
    %c0_2 = arith.constant 0 : index
    %1 = vector.load %arg1[%c0_1, %c0_2] : memref<108x256xbf16, #tpu.memory_space<vmem>>, vector<108x256xbf16>
    %cst = arith.constant dense<0.000000e+00> : vector<8x256xf32>
    %2 = tpu.matmul %0, %1, %cst {dimension_numbers = #tpu.dot_dimension_numbers<[1], [0], [0], [1], [0, 0, 1, 1], [], []>} : vector<8x108xbf16>, vector<108x256xbf16>, vector<8x256xf32> -> vector<8x256xf32>
    %c0_3 = arith.constant 0 : index
    %c0_4 = arith.constant 0 : index
    %3 = vector.load %arg3[%c0_3, %c0_4] : memref<8x1xf32, #tpu.memory_space<vmem>>, vector<8x1xf32>
    %4 = vector.broadcast %3 : vector<8x1xf32> to vector<8x256xf32>
    %5 = arith.addf %2, %4 : vector<8x256xf32>
    %cst_5 = arith.constant dense<0.000000e+00> : vector<8xf32>
    %6 = vector.multi_reduction <add>, %5, %cst_5 [1] : vector<8x256xf32> to vector<8xf32>
    %7 = vector.shape_cast %6 : vector<8xf32> to vector<8x1xf32>
    %cst_6 = arith.constant 2.560000e+02 : f32
    %8 = vector.broadcast %cst_6 : f32 to vector<8x1xf32>
    %9 = arith.divf %7, %8 : vector<8x1xf32>
    %10 = vector.broadcast %9 : vector<8x1xf32> to vector<8x256xf32>
    %11 = arith.subf %5, %10 : vector<8x256xf32>
    %12 = arith.mulf %11, %11 : vector<8x256xf32>
    %cst_7 = arith.constant dense<0.000000e+00> : vector<8xf32>
    %13 = vector.multi_reduction <add>, %12, %cst_7 [1] : vector<8x256xf32> to vector<8xf32>
    %14 = vector.shape_cast %13 : vector<8xf32> to vector<8x1xf32>
    %cst_8 = arith.constant 2.560000e+02 : f32
    %15 = vector.broadcast %cst_8 : f32 to vector<8x1xf32>
    %16 = arith.divf %14, %15 : vector<8x1xf32>
    %cst_9 = arith.constant 9.99999974E-6 : f32
    %17 = vector.broadcast %cst_9 : f32 to vector<8x1xf32>
    %18 = arith.addf %16, %17 : vector<8x1xf32>
    %19 = math.rsqrt %18 : vector<8x1xf32>
    %20 = vector.broadcast %19 : vector<8x1xf32> to vector<8x256xf32>
    %21 = arith.mulf %11, %20 : vector<8x256xf32>
    %c0_10 = arith.constant 0 : index
    %c0_11 = arith.constant 0 : index
    %22 = vector.load %arg4[%c0_10, %c0_11] : memref<8x1xf32, #tpu.memory_space<vmem>>, vector<8x1xf32>
    %23 = vector.broadcast %22 : vector<8x1xf32> to vector<8x256xf32>
    %24 = arith.mulf %21, %23 : vector<8x256xf32>
    %c0_12 = arith.constant 0 : index
    %c0_13 = arith.constant 0 : index
    %25 = vector.load %arg5[%c0_12, %c0_13] : memref<8x1xf32, #tpu.memory_space<vmem>>, vector<8x1xf32>
    %26 = vector.broadcast %25 : vector<8x1xf32> to vector<8x256xf32>
    %27 = arith.addf %24, %26 : vector<8x256xf32>
    %cst_14 = arith.constant 0.000000e+00 : f32
    %28 = vector.broadcast %cst_14 : f32 to vector<8x256xf32>
    %29 = arith.cmpf ogt, %27, %28 : vector<8x256xf32>
    %cst_15 = arith.constant 0.00999999977 : f32
    %30 = vector.broadcast %cst_15 : f32 to vector<8x256xf32>
    %31 = arith.mulf %30, %27 : vector<8x256xf32>
    %32 = arith.select %29, %27, %31 : vector<8x256xi1>, vector<8x256xf32>
    %c0_16 = arith.constant 0 : index
    %c0_17 = arith.constant 0 : index
    %33 = vector.load %arg6[%c0_16, %c0_17] : memref<8x256xf32, #tpu.memory_space<vmem>>, vector<8x256xf32>
    tpu.vector_store %arg6[%c0_16, %c0_17], %32 {strides = array<i32>} : memref<8x256xf32, #tpu.memory_space<vmem>>, vector<8x256xf32>,
    return
  }
  func.func @transform_0(%arg0: i32) -> (i32, i32) {
    %c0_i32 = arith.constant 0 : i32
    %c0_i32_0 = arith.constant 0 : i32
    %c0_i32_1 = arith.constant 0 : i32
    return %c0_i32, %c0_i32_0 : i32, i32
  }
  func.func @transform_1(%arg0: i32) -> (i32, i32) {
    %c0_i32 = arith.constant 0 : i32
    %c0_i32_0 = arith.constant 0 : i32
    %c0_i32_1 = arith.constant 0 : i32
    return %c0_i32, %c0_i32_0 : i32, i32
  }
  func.func @transform_2(%arg0: i32) -> (i32, i32) {
    %c0_i32 = arith.constant 0 : i32
    %c0_i32_0 = arith.constant 0 : i32
    %c0_i32_1 = arith.constant 0 : i32
    return %c0_i32, %c0_i32_0 : i32, i32
  }
  func.func @transform_3(%arg0: i32) -> (i32, i32) {
    %c0_i32 = arith.constant 0 : i32
    %c0_i32_0 = arith.constant 0 : i32
    %c0_i32_1 = arith.constant 0 : i32
    return %c0_i32, %c0_i32_0 : i32, i32
  }
  func.func @transform_4(%arg0: i32) -> (i32, i32) {
    %c0_i32 = arith.constant 0 : i32
    %c0_i32_0 = arith.constant 0 : i32
    %c0_i32_1 = arith.constant 0 : i32
    return %c0_i32, %c0_i32_0 : i32, i32
  }
  func.func @transform_5(%arg0: i32) -> (i32, i32) {
    %c0_i32 = arith.constant 0 : i32
    %c0_i32_0 = arith.constant 0 : i32
    %c0_i32_1 = arith.constant 0 : i32
    return %c0_i32, %c0_i32_0 : i32, i32
  }
}

module attributes {stable_mosaic.version = 11 : i64} {
  func.func @_pool_kernel(%arg0: memref<12x16x24xf32, #tpu.memory_space<vmem>>, %arg1: memref<1x24xi32, #tpu.memory_space<vmem>>, %arg2: memref<16x24xf32, #tpu.memory_space<vmem>>, %arg3: memref<16x24xi32, #tpu.memory_space<vmem>>) attributes {dimension_semantics = [], scalar_prefetch = 0 : i64, scratch_operands = 0 : i64, tpu.core_type = #tpu.core_type<tc>} {
    %c0 = arith.constant 0 : index
    %c0_0 = arith.constant 0 : index
    %c0_1 = arith.constant 0 : index
    %0 = vector.load %arg0[%c0, %c0_0, %c0_1] : memref<12x16x24xf32, #tpu.memory_space<vmem>>, vector<1x16x24xf32>
    %1 = vector.shape_cast %0 : vector<1x16x24xf32> to vector<16x24xf32>
    %c0_i32 = arith.constant 0 : i32
    %2 = vector.broadcast %c0_i32 : i32 to vector<16x24xi32>
    %c1 = arith.constant 1 : index
    %c0_2 = arith.constant 0 : index
    %c0_3 = arith.constant 0 : index
    %3 = vector.load %arg0[%c1, %c0_2, %c0_3] : memref<12x16x24xf32, #tpu.memory_space<vmem>>, vector<1x16x24xf32>
    %4 = vector.shape_cast %3 : vector<1x16x24xf32> to vector<16x24xf32>
    %5 = arith.cmpf ogt, %4, %1 : vector<16x24xf32>
    %6 = arith.select %5, %4, %1 : vector<16x24xi1>, vector<16x24xf32>
    %c1_i32 = arith.constant 1 : i32
    %7 = vector.broadcast %c1_i32 : i32 to vector<16x24xi32>
    %8 = arith.select %5, %7, %2 : vector<16x24xi1>, vector<16x24xi32>
    %c2 = arith.constant 2 : index
    %c0_4 = arith.constant 0 : index
    %c0_5 = arith.constant 0 : index
    %9 = vector.load %arg0[%c2, %c0_4, %c0_5] : memref<12x16x24xf32, #tpu.memory_space<vmem>>, vector<1x16x24xf32>
    %10 = vector.shape_cast %9 : vector<1x16x24xf32> to vector<16x24xf32>
    %11 = arith.cmpf ogt, %10, %6 : vector<16x24xf32>
    %12 = arith.select %11, %10, %6 : vector<16x24xi1>, vector<16x24xf32>
    %c4_i32 = arith.constant 4 : i32
    %13 = vector.broadcast %c4_i32 : i32 to vector<16x24xi32>
    %14 = arith.select %11, %13, %8 : vector<16x24xi1>, vector<16x24xi32>
    %c3 = arith.constant 3 : index
    %c0_6 = arith.constant 0 : index
    %c0_7 = arith.constant 0 : index
    %15 = vector.load %arg0[%c3, %c0_6, %c0_7] : memref<12x16x24xf32, #tpu.memory_space<vmem>>, vector<1x16x24xf32>
    %16 = vector.shape_cast %15 : vector<1x16x24xf32> to vector<16x24xf32>
    %17 = arith.cmpf ogt, %16, %12 : vector<16x24xf32>
    %18 = arith.select %17, %16, %12 : vector<16x24xi1>, vector<16x24xf32>
    %c5_i32 = arith.constant 5 : i32
    %19 = vector.broadcast %c5_i32 : i32 to vector<16x24xi32>
    %20 = arith.select %17, %19, %14 : vector<16x24xi1>, vector<16x24xi32>
    %c4 = arith.constant 4 : index
    %c0_8 = arith.constant 0 : index
    %c0_9 = arith.constant 0 : index
    %21 = vector.load %arg0[%c4, %c0_8, %c0_9] : memref<12x16x24xf32, #tpu.memory_space<vmem>>, vector<1x16x24xf32>
    %22 = vector.shape_cast %21 : vector<1x16x24xf32> to vector<16x24xf32>
    %23 = arith.cmpf ogt, %22, %18 : vector<16x24xf32>
    %24 = arith.select %23, %22, %18 : vector<16x24xi1>, vector<16x24xf32>
    %c16_i32 = arith.constant 16 : i32
    %25 = vector.broadcast %c16_i32 : i32 to vector<16x24xi32>
    %26 = arith.select %23, %25, %20 : vector<16x24xi1>, vector<16x24xi32>
    %c5 = arith.constant 5 : index
    %c0_10 = arith.constant 0 : index
    %c0_11 = arith.constant 0 : index
    %27 = vector.load %arg0[%c5, %c0_10, %c0_11] : memref<12x16x24xf32, #tpu.memory_space<vmem>>, vector<1x16x24xf32>
    %28 = vector.shape_cast %27 : vector<1x16x24xf32> to vector<16x24xf32>
    %29 = arith.cmpf ogt, %28, %24 : vector<16x24xf32>
    %30 = arith.select %29, %28, %24 : vector<16x24xi1>, vector<16x24xf32>
    %c17_i32 = arith.constant 17 : i32
    %31 = vector.broadcast %c17_i32 : i32 to vector<16x24xi32>
    %32 = arith.select %29, %31, %26 : vector<16x24xi1>, vector<16x24xi32>
    %c6 = arith.constant 6 : index
    %c0_12 = arith.constant 0 : index
    %c0_13 = arith.constant 0 : index
    %33 = vector.load %arg0[%c6, %c0_12, %c0_13] : memref<12x16x24xf32, #tpu.memory_space<vmem>>, vector<1x16x24xf32>
    %34 = vector.shape_cast %33 : vector<1x16x24xf32> to vector<16x24xf32>
    %35 = arith.cmpf ogt, %34, %30 : vector<16x24xf32>
    %36 = arith.select %35, %34, %30 : vector<16x24xi1>, vector<16x24xf32>
    %c20_i32 = arith.constant 20 : i32
    %37 = vector.broadcast %c20_i32 : i32 to vector<16x24xi32>
    %38 = arith.select %35, %37, %32 : vector<16x24xi1>, vector<16x24xi32>
    %c7 = arith.constant 7 : index
    %c0_14 = arith.constant 0 : index
    %c0_15 = arith.constant 0 : index
    %39 = vector.load %arg0[%c7, %c0_14, %c0_15] : memref<12x16x24xf32, #tpu.memory_space<vmem>>, vector<1x16x24xf32>
    %40 = vector.shape_cast %39 : vector<1x16x24xf32> to vector<16x24xf32>
    %41 = arith.cmpf ogt, %40, %36 : vector<16x24xf32>
    %42 = arith.select %41, %40, %36 : vector<16x24xi1>, vector<16x24xf32>
    %c21_i32 = arith.constant 21 : i32
    %43 = vector.broadcast %c21_i32 : i32 to vector<16x24xi32>
    %44 = arith.select %41, %43, %38 : vector<16x24xi1>, vector<16x24xi32>
    %c8 = arith.constant 8 : index
    %c0_16 = arith.constant 0 : index
    %c0_17 = arith.constant 0 : index
    %45 = vector.load %arg0[%c8, %c0_16, %c0_17] : memref<12x16x24xf32, #tpu.memory_space<vmem>>, vector<1x16x24xf32>
    %46 = vector.shape_cast %45 : vector<1x16x24xf32> to vector<16x24xf32>
    %47 = arith.cmpf ogt, %46, %42 : vector<16x24xf32>
    %48 = arith.select %47, %46, %42 : vector<16x24xi1>, vector<16x24xf32>
    %c32_i32 = arith.constant 32 : i32
    %49 = vector.broadcast %c32_i32 : i32 to vector<16x24xi32>
    %50 = arith.select %47, %49, %44 : vector<16x24xi1>, vector<16x24xi32>
    %c9 = arith.constant 9 : index
    %c0_18 = arith.constant 0 : index
    %c0_19 = arith.constant 0 : index
    %51 = vector.load %arg0[%c9, %c0_18, %c0_19] : memref<12x16x24xf32, #tpu.memory_space<vmem>>, vector<1x16x24xf32>
    %52 = vector.shape_cast %51 : vector<1x16x24xf32> to vector<16x24xf32>
    %53 = arith.cmpf ogt, %52, %48 : vector<16x24xf32>
    %54 = arith.select %53, %52, %48 : vector<16x24xi1>, vector<16x24xf32>
    %c33_i32 = arith.constant 33 : i32
    %55 = vector.broadcast %c33_i32 : i32 to vector<16x24xi32>
    %56 = arith.select %53, %55, %50 : vector<16x24xi1>, vector<16x24xi32>
    %c10 = arith.constant 10 : index
    %c0_20 = arith.constant 0 : index
    %c0_21 = arith.constant 0 : index
    %57 = vector.load %arg0[%c10, %c0_20, %c0_21] : memref<12x16x24xf32, #tpu.memory_space<vmem>>, vector<1x16x24xf32>
    %58 = vector.shape_cast %57 : vector<1x16x24xf32> to vector<16x24xf32>
    %59 = arith.cmpf ogt, %58, %54 : vector<16x24xf32>
    %60 = arith.select %59, %58, %54 : vector<16x24xi1>, vector<16x24xf32>
    %c36_i32 = arith.constant 36 : i32
    %61 = vector.broadcast %c36_i32 : i32 to vector<16x24xi32>
    %62 = arith.select %59, %61, %56 : vector<16x24xi1>, vector<16x24xi32>
    %c11 = arith.constant 11 : index
    %c0_22 = arith.constant 0 : index
    %c0_23 = arith.constant 0 : index
    %63 = vector.load %arg0[%c11, %c0_22, %c0_23] : memref<12x16x24xf32, #tpu.memory_space<vmem>>, vector<1x16x24xf32>
    %64 = vector.shape_cast %63 : vector<1x16x24xf32> to vector<16x24xf32>
    %65 = arith.cmpf ogt, %64, %60 : vector<16x24xf32>
    %66 = arith.select %65, %64, %60 : vector<16x24xi1>, vector<16x24xf32>
    %c37_i32 = arith.constant 37 : i32
    %67 = vector.broadcast %c37_i32 : i32 to vector<16x24xi32>
    %68 = arith.select %65, %67, %62 : vector<16x24xi1>, vector<16x24xi32>
    %c0_24 = arith.constant 0 : index
    %c0_25 = arith.constant 0 : index
    %69 = vector.load %arg2[%c0_24, %c0_25] : memref<16x24xf32, #tpu.memory_space<vmem>>, vector<16x24xf32>
    tpu.vector_store %arg2[%c0_24, %c0_25], %66 {strides = array<i32>} : memref<16x24xf32, #tpu.memory_space<vmem>>, vector<16x24xf32>,
    %c0_26 = arith.constant 0 : index
    %c0_27 = arith.constant 0 : index
    %70 = vector.load %arg1[%c0_26, %c0_27] : memref<1x24xi32, #tpu.memory_space<vmem>>, vector<1x24xi32>
    %71 = vector.broadcast %70 : vector<1x24xi32> to vector<16x24xi32>
    %72 = arith.addi %71, %68 : vector<16x24xi32>
    %c0_28 = arith.constant 0 : index
    %c0_29 = arith.constant 0 : index
    %73 = vector.load %arg3[%c0_28, %c0_29] : memref<16x24xi32, #tpu.memory_space<vmem>>, vector<16x24xi32>
    tpu.vector_store %arg3[%c0_28, %c0_29], %72 {strides = array<i32>} : memref<16x24xi32, #tpu.memory_space<vmem>>, vector<16x24xi32>,
    return
  }
}

module attributes {stable_mosaic.version = 11 : i64} {
  func.func @kernel(%arg0: i32, %arg1: memref<216x48xbf16, #tpu.memory_space<vmem>>, %arg2: memref<16x216xbf16, #tpu.memory_space<vmem>>, %arg3: memref<16x1xf32, #tpu.memory_space<vmem>>, %arg4: memref<16x1xf32, #tpu.memory_space<vmem>>, %arg5: memref<16x1xf32, #tpu.memory_space<vmem>>, %arg6: memref<16x48xf32, #tpu.memory_space<vmem>>) attributes {dimension_semantics = [#tpu.dimension_semantics<arbitrary>], iteration_bounds = array<i64: 1>, scalar_prefetch = 0 : i64, scratch_operands = 0 : i64, tpu.core_type = #tpu.core_type<tc>, window_params = [{pipeline_mode = #tpu.pipeline_mode<synchronous>, transform_indices = @transform_0, window_bounds = array<i64: 216, 48>}, {pipeline_mode = #tpu.pipeline_mode<synchronous>, transform_indices = @transform_1, window_bounds = array<i64: 16, 216>}, {pipeline_mode = #tpu.pipeline_mode<synchronous>, transform_indices = @transform_2, window_bounds = array<i64: 16, 1>}, {pipeline_mode = #tpu.pipeline_mode<synchronous>, transform_indices = @transform_3, window_bounds = array<i64: 16, 1>}, {pipeline_mode = #tpu.pipeline_mode<synchronous>, transform_indices = @transform_4, window_bounds = array<i64: 16, 1>}, {pipeline_mode = #tpu.pipeline_mode<synchronous>, transform_indices = @transform_5, window_bounds = array<i64: 16, 48>}]} {
    %c0 = arith.constant 0 : index
    %c0_0 = arith.constant 0 : index
    %0 = vector.load %arg2[%c0, %c0_0] : memref<16x216xbf16, #tpu.memory_space<vmem>>, vector<16x216xbf16>
    %c0_1 = arith.constant 0 : index
    %c0_2 = arith.constant 0 : index
    %1 = vector.load %arg1[%c0_1, %c0_2] : memref<216x48xbf16, #tpu.memory_space<vmem>>, vector<216x48xbf16>
    %cst = arith.constant dense<0.000000e+00> : vector<16x48xf32>
    %2 = tpu.matmul %0, %1, %cst {dimension_numbers = #tpu.dot_dimension_numbers<[1], [0], [0], [1], [0, 0, 1, 1], [], []>} : vector<16x216xbf16>, vector<216x48xbf16>, vector<16x48xf32> -> vector<16x48xf32>
    %c0_3 = arith.constant 0 : index
    %c0_4 = arith.constant 0 : index
    %3 = vector.load %arg3[%c0_3, %c0_4] : memref<16x1xf32, #tpu.memory_space<vmem>>, vector<16x1xf32>
    %4 = vector.broadcast %3 : vector<16x1xf32> to vector<16x48xf32>
    %5 = arith.addf %2, %4 : vector<16x48xf32>
    %cst_5 = arith.constant dense<0.000000e+00> : vector<16xf32>
    %6 = vector.multi_reduction <add>, %5, %cst_5 [1] : vector<16x48xf32> to vector<16xf32>
    %7 = vector.shape_cast %6 : vector<16xf32> to vector<16x1xf32>
    %cst_6 = arith.constant 4.800000e+01 : f32
    %8 = vector.broadcast %cst_6 : f32 to vector<16x1xf32>
    %9 = arith.divf %7, %8 : vector<16x1xf32>
    %10 = vector.broadcast %9 : vector<16x1xf32> to vector<16x48xf32>
    %11 = arith.subf %5, %10 : vector<16x48xf32>
    %12 = arith.mulf %11, %11 : vector<16x48xf32>
    %cst_7 = arith.constant dense<0.000000e+00> : vector<16xf32>
    %13 = vector.multi_reduction <add>, %12, %cst_7 [1] : vector<16x48xf32> to vector<16xf32>
    %14 = vector.shape_cast %13 : vector<16xf32> to vector<16x1xf32>
    %cst_8 = arith.constant 4.800000e+01 : f32
    %15 = vector.broadcast %cst_8 : f32 to vector<16x1xf32>
    %16 = arith.divf %14, %15 : vector<16x1xf32>
    %cst_9 = arith.constant 9.99999974E-6 : f32
    %17 = vector.broadcast %cst_9 : f32 to vector<16x1xf32>
    %18 = arith.addf %16, %17 : vector<16x1xf32>
    %19 = math.rsqrt %18 : vector<16x1xf32>
    %20 = vector.broadcast %19 : vector<16x1xf32> to vector<16x48xf32>
    %21 = arith.mulf %11, %20 : vector<16x48xf32>
    %c0_10 = arith.constant 0 : index
    %c0_11 = arith.constant 0 : index
    %22 = vector.load %arg4[%c0_10, %c0_11] : memref<16x1xf32, #tpu.memory_space<vmem>>, vector<16x1xf32>
    %23 = vector.broadcast %22 : vector<16x1xf32> to vector<16x48xf32>
    %24 = arith.mulf %21, %23 : vector<16x48xf32>
    %c0_12 = arith.constant 0 : index
    %c0_13 = arith.constant 0 : index
    %25 = vector.load %arg5[%c0_12, %c0_13] : memref<16x1xf32, #tpu.memory_space<vmem>>, vector<16x1xf32>
    %26 = vector.broadcast %25 : vector<16x1xf32> to vector<16x48xf32>
    %27 = arith.addf %24, %26 : vector<16x48xf32>
    %c0_14 = arith.constant 0 : index
    %c0_15 = arith.constant 0 : index
    %28 = vector.load %arg6[%c0_14, %c0_15] : memref<16x48xf32, #tpu.memory_space<vmem>>, vector<16x48xf32>
    tpu.vector_store %arg6[%c0_14, %c0_15], %27 {strides = array<i32>} : memref<16x48xf32, #tpu.memory_space<vmem>>, vector<16x48xf32>,
    return
  }
  func.func @transform_0(%arg0: i32) -> (i32, i32) {
    %c0_i32 = arith.constant 0 : i32
    %c0_i32_0 = arith.constant 0 : i32
    %c0_i32_1 = arith.constant 0 : i32
    return %c0_i32, %c0_i32_0 : i32, i32
  }
  func.func @transform_1(%arg0: i32) -> (i32, i32) {
    %c0_i32 = arith.constant 0 : i32
    %c0_i32_0 = arith.constant 0 : i32
    %c0_i32_1 = arith.constant 0 : i32
    return %c0_i32, %c0_i32_0 : i32, i32
  }
  func.func @transform_2(%arg0: i32) -> (i32, i32) {
    %c0_i32 = arith.constant 0 : i32
    %c0_i32_0 = arith.constant 0 : i32
    %c0_i32_1 = arith.constant 0 : i32
    return %c0_i32, %c0_i32_0 : i32, i32
  }
  func.func @transform_3(%arg0: i32) -> (i32, i32) {
    %c0_i32 = arith.constant 0 : i32
    %c0_i32_0 = arith.constant 0 : i32
    %c0_i32_1 = arith.constant 0 : i32
    return %c0_i32, %c0_i32_0 : i32, i32
  }
  func.func @transform_4(%arg0: i32) -> (i32, i32) {
    %c0_i32 = arith.constant 0 : i32
    %c0_i32_0 = arith.constant 0 : i32
    %c0_i32_1 = arith.constant 0 : i32
    return %c0_i32, %c0_i32_0 : i32, i32
  }
  func.func @transform_5(%arg0: i32) -> (i32, i32) {
    %c0_i32 = arith.constant 0 : i32
    %c0_i32_0 = arith.constant 0 : i32
    %c0_i32_1 = arith.constant 0 : i32
    return %c0_i32, %c0_i32_0 : i32, i32
  }
}

module attributes {stable_mosaic.version = 11 : i64} {
  func.func @_pool_kernel(%arg0: memref<12x32x4xf32, #tpu.memory_space<vmem>>, %arg1: memref<1x4xi32, #tpu.memory_space<vmem>>, %arg2: memref<32x4xf32, #tpu.memory_space<vmem>>, %arg3: memref<32x4xi32, #tpu.memory_space<vmem>>) attributes {dimension_semantics = [], scalar_prefetch = 0 : i64, scratch_operands = 0 : i64, tpu.core_type = #tpu.core_type<tc>} {
    %c0 = arith.constant 0 : index
    %c0_0 = arith.constant 0 : index
    %c0_1 = arith.constant 0 : index
    %0 = vector.load %arg0[%c0, %c0_0, %c0_1] : memref<12x32x4xf32, #tpu.memory_space<vmem>>, vector<1x32x4xf32>
    %1 = vector.shape_cast %0 : vector<1x32x4xf32> to vector<32x4xf32>
    %c0_i32 = arith.constant 0 : i32
    %2 = vector.broadcast %c0_i32 : i32 to vector<32x4xi32>
    %c1 = arith.constant 1 : index
    %c0_2 = arith.constant 0 : index
    %c0_3 = arith.constant 0 : index
    %3 = vector.load %arg0[%c1, %c0_2, %c0_3] : memref<12x32x4xf32, #tpu.memory_space<vmem>>, vector<1x32x4xf32>
    %4 = vector.shape_cast %3 : vector<1x32x4xf32> to vector<32x4xf32>
    %5 = arith.cmpf ogt, %4, %1 : vector<32x4xf32>
    %6 = arith.select %5, %4, %1 : vector<32x4xi1>, vector<32x4xf32>
    %c1_i32 = arith.constant 1 : i32
    %7 = vector.broadcast %c1_i32 : i32 to vector<32x4xi32>
    %8 = arith.select %5, %7, %2 : vector<32x4xi1>, vector<32x4xi32>
    %c2 = arith.constant 2 : index
    %c0_4 = arith.constant 0 : index
    %c0_5 = arith.constant 0 : index
    %9 = vector.load %arg0[%c2, %c0_4, %c0_5] : memref<12x32x4xf32, #tpu.memory_space<vmem>>, vector<1x32x4xf32>
    %10 = vector.shape_cast %9 : vector<1x32x4xf32> to vector<32x4xf32>
    %11 = arith.cmpf ogt, %10, %6 : vector<32x4xf32>
    %12 = arith.select %11, %10, %6 : vector<32x4xi1>, vector<32x4xf32>
    %c2_i32 = arith.constant 2 : i32
    %13 = vector.broadcast %c2_i32 : i32 to vector<32x4xi32>
    %14 = arith.select %11, %13, %8 : vector<32x4xi1>, vector<32x4xi32>
    %c3 = arith.constant 3 : index
    %c0_6 = arith.constant 0 : index
    %c0_7 = arith.constant 0 : index
    %15 = vector.load %arg0[%c3, %c0_6, %c0_7] : memref<12x32x4xf32, #tpu.memory_space<vmem>>, vector<1x32x4xf32>
    %16 = vector.shape_cast %15 : vector<1x32x4xf32> to vector<32x4xf32>
    %17 = arith.cmpf ogt, %16, %12 : vector<32x4xf32>
    %18 = arith.select %17, %16, %12 : vector<32x4xi1>, vector<32x4xf32>
    %c3_i32 = arith.constant 3 : i32
    %19 = vector.broadcast %c3_i32 : i32 to vector<32x4xi32>
    %20 = arith.select %17, %19, %14 : vector<32x4xi1>, vector<32x4xi32>
    %c4 = arith.constant 4 : index
    %c0_8 = arith.constant 0 : index
    %c0_9 = arith.constant 0 : index
    %21 = vector.load %arg0[%c4, %c0_8, %c0_9] : memref<12x32x4xf32, #tpu.memory_space<vmem>>, vector<1x32x4xf32>
    %22 = vector.shape_cast %21 : vector<1x32x4xf32> to vector<32x4xf32>
    %23 = arith.cmpf ogt, %22, %18 : vector<32x4xf32>
    %24 = arith.select %23, %22, %18 : vector<32x4xi1>, vector<32x4xf32>
    %c4_i32 = arith.constant 4 : i32
    %25 = vector.broadcast %c4_i32 : i32 to vector<32x4xi32>
    %26 = arith.select %23, %25, %20 : vector<32x4xi1>, vector<32x4xi32>
    %c5 = arith.constant 5 : index
    %c0_10 = arith.constant 0 : index
    %c0_11 = arith.constant 0 : index
    %27 = vector.load %arg0[%c5, %c0_10, %c0_11] : memref<12x32x4xf32, #tpu.memory_space<vmem>>, vector<1x32x4xf32>
    %28 = vector.shape_cast %27 : vector<1x32x4xf32> to vector<32x4xf32>
    %29 = arith.cmpf ogt, %28, %24 : vector<32x4xf32>
    %30 = arith.select %29, %28, %24 : vector<32x4xi1>, vector<32x4xf32>
    %c5_i32 = arith.constant 5 : i32
    %31 = vector.broadcast %c5_i32 : i32 to vector<32x4xi32>
    %32 = arith.select %29, %31, %26 : vector<32x4xi1>, vector<32x4xi32>
    %c6 = arith.constant 6 : index
    %c0_12 = arith.constant 0 : index
    %c0_13 = arith.constant 0 : index
    %33 = vector.load %arg0[%c6, %c0_12, %c0_13] : memref<12x32x4xf32, #tpu.memory_space<vmem>>, vector<1x32x4xf32>
    %34 = vector.shape_cast %33 : vector<1x32x4xf32> to vector<32x4xf32>
    %35 = arith.cmpf ogt, %34, %30 : vector<32x4xf32>
    %36 = arith.select %35, %34, %30 : vector<32x4xi1>, vector<32x4xf32>
    %c6_i32 = arith.constant 6 : i32
    %37 = vector.broadcast %c6_i32 : i32 to vector<32x4xi32>
    %38 = arith.select %35, %37, %32 : vector<32x4xi1>, vector<32x4xi32>
    %c7 = arith.constant 7 : index
    %c0_14 = arith.constant 0 : index
    %c0_15 = arith.constant 0 : index
    %39 = vector.load %arg0[%c7, %c0_14, %c0_15] : memref<12x32x4xf32, #tpu.memory_space<vmem>>, vector<1x32x4xf32>
    %40 = vector.shape_cast %39 : vector<1x32x4xf32> to vector<32x4xf32>
    %41 = arith.cmpf ogt, %40, %36 : vector<32x4xf32>
    %42 = arith.select %41, %40, %36 : vector<32x4xi1>, vector<32x4xf32>
    %c7_i32 = arith.constant 7 : i32
    %43 = vector.broadcast %c7_i32 : i32 to vector<32x4xi32>
    %44 = arith.select %41, %43, %38 : vector<32x4xi1>, vector<32x4xi32>
    %c8 = arith.constant 8 : index
    %c0_16 = arith.constant 0 : index
    %c0_17 = arith.constant 0 : index
    %45 = vector.load %arg0[%c8, %c0_16, %c0_17] : memref<12x32x4xf32, #tpu.memory_space<vmem>>, vector<1x32x4xf32>
    %46 = vector.shape_cast %45 : vector<1x32x4xf32> to vector<32x4xf32>
    %47 = arith.cmpf ogt, %46, %42 : vector<32x4xf32>
    %48 = arith.select %47, %46, %42 : vector<32x4xi1>, vector<32x4xf32>
    %c8_i32 = arith.constant 8 : i32
    %49 = vector.broadcast %c8_i32 : i32 to vector<32x4xi32>
    %50 = arith.select %47, %49, %44 : vector<32x4xi1>, vector<32x4xi32>
    %c9 = arith.constant 9 : index
    %c0_18 = arith.constant 0 : index
    %c0_19 = arith.constant 0 : index
    %51 = vector.load %arg0[%c9, %c0_18, %c0_19] : memref<12x32x4xf32, #tpu.memory_space<vmem>>, vector<1x32x4xf32>
    %52 = vector.shape_cast %51 : vector<1x32x4xf32> to vector<32x4xf32>
    %53 = arith.cmpf ogt, %52, %48 : vector<32x4xf32>
    %54 = arith.select %53, %52, %48 : vector<32x4xi1>, vector<32x4xf32>
    %c9_i32 = arith.constant 9 : i32
    %55 = vector.broadcast %c9_i32 : i32 to vector<32x4xi32>
    %56 = arith.select %53, %55, %50 : vector<32x4xi1>, vector<32x4xi32>
    %c10 = arith.constant 10 : index
    %c0_20 = arith.constant 0 : index
    %c0_21 = arith.constant 0 : index
    %57 = vector.load %arg0[%c10, %c0_20, %c0_21] : memref<12x32x4xf32, #tpu.memory_space<vmem>>, vector<1x32x4xf32>
    %58 = vector.shape_cast %57 : vector<1x32x4xf32> to vector<32x4xf32>
    %59 = arith.cmpf ogt, %58, %54 : vector<32x4xf32>
    %60 = arith.select %59, %58, %54 : vector<32x4xi1>, vector<32x4xf32>
    %c10_i32 = arith.constant 10 : i32
    %61 = vector.broadcast %c10_i32 : i32 to vector<32x4xi32>
    %62 = arith.select %59, %61, %56 : vector<32x4xi1>, vector<32x4xi32>
    %c11 = arith.constant 11 : index
    %c0_22 = arith.constant 0 : index
    %c0_23 = arith.constant 0 : index
    %63 = vector.load %arg0[%c11, %c0_22, %c0_23] : memref<12x32x4xf32, #tpu.memory_space<vmem>>, vector<1x32x4xf32>
    %64 = vector.shape_cast %63 : vector<1x32x4xf32> to vector<32x4xf32>
    %65 = arith.cmpf ogt, %64, %60 : vector<32x4xf32>
    %66 = arith.select %65, %64, %60 : vector<32x4xi1>, vector<32x4xf32>
    %c11_i32 = arith.constant 11 : i32
    %67 = vector.broadcast %c11_i32 : i32 to vector<32x4xi32>
    %68 = arith.select %65, %67, %62 : vector<32x4xi1>, vector<32x4xi32>
    %c0_24 = arith.constant 0 : index
    %c0_25 = arith.constant 0 : index
    %69 = vector.load %arg2[%c0_24, %c0_25] : memref<32x4xf32, #tpu.memory_space<vmem>>, vector<32x4xf32>
    tpu.vector_store %arg2[%c0_24, %c0_25], %66 {strides = array<i32>} : memref<32x4xf32, #tpu.memory_space<vmem>>, vector<32x4xf32>,
    %c0_26 = arith.constant 0 : index
    %c0_27 = arith.constant 0 : index
    %70 = vector.load %arg1[%c0_26, %c0_27] : memref<1x4xi32, #tpu.memory_space<vmem>>, vector<1x4xi32>
    %71 = vector.broadcast %70 : vector<1x4xi32> to vector<32x4xi32>
    %72 = arith.addi %71, %68 : vector<32x4xi32>
    %c0_28 = arith.constant 0 : index
    %c0_29 = arith.constant 0 : index
    %73 = vector.load %arg3[%c0_28, %c0_29] : memref<32x4xi32, #tpu.memory_space<vmem>>, vector<32x4xi32>
    tpu.vector_store %arg3[%c0_28, %c0_29], %72 {strides = array<i32>} : memref<32x4xi32, #tpu.memory_space<vmem>>, vector<32x4xi32>,
    return
  }
}

module attributes {stable_mosaic.version = 11 : i64} {
  func.func @_latent_kernel(%arg0: memref<2x64xf32, #tpu.memory_space<vmem>>, %arg1: memref<64x8xf32, #tpu.memory_space<vmem>>, %arg2: memref<1x8xf32, #tpu.memory_space<vmem>>, %arg3: memref<64x8xf32, #tpu.memory_space<vmem>>, %arg4: memref<1x8xf32, #tpu.memory_space<vmem>>, %arg5: memref<2x8xf32, #tpu.memory_space<vmem>>, %arg6: memref<8x64xf32, #tpu.memory_space<vmem>>, %arg7: memref<1x64xf32, #tpu.memory_space<vmem>>, %arg8: memref<2x8xf32, #tpu.memory_space<vmem>>, %arg9: memref<2x8xf32, #tpu.memory_space<vmem>>, %arg10: memref<2x8xf32, #tpu.memory_space<vmem>>, %arg11: memref<2x64xf32, #tpu.memory_space<vmem>>) attributes {dimension_semantics = [], scalar_prefetch = 0 : i64, scratch_operands = 0 : i64, tpu.core_type = #tpu.core_type<tc>} {
    %c0 = arith.constant 0 : index
    %c0_0 = arith.constant 0 : index
    %0 = vector.load %arg0[%c0, %c0_0] : memref<2x64xf32, #tpu.memory_space<vmem>>, vector<2x64xf32>
    %c0_1 = arith.constant 0 : index
    %c0_2 = arith.constant 0 : index
    %1 = vector.load %arg1[%c0_1, %c0_2] : memref<64x8xf32, #tpu.memory_space<vmem>>, vector<64x8xf32>
    %cst = arith.constant dense<0.000000e+00> : vector<2x8xf32>
    %2 = tpu.matmul %0, %1, %cst {dimension_numbers = #tpu.dot_dimension_numbers<[1], [0], [0], [1], [0, 0, 1, 1], [], []>} : vector<2x64xf32>, vector<64x8xf32>, vector<2x8xf32> -> vector<2x8xf32>
    %c0_3 = arith.constant 0 : index
    %c0_4 = arith.constant 0 : index
    %3 = vector.load %arg2[%c0_3, %c0_4] : memref<1x8xf32, #tpu.memory_space<vmem>>, vector<1x8xf32>
    %4 = vector.broadcast %3 : vector<1x8xf32> to vector<2x8xf32>
    %5 = arith.addf %2, %4 : vector<2x8xf32>
    %c0_5 = arith.constant 0 : index
    %c0_6 = arith.constant 0 : index
    %6 = vector.load %arg3[%c0_5, %c0_6] : memref<64x8xf32, #tpu.memory_space<vmem>>, vector<64x8xf32>
    %cst_7 = arith.constant dense<0.000000e+00> : vector<2x8xf32>
    %7 = tpu.matmul %0, %6, %cst_7 {dimension_numbers = #tpu.dot_dimension_numbers<[1], [0], [0], [1], [0, 0, 1, 1], [], []>} : vector<2x64xf32>, vector<64x8xf32>, vector<2x8xf32> -> vector<2x8xf32>
    %c0_8 = arith.constant 0 : index
    %c0_9 = arith.constant 0 : index
    %8 = vector.load %arg4[%c0_8, %c0_9] : memref<1x8xf32, #tpu.memory_space<vmem>>, vector<1x8xf32>
    %9 = vector.broadcast %8 : vector<1x8xf32> to vector<2x8xf32>
    %10 = arith.addf %7, %9 : vector<2x8xf32>
    %cst_10 = arith.constant -1.000000e+01 : f32
    %cst_11 = arith.constant 1.000000e+01 : f32
    %11 = vector.broadcast %cst_10 : f32 to vector<2x8xf32>
    %12 = arith.maximumf %11, %10 : vector<2x8xf32>
    %13 = vector.broadcast %cst_11 : f32 to vector<2x8xf32>
    %14 = arith.minimumf %13, %12 : vector<2x8xf32>
    %15 = math.exp %14 : vector<2x8xf32>
    %cst_12 = arith.constant 9.99999997E-7 : f32
    %16 = vector.broadcast %cst_12 : f32 to vector<2x8xf32>
    %17 = arith.maximumf %15, %16 : vector<2x8xf32>
    %18 = math.sqrt %17 : vector<2x8xf32>
    %c0_13 = arith.constant 0 : index
    %c0_14 = arith.constant 0 : index
    %19 = vector.load %arg5[%c0_13, %c0_14] : memref<2x8xf32, #tpu.memory_space<vmem>>, vector<2x8xf32>
    %20 = arith.mulf %19, %18 : vector<2x8xf32>
    %21 = arith.addf %20, %5 : vector<2x8xf32>
    %c0_15 = arith.constant 0 : index
    %c0_16 = arith.constant 0 : index
    %22 = vector.load %arg6[%c0_15, %c0_16] : memref<8x64xf32, #tpu.memory_space<vmem>>, vector<8x64xf32>
    %cst_17 = arith.constant dense<0.000000e+00> : vector<2x64xf32>
    %23 = tpu.matmul %21, %22, %cst_17 {dimension_numbers = #tpu.dot_dimension_numbers<[1], [0], [0], [1], [0, 0, 1, 1], [], []>} : vector<2x8xf32>, vector<8x64xf32>, vector<2x64xf32> -> vector<2x64xf32>
    %c0_18 = arith.constant 0 : index
    %c0_19 = arith.constant 0 : index
    %24 = vector.load %arg7[%c0_18, %c0_19] : memref<1x64xf32, #tpu.memory_space<vmem>>, vector<1x64xf32>
    %25 = vector.broadcast %24 : vector<1x64xf32> to vector<2x64xf32>
    %26 = arith.addf %23, %25 : vector<2x64xf32>
    %c0_20 = arith.constant 0 : index
    %c0_21 = arith.constant 0 : index
    %27 = vector.load %arg8[%c0_20, %c0_21] : memref<2x8xf32, #tpu.memory_space<vmem>>, vector<2x8xf32>
    tpu.vector_store %arg8[%c0_20, %c0_21], %5 {strides = array<i32>} : memref<2x8xf32, #tpu.memory_space<vmem>>, vector<2x8xf32>,
    %c0_22 = arith.constant 0 : index
    %c0_23 = arith.constant 0 : index
    %28 = vector.load %arg9[%c0_22, %c0_23] : memref<2x8xf32, #tpu.memory_space<vmem>>, vector<2x8xf32>
    tpu.vector_store %arg9[%c0_22, %c0_23], %14 {strides = array<i32>} : memref<2x8xf32, #tpu.memory_space<vmem>>, vector<2x8xf32>,
    %c0_24 = arith.constant 0 : index
    %c0_25 = arith.constant 0 : index
    %29 = vector.load %arg10[%c0_24, %c0_25] : memref<2x8xf32, #tpu.memory_space<vmem>>, vector<2x8xf32>
    tpu.vector_store %arg10[%c0_24, %c0_25], %21 {strides = array<i32>} : memref<2x8xf32, #tpu.memory_space<vmem>>, vector<2x8xf32>,
    %c0_26 = arith.constant 0 : index
    %c0_27 = arith.constant 0 : index
    %30 = vector.load %arg11[%c0_26, %c0_27] : memref<2x64xf32, #tpu.memory_space<vmem>>, vector<2x64xf32>
    tpu.vector_store %arg11[%c0_26, %c0_27], %26 {strides = array<i32>} : memref<2x64xf32, #tpu.memory_space<vmem>>, vector<2x64xf32>,
    return
  }
}

module attributes {stable_mosaic.version = 11 : i64} {
  func.func @kernel(%arg0: i32, %arg1: memref<432x48xbf16, #tpu.memory_space<vmem>>, %arg2: memref<8x432xbf16, #tpu.memory_space<vmem>>, %arg3: memref<8x1xf32, #tpu.memory_space<vmem>>, %arg4: memref<8x1xf32, #tpu.memory_space<vmem>>, %arg5: memref<8x1xf32, #tpu.memory_space<vmem>>, %arg6: memref<8x48xf32, #tpu.memory_space<vmem>>) attributes {dimension_semantics = [#tpu.dimension_semantics<arbitrary>], iteration_bounds = array<i64: 1>, scalar_prefetch = 0 : i64, scratch_operands = 0 : i64, tpu.core_type = #tpu.core_type<tc>, window_params = [{pipeline_mode = #tpu.pipeline_mode<synchronous>, transform_indices = @transform_0, window_bounds = array<i64: 432, 48>}, {pipeline_mode = #tpu.pipeline_mode<synchronous>, transform_indices = @transform_1, window_bounds = array<i64: 8, 432>}, {pipeline_mode = #tpu.pipeline_mode<synchronous>, transform_indices = @transform_2, window_bounds = array<i64: 8, 1>}, {pipeline_mode = #tpu.pipeline_mode<synchronous>, transform_indices = @transform_3, window_bounds = array<i64: 8, 1>}, {pipeline_mode = #tpu.pipeline_mode<synchronous>, transform_indices = @transform_4, window_bounds = array<i64: 8, 1>}, {pipeline_mode = #tpu.pipeline_mode<synchronous>, transform_indices = @transform_5, window_bounds = array<i64: 8, 48>}]} {
    %c0 = arith.constant 0 : index
    %c0_0 = arith.constant 0 : index
    %0 = vector.load %arg2[%c0, %c0_0] : memref<8x432xbf16, #tpu.memory_space<vmem>>, vector<8x432xbf16>
    %c0_1 = arith.constant 0 : index
    %c0_2 = arith.constant 0 : index
    %1 = vector.load %arg1[%c0_1, %c0_2] : memref<432x48xbf16, #tpu.memory_space<vmem>>, vector<432x48xbf16>
    %cst = arith.constant dense<0.000000e+00> : vector<8x48xf32>
    %2 = tpu.matmul %0, %1, %cst {dimension_numbers = #tpu.dot_dimension_numbers<[1], [0], [0], [1], [0, 0, 1, 1], [], []>} : vector<8x432xbf16>, vector<432x48xbf16>, vector<8x48xf32> -> vector<8x48xf32>
    %c0_3 = arith.constant 0 : index
    %c0_4 = arith.constant 0 : index
    %3 = vector.load %arg3[%c0_3, %c0_4] : memref<8x1xf32, #tpu.memory_space<vmem>>, vector<8x1xf32>
    %4 = vector.broadcast %3 : vector<8x1xf32> to vector<8x48xf32>
    %5 = arith.addf %2, %4 : vector<8x48xf32>
    %cst_5 = arith.constant dense<0.000000e+00> : vector<8xf32>
    %6 = vector.multi_reduction <add>, %5, %cst_5 [1] : vector<8x48xf32> to vector<8xf32>
    %7 = vector.shape_cast %6 : vector<8xf32> to vector<8x1xf32>
    %cst_6 = arith.constant 4.800000e+01 : f32
    %8 = vector.broadcast %cst_6 : f32 to vector<8x1xf32>
    %9 = arith.divf %7, %8 : vector<8x1xf32>
    %10 = vector.broadcast %9 : vector<8x1xf32> to vector<8x48xf32>
    %11 = arith.subf %5, %10 : vector<8x48xf32>
    %12 = arith.mulf %11, %11 : vector<8x48xf32>
    %cst_7 = arith.constant dense<0.000000e+00> : vector<8xf32>
    %13 = vector.multi_reduction <add>, %12, %cst_7 [1] : vector<8x48xf32> to vector<8xf32>
    %14 = vector.shape_cast %13 : vector<8xf32> to vector<8x1xf32>
    %cst_8 = arith.constant 4.800000e+01 : f32
    %15 = vector.broadcast %cst_8 : f32 to vector<8x1xf32>
    %16 = arith.divf %14, %15 : vector<8x1xf32>
    %cst_9 = arith.constant 9.99999974E-6 : f32
    %17 = vector.broadcast %cst_9 : f32 to vector<8x1xf32>
    %18 = arith.addf %16, %17 : vector<8x1xf32>
    %19 = math.rsqrt %18 : vector<8x1xf32>
    %20 = vector.broadcast %19 : vector<8x1xf32> to vector<8x48xf32>
    %21 = arith.mulf %11, %20 : vector<8x48xf32>
    %c0_10 = arith.constant 0 : index
    %c0_11 = arith.constant 0 : index
    %22 = vector.load %arg4[%c0_10, %c0_11] : memref<8x1xf32, #tpu.memory_space<vmem>>, vector<8x1xf32>
    %23 = vector.broadcast %22 : vector<8x1xf32> to vector<8x48xf32>
    %24 = arith.mulf %21, %23 : vector<8x48xf32>
    %c0_12 = arith.constant 0 : index
    %c0_13 = arith.constant 0 : index
    %25 = vector.load %arg5[%c0_12, %c0_13] : memref<8x1xf32, #tpu.memory_space<vmem>>, vector<8x1xf32>
    %26 = vector.broadcast %25 : vector<8x1xf32> to vector<8x48xf32>
    %27 = arith.addf %24, %26 : vector<8x48xf32>
    %cst_14 = arith.constant 0.000000e+00 : f32
    %28 = vector.broadcast %cst_14 : f32 to vector<8x48xf32>
    %29 = arith.cmpf ogt, %27, %28 : vector<8x48xf32>
    %cst_15 = arith.constant 0.00999999977 : f32
    %30 = vector.broadcast %cst_15 : f32 to vector<8x48xf32>
    %31 = arith.mulf %30, %27 : vector<8x48xf32>
    %32 = arith.select %29, %27, %31 : vector<8x48xi1>, vector<8x48xf32>
    %c0_16 = arith.constant 0 : index
    %c0_17 = arith.constant 0 : index
    %33 = vector.load %arg6[%c0_16, %c0_17] : memref<8x48xf32, #tpu.memory_space<vmem>>, vector<8x48xf32>
    tpu.vector_store %arg6[%c0_16, %c0_17], %32 {strides = array<i32>} : memref<8x48xf32, #tpu.memory_space<vmem>>, vector<8x48xf32>,
    return
  }
  func.func @transform_0(%arg0: i32) -> (i32, i32) {
    %c0_i32 = arith.constant 0 : i32
    %c0_i32_0 = arith.constant 0 : i32
    %c0_i32_1 = arith.constant 0 : i32
    return %c0_i32, %c0_i32_0 : i32, i32
  }
  func.func @transform_1(%arg0: i32) -> (i32, i32) {
    %c0_i32 = arith.constant 0 : i32
    %c0_i32_0 = arith.constant 0 : i32
    %c0_i32_1 = arith.constant 0 : i32
    return %c0_i32, %c0_i32_0 : i32, i32
  }
  func.func @transform_2(%arg0: i32) -> (i32, i32) {
    %c0_i32 = arith.constant 0 : i32
    %c0_i32_0 = arith.constant 0 : i32
    %c0_i32_1 = arith.constant 0 : i32
    return %c0_i32, %c0_i32_0 : i32, i32
  }
  func.func @transform_3(%arg0: i32) -> (i32, i32) {
    %c0_i32 = arith.constant 0 : i32
    %c0_i32_0 = arith.constant 0 : i32
    %c0_i32_1 = arith.constant 0 : i32
    return %c0_i32, %c0_i32_0 : i32, i32
  }
  func.func @transform_4(%arg0: i32) -> (i32, i32) {
    %c0_i32 = arith.constant 0 : i32
    %c0_i32_0 = arith.constant 0 : i32
    %c0_i32_1 = arith.constant 0 : i32
    return %c0_i32, %c0_i32_0 : i32, i32
  }
  func.func @transform_5(%arg0: i32) -> (i32, i32) {
    %c0_i32 = arith.constant 0 : i32
    %c0_i32_0 = arith.constant 0 : i32
    %c0_i32_1 = arith.constant 0 : i32
    return %c0_i32, %c0_i32_0 : i32, i32
  }
}

module attributes {stable_mosaic.version = 11 : i64} {
  func.func @kernel(%arg0: i32, %arg1: memref<216x256xbf16, #tpu.memory_space<vmem>>, %arg2: memref<4x216xbf16, #tpu.memory_space<vmem>>, %arg3: memref<4x1xf32, #tpu.memory_space<vmem>>, %arg4: memref<4x1xf32, #tpu.memory_space<vmem>>, %arg5: memref<4x1xf32, #tpu.memory_space<vmem>>, %arg6: memref<4x256xf32, #tpu.memory_space<vmem>>) attributes {dimension_semantics = [#tpu.dimension_semantics<arbitrary>], iteration_bounds = array<i64: 1>, scalar_prefetch = 0 : i64, scratch_operands = 0 : i64, tpu.core_type = #tpu.core_type<tc>, window_params = [{pipeline_mode = #tpu.pipeline_mode<synchronous>, transform_indices = @transform_0, window_bounds = array<i64: 216, 256>}, {pipeline_mode = #tpu.pipeline_mode<synchronous>, transform_indices = @transform_1, window_bounds = array<i64: 4, 216>}, {pipeline_mode = #tpu.pipeline_mode<synchronous>, transform_indices = @transform_2, window_bounds = array<i64: 4, 1>}, {pipeline_mode = #tpu.pipeline_mode<synchronous>, transform_indices = @transform_3, window_bounds = array<i64: 4, 1>}, {pipeline_mode = #tpu.pipeline_mode<synchronous>, transform_indices = @transform_4, window_bounds = array<i64: 4, 1>}, {pipeline_mode = #tpu.pipeline_mode<synchronous>, transform_indices = @transform_5, window_bounds = array<i64: 4, 256>}]} {
    %c0 = arith.constant 0 : index
    %c0_0 = arith.constant 0 : index
    %0 = vector.load %arg2[%c0, %c0_0] : memref<4x216xbf16, #tpu.memory_space<vmem>>, vector<4x216xbf16>
    %c0_1 = arith.constant 0 : index
    %c0_2 = arith.constant 0 : index
    %1 = vector.load %arg1[%c0_1, %c0_2] : memref<216x256xbf16, #tpu.memory_space<vmem>>, vector<216x256xbf16>
    %cst = arith.constant dense<0.000000e+00> : vector<4x256xf32>
    %2 = tpu.matmul %0, %1, %cst {dimension_numbers = #tpu.dot_dimension_numbers<[1], [0], [0], [1], [0, 0, 1, 1], [], []>} : vector<4x216xbf16>, vector<216x256xbf16>, vector<4x256xf32> -> vector<4x256xf32>
    %c0_3 = arith.constant 0 : index
    %c0_4 = arith.constant 0 : index
    %3 = vector.load %arg3[%c0_3, %c0_4] : memref<4x1xf32, #tpu.memory_space<vmem>>, vector<4x1xf32>
    %4 = vector.broadcast %3 : vector<4x1xf32> to vector<4x256xf32>
    %5 = arith.addf %2, %4 : vector<4x256xf32>
    %cst_5 = arith.constant dense<0.000000e+00> : vector<4xf32>
    %6 = vector.multi_reduction <add>, %5, %cst_5 [1] : vector<4x256xf32> to vector<4xf32>
    %7 = vector.shape_cast %6 : vector<4xf32> to vector<4x1xf32>
    %cst_6 = arith.constant 2.560000e+02 : f32
    %8 = vector.broadcast %cst_6 : f32 to vector<4x1xf32>
    %9 = arith.divf %7, %8 : vector<4x1xf32>
    %10 = vector.broadcast %9 : vector<4x1xf32> to vector<4x256xf32>
    %11 = arith.subf %5, %10 : vector<4x256xf32>
    %12 = arith.mulf %11, %11 : vector<4x256xf32>
    %cst_7 = arith.constant dense<0.000000e+00> : vector<4xf32>
    %13 = vector.multi_reduction <add>, %12, %cst_7 [1] : vector<4x256xf32> to vector<4xf32>
    %14 = vector.shape_cast %13 : vector<4xf32> to vector<4x1xf32>
    %cst_8 = arith.constant 2.560000e+02 : f32
    %15 = vector.broadcast %cst_8 : f32 to vector<4x1xf32>
    %16 = arith.divf %14, %15 : vector<4x1xf32>
    %cst_9 = arith.constant 9.99999974E-6 : f32
    %17 = vector.broadcast %cst_9 : f32 to vector<4x1xf32>
    %18 = arith.addf %16, %17 : vector<4x1xf32>
    %19 = math.rsqrt %18 : vector<4x1xf32>
    %20 = vector.broadcast %19 : vector<4x1xf32> to vector<4x256xf32>
    %21 = arith.mulf %11, %20 : vector<4x256xf32>
    %c0_10 = arith.constant 0 : index
    %c0_11 = arith.constant 0 : index
    %22 = vector.load %arg4[%c0_10, %c0_11] : memref<4x1xf32, #tpu.memory_space<vmem>>, vector<4x1xf32>
    %23 = vector.broadcast %22 : vector<4x1xf32> to vector<4x256xf32>
    %24 = arith.mulf %21, %23 : vector<4x256xf32>
    %c0_12 = arith.constant 0 : index
    %c0_13 = arith.constant 0 : index
    %25 = vector.load %arg5[%c0_12, %c0_13] : memref<4x1xf32, #tpu.memory_space<vmem>>, vector<4x1xf32>
    %26 = vector.broadcast %25 : vector<4x1xf32> to vector<4x256xf32>
    %27 = arith.addf %24, %26 : vector<4x256xf32>
    %cst_14 = arith.constant 0.000000e+00 : f32
    %28 = vector.broadcast %cst_14 : f32 to vector<4x256xf32>
    %29 = arith.cmpf ogt, %27, %28 : vector<4x256xf32>
    %cst_15 = arith.constant 0.00999999977 : f32
    %30 = vector.broadcast %cst_15 : f32 to vector<4x256xf32>
    %31 = arith.mulf %30, %27 : vector<4x256xf32>
    %32 = arith.select %29, %27, %31 : vector<4x256xi1>, vector<4x256xf32>
    %c0_16 = arith.constant 0 : index
    %c0_17 = arith.constant 0 : index
    %33 = vector.load %arg6[%c0_16, %c0_17] : memref<4x256xf32, #tpu.memory_space<vmem>>, vector<4x256xf32>
    tpu.vector_store %arg6[%c0_16, %c0_17], %32 {strides = array<i32>} : memref<4x256xf32, #tpu.memory_space<vmem>>, vector<4x256xf32>,
    return
  }
  func.func @transform_0(%arg0: i32) -> (i32, i32) {
    %c0_i32 = arith.constant 0 : i32
    %c0_i32_0 = arith.constant 0 : i32
    %c0_i32_1 = arith.constant 0 : i32
    return %c0_i32, %c0_i32_0 : i32, i32
  }
  func.func @transform_1(%arg0: i32) -> (i32, i32) {
    %c0_i32 = arith.constant 0 : i32
    %c0_i32_0 = arith.constant 0 : i32
    %c0_i32_1 = arith.constant 0 : i32
    return %c0_i32, %c0_i32_0 : i32, i32
  }
  func.func @transform_2(%arg0: i32) -> (i32, i32) {
    %c0_i32 = arith.constant 0 : i32
    %c0_i32_0 = arith.constant 0 : i32
    %c0_i32_1 = arith.constant 0 : i32
    return %c0_i32, %c0_i32_0 : i32, i32
  }
  func.func @transform_3(%arg0: i32) -> (i32, i32) {
    %c0_i32 = arith.constant 0 : i32
    %c0_i32_0 = arith.constant 0 : i32
    %c0_i32_1 = arith.constant 0 : i32
    return %c0_i32, %c0_i32_0 : i32, i32
  }
  func.func @transform_4(%arg0: i32) -> (i32, i32) {
    %c0_i32 = arith.constant 0 : i32
    %c0_i32_0 = arith.constant 0 : i32
    %c0_i32_1 = arith.constant 0 : i32
    return %c0_i32, %c0_i32_0 : i32, i32
  }
  func.func @transform_5(%arg0: i32) -> (i32, i32) {
    %c0_i32 = arith.constant 0 : i32
    %c0_i32_0 = arith.constant 0 : i32
    %c0_i32_1 = arith.constant 0 : i32
    return %c0_i32, %c0_i32_0 : i32, i32
  }
}

module attributes {stable_mosaic.version = 11 : i64} {
  func.func @kernel(%arg0: i32, %arg1: memref<108x1280xbf16, #tpu.memory_space<vmem>>, %arg2: memref<2x108xbf16, #tpu.memory_space<vmem>>, %arg3: memref<2x1xf32, #tpu.memory_space<vmem>>, %arg4: memref<2x1xf32, #tpu.memory_space<vmem>>, %arg5: memref<2x1xf32, #tpu.memory_space<vmem>>, %arg6: memref<2x1280xf32, #tpu.memory_space<vmem>>) attributes {dimension_semantics = [#tpu.dimension_semantics<arbitrary>], iteration_bounds = array<i64: 1>, scalar_prefetch = 0 : i64, scratch_operands = 0 : i64, tpu.core_type = #tpu.core_type<tc>, window_params = [{pipeline_mode = #tpu.pipeline_mode<synchronous>, transform_indices = @transform_0, window_bounds = array<i64: 108, 1280>}, {pipeline_mode = #tpu.pipeline_mode<synchronous>, transform_indices = @transform_1, window_bounds = array<i64: 2, 108>}, {pipeline_mode = #tpu.pipeline_mode<synchronous>, transform_indices = @transform_2, window_bounds = array<i64: 2, 1>}, {pipeline_mode = #tpu.pipeline_mode<synchronous>, transform_indices = @transform_3, window_bounds = array<i64: 2, 1>}, {pipeline_mode = #tpu.pipeline_mode<synchronous>, transform_indices = @transform_4, window_bounds = array<i64: 2, 1>}, {pipeline_mode = #tpu.pipeline_mode<synchronous>, transform_indices = @transform_5, window_bounds = array<i64: 2, 1280>}]} {
    %c0 = arith.constant 0 : index
    %c0_0 = arith.constant 0 : index
    %0 = vector.load %arg2[%c0, %c0_0] : memref<2x108xbf16, #tpu.memory_space<vmem>>, vector<2x108xbf16>
    %c0_1 = arith.constant 0 : index
    %c0_2 = arith.constant 0 : index
    %1 = vector.load %arg1[%c0_1, %c0_2] : memref<108x1280xbf16, #tpu.memory_space<vmem>>, vector<108x1280xbf16>
    %cst = arith.constant dense<0.000000e+00> : vector<2x1280xf32>
    %2 = tpu.matmul %0, %1, %cst {dimension_numbers = #tpu.dot_dimension_numbers<[1], [0], [0], [1], [0, 0, 1, 1], [], []>} : vector<2x108xbf16>, vector<108x1280xbf16>, vector<2x1280xf32> -> vector<2x1280xf32>
    %c0_3 = arith.constant 0 : index
    %c0_4 = arith.constant 0 : index
    %3 = vector.load %arg3[%c0_3, %c0_4] : memref<2x1xf32, #tpu.memory_space<vmem>>, vector<2x1xf32>
    %4 = vector.broadcast %3 : vector<2x1xf32> to vector<2x1280xf32>
    %5 = arith.addf %2, %4 : vector<2x1280xf32>
    %cst_5 = arith.constant dense<0.000000e+00> : vector<2xf32>
    %6 = vector.multi_reduction <add>, %5, %cst_5 [1] : vector<2x1280xf32> to vector<2xf32>
    %7 = vector.shape_cast %6 : vector<2xf32> to vector<2x1xf32>
    %cst_6 = arith.constant 1.280000e+03 : f32
    %8 = vector.broadcast %cst_6 : f32 to vector<2x1xf32>
    %9 = arith.divf %7, %8 : vector<2x1xf32>
    %10 = vector.broadcast %9 : vector<2x1xf32> to vector<2x1280xf32>
    %11 = arith.subf %5, %10 : vector<2x1280xf32>
    %12 = arith.mulf %11, %11 : vector<2x1280xf32>
    %cst_7 = arith.constant dense<0.000000e+00> : vector<2xf32>
    %13 = vector.multi_reduction <add>, %12, %cst_7 [1] : vector<2x1280xf32> to vector<2xf32>
    %14 = vector.shape_cast %13 : vector<2xf32> to vector<2x1xf32>
    %cst_8 = arith.constant 1.280000e+03 : f32
    %15 = vector.broadcast %cst_8 : f32 to vector<2x1xf32>
    %16 = arith.divf %14, %15 : vector<2x1xf32>
    %cst_9 = arith.constant 9.99999974E-6 : f32
    %17 = vector.broadcast %cst_9 : f32 to vector<2x1xf32>
    %18 = arith.addf %16, %17 : vector<2x1xf32>
    %19 = math.rsqrt %18 : vector<2x1xf32>
    %20 = vector.broadcast %19 : vector<2x1xf32> to vector<2x1280xf32>
    %21 = arith.mulf %11, %20 : vector<2x1280xf32>
    %c0_10 = arith.constant 0 : index
    %c0_11 = arith.constant 0 : index
    %22 = vector.load %arg4[%c0_10, %c0_11] : memref<2x1xf32, #tpu.memory_space<vmem>>, vector<2x1xf32>
    %23 = vector.broadcast %22 : vector<2x1xf32> to vector<2x1280xf32>
    %24 = arith.mulf %21, %23 : vector<2x1280xf32>
    %c0_12 = arith.constant 0 : index
    %c0_13 = arith.constant 0 : index
    %25 = vector.load %arg5[%c0_12, %c0_13] : memref<2x1xf32, #tpu.memory_space<vmem>>, vector<2x1xf32>
    %26 = vector.broadcast %25 : vector<2x1xf32> to vector<2x1280xf32>
    %27 = arith.addf %24, %26 : vector<2x1280xf32>
    %cst_14 = arith.constant 0.000000e+00 : f32
    %28 = vector.broadcast %cst_14 : f32 to vector<2x1280xf32>
    %29 = arith.cmpf ogt, %27, %28 : vector<2x1280xf32>
    %cst_15 = arith.constant 0.00999999977 : f32
    %30 = vector.broadcast %cst_15 : f32 to vector<2x1280xf32>
    %31 = arith.mulf %30, %27 : vector<2x1280xf32>
    %32 = arith.select %29, %27, %31 : vector<2x1280xi1>, vector<2x1280xf32>
    %c0_16 = arith.constant 0 : index
    %c0_17 = arith.constant 0 : index
    %33 = vector.load %arg6[%c0_16, %c0_17] : memref<2x1280xf32, #tpu.memory_space<vmem>>, vector<2x1280xf32>
    tpu.vector_store %arg6[%c0_16, %c0_17], %32 {strides = array<i32>} : memref<2x1280xf32, #tpu.memory_space<vmem>>, vector<2x1280xf32>,
    return
  }
  func.func @transform_0(%arg0: i32) -> (i32, i32) {
    %c0_i32 = arith.constant 0 : i32
    %c0_i32_0 = arith.constant 0 : i32
    %c0_i32_1 = arith.constant 0 : i32
    return %c0_i32, %c0_i32_0 : i32, i32
  }
  func.func @transform_1(%arg0: i32) -> (i32, i32) {
    %c0_i32 = arith.constant 0 : i32
    %c0_i32_0 = arith.constant 0 : i32
    %c0_i32_1 = arith.constant 0 : i32
    return %c0_i32, %c0_i32_0 : i32, i32
  }
  func.func @transform_2(%arg0: i32) -> (i32, i32) {
    %c0_i32 = arith.constant 0 : i32
    %c0_i32_0 = arith.constant 0 : i32
    %c0_i32_1 = arith.constant 0 : i32
    return %c0_i32, %c0_i32_0 : i32, i32
  }
  func.func @transform_3(%arg0: i32) -> (i32, i32) {
    %c0_i32 = arith.constant 0 : i32
    %c0_i32_0 = arith.constant 0 : i32
    %c0_i32_1 = arith.constant 0 : i32
    return %c0_i32, %c0_i32_0 : i32, i32
  }
  func.func @transform_4(%arg0: i32) -> (i32, i32) {
    %c0_i32 = arith.constant 0 : i32
    %c0_i32_0 = arith.constant 0 : i32
    %c0_i32_1 = arith.constant 0 : i32
    return %c0_i32, %c0_i32_0 : i32, i32
  }
  func.func @transform_5(%arg0: i32) -> (i32, i32) {
    %c0_i32 = arith.constant 0 : i32
    %c0_i32_0 = arith.constant 0 : i32
    %c0_i32_1 = arith.constant 0 : i32
    return %c0_i32, %c0_i32_0 : i32, i32
  }
}

module attributes {stable_mosaic.version = 11 : i64} {
  func.func @kernel(%arg0: i32, %arg1: memref<54x6144xbf16, #tpu.memory_space<vmem>>, %arg2: memref<1x54xbf16, #tpu.memory_space<vmem>>, %arg3: memref<1x1xf32, #tpu.memory_space<vmem>>, %arg4: memref<1x1xf32, #tpu.memory_space<vmem>>, %arg5: memref<1x1xf32, #tpu.memory_space<vmem>>, %arg6: memref<1x6144xf32, #tpu.memory_space<vmem>>) attributes {dimension_semantics = [#tpu.dimension_semantics<arbitrary>], iteration_bounds = array<i64: 1>, scalar_prefetch = 0 : i64, scratch_operands = 0 : i64, tpu.core_type = #tpu.core_type<tc>, window_params = [{pipeline_mode = #tpu.pipeline_mode<synchronous>, transform_indices = @transform_0, window_bounds = array<i64: 54, 6144>}, {pipeline_mode = #tpu.pipeline_mode<synchronous>, transform_indices = @transform_1, window_bounds = array<i64: 1, 54>}, {pipeline_mode = #tpu.pipeline_mode<synchronous>, transform_indices = @transform_2, window_bounds = array<i64: 1, 1>}, {pipeline_mode = #tpu.pipeline_mode<synchronous>, transform_indices = @transform_3, window_bounds = array<i64: 1, 1>}, {pipeline_mode = #tpu.pipeline_mode<synchronous>, transform_indices = @transform_4, window_bounds = array<i64: 1, 1>}, {pipeline_mode = #tpu.pipeline_mode<synchronous>, transform_indices = @transform_5, window_bounds = array<i64: 1, 6144>}]} {
    %c0 = arith.constant 0 : index
    %c0_0 = arith.constant 0 : index
    %0 = vector.load %arg2[%c0, %c0_0] : memref<1x54xbf16, #tpu.memory_space<vmem>>, vector<1x54xbf16>
    %c0_1 = arith.constant 0 : index
    %c0_2 = arith.constant 0 : index
    %1 = vector.load %arg1[%c0_1, %c0_2] : memref<54x6144xbf16, #tpu.memory_space<vmem>>, vector<54x6144xbf16>
    %cst = arith.constant dense<0.000000e+00> : vector<1x6144xf32>
    %2 = tpu.matmul %0, %1, %cst {dimension_numbers = #tpu.dot_dimension_numbers<[1], [0], [0], [1], [0, 0, 1, 1], [], []>} : vector<1x54xbf16>, vector<54x6144xbf16>, vector<1x6144xf32> -> vector<1x6144xf32>
    %c0_3 = arith.constant 0 : index
    %c0_4 = arith.constant 0 : index
    %3 = vector.load %arg3[%c0_3, %c0_4] : memref<1x1xf32, #tpu.memory_space<vmem>>, vector<1x1xf32>
    %4 = vector.broadcast %3 : vector<1x1xf32> to vector<1x6144xf32>
    %5 = arith.addf %2, %4 : vector<1x6144xf32>
    %cst_5 = arith.constant dense<0.000000e+00> : vector<1xf32>
    %6 = vector.multi_reduction <add>, %5, %cst_5 [1] : vector<1x6144xf32> to vector<1xf32>
    %7 = vector.shape_cast %6 : vector<1xf32> to vector<1x1xf32>
    %cst_6 = arith.constant 6.144000e+03 : f32
    %8 = vector.broadcast %cst_6 : f32 to vector<1x1xf32>
    %9 = arith.divf %7, %8 : vector<1x1xf32>
    %10 = vector.broadcast %9 : vector<1x1xf32> to vector<1x6144xf32>
    %11 = arith.subf %5, %10 : vector<1x6144xf32>
    %12 = arith.mulf %11, %11 : vector<1x6144xf32>
    %cst_7 = arith.constant dense<0.000000e+00> : vector<1xf32>
    %13 = vector.multi_reduction <add>, %12, %cst_7 [1] : vector<1x6144xf32> to vector<1xf32>
    %14 = vector.shape_cast %13 : vector<1xf32> to vector<1x1xf32>
    %cst_8 = arith.constant 6.144000e+03 : f32
    %15 = vector.broadcast %cst_8 : f32 to vector<1x1xf32>
    %16 = arith.divf %14, %15 : vector<1x1xf32>
    %cst_9 = arith.constant 9.99999974E-6 : f32
    %17 = vector.broadcast %cst_9 : f32 to vector<1x1xf32>
    %18 = arith.addf %16, %17 : vector<1x1xf32>
    %19 = math.rsqrt %18 : vector<1x1xf32>
    %20 = vector.broadcast %19 : vector<1x1xf32> to vector<1x6144xf32>
    %21 = arith.mulf %11, %20 : vector<1x6144xf32>
    %c0_10 = arith.constant 0 : index
    %c0_11 = arith.constant 0 : index
    %22 = vector.load %arg4[%c0_10, %c0_11] : memref<1x1xf32, #tpu.memory_space<vmem>>, vector<1x1xf32>
    %23 = vector.broadcast %22 : vector<1x1xf32> to vector<1x6144xf32>
    %24 = arith.mulf %21, %23 : vector<1x6144xf32>
    %c0_12 = arith.constant 0 : index
    %c0_13 = arith.constant 0 : index
    %25 = vector.load %arg5[%c0_12, %c0_13] : memref<1x1xf32, #tpu.memory_space<vmem>>, vector<1x1xf32>
    %26 = vector.broadcast %25 : vector<1x1xf32> to vector<1x6144xf32>
    %27 = arith.addf %24, %26 : vector<1x6144xf32>
    %c0_14 = arith.constant 0 : index
    %c0_15 = arith.constant 0 : index
    %28 = vector.load %arg6[%c0_14, %c0_15] : memref<1x6144xf32, #tpu.memory_space<vmem>>, vector<1x6144xf32>
    tpu.vector_store %arg6[%c0_14, %c0_15], %27 {strides = array<i32>} : memref<1x6144xf32, #tpu.memory_space<vmem>>, vector<1x6144xf32>,
    return
  }
  func.func @transform_0(%arg0: i32) -> (i32, i32) {
    %c0_i32 = arith.constant 0 : i32
    %c0_i32_0 = arith.constant 0 : i32
    %c0_i32_1 = arith.constant 0 : i32
    return %c0_i32, %c0_i32_0 : i32, i32
  }
  func.func @transform_1(%arg0: i32) -> (i32, i32) {
    %c0_i32 = arith.constant 0 : i32
    %c0_i32_0 = arith.constant 0 : i32
    %c0_i32_1 = arith.constant 0 : i32
    return %c0_i32, %c0_i32_0 : i32, i32
  }
  func.func @transform_2(%arg0: i32) -> (i32, i32) {
    %c0_i32 = arith.constant 0 : i32
    %c0_i32_0 = arith.constant 0 : i32
    %c0_i32_1 = arith.constant 0 : i32
    return %c0_i32, %c0_i32_0 : i32, i32
  }
  func.func @transform_3(%arg0: i32) -> (i32, i32) {
    %c0_i32 = arith.constant 0 : i32
    %c0_i32_0 = arith.constant 0 : i32
    %c0_i32_1 = arith.constant 0 : i32
    return %c0_i32, %c0_i32_0 : i32, i32
  }
  func.func @transform_4(%arg0: i32) -> (i32, i32) {
    %c0_i32 = arith.constant 0 : i32
    %c0_i32_0 = arith.constant 0 : i32
    %c0_i32_1 = arith.constant 0 : i32
    return %c0_i32, %c0_i32_0 : i32, i32
  }
  func.func @transform_5(%arg0: i32) -> (i32, i32) {
    %c0_i32 = arith.constant 0 : i32
    %c0_i32_0 = arith.constant 0 : i32
    %c0_i32_1 = arith.constant 0 : i32
    return %c0_i32, %c0_i32_0 : i32, i32
  }
}

</mosaic_0001>

<llo_original>
// kernel: vae_forward.13
$region0: #{vae_forward.13}
  #allocation0 [shape = 'u32[]', space=smem, size = 0x4, offset = 0x4, fixed_abs, tag = 'smem constant byte address 0x4 - core index']
  #allocation1 [shape = 'u32[144,128]{1,0:T(1,128)}', space=vmem, size = 0x12000, scoped, tag = 'internal scratch']
  %s0 = inlined_call_operand.vmem [shape: bf16[27,6144], index: 0, kind: input, shape index: {}]
  %s1 = inlined_call_operand.vmem [shape: bf16[2,27], index: 1, kind: input, shape index: {}]
  %s2 = inlined_call_operand.vmem [shape: f32[2,1], index: 2, kind: input, shape index: {}]
  %s3 = inlined_call_operand.vmem [shape: f32[2,1], index: 3, kind: input, shape index: {}]
  %s4 = inlined_call_operand.vmem [shape: f32[2,1], index: 4, kind: input, shape index: {}]
  %s5 = inlined_call_operand.vmem [shape: f32[2,6144], index: 5, kind: output, shape index: {}]
  %s6 = sld [smem:[#allocation0]]
  $region30: #{vae_forward.13} parent=0
    _
  %s8 = ssub.s32 1, %s6
  %s9 = scalar_select 0, %s8, %s6
  // Predicated region
  $region2: #{vae_forward.13} parent=0 // pred_check
    _
  $region3: #{vae_forward.13} parent=0 // pred_check_branch
    %11 = sbr.rel (0) target = $region5
  $region4: #{vae_forward.13} parent=0 // pred_region
    _
  $region5: #{vae_forward.13} parent=0 // pred_fallthru
    _
  // Predicated region
  $region6: #{vae_forward.13} parent=0 // pred_check
    _
  $region7: #{vae_forward.13} parent=0 // pred_check_branch
    %13 = sbr.rel (0) target = $region9
  $region8: #{vae_forward.13} parent=0 // pred_region
    _
  $region9: #{vae_forward.13} parent=0 // pred_fallthru
    _
  // Predicated region
  $region10: #{vae_forward.13} parent=0 // pred_check
    _
  $region11: #{vae_forward.13} parent=0 // pred_check_branch
    %15 = sbr.rel (0) target = $region13
  $region12: #{vae_forward.13} parent=0 // pred_region
    _
  $region13: #{vae_forward.13} parent=0 // pred_fallthru
    _
  // Predicated region
  $region14: #{vae_forward.13} parent=0 // pred_check
    _
  $region15: #{vae_forward.13} parent=0 // pred_check_branch
    %17 = sbr.rel (0) target = $region17
  $region16: #{vae_forward.13} parent=0 // pred_region
    _
  $region17: #{vae_forward.13} parent=0 // pred_fallthru
    _
  // Predicated region
  $region18: #{vae_forward.13} parent=0 // pred_check
    _
  $region19: #{vae_forward.13} parent=0 // pred_check_branch
    %19 = sbr.rel (0) target = $region21
  $region20: #{vae_forward.13} parent=0 // pred_region
    _
  $region21: #{vae_forward.13} parent=0 // pred_fallthru
    _
  %v21 = vld [vmem:[%s1] sm:$0x1]
  %v22 = vld [vmem:[%s0] sm:$0xff]
  %v23 = vld [vmem:[%s0 + $0x8] sm:$0xff]
  %v24 = vld [vmem:[%s0 + $0x10] sm:$0xff]
  %v25 = vld [vmem:[%s0 + $0x18] sm:$0xff]
  %v26 = vld [vmem:[%s0 + $0x20] sm:$0xff]
  %v27 = vld [vmem:[%s0 + $0x28] sm:$0xff]
  %v28 = vld [vmem:[%s0 + $0x30] sm:$0xff]
  %v29 = vld [vmem:[%s0 + $0x38] sm:$0xff]
  %v30 = vld [vmem:[%s0 + $0x40] sm:$0xff]
  %v31 = vld [vmem:[%s0 + $0x48] sm:$0xff]
  %v32 = vld [vmem:[%s0 + $0x50] sm:$0xff]
  %v33 = vld [vmem:[%s0 + $0x58] sm:$0xff]
  %v34 = vld [vmem:[%s0 + $0x60] sm:$0xff]
  %v35 = vld [vmem:[%s0 + $0x68] sm:$0xff]
  %v36 = vld [vmem:[%s0 + $0x70] sm:$0xff]
  %v37 = vld [vmem:[%s0 + $0x78] sm:$0xff]
  %v38 = vld [vmem:[%s0 + $0x80] sm:$0xff]
  %v39 = vld [vmem:[%s0 + $0x88] sm:$0xff]
  %v40 = vld [vmem:[%s0 + $0x90] sm:$0xff]
  %v41 = vld [vmem:[%s0 + $0x98] sm:$0xff]
  %v42 = vld [vmem:[%s0 + $0xa0] sm:$0xff]
  %v43 = vld [vmem:[%s0 + $0xa8] sm:$0xff]
  %v44 = vld [vmem:[%s0 + $0xb0] sm:$0xff]
  %v45 = vld [vmem:[%s0 + $0xb8] sm:$0xff]
  %v46 = vld [vmem:[%s0 + $0xc0] sm:$0xff]
  %v47 = vld [vmem:[%s0 + $0xc8] sm:$0xff]
  %v48 = vld [vmem:[%s0 + $0xd0] sm:$0xff]
  %v49 = vld [vmem:[%s0 + $0xd8] sm:$0xff]
  %v50 = vld [vmem:[%s0 + $0xe0] sm:$0xff]
  %v51 = vld [vmem:[%s0 + $0xe8] sm:$0xff]
  %v52 = vld [vmem:[%s0 + $0xf0] sm:$0xff]
  %v53 = vld [vmem:[%s0 + $0xf8] sm:$0xff]
  %v54 = vld [vmem:[%s0 + $0x100] sm:$0xff]
  %v55 = vld [vmem:[%s0 + $0x108] sm:$0xff]
  %v56 = vld [vmem:[%s0 + $0x110] sm:$0xff]
  %v57 = vld [vmem:[%s0 + $0x118] sm:$0xff]
  %v58 = vld [vmem:[%s0 + $0x120] sm:$0xff]
  %v59 = vld [vmem:[%s0 + $0x128] sm:$0xff]
  %v60 = vld [vmem:[%s0 + $0x130] sm:$0xff]
  %v61 = vld [vmem:[%s0 + $0x138] sm:$0xff]
  %v62 = vld [vmem:[%s0 + $0x140] sm:$0xff]
  %v63 = vld [vmem:[%s0 + $0x148] sm:$0xff]
  %v64 = vld [vmem:[%s0 + $0x150] sm:$0xff]
  %v65 = vld [vmem:[%s0 + $0x158] sm:$0xff]
  %v66 = vld [vmem:[%s0 + $0x160] sm:$0xff]
  %v67 = vld [vmem:[%s0 + $0x168] sm:$0xff]
  %v68 = vld [vmem:[%s0 + $0x170] sm:$0xff]
  %v69 = vld [vmem:[%s0 + $0x178] sm:$0xff]
  %v70 = vld [vmem:[%s0 + $0x180] sm:$0xff]
  %v71 = vld [vmem:[%s0 + $0x188] sm:$0xff]
  %v72 = vld [vmem:[%s0 + $0x190] sm:$0xff]
  %v73 = vld [vmem:[%s0 + $0x198] sm:$0xff]
  %v74 = vld [vmem:[%s0 + $0x1a0] sm:$0xff]
  %v75 = vld [vmem:[%s0 + $0x1a8] sm:$0xff]
  %v76 = vld [vmem:[%s0 + $0x1b0] sm:$0xff]
  %v77 = vld [vmem:[%s0 + $0x1b8] sm:$0xff]
  %v78 = vld [vmem:[%s0 + $0x1c0] sm:$0xff]
  %v79 = vld [vmem:[%s0 + $0x1c8] sm:$0xff]
  %v80 = vld [vmem:[%s0 + $0x1d0] sm:$0xff]
  %v81 = vld [vmem:[%s0 + $0x1d8] sm:$0xff]
  %v82 = vld [vmem:[%s0 + $0x1e0] sm:$0xff]
  %v83 = vld [vmem:[%s0 + $0x1e8] sm:$0xff]
  %v84 = vld [vmem:[%s0 + $0x1f0] sm:$0xff]
  %v85 = vld [vmem:[%s0 + $0x1f8] sm:$0xff]
  %v86 = vld [vmem:[%s0 + $0x200] sm:$0xff]
  %v87 = vld [vmem:[%s0 + $0x208] sm:$0xff]
  %v88 = vld [vmem:[%s0 + $0x210] sm:$0xff]
  %v89 = vld [vmem:[%s0 + $0x218] sm:$0xff]
  %v90 = vld [vmem:[%s0 + $0x220] sm:$0xff]
  %v91 = vld [vmem:[%s0 + $0x228] sm:$0xff]
  %v92 = vld [vmem:[%s0 + $0x230] sm:$0xff]
  %v93 = vld [vmem:[%s0 + $0x238] sm:$0xff]
  %v94 = vld [vmem:[%s0 + $0x240] sm:$0x33]
  %v95 = vld [vmem:[%s0 + $0x248] sm:$0x33]
  %v96 = vld [vmem:[%s0 + $0x250] sm:$0x33]
  %v97 = vld [vmem:[%s0 + $0x258] sm:$0x33]
  %v98 = vld [vmem:[%s0 + $0x260] sm:$0x33]
  %v99 = vld [vmem:[%s0 + $0x268] sm:$0x33]
  %v100 = vld [vmem:[%s0 + $0x270] sm:$0x33]
  %v101 = vld [vmem:[%s0 + $0x278] sm:$0x33]
  %v102 = vld [vmem:[%s0 + $0x280] sm:$0x33]
  %v103 = vld [vmem:[%s0 + $0x288] sm:$0x33]
  %v104 = vld [vmem:[%s0 + $0x290] sm:$0x33]
  %v105 = vld [vmem:[%s0 + $0x298] sm:$0x33]
  %v106 = vld [vmem:[%s0 + $0x2a0] sm:$0x33]
  %v107 = vld [vmem:[%s0 + $0x2a8] sm:$0x33]
  %v108 = vld [vmem:[%s0 + $0x2b0] sm:$0x33]
  %v109 = vld [vmem:[%s0 + $0x2b8] sm:$0x33]
  %v110 = vld [vmem:[%s0 + $0x2c0] sm:$0x33]
  %v111 = vld [vmem:[%s0 + $0x2c8] sm:$0x33]
  %v112 = vld [vmem:[%s0 + $0x2d0] sm:$0x33]
  %v113 = vld [vmem:[%s0 + $0x2d8] sm:$0x33]
  %v114 = vld [vmem:[%s0 + $0x2e0] sm:$0x33]
  %v115 = vld [vmem:[%s0 + $0x2e8] sm:$0x33]
  %v116 = vld [vmem:[%s0 + $0x2f0] sm:$0x33]
  %v117 = vld [vmem:[%s0 + $0x2f8] sm:$0x33]
  %v118 = vld [vmem:[%s2] sm:$0x3]
  %120 = vset.pattern.permute.xlu0 0
  %121 = vperm.xlu0 %120, %v118
  %v122 = vpop.permute.xlu0 %121
  %v220 = vunpack.c.l.b16 %v22
  %v221 = vunpack.c.h.b16 %v22
  %v222 = vunpack.c.l.b16 %v23
  %v223 = vunpack.c.h.b16 %v23
  %v224 = vunpack.c.l.b16 %v24
  %v225 = vunpack.c.h.b16 %v24
  %v226 = vunpack.c.l.b16 %v25
  %v227 = vunpack.c.h.b16 %v25
  %v228 = vunpack.c.l.b16 %v26
  %v229 = vunpack.c.h.b16 %v26
  %v230 = vunpack.c.l.b16 %v27
  %v231 = vunpack.c.h.b16 %v27
  %v232 = vunpack.c.l.b16 %v28
  %v233 = vunpack.c.h.b16 %v28
  %v234 = vunpack.c.l.b16 %v29
  %v235 = vunpack.c.h.b16 %v29
  %v236 = vunpack.c.l.b16 %v30
  %v237 = vunpack.c.h.b16 %v30
  %v238 = vunpack.c.l.b16 %v31
  %v239 = vunpack.c.h.b16 %v31
  %v240 = vunpack.c.l.b16 %v32
  %v241 = vunpack.c.h.b16 %v32
  %v242 = vunpack.c.l.b16 %v33
  %v243 = vunpack.c.h.b16 %v33
  %v244 = vunpack.c.l.b16 %v34
  %v245 = vunpack.c.h.b16 %v34
  %v246 = vunpack.c.l.b16 %v35
  %v247 = vunpack.c.h.b16 %v35
  %v248 = vunpack.c.l.b16 %v36
  %v249 = vunpack.c.h.b16 %v36
  %v250 = vunpack.c.l.b16 %v37
  %v251 = vunpack.c.h.b16 %v37
  %v252 = vunpack.c.l.b16 %v38
  %v253 = vunpack.c.h.b16 %v38
  %v254 = vunpack.c.l.b16 %v39
  %v255 = vunpack.c.h.b16 %v39
  %v256 = vunpack.c.l.b16 %v40
  %v257 = vunpack.c.h.b16 %v40
  %v258 = vunpack.c.l.b16 %v41
  %v259 = vunpack.c.h.b16 %v41
  %v260 = vunpack.c.l.b16 %v42
  %v261 = vunpack.c.h.b16 %v42
  %v262 = vunpack.c.l.b16 %v43
  %v263 = vunpack.c.h.b16 %v43
  %v264 = vunpack.c.l.b16 %v44
  %v265 = vunpack.c.h.b16 %v44
  %v266 = vunpack.c.l.b16 %v45
  %v267 = vunpack.c.h.b16 %v45
  %v268 = vunpack.c.l.b16 %v46
  %v269 = vunpack.c.h.b16 %v46
  %v270 = vunpack.c.l.b16 %v47
  %v271 = vunpack.c.h.b16 %v47
  %v272 = vunpack.c.l.b16 %v48
  %v273 = vunpack.c.h.b16 %v48
  %v274 = vunpack.c.l.b16 %v49
  %v275 = vunpack.c.h.b16 %v49
  %v276 = vunpack.c.l.b16 %v50
  %v277 = vunpack.c.h.b16 %v50
  %v278 = vunpack.c.l.b16 %v51
  %v279 = vunpack.c.h.b16 %v51
  %v280 = vunpack.c.l.b16 %v52
  %v281 = vunpack.c.h.b16 %v52
  %v282 = vunpack.c.l.b16 %v53
  %v283 = vunpack.c.h.b16 %v53
  %v284 = vunpack.c.l.b16 %v54
  %v285 = vunpack.c.h.b16 %v54
  %v286 = vunpack.c.l.b16 %v55
  %v287 = vunpack.c.h.b16 %v55
  %v288 = vunpack.c.l.b16 %v56
  %v289 = vunpack.c.h.b16 %v56
  %v290 = vunpack.c.l.b16 %v57
  %v291 = vunpack.c.h.b16 %v57
  %v292 = vunpack.c.l.b16 %v58
  %v293 = vunpack.c.h.b16 %v58
  %v294 = vunpack.c.l.b16 %v59
  %v295 = vunpack.c.h.b16 %v59
  %v296 = vunpack.c.l.b16 %v60
  %v297 = vunpack.c.h.b16 %v60
  %v298 = vunpack.c.l.b16 %v61
  %v299 = vunpack.c.h.b16 %v61
  %v300 = vunpack.c.l.b16 %v62
  %v301 = vunpack.c.h.b16 %v62
  %v302 = vunpack.c.l.b16 %v63
  %v303 = vunpack.c.h.b16 %v63
  %v304 = vunpack.c.l.b16 %v64
  %v305 = vunpack.c.h.b16 %v64
  %v306 = vunpack.c.l.b16 %v65
  %v307 = vunpack.c.h.b16 %v65
  %v308 = vunpack.c.l.b16 %v66
  %v309 = vunpack.c.h.b16 %v66
  %v310 = vunpack.c.l.b16 %v67
  %v311 = vunpack.c.h.b16 %v67
  %v312 = vunpack.c.l.b16 %v68
  %v313 = vunpack.c.h.b16 %v68
  %v314 = vunpack.c.l.b16 %v69
  %v315 = vunpack.c.h.b16 %v69
  %v316 = vunpack.c.l.b16 %v70
  %v317 = vunpack.c.h.b16 %v70
  %v318 = vunpack.c.l.b16 %v71
  %v319 = vunpack.c.h.b16 %v71
  %v320 = vunpack.c.l.b16 %v72
  %v321 = vunpack.c.h.b16 %v72
  %v322 = vunpack.c.l.b16 %v73
  %v323 = vunpack.c.h.b16 %v73
  %v324 = vunpack.c.l.b16 %v74
  %v325 = vunpack.c.h.b16 %v74
  %v326 = vunpack.c.l.b16 %v75
  %v327 = vunpack.c.h.b16 %v75
  %v328 = vunpack.c.l.b16 %v76
  %v329 = vunpack.c.h.b16 %v76
  %v330 = vunpack.c.l.b16 %v77
  %v331 = vunpack.c.h.b16 %v77
  %v332 = vunpack.c.l.b16 %v78
  %v333 = vunpack.c.h.b16 %v78
  %v334 = vunpack.c.l.b16 %v79
  %v335 = vunpack.c.h.b16 %v79
  %v336 = vunpack.c.l.b16 %v80
  %v337 = vunpack.c.h.b16 %v80
  %v338 = vunpack.c.l.b16 %v81
  %v339 = vunpack.c.h.b16 %v81
  %v340 = vunpack.c.l.b16 %v82
  %v341 = vunpack.c.h.b16 %v82
  %v342 = vunpack.c.l.b16 %v83
  %v343 = vunpack.c.h.b16 %v83
  %v344 = vunpack.c.l.b16 %v84
  %v345 = vunpack.c.h.b16 %v84
  %v346 = vunpack.c.l.b16 %v85
  %v347 = vunpack.c.h.b16 %v85
  %v348 = vunpack.c.l.b16 %v86
  %v349 = vunpack.c.h.b16 %v86
  %v350 = vunpack.c.l.b16 %v87
  %v351 = vunpack.c.h.b16 %v87
  %v352 = vunpack.c.l.b16 %v88
  %v353 = vunpack.c.h.b16 %v88
  %v354 = vunpack.c.l.b16 %v89
  %v355 = vunpack.c.h.b16 %v89
  %v356 = vunpack.c.l.b16 %v90
  %v357 = vunpack.c.h.b16 %v90
  %v358 = vunpack.c.l.b16 %v91
  %v359 = vunpack.c.h.b16 %v91
  %v360 = vunpack.c.l.b16 %v92
  %v361 = vunpack.c.h.b16 %v92
  %v362 = vunpack.c.l.b16 %v93
  %v363 = vunpack.c.h.b16 %v93
  %v364 = vunpack.c.l.b16 %v94
  %v365 = vunpack.c.h.b16 %v94
  %v366 = vunpack.c.l.b16 %v95
  %v367 = vunpack.c.h.b16 %v95
  %v368 = vunpack.c.l.b16 %v96
  %v369 = vunpack.c.h.b16 %v96
  %v370 = vunpack.c.l.b16 %v97
  %v371 = vunpack.c.h.b16 %v97
  %v372 = vunpack.c.l.b16 %v98
  %v373 = vunpack.c.h.b16 %v98
  %v374 = vunpack.c.l.b16 %v99
  %v375 = vunpack.c.h.b16 %v99
  %v376 = vunpack.c.l.b16 %v100
  %v377 = vunpack.c.h.b16 %v100
  %v378 = vunpack.c.l.b16 %v101
  %v379 = vunpack.c.h.b16 %v101
  %v380 = vunpack.c.l.b16 %v102
  %v381 = vunpack.c.h.b16 %v102
  %v382 = vunpack.c.l.b16 %v103
  %v383 = vunpack.c.h.b16 %v103
  %v384 = vunpack.c.l.b16 %v104
  %v385 = vunpack.c.h.b16 %v104
  %v386 = vunpack.c.l.b16 %v105
  %v387 = vunpack.c.h.b16 %v105
  %v388 = vunpack.c.l.b16 %v106
  %v389 = vunpack.c.h.b16 %v106
  %v390 = vunpack.c.l.b16 %v107
  %v391 = vunpack.c.h.b16 %v107
  %v392 = vunpack.c.l.b16 %v108
  %v393 = vunpack.c.h.b16 %v108
  %v394 = vunpack.c.l.b16 %v109
  %v395 = vunpack.c.h.b16 %v109
  %v396 = vunpack.c.l.b16 %v110
  %v397 = vunpack.c.h.b16 %v110
  %v398 = vunpack.c.l.b16 %v111
  %v399 = vunpack.c.h.b16 %v111
  %v400 = vunpack.c.l.b16 %v112
  %v401 = vunpack.c.h.b16 %v112
  %v402 = vunpack.c.l.b16 %v113
  %v403 = vunpack.c.h.b16 %v113
  %v404 = vunpack.c.l.b16 %v114
  %v405 = vunpack.c.h.b16 %v114
  %v406 = vunpack.c.l.b16 %v115
  %v407 = vunpack.c.h.b16 %v115
  %v408 = vunpack.c.l.b16 %v116
  %v409 = vunpack.c.h.b16 %v116
  %v410 = vunpack.c.l.b16 %v117
  %v411 = vunpack.c.h.b16 %v117
  %v412 = vpack.c.b16 %v268, %v220
  %v413 = vpack.c.b16 %v269, %v221
  %v414 = vpack.c.b16 %v270, %v222
  %v415 = vpack.c.b16 %v271, %v223
  %v416 = vpack.c.b16 %v272, %v224
  %v417 = vpack.c.b16 %v273, %v225
  %v418 = vpack.c.b16 %v274, %v226
  %v419 = vpack.c.b16 %v275, %v227
  %v420 = vpack.c.b16 %v276, %v228
  %v421 = vpack.c.b16 %v277, %v229
  %v422 = vpack.c.b16 %v278, %v230
  %v423 = vpack.c.b16 %v279, %v231
  %v424 = vpack.c.b16 %v280, %v232
  %v425 = vpack.c.b16 %v281, %v233
  %v426 = vpack.c.b16 %v282, %v234
  %v427 = vpack.c.b16 %v283, %v235
  %v428 = vpack.c.b16 %v284, %v236
  %v429 = vpack.c.b16 %v285, %v237
  %v430 = vpack.c.b16 %v286, %v238
  %v431 = vpack.c.b16 %v287, %v239
  %v432 = vpack.c.b16 %v288, %v240
  %v433 = vpack.c.b16 %v289, %v241
  %v434 = vpack.c.b16 %v290, %v242
  %v435 = vpack.c.b16 %v291, %v243
  %v436 = vpack.c.b16 %v292, %v244
  %v437 = vpack.c.b16 %v293, %v245
  %v438 = vpack.c.b16 %v294, %v246
  %v439 = vpack.c.b16 %v295, %v247
  %v440 = vpack.c.b16 %v296, %v248
  %v441 = vpack.c.b16 %v297, %v249
  %v442 = vpack.c.b16 %v298, %v250
  %v443 = vpack.c.b16 %v299, %v251
  %v444 = vpack.c.b16 %v300, %v252
  %v445 = vpack.c.b16 %v301, %v253
  %v446 = vpack.c.b16 %v302, %v254
  %v447 = vpack.c.b16 %v303, %v255
  %v448 = vpack.c.b16 %v304, %v256
  %v449 = vpack.c.b16 %v305, %v257
  %v450 = vpack.c.b16 %v306, %v258
  %v451 = vpack.c.b16 %v307, %v259
  %v452 = vpack.c.b16 %v308, %v260
  %v453 = vpack.c.b16 %v309, %v261
  %v454 = vpack.c.b16 %v310, %v262
  %v455 = vpack.c.b16 %v311, %v263
  %v456 = vpack.c.b16 %v312, %v264
  %v457 = vpack.c.b16 %v313, %v265
  %v458 = vpack.c.b16 %v314, %v266
  %v459 = vpack.c.b16 %v315, %v267
  %v460 = vpack.c.b16 %v364, %v316
  %v461 = vpack.c.b16 %v365, %v317
  %v462 = vpack.c.b16 %v366, %v318
  %v463 = vpack.c.b16 %v367, %v319
  %v464 = vpack.c.b16 %v368, %v320
  %v465 = vpack.c.b16 %v369, %v321
  %v466 = vpack.c.b16 %v370, %v322
  %v467 = vpack.c.b16 %v371, %v323
  %v468 = vpack.c.b16 %v372, %v324
  %v469 = vpack.c.b16 %v373, %v325
  %v470 = vpack.c.b16 %v374, %v326
  %v471 = vpack.c.b16 %v375, %v327
  %v472 = vpack.c.b16 %v376, %v328
  %v473 = vpack.c.b16 %v377, %v329
  %v474 = vpack.c.b16 %v378, %v330
  %v475 = vpack.c.b16 %v379, %v331
  %v476 = vpack.c.b16 %v380, %v332
  %v477 = vpack.c.b16 %v381, %v333
  %v478 = vpack.c.b16 %v382, %v334
  %v479 = vpack.c.b16 %v383, %v335
  %v480 = vpack.c.b16 %v384, %v336
  %v481 = vpack.c.b16 %v385, %v337
  %v482 = vpack.c.b16 %v386, %v338
  %v483 = vpack.c.b16 %v387, %v339
  %v484 = vpack.c.b16 %v388, %v340
  %v485 = vpack.c.b16 %v389, %v341
  %v486 = vpack.c.b16 %v390, %v342
  %v487 = vpack.c.b16 %v391, %v343
  %v488 = vpack.c.b16 %v392, %v344
  %v489 = vpack.c.b16 %v393, %v345
  %v490 = vpack.c.b16 %v394, %v346
  %v491 = vpack.c.b16 %v395, %v347
  %v492 = vpack.c.b16 %v396, %v348
  %v493 = vpack.c.b16 %v397, %v349
  %v494 = vpack.c.b16 %v398, %v350
  %v495 = vpack.c.b16 %v399, %v351
  %v496 = vpack.c.b16 %v400, %v352
  %v497 = vpack.c.b16 %v401, %v353
  %v498 = vpack.c.b16 %v402, %v354
  %v499 = vpack.c.b16 %v403, %v355
  %v500 = vpack.c.b16 %v404, %v356
  %v501 = vpack.c.b16 %v405, %v357
  %v502 = vpack.c.b16 %v406, %v358
  %v503 = vpack.c.b16 %v407, %v359
  %v504 = vpack.c.b16 %v408, %v360
  %v505 = vpack.c.b16 %v409, %v361
  %v506 = vpack.c.b16 %v410, %v362
  %v507 = vpack.c.b16 %v411, %v363
  %vm556 = vcmask 220160
  %v558 = vsel %vm556, %v21, 0
  %vm560 = vcmask 1044480
  %vm561 = vcmask 1045504
  %v562 = vsel %vm560, 4294967295, 65535
  %v563 = vsel %vm561, %v562, 0
  %v565 = vand.u32 %v460, %v563
  %v568 = vand.u32 %v461, %v563
  %v571 = vand.u32 %v462, %v563
  %v574 = vand.u32 %v463, %v563
  %v577 = vand.u32 %v464, %v563
  %v580 = vand.u32 %v465, %v563
  %v583 = vand.u32 %v466, %v563
  %v586 = vand.u32 %v467, %v563
  %v589 = vand.u32 %v468, %v563
  %v592 = vand.u32 %v469, %v563
  %v595 = vand.u32 %v470, %v563
  %v598 = vand.u32 %v471, %v563
  %v601 = vand.u32 %v472, %v563
  %v604 = vand.u32 %v473, %v563
  %v607 = vand.u32 %v474, %v563
  %v610 = vand.u32 %v475, %v563
  %v613 = vand.u32 %v476, %v563
  %v616 = vand.u32 %v477, %v563
  %v619 = vand.u32 %v478, %v563
  %v622 = vand.u32 %v479, %v563
  %v625 = vand.u32 %v480, %v563
  %v628 = vand.u32 %v481, %v563
  %v631 = vand.u32 %v482, %v563
  %v634 = vand.u32 %v483, %v563
  %v637 = vand.u32 %v484, %v563
  %v640 = vand.u32 %v485, %v563
  %v643 = vand.u32 %v486, %v563
  %v646 = vand.u32 %v487, %v563
  %v649 = vand.u32 %v488, %v563
  %v652 = vand.u32 %v489, %v563
  %v655 = vand.u32 %v490, %v563
  %v658 = vand.u32 %v491, %v563
  %v661 = vand.u32 %v492, %v563
  %v664 = vand.u32 %v493, %v563
  %v667 = vand.u32 %v494, %v563
  %v670 = vand.u32 %v495, %v563
  %v673 = vand.u32 %v496, %v563
  %v676 = vand.u32 %v497, %v563
  %v679 = vand.u32 %v498, %v563
  %v682 = vand.u32 %v499, %v563
  %v685 = vand.u32 %v500, %v563
  %v688 = vand.u32 %v501, %v563
  %v691 = vand.u32 %v502, %v563
  %v694 = vand.u32 %v503, %v563
  %v697 = vand.u32 %v504, %v563
  %v700 = vand.u32 %v505, %v563
  %v703 = vand.u32 %v506, %v563
  %v706 = vand.u32 %v507, %v563
  %708 = vmatprep.subr.bf16.mxu0 %v413
  %709 = vmatpush1.bf16.msra.mxu0 %v412
  %710 = vmatprep.subr.bf16.mxu0 %v568
  %711 = vmatpush1.bf16.msra.mxu0 %v565
  %712 = vmatprep.subr.bf16.mxu0 0
  %713 = vmatpush1.bf16.msra.mxu0 0
  %714 = vmatprep.subr.bf16.mxu0 0
  %715 = vmatpush1.bf16.msra.mxu0 0
  %716 = vmatprep.subr.bf16.mxu0 0
  %717 = vmatpush1.bf16.msra.mxu0 0
  %718 = vmatprep.subr.bf16.mxu0 0
  %719 = vmatpush1.bf16.msra.mxu0 0
  %720 = vmatprep.subr.bf16.mxu0 0
  %721 = vmatpush1.bf16.msra.mxu0 0
  %722 = vmatprep.subr.bf16.mxu0 0
  %723 = vmatpush1.bf16.msra.mxu0 0
  %724 = vmatprep.subr.bf16.mxu0 0
  %725 = vmatpush1.bf16.msra.mxu0 0
  %726 = vmatprep.subr.bf16.mxu0 0
  %727 = vmatpush1.bf16.msra.mxu0 0
  %728 = vmatprep.subr.bf16.mxu0 0
  %729 = vmatpush1.bf16.msra.mxu0 0
  %730 = vmatprep.subr.bf16.mxu0 0
  %731 = vmatpush1.bf16.msra.mxu0 0
  %732 = vmatprep.subr.bf16.mxu0 0
  %733 = vmatpush1.bf16.msra.mxu0 0
  %734 = vmatprep.subr.bf16.mxu0 0
  %735 = vmatpush1.bf16.msra.mxu0 0
  %736 = vmatprep.subr.bf16.mxu0 0
  %737 = vmatpush1.bf16.msra.mxu0 0
  %738 = vmatprep.subr.bf16.mxu0 0
  %739 = vmatpush1.bf16.msra.mxu0 0
  %740 = vmatprep.mubr.bf16.mxu0 0
  %741 = vmatmul.mubr.bf16.gmra.mrb[0].mxu0 %v558
  %v742 = vpop.f32.mrb[0].mxu0
  %v743 = vadd.f32 %v122, %v742
  %v744 = vpop.f32.mrb[0].mxu0
  %v745 = vadd.f32 %v122, %v744
  %v746 = vpop.f32.mrb[0].mxu0
  %v747 = vpop.f32.mrb[0].mxu0
  %748 = vdwg.mxu0
  %749 = vmatprep.subr.bf16.mxu0 %v415
  %750 = vmatpush1.bf16.msra.mxu0 %v414
  %751 = vmatprep.subr.bf16.mxu0 %v574
  %752 = vmatpush1.bf16.msra.mxu0 %v571
  %753 = vmatprep.subr.bf16.mxu0 0
  %754 = vmatpush1.bf16.msra.mxu0 0
  %755 = vmatprep.subr.bf16.mxu0 0
  %756 = vmatpush1.bf16.msra.mxu0 0
  %757 = vmatprep.subr.bf16.mxu0 0
  %758 = vmatpush1.bf16.msra.mxu0 0
  %759 = vmatprep.subr.bf16.mxu0 0
  %760 = vmatpush1.bf16.msra.mxu0 0
  %761 = vmatprep.subr.bf16.mxu0 0
  %762 = vmatpush1.bf16.msra.mxu0 0
  %763 = vmatprep.subr.bf16.mxu0 0
  %764 = vmatpush1.bf16.msra.mxu0 0
  %765 = vmatprep.subr.bf16.mxu0 0
  %766 = vmatpush1.bf16.msra.mxu0 0
  %767 = vmatprep.subr.bf16.mxu0 0
  %768 = vmatpush1.bf16.msra.mxu0 0
  %769 = vmatprep.subr.bf16.mxu0 0
  %770 = vmatpush1.bf16.msra.mxu0 0
  %771 = vmatprep.subr.bf16.mxu0 0
  %772 = vmatpush1.bf16.msra.mxu0 0
  %773 = vmatprep.subr.bf16.mxu0 0
  %774 = vmatpush1.bf16.msra.mxu0 0
  %775 = vmatprep.subr.bf16.mxu0 0
  %776 = vmatpush1.bf16.msra.mxu0 0
  %777 = vmatprep.subr.bf16.mxu0 0
  %778 = vmatpush1.bf16.msra.mxu0 0
  %779 = vmatprep.subr.bf16.mxu0 0
  %780 = vmatpush1.bf16.msra.mxu0 0
  %781 = vmatprep.mubr.bf16.mxu0 0
  %782 = vmatmul.mubr.bf16.gmra.mrb[0].mxu0 %v558
  %v783 = vpop.f32.mrb[0].mxu0
  %v784 = vadd.f32 %v122, %v783
  %v785 = vpop.f32.mrb[0].mxu0
  %v786 = vadd.f32 %v122, %v785
  %v787 = vpop.f32.mrb[0].mxu0
  %v788 = vpop.f32.mrb[0].mxu0
  %789 = vdwg.mxu0
  %790 = vmatprep.subr.bf16.mxu0 %v417
  %791 = vmatpush1.bf16.msra.mxu0 %v416
  %792 = vmatprep.subr.bf16.mxu0 %v580
  %793 = vmatpush1.bf16.msra.mxu0 %v577
  %794 = vmatprep.subr.bf16.mxu0 0
  %795 = vmatpush1.bf16.msra.mxu0 0
  %796 = vmatprep.subr.bf16.mxu0 0
  %797 = vmatpush1.bf16.msra.mxu0 0
  %798 = vmatprep.subr.bf16.mxu0 0
  %799 = vmatpush1.bf16.msra.mxu0 0
  %800 = vmatprep.subr.bf16.mxu0 0
  %801 = vmatpush1.bf16.msra.mxu0 0
  %802 = vmatprep.subr.bf16.mxu0 0
  %803 = vmatpush1.bf16.msra.mxu0 0
  %804 = vmatprep.subr.bf16.mxu0 0
  %805 = vmatpush1.bf16.msra.mxu0 0
  %806 = vmatprep.subr.bf16.mxu0 0
  %807 = vmatpush1.bf16.msra.mxu0 0
  %808 = vmatprep.subr.bf16.mxu0 0
  %809 = vmatpush1.bf16.msra.mxu0 0
  %810 = vmatprep.subr.bf16.mxu0 0
  %811 = vmatpush1.bf16.msra.mxu0 0
  %812 = vmatprep.subr.bf16.mxu0 0
  %813 = vmatpush1.bf16.msra.mxu0 0
  %814 = vmatprep.subr.bf16.mxu0 0
  %815 = vmatpush1.bf16.msra.mxu0 0
  %816 = vmatprep.subr.bf16.mxu0 0
  %817 = vmatpush1.bf16.msra.mxu0 0
  %818 = vmatprep.subr.bf16.mxu0 0
  %819 = vmatpush1.bf16.msra.mxu0 0
  %820 = vmatprep.subr.bf16.mxu0 0
  %821 = vmatpush1.bf16.msra.mxu0 0
  %822 = vmatprep.mubr.bf16.mxu0 0
  %823 = vmatmul.mubr.bf16.gmra.mrb[0].mxu0 %v558
  %v824 = vpop.f32.mrb[0].mxu0
  %v825 = vadd.f32 %v122, %v824
  %v826 = vpop.f32.mrb[0].mxu0
  %v827 = vadd.f32 %v122, %v826
  %v828 = vpop.f32.mrb[0].mxu0
  %v829 = vpop.f32.mrb[0].mxu0
  %830 = vdwg.mxu0
  %831 = vmatprep.subr.bf16.mxu0 %v419
  %832 = vmatpush1.bf16.msra.mxu0 %v418
  %833 = vmatprep.subr.bf16.mxu0 %v586
  %834 = vmatpush1.bf16.msra.mxu0 %v583
  %835 = vmatprep.subr.bf16.mxu0 0
  %836 = vmatpush1.bf16.msra.mxu0 0
  %837 = vmatprep.subr.bf16.mxu0 0
  %838 = vmatpush1.bf16.msra.mxu0 0
  %839 = vmatprep.subr.bf16.mxu0 0
  %840 = vmatpush1.bf16.msra.mxu0 0
  %841 = vmatprep.subr.bf16.mxu0 0
  %842 = vmatpush1.bf16.msra.mxu0 0
  %843 = vmatprep.subr.bf16.mxu0 0
  %844 = vmatpush1.bf16.msra.mxu0 0
  %845 = vmatprep.subr.bf16.mxu0 0
  %846 = vmatpush1.bf16.msra.mxu0 0
  %847 = vmatprep.subr.bf16.mxu0 0
  %848 = vmatpush1.bf16.msra.mxu0 0
  %849 = vmatprep.subr.bf16.mxu0 0
  %850 = vmatpush1.bf16.msra.mxu0 0
  %851 = vmatprep.subr.bf16.mxu0 0
  %852 = vmatpush1.bf16.msra.mxu0 0
  %853 = vmatprep.subr.bf16.mxu0 0
  %854 = vmatpush1.bf16.msra.mxu0 0
  %855 = vmatprep.subr.bf16.mxu0 0
  %856 = vmatpush1.bf16.msra.mxu0 0
  %857 = vmatprep.subr.bf16.mxu0 0
  %858 = vmatpush1.bf16.msra.mxu0 0
  %859 = vmatprep.subr.bf16.mxu0 0
  %860 = vmatpush1.bf16.msra.mxu0 0
  %861 = vmatprep.subr.bf16.mxu0 0
  %862 = vmatpush1.bf16.msra.mxu0 0
  %863 = vmatprep.mubr.bf16.mxu0 0
  %864 = vmatmul.mubr.bf16.gmra.mrb[0].mxu0 %v558
  %v865 = vpop.f32.mrb[0].mxu0
  %v866 = vadd.f32 %v122, %v865
  %v867 = vpop.f32.mrb[0].mxu0
  %v868 = vadd.f32 %v122, %v867
  %v869 = vpop.f32.mrb[0].mxu0
  %v870 = vpop.f32.mrb[0].mxu0
  %871 = vdwg.mxu0
  %872 = vmatprep.subr.bf16.mxu0 %v421
  %873 = vmatpush1.bf16.msra.mxu0 %v420
  %874 = vmatprep.subr.bf16.mxu0 %v592
  %875 = vmatpush1.bf16.msra.mxu0 %v589
  %876 = vmatprep.subr.bf16.mxu0 0
  %877 = vmatpush1.bf16.msra.mxu0 0
  %878 = vmatprep.subr.bf16.mxu0 0
  %879 = vmatpush1.bf16.msra.mxu0 0
  %880 = vmatprep.subr.bf16.mxu0 0
  %881 = vmatpush1.bf16.msra.mxu0 0
  %882 = vmatprep.subr.bf16.mxu0 0
  %883 = vmatpush1.bf16.msra.mxu0 0
  %884 = vmatprep.subr.bf16.mxu0 0
  %885 = vmatpush1.bf16.msra.mxu0 0
  %886 = vmatprep.subr.bf16.mxu0 0
  %887 = vmatpush1.bf16.msra.mxu0 0
  %888 = vmatprep.subr.bf16.mxu0 0
  %889 = vmatpush1.bf16.msra.mxu0 0
  %890 = vmatprep.subr.bf16.mxu0 0
  %891 = vmatpush1.bf16.msra.mxu0 0
  %892 = vmatprep.subr.bf16.mxu0 0
  %893 = vmatpush1.bf16.msra.mxu0 0
  %894 = vmatprep.subr.bf16.mxu0 0
  %895 = vmatpush1.bf16.msra.mxu0 0
  %896 = vmatprep.subr.bf16.mxu0 0
  %897 = vmatpush1.bf16.msra.mxu0 0
  %898 = vmatprep.subr.bf16.mxu0 0
  %899 = vmatpush1.bf16.msra.mxu0 0
  %900 = vmatprep.subr.bf16.mxu0 0
  %901 = vmatpush1.bf16.msra.mxu0 0
  %902 = vmatprep.subr.bf16.mxu0 0
  %903 = vmatpush1.bf16.msra.mxu0 0
  %904 = vmatprep.mubr.bf16.mxu0 0
  %905 = vmatmul.mubr.bf16.gmra.mrb[0].mxu0 %v558
  %v906 = vpop.f32.mrb[0].mxu0
  %v907 = vadd.f32 %v122, %v906
  %v908 = vpop.f32.mrb[0].mxu0
  %v909 = vadd.f32 %v122, %v908
  %v910 = vpop.f32.mrb[0].mxu0
  %v911 = vpop.f32.mrb[0].mxu0
  %912 = vdwg.mxu0
  %913 = vmatprep.subr.bf16.mxu0 %v423
  %914 = vmatpush1.bf16.msra.mxu0 %v422
  %915 = vmatprep.subr.bf16.mxu0 %v598
  %916 = vmatpush1.bf16.msra.mxu0 %v595
  %917 = vmatprep.subr.bf16.mxu0 0
  %918 = vmatpush1.bf16.msra.mxu0 0
  %919 = vmatprep.subr.bf16.mxu0 0
  %920 = vmatpush1.bf16.msra.mxu0 0
  %921 = vmatprep.subr.bf16.mxu0 0
  %922 = vmatpush1.bf16.msra.mxu0 0
  %923 = vmatprep.subr.bf16.mxu0 0
  %924 = vmatpush1.bf16.msra.mxu0 0
  %925 = vmatprep.subr.bf16.mxu0 0
  %926 = vmatpush1.bf16.msra.mxu0 0
  %927 = vmatprep.subr.bf16.mxu0 0
  %928 = vmatpush1.bf16.msra.mxu0 0
  %929 = vmatprep.subr.bf16.mxu0 0
  %930 = vmatpush1.bf16.msra.mxu0 0
  %931 = vmatprep.subr.bf16.mxu0 0
  %932 = vmatpush1.bf16.msra.mxu0 0
  %933 = vmatprep.subr.bf16.mxu0 0
  %934 = vmatpush1.bf16.msra.mxu0 0
  %935 = vmatprep.subr.bf16.mxu0 0
  %936 = vmatpush1.bf16.msra.mxu0 0
  %937 = vmatprep.subr.bf16.mxu0 0
  %938 = vmatpush1.bf16.msra.mxu0 0
  %939 = vmatprep.subr.bf16.mxu0 0
  %940 = vmatpush1.bf16.msra.mxu0 0
  %941 = vmatprep.subr.bf16.mxu0 0
  %942 = vmatpush1.bf16.msra.mxu0 0
  %943 = vmatprep.subr.bf16.mxu0 0
  %944 = vmatpush1.bf16.msra.mxu0 0
  %945 = vmatprep.mubr.bf16.mxu0 0
  %946 = vmatmul.mubr.bf16.gmra.mrb[0].mxu0 %v558
  %v947 = vpop.f32.mrb[0].mxu0
  %v948 = vadd.f32 %v122, %v947
  %v949 = vpop.f32.mrb[0].mxu0
  %v950 = vadd.f32 %v122, %v949
  %v951 = vpop.f32.mrb[0].mxu0
  %v952 = vpop.f32.mrb[0].mxu0
  %953 = vdwg.mxu0
  %954 = vmatprep.subr.bf16.mxu0 %v425
  %955 = vmatpush1.bf16.msra.mxu0 %v424
  %956 = vmatprep.subr.bf16.mxu0 %v604
  %957 = vmatpush1.bf16.msra.mxu0 %v601
  %958 = vmatprep.subr.bf16.mxu0 0
  %959 = vmatpush1.bf16.msra.mxu0 0
  %960 = vmatprep.subr.bf16.mxu0 0
  %961 = vmatpush1.bf16.msra.mxu0 0
  %962 = vmatprep.subr.bf16.mxu0 0
  %963 = vmatpush1.bf16.msra.mxu0 0
  %964 = vmatprep.subr.bf16.mxu0 0
  %965 = vmatpush1.bf16.msra.mxu0 0
  %966 = vmatprep.subr.bf16.mxu0 0
  %967 = vmatpush1.bf16.msra.mxu0 0
  %968 = vmatprep.subr.bf16.mxu0 0
  %969 = vmatpush1.bf16.msra.mxu0 0
  %970 = vmatprep.subr.bf16.mxu0 0
  %971 = vmatpush1.bf16.msra.mxu0 0
  %972 = vmatprep.subr.bf16.mxu0 0
  %973 = vmatpush1.bf16.msra.mxu0 0
  %974 = vmatprep.subr.bf16.mxu0 0
  %975 = vmatpush1.bf16.msra.mxu0 0
  %976 = vmatprep.subr.bf16.mxu0 0
  %977 = vmatpush1.bf16.msra.mxu0 0
  %978 = vmatprep.subr.bf16.mxu0 0
  %979 = vmatpush1.bf16.msra.mxu0 0
  %980 = vmatprep.subr.bf16.mxu0 0
  %981 = vmatpush1.bf16.msra.mxu0 0
  %982 = vmatprep.subr.bf16.mxu0 0
  %983 = vmatpush1.bf16.msra.mxu0 0
  %984 = vmatprep.subr.bf16.mxu0 0
  %985 = vmatpush1.bf16.msra.mxu0 0
  %986 = vmatprep.mubr.bf16.mxu0 0
  %987 = vmatmul.mubr.bf16.gmra.mrb[0].mxu0 %v558
  %v988 = vpop.f32.mrb[0].mxu0
  %v989 = vadd.f32 %v122, %v988
  %v990 = vpop.f32.mrb[0].mxu0
  %v991 = vadd.f32 %v122, %v990
  %v992 = vpop.f32.mrb[0].mxu0
  %v993 = vpop.f32.mrb[0].mxu0
  %994 = vdwg.mxu0
  %995 = vmatprep.subr.bf16.mxu0 %v427
  %996 = vmatpush1.bf16.msra.mxu0 %v426
  %997 = vmatprep.subr.bf16.mxu0 %v610
  %998 = vmatpush1.bf16.msra.mxu0 %v607
  %999 = vmatprep.subr.bf16.mxu0 0
  %1000 = vmatpush1.bf16.msra.mxu0 0
  %1001 = vmatprep.subr.bf16.mxu0 0
  %1002 = vmatpush1.bf16.msra.mxu0 0
  %1003 = vmatprep.subr.bf16.mxu0 0
  %1004 = vmatpush1.bf16.msra.mxu0 0
  %1005 = vmatprep.subr.bf16.mxu0 0
  %1006 = vmatpush1.bf16.msra.mxu0 0
  %1007 = vmatprep.subr.bf16.mxu0 0
  %1008 = vmatpush1.bf16.msra.mxu0 0
  %1009 = vmatprep.subr.bf16.mxu0 0
  %1010 = vmatpush1.bf16.msra.mxu0 0
  %1011 = vmatprep.subr.bf16.mxu0 0
  %1012 = vmatpush1.bf16.msra.mxu0 0
  %1013 = vmatprep.subr.bf16.mxu0 0
  %1014 = vmatpush1.bf16.msra.mxu0 0
  %1015 = vmatprep.subr.bf16.mxu0 0
  %1016 = vmatpush1.bf16.msra.mxu0 0
  %1017 = vmatprep.subr.bf16.mxu0 0
  %1018 = vmatpush1.bf16.msra.mxu0 0
  %1019 = vmatprep.subr.bf16.mxu0 0
  %1020 = vmatpush1.bf16.msra.mxu0 0
  %1021 = vmatprep.subr.bf16.mxu0 0
  %1022 = vmatpush1.bf16.msra.mxu0 0
  %1023 = vmatprep.subr.bf16.mxu0 0
  %1024 = vmatpush1.bf16.msra.mxu0 0
  %1025 = vmatprep.subr.bf16.mxu0 0
  %1026 = vmatpush1.bf16.msra.mxu0 0
  %1027 = vmatprep.mubr.bf16.mxu0 0
  %1028 = vmatmul.mubr.bf16.gmra.mrb[0].mxu0 %v558
  %v1029 = vpop.f32.mrb[0].mxu0
  %v1030 = vadd.f32 %v122, %v1029
  %v1031 = vpop.f32.mrb[0].mxu0
  %v1032 = vadd.f32 %v122, %v1031
  %v1033 = vpop.f32.mrb[0].mxu0
  %v1034 = vpop.f32.mrb[0].mxu0
  %1035 = vdwg.mxu0
  %1036 = vmatprep.subr.bf16.mxu0 %v429
  %1037 = vmatpush1.bf16.msra.mxu0 %v428
  %1038 = vmatprep.subr.bf16.mxu0 %v616
  %1039 = vmatpush1.bf16.msra.mxu0 %v613
  %1040 = vmatprep.subr.bf16.mxu0 0
  %1041 = vmatpush1.bf16.msra.mxu0 0
  %1042 = vmatprep.subr.bf16.mxu0 0
  %1043 = vmatpush1.bf16.msra.mxu0 0
  %1044 = vmatprep.subr.bf16.mxu0 0
  %1045 = vmatpush1.bf16.msra.mxu0 0
  %1046 = vmatprep.subr.bf16.mxu0 0
  %1047 = vmatpush1.bf16.msra.mxu0 0
  %1048 = vmatprep.subr.bf16.mxu0 0
  %1049 = vmatpush1.bf16.msra.mxu0 0
  %1050 = vmatprep.subr.bf16.mxu0 0
  %1051 = vmatpush1.bf16.msra.mxu0 0
  %1052 = vmatprep.subr.bf16.mxu0 0
  %1053 = vmatpush1.bf16.msra.mxu0 0
  %1054 = vmatprep.subr.bf16.mxu0 0
  %1055 = vmatpush1.bf16.msra.mxu0 0
  %1056 = vmatprep.subr.bf16.mxu0 0
  %1057 = vmatpush1.bf16.msra.mxu0 0
  %1058 = vmatprep.subr.bf16.mxu0 0
  %1059 = vmatpush1.bf16.msra.mxu0 0
  %1060 = vmatprep.subr.bf16.mxu0 0
  %1061 = vmatpush1.bf16.msra.mxu0 0
  %1062 = vmatprep.subr.bf16.mxu0 0
  %1063 = vmatpush1.bf16.msra.mxu0 0
  %1064 = vmatprep.subr.bf16.mxu0 0
  %1065 = vmatpush1.bf16.msra.mxu0 0
  %1066 = vmatprep.subr.bf16.mxu0 0
  %1067 = vmatpush1.bf16.msra.mxu0 0
  %1068 = vmatprep.mubr.bf16.mxu0 0
  %1069 = vmatmul.mubr.bf16.gmra.mrb[0].mxu0 %v558
  %v1070 = vpop.f32.mrb[0].mxu0
  %v1071 = vadd.f32 %v122, %v1070
  %v1072 = vpop.f32.mrb[0].mxu0
  %v1073 = vadd.f32 %v122, %v1072
  %v1074 = vpop.f32.mrb[0].mxu0
  %v1075 = vpop.f32.mrb[0].mxu0
  %1076 = vdwg.mxu0
  %1077 = vmatprep.subr.bf16.mxu0 %v431
  %1078 = vmatpush1.bf16.msra.mxu0 %v430
  %1079 = vmatprep.subr.bf16.mxu0 %v622
  %1080 = vmatpush1.bf16.msra.mxu0 %v619
  %1081 = vmatprep.subr.bf16.mxu0 0
  %1082 = vmatpush1.bf16.msra.mxu0 0
  %1083 = vmatprep.subr.bf16.mxu0 0
  %1084 = vmatpush1.bf16.msra.mxu0 0
  %1085 = vmatprep.subr.bf16.mxu0 0
  %1086 = vmatpush1.bf16.msra.mxu0 0
  %1087 = vmatprep.subr.bf16.mxu0 0
  %1088 = vmatpush1.bf16.msra.mxu0 0
  %1089 = vmatprep.subr.bf16.mxu0 0
  %1090 = vmatpush1.bf16.msra.mxu0 0
  %1091 = vmatprep.subr.bf16.mxu0 0
  %1092 = vmatpush1.bf16.msra.mxu0 0
  %1093 = vmatprep.subr.bf16.mxu0 0
  %1094 = vmatpush1.bf16.msra.mxu0 0
  %1095 = vmatprep.subr.bf16.mxu0 0
  %1096 = vmatpush1.bf16.msra.mxu0 0
  %1097 = vmatprep.subr.bf16.mxu0 0
  %1098 = vmatpush1.bf16.msra.mxu0 0
  %1099 = vmatprep.subr.bf16.mxu0 0
  %1100 = vmatpush1.bf16.msra.mxu0 0
  %1101 = vmatprep.subr.bf16.mxu0 0
  %1102 = vmatpush1.bf16.msra.mxu0 0
  %1103 = vmatprep.subr.bf16.mxu0 0
  %1104 = vmatpush1.bf16.msra.mxu0 0
  %1105 = vmatprep.subr.bf16.mxu0 0
  %1106 = vmatpush1.bf16.msra.mxu0 0
  %1107 = vmatprep.subr.bf16.mxu0 0
  %1108 = vmatpush1.bf16.msra.mxu0 0
  %1109 = vmatprep.mubr.bf16.mxu0 0
  %1110 = vmatmul.mubr.bf16.gmra.mrb[0].mxu0 %v558
  %v1111 = vpop.f32.mrb[0].mxu0
  %v1112 = vadd.f32 %v122, %v1111
  %v1113 = vpop.f32.mrb[0].mxu0
  %v1114 = vadd.f32 %v122, %v1113
  %v1115 = vpop.f32.mrb[0].mxu0
  %v1116 = vpop.f32.mrb[0].mxu0
  %1117 = vdwg.mxu0
  %1118 = vmatprep.subr.bf16.mxu0 %v433
  %1119 = vmatpush1.bf16.msra.mxu0 %v432
  %1120 = vmatprep.subr.bf16.mxu0 %v628
  %1121 = vmatpush1.bf16.msra.mxu0 %v625
  %1122 = vmatprep.subr.bf16.mxu0 0
  %1123 = vmatpush1.bf16.msra.mxu0 0
  %1124 = vmatprep.subr.bf16.mxu0 0
  %1125 = vmatpush1.bf16.msra.mxu0 0
  %1126 = vmatprep.subr.bf16.mxu0 0
  %1127 = vmatpush1.bf16.msra.mxu0 0
  %1128 = vmatprep.subr.bf16.mxu0 0
  %1129 = vmatpush1.bf16.msra.mxu0 0
  %1130 = vmatprep.subr.bf16.mxu0 0
  %1131 = vmatpush1.bf16.msra.mxu0 0
  %1132 = vmatprep.subr.bf16.mxu0 0
  %1133 = vmatpush1.bf16.msra.mxu0 0
  %1134 = vmatprep.subr.bf16.mxu0 0
  %1135 = vmatpush1.bf16.msra.mxu0 0
  %1136 = vmatprep.subr.bf16.mxu0 0
  %1137 = vmatpush1.bf16.msra.mxu0 0
  %1138 = vmatprep.subr.bf16.mxu0 0
  %1139 = vmatpush1.bf16.msra.mxu0 0
  %1140 = vmatprep.subr.bf16.mxu0 0
  %1141 = vmatpush1.bf16.msra.mxu0 0
  %1142 = vmatprep.subr.bf16.mxu0 0
  %1143 = vmatpush1.bf16.msra.mxu0 0
  %1144 = vmatprep.subr.bf16.mxu0 0
  %1145 = vmatpush1.bf16.msra.mxu0 0
  %1146 = vmatprep.subr.bf16.mxu0 0
  %1147 = vmatpush1.bf16.msra.mxu0 0
  %1148 = vmatprep.subr.bf16.mxu0 0
  %1149 = vmatpush1.bf16.msra.mxu0 0
  %1150 = vmatprep.mubr.bf16.mxu0 0
  %1151 = vmatmul.mubr.bf16.gmra.mrb[0].mxu0 %v558
  %v1152 = vpop.f32.mrb[0].mxu0
  %v1153 = vadd.f32 %v122, %v1152
  %v1154 = vpop.f32.mrb[0].mxu0
  %v1155 = vadd.f32 %v122, %v1154
  %v1156 = vpop.f32.mrb[0].mxu0
  %v1157 = vpop.f32.mrb[0].mxu0
  %1158 = vdwg.mxu0
  %1159 = vmatprep.subr.bf16.mxu0 %v435
  %1160 = vmatpush1.bf16.msra.mxu0 %v434
  %1161 = vmatprep.subr.bf16.mxu0 %v634
  %1162 = vmatpush1.bf16.msra.mxu0 %v631
  %1163 = vmatprep.subr.bf16.mxu0 0
  %1164 = vmatpush1.bf16.msra.mxu0 0
  %1165 = vmatprep.subr.bf16.mxu0 0
  %1166 = vmatpush1.bf16.msra.mxu0 0
  %1167 = vmatprep.subr.bf16.mxu0 0
  %1168 = vmatpush1.bf16.msra.mxu0 0
  %1169 = vmatprep.subr.bf16.mxu0 0
  %1170 = vmatpush1.bf16.msra.mxu0 0
  %1171 = vmatprep.subr.bf16.mxu0 0
  %1172 = vmatpush1.bf16.msra.mxu0 0
  %1173 = vmatprep.subr.bf16.mxu0 0
  %1174 = vmatpush1.bf16.msra.mxu0 0
  %1175 = vmatprep.subr.bf16.mxu0 0
  %1176 = vmatpush1.bf16.msra.mxu0 0
  %1177 = vmatprep.subr.bf16.mxu0 0
  %1178 = vmatpush1.bf16.msra.mxu0 0
  %1179 = vmatprep.subr.bf16.mxu0 0
  %1180 = vmatpush1.bf16.msra.mxu0 0
  %1181 = vmatprep.subr.bf16.mxu0 0
  %1182 = vmatpush1.bf16.msra.mxu0 0
  %1183 = vmatprep.subr.bf16.mxu0 0
  %1184 = vmatpush1.bf16.msra.mxu0 0
  %1185 = vmatprep.subr.bf16.mxu0 0
  %1186 = vmatpush1.bf16.msra.mxu0 0
  %1187 = vmatprep.subr.bf16.mxu0 0
  %1188 = vmatpush1.bf16.msra.mxu0 0
  %1189 = vmatprep.subr.bf16.mxu0 0
  %1190 = vmatpush1.bf16.msra.mxu0 0
  %1191 = vmatprep.mubr.bf16.mxu0 0
  %1192 = vmatmul.mubr.bf16.gmra.mrb[0].mxu0 %v558
  %v1193 = vpop.f32.mrb[0].mxu0
  %v1194 = vadd.f32 %v122, %v1193
  %v1195 = vpop.f32.mrb[0].mxu0
  %v1196 = vadd.f32 %v122, %v1195
  %v1197 = vpop.f32.mrb[0].mxu0
  %v1198 = vpop.f32.mrb[0].mxu0
  %1199 = vdwg.mxu0
  %1200 = vmatprep.subr.bf16.mxu0 %v437
  %1201 = vmatpush1.bf16.msra.mxu0 %v436
  %1202 = vmatprep.subr.bf16.mxu0 %v640
  %1203 = vmatpush1.bf16.msra.mxu0 %v637
  %1204 = vmatprep.subr.bf16.mxu0 0
  %1205 = vmatpush1.bf16.msra.mxu0 0
  %1206 = vmatprep.subr.bf16.mxu0 0
  %1207 = vmatpush1.bf16.msra.mxu0 0
  %1208 = vmatprep.subr.bf16.mxu0 0
  %1209 = vmatpush1.bf16.msra.mxu0 0
  %1210 = vmatprep.subr.bf16.mxu0 0
  %1211 = vmatpush1.bf16.msra.mxu0 0
  %1212 = vmatprep.subr.bf16.mxu0 0
  %1213 = vmatpush1.bf16.msra.mxu0 0
  %1214 = vmatprep.subr.bf16.mxu0 0
  %1215 = vmatpush1.bf16.msra.mxu0 0
  %1216 = vmatprep.subr.bf16.mxu0 0
  %1217 = vmatpush1.bf16.msra.mxu0 0
  %1218 = vmatprep.subr.bf16.mxu0 0
  %1219 = vmatpush1.bf16.msra.mxu0 0
  %1220 = vmatprep.subr.bf16.mxu0 0
  %1221 = vmatpush1.bf16.msra.mxu0 0
  %1222 = vmatprep.subr.bf16.mxu0 0
  %1223 = vmatpush1.bf16.msra.mxu0 0
  %1224 = vmatprep.subr.bf16.mxu0 0
  %1225 = vmatpush1.bf16.msra.mxu0 0
  %1226 = vmatprep.subr.bf16.mxu0 0
  %1227 = vmatpush1.bf16.msra.mxu0 0
  %1228 = vmatprep.subr.bf16.mxu0 0
  %1229 = vmatpush1.bf16.msra.mxu0 0
  %1230 = vmatprep.subr.bf16.mxu0 0
  %1231 = vmatpush1.bf16.msra.mxu0 0
  %1232 = vmatprep.mubr.bf16.mxu0 0
  %1233 = vmatmul.mubr.bf16.gmra.mrb[0].mxu0 %v558
  %v1234 = vpop.f32.mrb[0].mxu0
  %v1235 = vadd.f32 %v122, %v1234
  %v1236 = vpop.f32.mrb[0].mxu0
  %v1237 = vadd.f32 %v122, %v1236
  %v1238 = vpop.f32.mrb[0].mxu0
  %v1239 = vpop.f32.mrb[0].mxu0
  %1240 = vdwg.mxu0
  %1241 = vmatprep.subr.bf16.mxu0 %v439
  %1242 = vmatpush1.bf16.msra.mxu0 %v438
  %1243 = vmatprep.subr.bf16.mxu0 %v646
  %1244 = vmatpush1.bf16.msra.mxu0 %v643
  %1245 = vmatprep.subr.bf16.mxu0 0
  %1246 = vmatpush1.bf16.msra.mxu0 0
  %1247 = vmatprep.subr.bf16.mxu0 0
  %1248 = vmatpush1.bf16.msra.mxu0 0
  %1249 = vmatprep.subr.bf16.mxu0 0
  %1250 = vmatpush1.bf16.msra.mxu0 0
  %1251 = vmatprep.subr.bf16.mxu0 0
  %1252 = vmatpush1.bf16.msra.mxu0 0
  %1253 = vmatprep.subr.bf16.mxu0 0
  %1254 = vmatpush1.bf16.msra.mxu0 0
  %1255 = vmatprep.subr.bf16.mxu0 0
  %1256 = vmatpush1.bf16.msra.mxu0 0
  %1257 = vmatprep.subr.bf16.mxu0 0
  %1258 = vmatpush1.bf16.msra.mxu0 0
  %1259 = vmatprep.subr.bf16.mxu0 0
  %1260 = vmatpush1.bf16.msra.mxu0 0
  %1261 = vmatprep.subr.bf16.mxu0 0
  %1262 = vmatpush1.bf16.msra.mxu0 0
  %1263 = vmatprep.subr.bf16.mxu0 0
  %1264 = vmatpush1.bf16.msra.mxu0 0
  %1265 = vmatprep.subr.bf16.mxu0 0
  %1266 = vmatpush1.bf16.msra.mxu0 0
  %1267 = vmatprep.subr.bf16.mxu0 0
  %1268 = vmatpush1.bf16.msra.mxu0 0
  %1269 = vmatprep.subr.bf16.mxu0 0
  %1270 = vmatpush1.bf16.msra.mxu0 0
  %1271 = vmatprep.subr.bf16.mxu0 0
  %1272 = vmatpush1.bf16.msra.mxu0 0
  %1273 = vmatprep.mubr.bf16.mxu0 0
  %1274 = vmatmul.mubr.bf16.gmra.mrb[0].mxu0 %v558
  %v1275 = vpop.f32.mrb[0].mxu0
  %v1276 = vadd.f32 %v122, %v1275
  %v1277 = vpop.f32.mrb[0].mxu0
  %v1278 = vadd.f32 %v122, %v1277
  %v1279 = vpop.f32.mrb[0].mxu0
  %v1280 = vpop.f32.mrb[0].mxu0
  %1281 = vdwg.mxu0
  %1282 = vmatprep.subr.bf16.mxu0 %v441
  %1283 = vmatpush1.bf16.msra.mxu0 %v440
  %1284 = vmatprep.subr.bf16.mxu0 %v652
  %1285 = vmatpush1.bf16.msra.mxu0 %v649
  %1286 = vmatprep.subr.bf16.mxu0 0
  %1287 = vmatpush1.bf16.msra.mxu0 0
  %1288 = vmatprep.subr.bf16.mxu0 0
  %1289 = vmatpush1.bf16.msra.mxu0 0
  %1290 = vmatprep.subr.bf16.mxu0 0
  %1291 = vmatpush1.bf16.msra.mxu0 0
  %1292 = vmatprep.subr.bf16.mxu0 0
  %1293 = vmatpush1.bf16.msra.mxu0 0
  %1294 = vmatprep.subr.bf16.mxu0 0
  %1295 = vmatpush1.bf16.msra.mxu0 0
  %1296 = vmatprep.subr.bf16.mxu0 0
  %1297 = vmatpush1.bf16.msra.mxu0 0
  %1298 = vmatprep.subr.bf16.mxu0 0
  %1299 = vmatpush1.bf16.msra.mxu0 0
  %1300 = vmatprep.subr.bf16.mxu0 0
  %1301 = vmatpush1.bf16.msra.mxu0 0
  %1302 = vmatprep.subr.bf16.mxu0 0
  %1303 = vmatpush1.bf16.msra.mxu0 0
  %1304 = vmatprep.subr.bf16.mxu0 0
  %1305 = vmatpush1.bf16.msra.mxu0 0
  %1306 = vmatprep.subr.bf16.mxu0 0
  %1307 = vmatpush1.bf16.msra.mxu0 0
  %1308 = vmatprep.subr.bf16.mxu0 0
  %1309 = vmatpush1.bf16.msra.mxu0 0
  %1310 = vmatprep.subr.bf16.mxu0 0
  %1311 = vmatpush1.bf16.msra.mxu0 0
  %1312 = vmatprep.subr.bf16.mxu0 0
  %1313 = vmatpush1.bf16.msra.mxu0 0
  %1314 = vmatprep.mubr.bf16.mxu0 0
  %1315 = vmatmul.mubr.bf16.gmra.mrb[0].mxu0 %v558
  %v1316 = vpop.f32.mrb[0].mxu0
  %v1317 = vadd.f32 %v122, %v1316
  %v1318 = vpop.f32.mrb[0].mxu0
  %v1319 = vadd.f32 %v122, %v1318
  %v1320 = vpop.f32.mrb[0].mxu0
  %v1321 = vpop.f32.mrb[0].mxu0
  %1322 = vdwg.mxu0
  %1323 = vmatprep.subr.bf16.mxu0 %v443
  %1324 = vmatpush1.bf16.msra.mxu0 %v442
  %1325 = vmatprep.subr.bf16.mxu0 %v658
  %1326 = vmatpush1.bf16.msra.mxu0 %v655
  %1327 = vmatprep.subr.bf16.mxu0 0
  %1328 = vmatpush1.bf16.msra.mxu0 0
  %1329 = vmatprep.subr.bf16.mxu0 0
  %1330 = vmatpush1.bf16.msra.mxu0 0
  %1331 = vmatprep.subr.bf16.mxu0 0
  %1332 = vmatpush1.bf16.msra.mxu0 0
  %1333 = vmatprep.subr.bf16.mxu0 0
  %1334 = vmatpush1.bf16.msra.mxu0 0
  %1335 = vmatprep.subr.bf16.mxu0 0
  %1336 = vmatpush1.bf16.msra.mxu0 0
  %1337 = vmatprep.subr.bf16.mxu0 0
  %1338 = vmatpush1.bf16.msra.mxu0 0
  %1339 = vmatprep.subr.bf16.mxu0 0
  %1340 = vmatpush1.bf16.msra.mxu0 0
  %1341 = vmatprep.subr.bf16.mxu0 0
  %1342 = vmatpush1.bf16.msra.mxu0 0
  %1343 = vmatprep.subr.bf16.mxu0 0
  %1344 = vmatpush1.bf16.msra.mxu0 0
  %1345 = vmatprep.subr.bf16.mxu0 0
  %1346 = vmatpush1.bf16.msra.mxu0 0
  %1347 = vmatprep.subr.bf16.mxu0 0
  %1348 = vmatpush1.bf16.msra.mxu0 0
  %1349 = vmatprep.subr.bf16.mxu0 0
  %1350 = vmatpush1.bf16.msra.mxu0 0
  %1351 = vmatprep.subr.bf16.mxu0 0
  %1352 = vmatpush1.bf16.msra.mxu0 0
  %1353 = vmatprep.subr.bf16.mxu0 0
  %1354 = vmatpush1.bf16.msra.mxu0 0
  %1355 = vmatprep.mubr.bf16.mxu0 0
  %1356 = vmatmul.mubr.bf16.gmra.mrb[0].mxu0 %v558
  %v1357 = vpop.f32.mrb[0].mxu0
  %v1358 = vadd.f32 %v122, %v1357
  %v1359 = vpop.f32.mrb[0].mxu0
  %v1360 = vadd.f32 %v122, %v1359
  %v1361 = vpop.f32.mrb[0].mxu0
  %v1362 = vpop.f32.mrb[0].mxu0
  %1363 = vdwg.mxu0
  %1364 = vmatprep.subr.bf16.mxu0 %v445
  %1365 = vmatpush1.bf16.msra.mxu0 %v444
  %1366 = vmatprep.subr.bf16.mxu0 %v664
  %1367 = vmatpush1.bf16.msra.mxu0 %v661
  %1368 = vmatprep.subr.bf16.mxu0 0
  %1369 = vmatpush1.bf16.msra.mxu0 0
  %1370 = vmatprep.subr.bf16.mxu0 0
  %1371 = vmatpush1.bf16.msra.mxu0 0
  %1372 = vmatprep.subr.bf16.mxu0 0
  %1373 = vmatpush1.bf16.msra.mxu0 0
  %1374 = vmatprep.subr.bf16.mxu0 0
  %1375 = vmatpush1.bf16.msra.mxu0 0
  %1376 = vmatprep.subr.bf16.mxu0 0
  %1377 = vmatpush1.bf16.msra.mxu0 0
  %1378 = vmatprep.subr.bf16.mxu0 0
  %1379 = vmatpush1.bf16.msra.mxu0 0
  %1380 = vmatprep.subr.bf16.mxu0 0
  %1381 = vmatpush1.bf16.msra.mxu0 0
  %1382 = vmatprep.subr.bf16.mxu0 0
  %1383 = vmatpush1.bf16.msra.mxu0 0
  %1384 = vmatprep.subr.bf16.mxu0 0
  %1385 = vmatpush1.bf16.msra.mxu0 0
  %1386 = vmatprep.subr.bf16.mxu0 0
  %1387 = vmatpush1.bf16.msra.mxu0 0
  %1388 = vmatprep.subr.bf16.mxu0 0
  %1389 = vmatpush1.bf16.msra.mxu0 0
  %1390 = vmatprep.subr.bf16.mxu0 0
  %1391 = vmatpush1.bf16.msra.mxu0 0
  %1392 = vmatprep.subr.bf16.mxu0 0
  %1393 = vmatpush1.bf16.msra.mxu0 0
  %1394 = vmatprep.subr.bf16.mxu0 0
  %1395 = vmatpush1.bf16.msra.mxu0 0
  %1396 = vmatprep.mubr.bf16.mxu0 0
  %1397 = vmatmul.mubr.bf16.gmra.mrb[0].mxu0 %v558
  %v1398 = vpop.f32.mrb[0].mxu0
  %v1399 = vadd.f32 %v122, %v1398
  %v1400 = vpop.f32.mrb[0].mxu0
  %v1401 = vadd.f32 %v122, %v1400
  %v1402 = vpop.f32.mrb[0].mxu0
  %v1403 = vpop.f32.mrb[0].mxu0
  %1404 = vdwg.mxu0
  %1405 = vmatprep.subr.bf16.mxu0 %v447
  %1406 = vmatpush1.bf16.msra.mxu0 %v446
  %1407 = vmatprep.subr.bf16.mxu0 %v670
  %1408 = vmatpush1.bf16.msra.mxu0 %v667
  %1409 = vmatprep.subr.bf16.mxu0 0
  %1410 = vmatpush1.bf16.msra.mxu0 0
  %1411 = vmatprep.subr.bf16.mxu0 0
  %1412 = vmatpush1.bf16.msra.mxu0 0
  %1413 = vmatprep.subr.bf16.mxu0 0
  %1414 = vmatpush1.bf16.msra.mxu0 0
  %1415 = vmatprep.subr.bf16.mxu0 0
  %1416 = vmatpush1.bf16.msra.mxu0 0
  %1417 = vmatprep.subr.bf16.mxu0 0
  %1418 = vmatpush1.bf16.msra.mxu0 0
  %1419 = vmatprep.subr.bf16.mxu0 0
  %1420 = vmatpush1.bf16.msra.mxu0 0
  %1421 = vmatprep.subr.bf16.mxu0 0
  %1422 = vmatpush1.bf16.msra.mxu0 0
  %1423 = vmatprep.subr.bf16.mxu0 0
  %1424 = vmatpush1.bf16.msra.mxu0 0
  %1425 = vmatprep.subr.bf16.mxu0 0
  %1426 = vmatpush1.bf16.msra.mxu0 0
  %1427 = vmatprep.subr.bf16.mxu0 0
  %1428 = vmatpush1.bf16.msra.mxu0 0
  %1429 = vmatprep.subr.bf16.mxu0 0
  %1430 = vmatpush1.bf16.msra.mxu0 0
  %1431 = vmatprep.subr.bf16.mxu0 0
  %1432 = vmatpush1.bf16.msra.mxu0 0
  %1433 = vmatprep.subr.bf16.mxu0 0
  %1434 = vmatpush1.bf16.msra.mxu0 0
  %1435 = vmatprep.subr.bf16.mxu0 0
  %1436 = vmatpush1.bf16.msra.mxu0 0
  %1437 = vmatprep.mubr.bf16.mxu0 0
  %1438 = vmatmul.mubr.bf16.gmra.mrb[0].mxu0 %v558
  %v1439 = vpop.f32.mrb[0].mxu0
  %v1440 = vadd.f32 %v122, %v1439
  %v1441 = vpop.f32.mrb[0].mxu0
  %v1442 = vadd.f32 %v122, %v1441
  %v1443 = vpop.f32.mrb[0].mxu0
  %v1444 = vpop.f32.mrb[0].mxu0
  %1445 = vdwg.mxu0
  %1446 = vmatprep.subr.bf16.mxu0 %v449
  %1447 = vmatpush1.bf16.msra.mxu0 %v448
  %1448 = vmatprep.subr.bf16.mxu0 %v676
  %1449 = vmatpush1.bf16.msra.mxu0 %v673
  %1450 = vmatprep.subr.bf16.mxu0 0
  %1451 = vmatpush1.bf16.msra.mxu0 0
  %1452 = vmatprep.subr.bf16.mxu0 0
  %1453 = vmatpush1.bf16.msra.mxu0 0
  %1454 = vmatprep.subr.bf16.mxu0 0
  %1455 = vmatpush1.bf16.msra.mxu0 0
  %1456 = vmatprep.subr.bf16.mxu0 0
  %1457 = vmatpush1.bf16.msra.mxu0 0
  %1458 = vmatprep.subr.bf16.mxu0 0
  %1459 = vmatpush1.bf16.msra.mxu0 0
  %1460 = vmatprep.subr.bf16.mxu0 0
  %1461 = vmatpush1.bf16.msra.mxu0 0
  %1462 = vmatprep.subr.bf16.mxu0 0
  %1463 = vmatpush1.bf16.msra.mxu0 0
  %1464 = vmatprep.subr.bf16.mxu0 0
  %1465 = vmatpush1.bf16.msra.mxu0 0
  %1466 = vmatprep.subr.bf16.mxu0 0
  %1467 = vmatpush1.bf16.msra.mxu0 0
  %1468 = vmatprep.subr.bf16.mxu0 0
  %1469 = vmatpush1.bf16.msra.mxu0 0
  %1470 = vmatprep.subr.bf16.mxu0 0
  %1471 = vmatpush1.bf16.msra.mxu0 0
  %1472 = vmatprep.subr.bf16.mxu0 0
  %1473 = vmatpush1.bf16.msra.mxu0 0
  %1474 = vmatprep.subr.bf16.mxu0 0
  %1475 = vmatpush1.bf16.msra.mxu0 0
  %1476 = vmatprep.subr.bf16.mxu0 0
  %1477 = vmatpush1.bf16.msra.mxu0 0
  %1478 = vmatprep.mubr.bf16.mxu0 0
  %1479 = vmatmul.mubr.bf16.gmra.mrb[0].mxu0 %v558
  %v1480 = vpop.f32.mrb[0].mxu0
  %v1481 = vadd.f32 %v122, %v1480
  %v1482 = vpop.f32.mrb[0].mxu0
  %v1483 = vadd.f32 %v122, %v1482
  %v1484 = vpop.f32.mrb[0].mxu0
  %v1485 = vpop.f32.mrb[0].mxu0
  %1486 = vdwg.mxu0
  %1487 = vmatprep.subr.bf16.mxu0 %v451
  %1488 = vmatpush1.bf16.msra.mxu0 %v450
  %1489 = vmatprep.subr.bf16.mxu0 %v682
  %1490 = vmatpush1.bf16.msra.mxu0 %v679
  %1491 = vmatprep.subr.bf16.mxu0 0
  %1492 = vmatpush1.bf16.msra.mxu0 0
  %1493 = vmatprep.subr.bf16.mxu0 0
  %1494 = vmatpush1.bf16.msra.mxu0 0
  %1495 = vmatprep.subr.bf16.mxu0 0
  %1496 = vmatpush1.bf16.msra.mxu0 0
  %1497 = vmatprep.subr.bf16.mxu0 0
  %1498 = vmatpush1.bf16.msra.mxu0 0
  %1499 = vmatprep.subr.bf16.mxu0 0
  %1500 = vmatpush1.bf16.msra.mxu0 0
  %1501 = vmatprep.subr.bf16.mxu0 0
  %1502 = vmatpush1.bf16.msra.mxu0 0
  %1503 = vmatprep.subr.bf16.mxu0 0
  %1504 = vmatpush1.bf16.msra.mxu0 0
  %1505 = vmatprep.subr.bf16.mxu0 0
  %1506 = vmatpush1.bf16.msra.mxu0 0
  %1507 = vmatprep.subr.bf16.mxu0 0
  %1508 = vmatpush1.bf16.msra.mxu0 0
  %1509 = vmatprep.subr.bf16.mxu0 0
  %1510 = vmatpush1.bf16.msra.mxu0 0
  %1511 = vmatprep.subr.bf16.mxu0 0
  %1512 = vmatpush1.bf16.msra.mxu0 0
  %1513 = vmatprep.subr.bf16.mxu0 0
  %1514 = vmatpush1.bf16.msra.mxu0 0
  %1515 = vmatprep.subr.bf16.mxu0 0
  %1516 = vmatpush1.bf16.msra.mxu0 0
  %1517 = vmatprep.subr.bf16.mxu0 0
  %1518 = vmatpush1.bf16.msra.mxu0 0
  %1519 = vmatprep.mubr.bf16.mxu0 0
  %1520 = vmatmul.mubr.bf16.gmra.mrb[0].mxu0 %v558
  %v1521 = vpop.f32.mrb[0].mxu0
  %v1522 = vadd.f32 %v122, %v1521
  %v1523 = vpop.f32.mrb[0].mxu0
  %v1524 = vadd.f32 %v122, %v1523
  %v1525 = vpop.f32.mrb[0].mxu0
  %v1526 = vpop.f32.mrb[0].mxu0
  %1527 = vdwg.mxu0
  %1528 = vmatprep.subr.bf16.mxu0 %v453
  %1529 = vmatpush1.bf16.msra.mxu0 %v452
  %1530 = vmatprep.subr.bf16.mxu0 %v688
  %1531 = vmatpush1.bf16.msra.mxu0 %v685
  %1532 = vmatprep.subr.bf16.mxu0 0
  %1533 = vmatpush1.bf16.msra.mxu0 0
  %1534 = vmatprep.subr.bf16.mxu0 0
  %1535 = vmatpush1.bf16.msra.mxu0 0
  %1536 = vmatprep.subr.bf16.mxu0 0
  %1537 = vmatpush1.bf16.msra.mxu0 0
  %1538 = vmatprep.subr.bf16.mxu0 0
  %1539 = vmatpush1.bf16.msra.mxu0 0
  %1540 = vmatprep.subr.bf16.mxu0 0
  %1541 = vmatpush1.bf16.msra.mxu0 0
  %1542 = vmatprep.subr.bf16.mxu0 0
  %1543 = vmatpush1.bf16.msra.mxu0 0
  %1544 = vmatprep.subr.bf16.mxu0 0
  %1545 = vmatpush1.bf16.msra.mxu0 0
  %1546 = vmatprep.subr.bf16.mxu0 0
  %1547 = vmatpush1.bf16.msra.mxu0 0
  %1548 = vmatprep.subr.bf16.mxu0 0
  %1549 = vmatpush1.bf16.msra.mxu0 0
  %1550 = vmatprep.subr.bf16.mxu0 0
  %1551 = vmatpush1.bf16.msra.mxu0 0
  %1552 = vmatprep.subr.bf16.mxu0 0
  %1553 = vmatpush1.bf16.msra.mxu0 0
  %1554 = vmatprep.subr.bf16.mxu0 0
  %1555 = vmatpush1.bf16.msra.mxu0 0
  %1556 = vmatprep.subr.bf16.mxu0 0
  %1557 = vmatpush1.bf16.msra.mxu0 0
  %1558 = vmatprep.subr.bf16.mxu0 0
  %1559 = vmatpush1.bf16.msra.mxu0 0
  %1560 = vmatprep.mubr.bf16.mxu0 0
  %1561 = vmatmul.mubr.bf16.gmra.mrb[0].mxu0 %v558
  %v1562 = vpop.f32.mrb[0].mxu0
  %v1563 = vadd.f32 %v122, %v1562
  %v1564 = vpop.f32.mrb[0].mxu0
  %v1565 = vadd.f32 %v122, %v1564
  %v1566 = vpop.f32.mrb[0].mxu0
  %v1567 = vpop.f32.mrb[0].mxu0
  %1568 = vdwg.mxu0
  %1569 = vmatprep.subr.bf16.mxu0 %v455
  %1570 = vmatpush1.bf16.msra.mxu0 %v454
  %1571 = vmatprep.subr.bf16.mxu0 %v694
  %1572 = vmatpush1.bf16.msra.mxu0 %v691
  %1573 = vmatprep.subr.bf16.mxu0 0
  %1574 = vmatpush1.bf16.msra.mxu0 0
  %1575 = vmatprep.subr.bf16.mxu0 0
  %1576 = vmatpush1.bf16.msra.mxu0 0
  %1577 = vmatprep.subr.bf16.mxu0 0
  %1578 = vmatpush1.bf16.msra.mxu0 0
  %1579 = vmatprep.subr.bf16.mxu0 0
  %1580 = vmatpush1.bf16.msra.mxu0 0
  %1581 = vmatprep.subr.bf16.mxu0 0
  %1582 = vmatpush1.bf16.msra.mxu0 0
  %1583 = vmatprep.subr.bf16.mxu0 0
  %1584 = vmatpush1.bf16.msra.mxu0 0
  %1585 = vmatprep.subr.bf16.mxu0 0
  %1586 = vmatpush1.bf16.msra.mxu0 0
  %1587 = vmatprep.subr.bf16.mxu0 0
  %1588 = vmatpush1.bf16.msra.mxu0 0
  %1589 = vmatprep.subr.bf16.mxu0 0
  %1590 = vmatpush1.bf16.msra.mxu0 0
  %1591 = vmatprep.subr.bf16.mxu0 0
  %1592 = vmatpush1.bf16.msra.mxu0 0
  %1593 = vmatprep.subr.bf16.mxu0 0
  %1594 = vmatpush1.bf16.msra.mxu0 0
  %1595 = vmatprep.subr.bf16.mxu0 0
  %1596 = vmatpush1.bf16.msra.mxu0 0
  %1597 = vmatprep.subr.bf16.mxu0 0
  %1598 = vmatpush1.bf16.msra.mxu0 0
  %1599 = vmatprep.subr.bf16.mxu0 0
  %1600 = vmatpush1.bf16.msra.mxu0 0
  %1601 = vmatprep.mubr.bf16.mxu0 0
  %1602 = vmatmul.mubr.bf16.gmra.mrb[0].mxu0 %v558
  %v1603 = vpop.f32.mrb[0].mxu0
  %v1604 = vadd.f32 %v122, %v1603
  %v1605 = vpop.f32.mrb[0].mxu0
  %v1606 = vadd.f32 %v122, %v1605
  %v1607 = vpop.f32.mrb[0].mxu0
  %v1608 = vpop.f32.mrb[0].mxu0
  %1609 = vdwg.mxu0
  %1610 = vmatprep.subr.bf16.mxu0 %v457
  %1611 = vmatpush1.bf16.msra.mxu0 %v456
  %1612 = vmatprep.subr.bf16.mxu0 %v700
  %1613 = vmatpush1.bf16.msra.mxu0 %v697
  %1614 = vmatprep.subr.bf16.mxu0 0
  %1615 = vmatpush1.bf16.msra.mxu0 0
  %1616 = vmatprep.subr.bf16.mxu0 0
  %1617 = vmatpush1.bf16.msra.mxu0 0
  %1618 = vmatprep.subr.bf16.mxu0 0
  %1619 = vmatpush1.bf16.msra.mxu0 0
  %1620 = vmatprep.subr.bf16.mxu0 0
  %1621 = vmatpush1.bf16.msra.mxu0 0
  %1622 = vmatprep.subr.bf16.mxu0 0
  %1623 = vmatpush1.bf16.msra.mxu0 0
  %1624 = vmatprep.subr.bf16.mxu0 0
  %1625 = vmatpush1.bf16.msra.mxu0 0
  %1626 = vmatprep.subr.bf16.mxu0 0
  %1627 = vmatpush1.bf16.msra.mxu0 0
  %1628 = vmatprep.subr.bf16.mxu0 0
  %1629 = vmatpush1.bf16.msra.mxu0 0
  %1630 = vmatprep.subr.bf16.mxu0 0
  %1631 = vmatpush1.bf16.msra.mxu0 0
  %1632 = vmatprep.subr.bf16.mxu0 0
  %1633 = vmatpush1.bf16.msra.mxu0 0
  %1634 = vmatprep.subr.bf16.mxu0 0
  %1635 = vmatpush1.bf16.msra.mxu0 0
  %1636 = vmatprep.subr.bf16.mxu0 0
  %1637 = vmatpush1.bf16.msra.mxu0 0
  %1638 = vmatprep.subr.bf16.mxu0 0
  %1639 = vmatpush1.bf16.msra.mxu0 0
  %1640 = vmatprep.subr.bf16.mxu0 0
  %1641 = vmatpush1.bf16.msra.mxu0 0
  %1642 = vmatprep.mubr.bf16.mxu0 0
  %1643 = vmatmul.mubr.bf16.gmra.mrb[0].mxu0 %v558
  %v1644 = vpop.f32.mrb[0].mxu0
  %v1645 = vadd.f32 %v122, %v1644
  %v1646 = vpop.f32.mrb[0].mxu0
  %v1647 = vadd.f32 %v122, %v1646
  %v1648 = vpop.f32.mrb[0].mxu0
  %v1649 = vpop.f32.mrb[0].mxu0
  %1650 = vdwg.mxu0
  %1651 = vmatprep.subr.bf16.mxu0 %v459
  %1652 = vmatpush1.bf16.msra.mxu0 %v458
  %1653 = vmatprep.subr.bf16.mxu0 %v706
  %1654 = vmatpush1.bf16.msra.mxu0 %v703
  %1655 = vmatprep.subr.bf16.mxu0 0
  %1656 = vmatpush1.bf16.msra.mxu0 0
  %1657 = vmatprep.subr.bf16.mxu0 0
  %1658 = vmatpush1.bf16.msra.mxu0 0
  %1659 = vmatprep.subr.bf16.mxu0 0
  %1660 = vmatpush1.bf16.msra.mxu0 0
  %1661 = vmatprep.subr.bf16.mxu0 0
  %1662 = vmatpush1.bf16.msra.mxu0 0
  %1663 = vmatprep.subr.bf16.mxu0 0
  %1664 = vmatpush1.bf16.msra.mxu0 0
  %1665 = vmatprep.subr.bf16.mxu0 0
  %1666 = vmatpush1.bf16.msra.mxu0 0
  %1667 = vmatprep.subr.bf16.mxu0 0
  %1668 = vmatpush1.bf16.msra.mxu0 0
  %1669 = vmatprep.subr.bf16.mxu0 0
  %1670 = vmatpush1.bf16.msra.mxu0 0
  %1671 = vmatprep.subr.bf16.mxu0 0
  %1672 = vmatpush1.bf16.msra.mxu0 0
  %1673 = vmatprep.subr.bf16.mxu0 0
  %1674 = vmatpush1.bf16.msra.mxu0 0
  %1675 = vmatprep.subr.bf16.mxu0 0
  %1676 = vmatpush1.bf16.msra.mxu0 0
  %1677 = vmatprep.subr.bf16.mxu0 0
  %1678 = vmatpush1.bf16.msra.mxu0 0
  %1679 = vmatprep.subr.bf16.mxu0 0
  %1680 = vmatpush1.bf16.msra.mxu0 0
  %1681 = vmatprep.subr.bf16.mxu0 0
  %1682 = vmatpush1.bf16.msra.mxu0 0
  %1683 = vmatprep.mubr.bf16.mxu0 0
  %1684 = vmatmul.mubr.bf16.gmra.mrb[0].mxu0 %v558
  %v1685 = vpop.f32.mrb[0].mxu0
  %v1686 = vadd.f32 %v122, %v1685
  %v1687 = vpop.f32.mrb[0].mxu0
  %v1688 = vadd.f32 %v122, %v1687
  %v1689 = vpop.f32.mrb[0].mxu0
  %v1690 = vpop.f32.mrb[0].mxu0
  %1691 = vdwg.mxu0
  %vm1692 = vcmp.gt.f32.partialorder %v743, 0.0
  %vm1693 = vcmp.gt.f32.partialorder %v745, 0.0
  %vm1694 = vcmp.gt.f32.partialorder %v784, 0.0
  %vm1695 = vcmp.gt.f32.partialorder %v786, 0.0
  %vm1696 = vcmp.gt.f32.partialorder %v825, 0.0
  %vm1697 = vcmp.gt.f32.partialorder %v827, 0.0
  %vm1698 = vcmp.gt.f32.partialorder %v866, 0.0
  %vm1699 = vcmp.gt.f32.partialorder %v868, 0.0
  %vm1700 = vcmp.gt.f32.partialorder %v907, 0.0
  %vm1701 = vcmp.gt.f32.partialorder %v909, 0.0
  %vm1702 = vcmp.gt.f32.partialorder %v948, 0.0
  %vm1703 = vcmp.gt.f32.partialorder %v950, 0.0
  %vm1704 = vcmp.gt.f32.partialorder %v989, 0.0
  %vm1705 = vcmp.gt.f32.partialorder %v991, 0.0
  %vm1706 = vcmp.gt.f32.partialorder %v1030, 0.0
  %vm1707 = vcmp.gt.f32.partialorder %v1032, 0.0
  %vm1708 = vcmp.gt.f32.partialorder %v1071, 0.0
  %vm1709 = vcmp.gt.f32.partialorder %v1073, 0.0
  %vm1710 = vcmp.gt.f32.partialorder %v1112, 0.0
  %vm1711 = vcmp.gt.f32.partialorder %v1114, 0.0
  %vm1712 = vcmp.gt.f32.partialorder %v1153, 0.0
  %vm1713 = vcmp.gt.f32.partialorder %v1155, 0.0
  %vm1714 = vcmp.gt.f32.partialorder %v1194, 0.0
  %vm1715 = vcmp.gt.f32.partialorder %v1196, 0.0
  %vm1716 = vcmp.gt.f32.partialorder %v1235, 0.0
  %vm1717 = vcmp.gt.f32.partialorder %v1237, 0.0
  %vm1718 = vcmp.gt.f32.partialorder %v1276, 0.0
  %vm1719 = vcmp.gt.f32.partialorder %v1278, 0.0
  %vm1720 = vcmp.gt.f32.partialorder %v1317, 0.0
  %vm1721 = vcmp.gt.f32.partialorder %v1319, 0.0
  %vm1722 = vcmp.gt.f32.partialorder %v1358, 0.0
  %vm1723 = vcmp.gt.f32.partialorder %v1360, 0.0
  %vm1724 = vcmp.gt.f32.partialorder %v1399, 0.0
  %vm1725 = vcmp.gt.f32.partialorder %v1401, 0.0
  %vm1726 = vcmp.gt.f32.partialorder %v1440, 0.0
  %vm1727 = vcmp.gt.f32.partialorder %v1442, 0.0
  %vm1728 = vcmp.gt.f32.partialorder %v1481, 0.0
  %vm1729 = vcmp.gt.f32.partialorder %v1483, 0.0
  %vm1730 = vcmp.gt.f32.partialorder %v1522, 0.0
  %vm1731 = vcmp.gt.f32.partialorder %v1524, 0.0
  %vm1732 = vcmp.gt.f32.partialorder %v1563, 0.0
  %vm1733 = vcmp.gt.f32.partialorder %v1565, 0.0
  %vm1734 = vcmp.gt.f32.partialorder %v1604, 0.0
  %vm1735 = vcmp.gt.f32.partialorder %v1606, 0.0
  %vm1736 = vcmp.gt.f32.partialorder %v1645, 0.0
  %vm1737 = vcmp.gt.f32.partialorder %v1647, 0.0
  %vm1738 = vcmp.gt.f32.partialorder %v1686, 0.0
  %vm1739 = vcmp.gt.f32.partialorder %v1688, 0.0
  %v1740 = vmul.f32 %v743, 0.01
  %v1741 = vmul.f32 %v745, 0.01
  %v1742 = vmul.f32 %v784, 0.01
  %v1743 = vmul.f32 %v786, 0.01
  %v1744 = vmul.f32 %v825, 0.01
  %v1745 = vmul.f32 %v827, 0.01
  %v1746 = vmul.f32 %v866, 0.01
  %v1747 = vmul.f32 %v868, 0.01
  %v1748 = vmul.f32 %v907, 0.01
  %v1749 = vmul.f32 %v909, 0.01
  %v1750 = vmul.f32 %v948, 0.01
  %v1751 = vmul.f32 %v950, 0.01
  %v1752 = vmul.f32 %v989, 0.01
  %v1753 = vmul.f32 %v991, 0.01
  %v1754 = vmul.f32 %v1030, 0.01
  %v1755 = vmul.f32 %v1032, 0.01
  %v1756 = vmul.f32 %v1071, 0.01
  %v1757 = vmul.f32 %v1073, 0.01
  %v1758 = vmul.f32 %v1112, 0.01
  %v1759 = vmul.f32 %v1114, 0.01
  %v1760 = vmul.f32 %v1153, 0.01
  %v1761 = vmul.f32 %v1155, 0.01
  %v1762 = vmul.f32 %v1194, 0.01
  %v1763 = vmul.f32 %v1196, 0.01
  %v1764 = vmul.f32 %v1235, 0.01
  %v1765 = vmul.f32 %v1237, 0.01
  %v1766 = vmul.f32 %v1276, 0.01
  %v1767 = vmul.f32 %v1278, 0.01
  %v1768 = vmul.f32 %v1317, 0.01
  %v1769 = vmul.f32 %v1319, 0.01
  %v1770 = vmul.f32 %v1358, 0.01
  %v1771 = vmul.f32 %v1360, 0.01
  %v1772 = vmul.f32 %v1399, 0.01
  %v1773 = vmul.f32 %v1401, 0.01
  %v1774 = vmul.f32 %v1440, 0.01
  %v1775 = vmul.f32 %v1442, 0.01
  %v1776 = vmul.f32 %v1481, 0.01
  %v1777 = vmul.f32 %v1483, 0.01
  %v1778 = vmul.f32 %v1522, 0.01
  %v1779 = vmul.f32 %v1524, 0.01
  %v1780 = vmul.f32 %v1563, 0.01
  %v1781 = vmul.f32 %v1565, 0.01
  %v1782 = vmul.f32 %v1604, 0.01
  %v1783 = vmul.f32 %v1606, 0.01
  %v1784 = vmul.f32 %v1645, 0.01
  %v1785 = vmul.f32 %v1647, 0.01
  %v1786 = vmul.f32 %v1686, 0.01
  %v1787 = vmul.f32 %v1688, 0.01
  %v1788 = vsel %vm1692, %v743, %v1740
  %v1789 = vsel %vm1693, %v745, %v1741
  %v1790 = vsel %vm1694, %v784, %v1742
  %v1791 = vsel %vm1695, %v786, %v1743
  %v1792 = vsel %vm1696, %v825, %v1744
  %v1793 = vsel %vm1697, %v827, %v1745
  %v1794 = vsel %vm1698, %v866, %v1746
  %v1795 = vsel %vm1699, %v868, %v1747
  %v1796 = vsel %vm1700, %v907, %v1748
  %v1797 = vsel %vm1701, %v909, %v1749
  %v1798 = vsel %vm1702, %v948, %v1750
  %v1799 = vsel %vm1703, %v950, %v1751
  %v1800 = vsel %vm1704, %v989, %v1752
  %v1801 = vsel %vm1705, %v991, %v1753
  %v1802 = vsel %vm1706, %v1030, %v1754
  %v1803 = vsel %vm1707, %v1032, %v1755
  %v1804 = vsel %vm1708, %v1071, %v1756
  %v1805 = vsel %vm1709, %v1073, %v1757
  %v1806 = vsel %vm1710, %v1112, %v1758
  %v1807 = vsel %vm1711, %v1114, %v1759
  %v1808 = vsel %vm1712, %v1153, %v1760
  %v1809 = vsel %vm1713, %v1155, %v1761
  %v1810 = vsel %vm1714, %v1194, %v1762
  %v1811 = vsel %vm1715, %v1196, %v1763
  %v1812 = vsel %vm1716, %v1235, %v1764
  %v1813 = vsel %vm1717, %v1237, %v1765
  %v1814 = vsel %vm1718, %v1276, %v1766
  %v1815 = vsel %vm1719, %v1278, %v1767
  %v1816 = vsel %vm1720, %v1317, %v1768
  %v1817 = vsel %vm1721, %v1319, %v1769
  %v1818 = vsel %vm1722, %v1358, %v1770
  %v1819 = vsel %vm1723, %v1360, %v1771
  %v1820 = vsel %vm1724, %v1399, %v1772
  %v1821 = vsel %vm1725, %v1401, %v1773
  %v1822 = vsel %vm1726, %v1440, %v1774
  %v1823 = vsel %vm1727, %v1442, %v1775
  %v1824 = vsel %vm1728, %v1481, %v1776
  %v1825 = vsel %vm1729, %v1483, %v1777
  %v1826 = vsel %vm1730, %v1522, %v1778
  %v1827 = vsel %vm1731, %v1524, %v1779
  %v1828 = vsel %vm1732, %v1563, %v1780
  %v1829 = vsel %vm1733, %v1565, %v1781
  %v1830 = vsel %vm1734, %v1604, %v1782
  %v1831 = vsel %vm1735, %v1606, %v1783
  %v1832 = vsel %vm1736, %v1645, %v1784
  %v1833 = vsel %vm1737, %v1647, %v1785
  %v1834 = vsel %vm1738, %v1686, %v1786
  %v1835 = vsel %vm1739, %v1688, %v1787
  %vm1836 = vcmask 1041408
  %v1837 = vsel %vm1836, %v1788, 0.0
  %v1838 = vsel %vm1836, %v1789, 0.0
  %v1839 = vadd.f32 %v1837, %v1838
  %v1840 = vsel %vm1836, %v1790, 0.0
  %v1841 = vadd.f32 %v1839, %v1840
  %v1842 = vsel %vm1836, %v1791, 0.0
  %v1843 = vadd.f32 %v1841, %v1842
  %v1844 = vsel %vm1836, %v1792, 0.0
  %v1845 = vadd.f32 %v1843, %v1844
  %v1846 = vsel %vm1836, %v1793, 0.0
  %v1847 = vadd.f32 %v1845, %v1846
  %v1848 = vsel %vm1836, %v1794, 0.0
  %v1849 = vadd.f32 %v1847, %v1848
  %v1850 = vsel %vm1836, %v1795, 0.0
  %v1851 = vadd.f32 %v1849, %v1850
  %v1852 = vsel %vm1836, %v1796, 0.0
  %v1853 = vadd.f32 %v1851, %v1852
  %v1854 = vsel %vm1836, %v1797, 0.0
  %v1855 = vadd.f32 %v1853, %v1854
  %v1856 = vsel %vm1836, %v1798, 0.0
  %v1857 = vadd.f32 %v1855, %v1856
  %v1858 = vsel %vm1836, %v1799, 0.0
  %v1859 = vadd.f32 %v1857, %v1858
  %v1860 = vsel %vm1836, %v1800, 0.0
  %v1861 = vadd.f32 %v1859, %v1860
  %v1862 = vsel %vm1836, %v1801, 0.0
  %v1863 = vadd.f32 %v1861, %v1862
  %v1864 = vsel %vm1836, %v1802, 0.0
  %v1865 = vadd.f32 %v1863, %v1864
  %v1866 = vsel %vm1836, %v1803, 0.0
  %v1867 = vadd.f32 %v1865, %v1866
  %v1868 = vsel %vm1836, %v1804, 0.0
  %v1869 = vadd.f32 %v1867, %v1868
  %v1870 = vsel %vm1836, %v1805, 0.0
  %v1871 = vadd.f32 %v1869, %v1870
  %v1872 = vsel %vm1836, %v1806, 0.0
  %v1873 = vadd.f32 %v1871, %v1872
  %v1874 = vsel %vm1836, %v1807, 0.0
  %v1875 = vadd.f32 %v1873, %v1874
  %v1876 = vsel %vm1836, %v1808, 0.0
  %v1877 = vadd.f32 %v1875, %v1876
  %v1878 = vsel %vm1836, %v1809, 0.0
  %v1879 = vadd.f32 %v1877, %v1878
  %v1880 = vsel %vm1836, %v1810, 0.0
  %v1881 = vadd.f32 %v1879, %v1880
  %v1882 = vsel %vm1836, %v1811, 0.0
  %v1883 = vadd.f32 %v1881, %v1882
  %v1884 = vsel %vm1836, %v1812, 0.0
  %v1885 = vadd.f32 %v1883, %v1884
  %v1886 = vsel %vm1836, %v1813, 0.0
  %v1887 = vadd.f32 %v1885, %v1886
  %v1888 = vsel %vm1836, %v1814, 0.0
  %v1889 = vadd.f32 %v1887, %v1888
  %v1890 = vsel %vm1836, %v1815, 0.0
  %v1891 = vadd.f32 %v1889, %v1890
  %v1892 = vsel %vm1836, %v1816, 0.0
  %v1893 = vadd.f32 %v1891, %v1892
  %v1894 = vsel %vm1836, %v1817, 0.0
  %v1895 = vadd.f32 %v1893, %v1894
  %v1896 = vsel %vm1836, %v1818, 0.0
  %v1897 = vadd.f32 %v1895, %v1896
  %v1898 = vsel %vm1836, %v1819, 0.0
  %v1899 = vadd.f32 %v1897, %v1898
  %v1900 = vsel %vm1836, %v1820, 0.0
  %v1901 = vadd.f32 %v1899, %v1900
  %v1902 = vsel %vm1836, %v1821, 0.0
  %v1903 = vadd.f32 %v1901, %v1902
  %v1904 = vsel %vm1836, %v1822, 0.0
  %v1905 = vadd.f32 %v1903, %v1904
  %v1906 = vsel %vm1836, %v1823, 0.0
  %v1907 = vadd.f32 %v1905, %v1906
  %v1908 = vsel %vm1836, %v1824, 0.0
  %v1909 = vadd.f32 %v1907, %v1908
  %v1910 = vsel %vm1836, %v1825, 0.0
  %v1911 = vadd.f32 %v1909, %v1910
  %v1912 = vsel %vm1836, %v1826, 0.0
  %v1913 = vadd.f32 %v1911, %v1912
  %v1914 = vsel %vm1836, %v1827, 0.0
  %v1915 = vadd.f32 %v1913, %v1914
  %v1916 = vsel %vm1836, %v1828, 0.0
  %v1917 = vadd.f32 %v1915, %v1916
  %v1918 = vsel %vm1836, %v1829, 0.0
  %v1919 = vadd.f32 %v1917, %v1918
  %v1920 = vsel %vm1836, %v1830, 0.0
  %v1921 = vadd.f32 %v1919, %v1920
  %v1922 = vsel %vm1836, %v1831, 0.0
  %v1923 = vadd.f32 %v1921, %v1922
  %v1924 = vsel %vm1836, %v1832, 0.0
  %v1925 = vadd.f32 %v1923, %v1924
  %v1926 = vsel %vm1836, %v1833, 0.0
  %v1927 = vadd.f32 %v1925, %v1926
  %v1928 = vsel %vm1836, %v1834, 0.0
  %v1929 = vadd.f32 %v1927, %v1928
  %v1930 = vsel %vm1836, %v1835, 0.0
  %v1931 = vadd.f32 %v1929, %v1930
  %1932 = vadd.xlane.f32.xlu0 %v1931
  %v1933 = vpop.xlane.xlu0 %1932
  %v1934 = vrcp.pop 6144.0
  %v1935 = vmul.f32 %v1933, %v1934
  %v1936 = vsub.f32 %v1788, %v1935
  %v1937 = vsub.f32 %v1789, %v1935
  %v1938 = vsub.f32 %v1790, %v1935
  %v1939 = vsub.f32 %v1791, %v1935
  %v1940 = vsub.f32 %v1792, %v1935
  %v1941 = vsub.f32 %v1793, %v1935
  %v1942 = vsub.f32 %v1794, %v1935
  %v1943 = vsub.f32 %v1795, %v1935
  %v1944 = vsub.f32 %v1796, %v1935
  %v1945 = vsub.f32 %v1797, %v1935
  %v1946 = vsub.f32 %v1798, %v1935
  %v1947 = vsub.f32 %v1799, %v1935
  %v1948 = vsub.f32 %v1800, %v1935
  %v1949 = vsub.f32 %v1801, %v1935
  %v1950 = vsub.f32 %v1802, %v1935
  %v1951 = vsub.f32 %v1803, %v1935
  %v1952 = vsub.f32 %v1804, %v1935
  %v1953 = vsub.f32 %v1805, %v1935
  %v1954 = vsub.f32 %v1806, %v1935
  %v1955 = vsub.f32 %v1807, %v1935
  %v1956 = vsub.f32 %v1808, %v1935
  %v1957 = vsub.f32 %v1809, %v1935
  %v1958 = vsub.f32 %v1810, %v1935
  %v1959 = vsub.f32 %v1811, %v1935
  %v1960 = vsub.f32 %v1812, %v1935
  %v1961 = vsub.f32 %v1813, %v1935
  %v1962 = vsub.f32 %v1814, %v1935
  %v1963 = vsub.f32 %v1815, %v1935
  %v1964 = vsub.f32 %v1816, %v1935
  %v1965 = vsub.f32 %v1817, %v1935
  %v1966 = vsub.f32 %v1818, %v1935
  %v1967 = vsub.f32 %v1819, %v1935
  %v1968 = vsub.f32 %v1820, %v1935
  %v1969 = vsub.f32 %v1821, %v1935
  %v1970 = vsub.f32 %v1822, %v1935
  %v1971 = vsub.f32 %v1823, %v1935
  %v1972 = vsub.f32 %v1824, %v1935
  %v1973 = vsub.f32 %v1825, %v1935
  %v1974 = vsub.f32 %v1826, %v1935
  %v1975 = vsub.f32 %v1827, %v1935
  %v1976 = vsub.f32 %v1828, %v1935
  %v1977 = vsub.f32 %v1829, %v1935
  %v1978 = vsub.f32 %v1830, %v1935
  %v1979 = vsub.f32 %v1831, %v1935
  %v1980 = vsub.f32 %v1832, %v1935
  %v1981 = vsub.f32 %v1833, %v1935
  %v1982 = vsub.f32 %v1834, %v1935
  %v1983 = vsub.f32 %v1835, %v1935
  %v1984 = vmul.f32 %v1936, %v1936
  %v1985 = vmul.f32 %v1937, %v1937
  %v1986 = vmul.f32 %v1938, %v1938
  %v1987 = vmul.f32 %v1939, %v1939
  %v1988 = vmul.f32 %v1940, %v1940
  %v1989 = vmul.f32 %v1941, %v1941
  %v1990 = vmul.f32 %v1942, %v1942
  %v1991 = vmul.f32 %v1943, %v1943
  %v1992 = vmul.f32 %v1944, %v1944
  %v1993 = vmul.f32 %v1945, %v1945
  %v1994 = vmul.f32 %v1946, %v1946
  %v1995 = vmul.f32 %v1947, %v1947
  %v1996 = vmul.f32 %v1948, %v1948
  %v1997 = vmul.f32 %v1949, %v1949
  %v1998 = vmul.f32 %v1950, %v1950
  %v1999 = vmul.f32 %v1951, %v1951
  %v2000 = vmul.f32 %v1952, %v1952
  %v2001 = vmul.f32 %v1953, %v1953
  %v2002 = vmul.f32 %v1954, %v1954
  %v2003 = vmul.f32 %v1955, %v1955
  %v2004 = vmul.f32 %v1956, %v1956
  %v2005 = vmul.f32 %v1957, %v1957
  %v2006 = vmul.f32 %v1958, %v1958
  %v2007 = vmul.f32 %v1959, %v1959
  %v2008 = vmul.f32 %v1960, %v1960
  %v2009 = vmul.f32 %v1961, %v1961
  %v2010 = vmul.f32 %v1962, %v1962
  %v2011 = vmul.f32 %v1963, %v1963
  %v2012 = vmul.f32 %v1964, %v1964
  %v2013 = vmul.f32 %v1965, %v1965
  %v2014 = vmul.f32 %v1966, %v1966
  %v2015 = vmul.f32 %v1967, %v1967
  %v2016 = vmul.f32 %v1968, %v1968
  %v2017 = vmul.f32 %v1969, %v1969
  %v2018 = vmul.f32 %v1970, %v1970
  %v2019 = vmul.f32 %v1971, %v1971
  %v2020 = vmul.f32 %v1972, %v1972
  %v2021 = vmul.f32 %v1973, %v1973
  %v2022 = vmul.f32 %v1974, %v1974
  %v2023 = vmul.f32 %v1975, %v1975
  %v2024 = vmul.f32 %v1976, %v1976
  %v2025 = vmul.f32 %v1977, %v1977
  %v2026 = vmul.f32 %v1978, %v1978
  %v2027 = vmul.f32 %v1979, %v1979
  %v2028 = vmul.f32 %v1980, %v1980
  %v2029 = vmul.f32 %v1981, %v1981
  %v2030 = vmul.f32 %v1982, %v1982
  %v2031 = vmul.f32 %v1983, %v1983
  %v2032 = vsel %vm1836, %v1984, 0.0
  %v2033 = vsel %vm1836, %v1985, 0.0
  %v2034 = vadd.f32 %v2032, %v2033
  %v2035 = vsel %vm1836, %v1986, 0.0
  %v2036 = vadd.f32 %v2034, %v2035
  %v2037 = vsel %vm1836, %v1987, 0.0
  %v2038 = vadd.f32 %v2036, %v2037
  %v2039 = vsel %vm1836, %v1988, 0.0
  %v2040 = vadd.f32 %v2038, %v2039
  %v2041 = vsel %vm1836, %v1989, 0.0
  %v2042 = vadd.f32 %v2040, %v2041
  %v2043 = vsel %vm1836, %v1990, 0.0
  %v2044 = vadd.f32 %v2042, %v2043
  %v2045 = vsel %vm1836, %v1991, 0.0
  %v2046 = vadd.f32 %v2044, %v2045
  %v2047 = vsel %vm1836, %v1992, 0.0
  %v2048 = vadd.f32 %v2046, %v2047
  %v2049 = vsel %vm1836, %v1993, 0.0
  %v2050 = vadd.f32 %v2048, %v2049
  %v2051 = vsel %vm1836, %v1994, 0.0
  %v2052 = vadd.f32 %v2050, %v2051
  %v2053 = vsel %vm1836, %v1995, 0.0
  %v2054 = vadd.f32 %v2052, %v2053
  %v2055 = vsel %vm1836, %v1996, 0.0
  %v2056 = vadd.f32 %v2054, %v2055
  %v2057 = vsel %vm1836, %v1997, 0.0
  %v2058 = vadd.f32 %v2056, %v2057
  %v2059 = vsel %vm1836, %v1998, 0.0
  %v2060 = vadd.f32 %v2058, %v2059
  %v2061 = vsel %vm1836, %v1999, 0.0
  %v2062 = vadd.f32 %v2060, %v2061
  %v2063 = vsel %vm1836, %v2000, 0.0
  %v2064 = vadd.f32 %v2062, %v2063
  %v2065 = vsel %vm1836, %v2001, 0.0
  %v2066 = vadd.f32 %v2064, %v2065
  %v2067 = vsel %vm1836, %v2002, 0.0
  %v2068 = vadd.f32 %v2066, %v2067
  %v2069 = vsel %vm1836, %v2003, 0.0
  %v2070 = vadd.f32 %v2068, %v2069
  %v2071 = vsel %vm1836, %v2004, 0.0
  %v2072 = vadd.f32 %v2070, %v2071
  %v2073 = vsel %vm1836, %v2005, 0.0
  %v2074 = vadd.f32 %v2072, %v2073
  %v2075 = vsel %vm1836, %v2006, 0.0
  %v2076 = vadd.f32 %v2074, %v2075
  %v2077 = vsel %vm1836, %v2007, 0.0
  %v2078 = vadd.f32 %v2076, %v2077
  %v2079 = vsel %vm1836, %v2008, 0.0
  %v2080 = vadd.f32 %v2078, %v2079
  %v2081 = vsel %vm1836, %v2009, 0.0
  %v2082 = vadd.f32 %v2080, %v2081
  %v2083 = vsel %vm1836, %v2010, 0.0
  %v2084 = vadd.f32 %v2082, %v2083
  %v2085 = vsel %vm1836, %v2011, 0.0
  %v2086 = vadd.f32 %v2084, %v2085
  %v2087 = vsel %vm1836, %v2012, 0.0
  %v2088 = vadd.f32 %v2086, %v2087
  %v2089 = vsel %vm1836, %v2013, 0.0
  %v2090 = vadd.f32 %v2088, %v2089
  %v2091 = vsel %vm1836, %v2014, 0.0
  %v2092 = vadd.f32 %v2090, %v2091
  %v2093 = vsel %vm1836, %v2015, 0.0
  %v2094 = vadd.f32 %v2092, %v2093
  %v2095 = vsel %vm1836, %v2016, 0.0
  %v2096 = vadd.f32 %v2094, %v2095
  %v2097 = vsel %vm1836, %v2017, 0.0
  %v2098 = vadd.f32 %v2096, %v2097
  %v2099 = vsel %vm1836, %v2018, 0.0
  %v2100 = vadd.f32 %v2098, %v2099
  %v2101 = vsel %vm1836, %v2019, 0.0
  %v2102 = vadd.f32 %v2100, %v2101
  %v2103 = vsel %vm1836, %v2020, 0.0
  %v2104 = vadd.f32 %v2102, %v2103
  %v2105 = vsel %vm1836, %v2021, 0.0
  %v2106 = vadd.f32 %v2104, %v2105
  %v2107 = vsel %vm1836, %v2022, 0.0
  %v2108 = vadd.f32 %v2106, %v2107
  %v2109 = vsel %vm1836, %v2023, 0.0
  %v2110 = vadd.f32 %v2108, %v2109
  %v2111 = vsel %vm1836, %v2024, 0.0
  %v2112 = vadd.f32 %v2110, %v2111
  %v2113 = vsel %vm1836, %v2025, 0.0
  %v2114 = vadd.f32 %v2112, %v2113
  %v2115 = vsel %vm1836, %v2026, 0.0
  %v2116 = vadd.f32 %v2114, %v2115
  %v2117 = vsel %vm1836, %v2027, 0.0
  %v2118 = vadd.f32 %v2116, %v2117
  %v2119 = vsel %vm1836, %v2028, 0.0
  %v2120 = vadd.f32 %v2118, %v2119
  %v2121 = vsel %vm1836, %v2029, 0.0
  %v2122 = vadd.f32 %v2120, %v2121
  %v2123 = vsel %vm1836, %v2030, 0.0
  %v2124 = vadd.f32 %v2122, %v2123
  %v2125 = vsel %vm1836, %v2031, 0.0
  %v2126 = vadd.f32 %v2124, %v2125
  %2127 = vadd.xlane.f32.xlu0 %v2126
  %v2128 = vpop.xlane.xlu0 %2127
  %v2129 = vmul.f32 %v2128, %v1934
  %v2130 = vadd.f32 %v2129, 1e-05
  %v2131 = vrsqrt.pop %v2130
  %v2132 = vmul.f32 %v1936, %v2131
  %v2133 = vmul.f32 %v1937, %v2131
  %v2134 = vmul.f32 %v1938, %v2131
  %v2135 = vmul.f32 %v1939, %v2131
  %v2136 = vmul.f32 %v1940, %v2131
  %v2137 = vmul.f32 %v1941, %v2131
  %v2138 = vmul.f32 %v1942, %v2131
  %v2139 = vmul.f32 %v1943, %v2131
  %v2140 = vmul.f32 %v1944, %v2131
  %v2141 = vmul.f32 %v1945, %v2131
  %v2142 = vmul.f32 %v1946, %v2131
  %v2143 = vmul.f32 %v1947, %v2131
  %v2144 = vmul.f32 %v1948, %v2131
  %v2145 = vmul.f32 %v1949, %v2131
  %v2146 = vmul.f32 %v1950, %v2131
  %v2147 = vmul.f32 %v1951, %v2131
  %v2148 = vmul.f32 %v1952, %v2131
  %v2149 = vmul.f32 %v1953, %v2131
  %v2150 = vmul.f32 %v1954, %v2131
  %v2151 = vmul.f32 %v1955, %v2131
  %v2152 = vmul.f32 %v1956, %v2131
  %v2153 = vmul.f32 %v1957, %v2131
  %v2154 = vmul.f32 %v1958, %v2131
  %v2155 = vmul.f32 %v1959, %v2131
  %v2156 = vmul.f32 %v1960, %v2131
  %v2157 = vmul.f32 %v1961, %v2131
  %v2158 = vmul.f32 %v1962, %v2131
  %v2159 = vmul.f32 %v1963, %v2131
  %v2160 = vmul.f32 %v1964, %v2131
  %v2161 = vmul.f32 %v1965, %v2131
  %v2162 = vmul.f32 %v1966, %v2131
  %v2163 = vmul.f32 %v1967, %v2131
  %v2164 = vmul.f32 %v1968, %v2131
  %v2165 = vmul.f32 %v1969, %v2131
  %v2166 = vmul.f32 %v1970, %v2131
  %v2167 = vmul.f32 %v1971, %v2131
  %v2168 = vmul.f32 %v1972, %v2131
  %v2169 = vmul.f32 %v1973, %v2131
  %v2170 = vmul.f32 %v1974, %v2131
  %v2171 = vmul.f32 %v1975, %v2131
  %v2172 = vmul.f32 %v1976, %v2131
  %v2173 = vmul.f32 %v1977, %v2131
  %v2174 = vmul.f32 %v1978, %v2131
  %v2175 = vmul.f32 %v1979, %v2131
  %v2176 = vmul.f32 %v1980, %v2131
  %v2177 = vmul.f32 %v1981, %v2131
  %v2178 = vmul.f32 %v1982, %v2131
  %v2179 = vmul.f32 %v1983, %v2131
  %v2180 = vld [vmem:[%s3] sm:$0x3]
  %2182 = vset.pattern.permute.xlu0 0
  %2183 = vperm.xlu0 %2182, %v2180
  %v2184 = vpop.permute.xlu0 %2183
  %v2186 = vmul.f32 %v2132, %v2184
  %v2187 = vmul.f32 %v2133, %v2184
  %v2188 = vmul.f32 %v2134, %v2184
  %v2189 = vmul.f32 %v2135, %v2184
  %v2190 = vmul.f32 %v2136, %v2184
  %v2191 = vmul.f32 %v2137, %v2184
  %v2192 = vmul.f32 %v2138, %v2184
  %v2193 = vmul.f32 %v2139, %v2184
  %v2194 = vmul.f32 %v2140, %v2184
  %v2195 = vmul.f32 %v2141, %v2184
  %v2196 = vmul.f32 %v2142, %v2184
  %v2197 = vmul.f32 %v2143, %v2184
  %v2198 = vmul.f32 %v2144, %v2184
  %v2199 = vmul.f32 %v2145, %v2184
  %v2200 = vmul.f32 %v2146, %v2184
  %v2201 = vmul.f32 %v2147, %v2184
  %v2202 = vmul.f32 %v2148, %v2184
  %v2203 = vmul.f32 %v2149, %v2184
  %v2204 = vmul.f32 %v2150, %v2184
  %v2205 = vmul.f32 %v2151, %v2184
  %v2206 = vmul.f32 %v2152, %v2184
  %v2207 = vmul.f32 %v2153, %v2184
  %v2208 = vmul.f32 %v2154, %v2184
  %v2209 = vmul.f32 %v2155, %v2184
  %v2210 = vmul.f32 %v2156, %v2184
  %v2211 = vmul.f32 %v2157, %v2184
  %v2212 = vmul.f32 %v2158, %v2184
  %v2213 = vmul.f32 %v2159, %v2184
  %v2214 = vmul.f32 %v2160, %v2184
  %v2215 = vmul.f32 %v2161, %v2184
  %v2216 = vmul.f32 %v2162, %v2184
  %v2217 = vmul.f32 %v2163, %v2184
  %v2218 = vmul.f32 %v2164, %v2184
  %v2219 = vmul.f32 %v2165, %v2184
  %v2220 = vmul.f32 %v2166, %v2184
  %v2221 = vmul.f32 %v2167, %v2184
  %v2222 = vmul.f32 %v2168, %v2184
  %v2223 = vmul.f32 %v2169, %v2184
  %v2224 = vmul.f32 %v2170, %v2184
  %v2225 = vmul.f32 %v2171, %v2184
  %v2226 = vmul.f32 %v2172, %v2184
  %v2227 = vmul.f32 %v2173, %v2184
  %v2228 = vmul.f32 %v2174, %v2184
  %v2229 = vmul.f32 %v2175, %v2184
  %v2230 = vmul.f32 %v2176, %v2184
  %v2231 = vmul.f32 %v2177, %v2184
  %v2232 = vmul.f32 %v2178, %v2184
  %v2233 = vmul.f32 %v2179, %v2184
  %v2234 = vld [vmem:[%s4] sm:$0x3]
  %2236 = vset.pattern.permute.xlu0 0
  %2237 = vperm.xlu0 %2236, %v2234
  %v2238 = vpop.permute.xlu0 %2237
  %v2240 = vadd.f32 %v2186, %v2238
  %v2241 = vadd.f32 %v2187, %v2238
  %v2242 = vadd.f32 %v2188, %v2238
  %v2243 = vadd.f32 %v2189, %v2238
  %v2244 = vadd.f32 %v2190, %v2238
  %v2245 = vadd.f32 %v2191, %v2238
  %v2246 = vadd.f32 %v2192, %v2238
  %v2247 = vadd.f32 %v2193, %v2238
  %v2248 = vadd.f32 %v2194, %v2238
  %v2249 = vadd.f32 %v2195, %v2238
  %v2250 = vadd.f32 %v2196, %v2238
  %v2251 = vadd.f32 %v2197, %v2238
  %v2252 = vadd.f32 %v2198, %v2238
  %v2253 = vadd.f32 %v2199, %v2238
  %v2254 = vadd.f32 %v2200, %v2238
  %v2255 = vadd.f32 %v2201, %v2238
  %v2256 = vadd.f32 %v2202, %v2238
  %v2257 = vadd.f32 %v2203, %v2238
  %v2258 = vadd.f32 %v2204, %v2238
  %v2259 = vadd.f32 %v2205, %v2238
  %v2260 = vadd.f32 %v2206, %v2238
  %v2261 = vadd.f32 %v2207, %v2238
  %v2262 = vadd.f32 %v2208, %v2238
  %v2263 = vadd.f32 %v2209, %v2238
  %v2264 = vadd.f32 %v2210, %v2238
  %v2265 = vadd.f32 %v2211, %v2238
  %v2266 = vadd.f32 %v2212, %v2238
  %v2267 = vadd.f32 %v2213, %v2238
  %v2268 = vadd.f32 %v2214, %v2238
  %v2269 = vadd.f32 %v2215, %v2238
  %v2270 = vadd.f32 %v2216, %v2238
  %v2271 = vadd.f32 %v2217, %v2238
  %v2272 = vadd.f32 %v2218, %v2238
  %v2273 = vadd.f32 %v2219, %v2238
  %v2274 = vadd.f32 %v2220, %v2238
  %v2275 = vadd.f32 %v2221, %v2238
  %v2276 = vadd.f32 %v2222, %v2238
  %v2277 = vadd.f32 %v2223, %v2238
  %v2278 = vadd.f32 %v2224, %v2238
  %v2279 = vadd.f32 %v2225, %v2238
  %v2280 = vadd.f32 %v2226, %v2238
  %v2281 = vadd.f32 %v2227, %v2238
  %v2282 = vadd.f32 %v2228, %v2238
  %v2283 = vadd.f32 %v2229, %v2238
  %v2284 = vadd.f32 %v2230, %v2238
  %v2285 = vadd.f32 %v2231, %v2238
  %v2286 = vadd.f32 %v2232, %v2238
  %v2287 = vadd.f32 %v2233, %v2238
  %v2336 = vcombine.low %v2240, %v2241
  %v2337 = vcombine.low %v2242, %v2243
  %v2339 = vunpack.c.l.s4 1983009808
  %v2340 = vunpack.c.0.s8 %v2339
  %v2341 = vlaneseq
  %v2342 = vshrl.u32 %v2341, 7
  %v2343 = vsub.s32 %v2340, %v2342
  %v2344 = vrot.slane %v2336, %v2343
  %v2346 = vunpack.c.l.s4 1983009808
  %v2347 = vunpack.c.0.s8 %v2346
  %v2348 = vlaneseq
  %v2349 = vshrl.u32 %v2348, 7
  %v2350 = vsub.s32 %v2347, %v2349
  %v2351 = vrot.slane %v2337, %v2350
  %v2352 = vcombine.low %v2344, %v2351
  %v2353 = vcombine.low %v2244, %v2245
  %v2354 = vcombine.low %v2246, %v2247
  %v2356 = vunpack.c.l.s4 1983009808
  %v2357 = vunpack.c.0.s8 %v2356
  %v2358 = vlaneseq
  %v2359 = vshrl.u32 %v2358, 7
  %v2360 = vsub.s32 %v2357, %v2359
  %v2361 = vrot.slane %v2353, %v2360
  %v2363 = vunpack.c.l.s4 1983009808
  %v2364 = vunpack.c.0.s8 %v2363
  %v2365 = vlaneseq
  %v2366 = vshrl.u32 %v2365, 7
  %v2367 = vsub.s32 %v2364, %v2366
  %v2368 = vrot.slane %v2354, %v2367
  %v2369 = vcombine.low %v2361, %v2368
  %v2370 = vcombine.low %v2248, %v2249
  %v2371 = vcombine.low %v2250, %v2251
  %v2373 = vunpack.c.l.s4 1983009808
  %v2374 = vunpack.c.0.s8 %v2373
  %v2375 = vlaneseq
  %v2376 = vshrl.u32 %v2375, 7
  %v2377 = vsub.s32 %v2374, %v2376
  %v2378 = vrot.slane %v2370, %v2377
  %v2380 = vunpack.c.l.s4 1983009808
  %v2381 = vunpack.c.0.s8 %v2380
  %v2382 = vlaneseq
  %v2383 = vshrl.u32 %v2382, 7
  %v2384 = vsub.s32 %v2381, %v2383
  %v2385 = vrot.slane %v2371, %v2384
  %v2386 = vcombine.low %v2378, %v2385
  %v2387 = vcombine.low %v2252, %v2253
  %v2388 = vcombine.low %v2254, %v2255
  %v2390 = vunpack.c.l.s4 1983009808
  %v2391 = vunpack.c.0.s8 %v2390
  %v2392 = vlaneseq
  %v2393 = vshrl.u32 %v2392, 7
  %v2394 = vsub.s32 %v2391, %v2393
  %v2395 = vrot.slane %v2387, %v2394
  %v2397 = vunpack.c.l.s4 1983009808
  %v2398 = vunpack.c.0.s8 %v2397
  %v2399 = vlaneseq
  %v2400 = vshrl.u32 %v2399, 7
  %v2401 = vsub.s32 %v2398, %v2400
  %v2402 = vrot.slane %v2388, %v2401
  %v2403 = vcombine.low %v2395, %v2402
  %v2404 = vcombine.low %v2256, %v2257
  %v2405 = vcombine.low %v2258, %v2259
  %v2407 = vunpack.c.l.s4 1983009808
  %v2408 = vunpack.c.0.s8 %v2407
  %v2409 = vlaneseq
  %v2410 = vshrl.u32 %v2409, 7
  %v2411 = vsub.s32 %v2408, %v2410
  %v2412 = vrot.slane %v2404, %v2411
  %v2414 = vunpack.c.l.s4 1983009808
  %v2415 = vunpack.c.0.s8 %v2414
  %v2416 = vlaneseq
  %v2417 = vshrl.u32 %v2416, 7
  %v2418 = vsub.s32 %v2415, %v2417
  %v2419 = vrot.slane %v2405, %v2418
  %v2420 = vcombine.low %v2412, %v2419
  %v2421 = vcombine.low %v2260, %v2261
  %v2422 = vcombine.low %v2262, %v2263
  %v2424 = vunpack.c.l.s4 1983009808
  %v2425 = vunpack.c.0.s8 %v2424
  %v2426 = vlaneseq
  %v2427 = vshrl.u32 %v2426, 7
  %v2428 = vsub.s32 %v2425, %v2427
  %v2429 = vrot.slane %v2421, %v2428
  %v2431 = vunpack.c.l.s4 1983009808
  %v2432 = vunpack.c.0.s8 %v2431
  %v2433 = vlaneseq
  %v2434 = vshrl.u32 %v2433, 7
  %v2435 = vsub.s32 %v2432, %v2434
  %v2436 = vrot.slane %v2422, %v2435
  %v2437 = vcombine.low %v2429, %v2436
  %v2438 = vcombine.low %v2264, %v2265
  %v2439 = vcombine.low %v2266, %v2267
  %v2441 = vunpack.c.l.s4 1983009808
  %v2442 = vunpack.c.0.s8 %v2441
  %v2443 = vlaneseq
  %v2444 = vshrl.u32 %v2443, 7
  %v2445 = vsub.s32 %v2442, %v2444
  %v2446 = vrot.slane %v2438, %v2445
  %v2448 = vunpack.c.l.s4 1983009808
  %v2449 = vunpack.c.0.s8 %v2448
  %v2450 = vlaneseq
  %v2451 = vshrl.u32 %v2450, 7
  %v2452 = vsub.s32 %v2449, %v2451
  %v2453 = vrot.slane %v2439, %v2452
  %v2454 = vcombine.low %v2446, %v2453
  %v2455 = vcombine.low %v2268, %v2269
  %v2456 = vcombine.low %v2270, %v2271
  %v2458 = vunpack.c.l.s4 1983009808
  %v2459 = vunpack.c.0.s8 %v2458
  %v2460 = vlaneseq
  %v2461 = vshrl.u32 %v2460, 7
  %v2462 = vsub.s32 %v2459, %v2461
  %v2463 = vrot.slane %v2455, %v2462
  %v2465 = vunpack.c.l.s4 1983009808
  %v2466 = vunpack.c.0.s8 %v2465
  %v2467 = vlaneseq
  %v2468 = vshrl.u32 %v2467, 7
  %v2469 = vsub.s32 %v2466, %v2468
  %v2470 = vrot.slane %v2456, %v2469
  %v2471 = vcombine.low %v2463, %v2470
  %v2472 = vcombine.low %v2272, %v2273
  %v2473 = vcombine.low %v2274, %v2275
  %v2475 = vunpack.c.l.s4 1983009808
  %v2476 = vunpack.c.0.s8 %v2475
  %v2477 = vlaneseq
  %v2478 = vshrl.u32 %v2477, 7
  %v2479 = vsub.s32 %v2476, %v2478
  %v2480 = vrot.slane %v2472, %v2479
  %v2482 = vunpack.c.l.s4 1983009808
  %v2483 = vunpack.c.0.s8 %v2482
  %v2484 = vlaneseq
  %v2485 = vshrl.u32 %v2484, 7
  %v2486 = vsub.s32 %v2483, %v2485
  %v2487 = vrot.slane %v2473, %v2486
  %v2488 = vcombine.low %v2480, %v2487
  %v2489 = vcombine.low %v2276, %v2277
  %v2490 = vcombine.low %v2278, %v2279
  %v2492 = vunpack.c.l.s4 1983009808
  %v2493 = vunpack.c.0.s8 %v2492
  %v2494 = vlaneseq
  %v2495 = vshrl.u32 %v2494, 7
  %v2496 = vsub.s32 %v2493, %v2495
  %v2497 = vrot.slane %v2489, %v2496
  %v2499 = vunpack.c.l.s4 1983009808
  %v2500 = vunpack.c.0.s8 %v2499
  %v2501 = vlaneseq
  %v2502 = vshrl.u32 %v2501, 7
  %v2503 = vsub.s32 %v2500, %v2502
  %v2504 = vrot.slane %v2490, %v2503
  %v2505 = vcombine.low %v2497, %v2504
  %v2506 = vcombine.low %v2280, %v2281
  %v2507 = vcombine.low %v2282, %v2283
  %v2509 = vunpack.c.l.s4 1983009808
  %v2510 = vunpack.c.0.s8 %v2509
  %v2511 = vlaneseq
  %v2512 = vshrl.u32 %v2511, 7
  %v2513 = vsub.s32 %v2510, %v2512
  %v2514 = vrot.slane %v2506, %v2513
  %v2516 = vunpack.c.l.s4 1983009808
  %v2517 = vunpack.c.0.s8 %v2516
  %v2518 = vlaneseq
  %v2519 = vshrl.u32 %v2518, 7
  %v2520 = vsub.s32 %v2517, %v2519
  %v2521 = vrot.slane %v2507, %v2520
  %v2522 = vcombine.low %v2514, %v2521
  %v2523 = vcombine.low %v2284, %v2285
  %v2524 = vcombine.low %v2286, %v2287
  %v2526 = vunpack.c.l.s4 1983009808
  %v2527 = vunpack.c.0.s8 %v2526
  %v2528 = vlaneseq
  %v2529 = vshrl.u32 %v2528, 7
  %v2530 = vsub.s32 %v2527, %v2529
  %v2531 = vrot.slane %v2523, %v2530
  %v2533 = vunpack.c.l.s4 1983009808
  %v2534 = vunpack.c.0.s8 %v2533
  %v2535 = vlaneseq
  %v2536 = vshrl.u32 %v2535, 7
  %v2537 = vsub.s32 %v2534, %v2536
  %v2538 = vrot.slane %v2524, %v2537
  %v2539 = vcombine.low %v2531, %v2538
  %2552 = vst [vmem:[%s5] sm:$0xff] %v2352
  %2553 = vst [vmem:[%s5 + $0x8] sm:$0xff] %v2369
  %2554 = vst [vmem:[%s5 + $0x10] sm:$0xff] %v2386
  %2555 = vst [vmem:[%s5 + $0x18] sm:$0xff] %v2403
  %2556 = vst [vmem:[%s5 + $0x20] sm:$0xff] %v2420
  %2557 = vst [vmem:[%s5 + $0x28] sm:$0xff] %v2437
  %2558 = vst [vmem:[%s5 + $0x30] sm:$0xff] %v2454
  %2559 = vst [vmem:[%s5 + $0x38] sm:$0xff] %v2471
  %2560 = vst [vmem:[%s5 + $0x40] sm:$0xff] %v2488
  %2561 = vst [vmem:[%s5 + $0x48] sm:$0xff] %v2505
  %2562 = vst [vmem:[%s5 + $0x50] sm:$0xff] %v2522
  %2563 = vst [vmem:[%s5 + $0x58] sm:$0xff] %v2539
  // Predicated region
  $region22: #{vae_forward.13} parent=0 // pred_check
    _
  $region23: #{vae_forward.13} parent=0 // pred_check_branch
    %2565 = sbr.rel (0) target = $region25
  $region24: #{vae_forward.13} parent=0 // pred_region
    _
  $region25: #{vae_forward.13} parent=0 // pred_fallthru
    _
  // Predicated region
  $region26: #{vae_forward.13} parent=0 // pred_check
    _
  $region27: #{vae_forward.13} parent=0 // pred_check_branch
    %2567 = sbr.rel (0) target = $region29
  $region28: #{vae_forward.13} parent=0 // pred_region
    _
  $region29: #{vae_forward.13} parent=0 // pred_fallthru
    _

// kernel: vae_forward.14
$region0: #{vae_forward.14}
  #allocation0 [shape = 'u32[]', space=smem, size = 0x4, offset = 0x4, fixed_abs, tag = 'smem constant byte address 0x4 - core index']
  #allocation1 [shape = 'u32[144,128]{1,0:T(1,128)}', space=vmem, size = 0x12000, scoped, tag = 'internal scratch']
  %s0 = inlined_call_operand.vmem [shape: f32[12,4,640], index: 0, kind: input, shape index: {}]
  %s1 = inlined_call_operand.vmem [shape: s32[1,640], index: 1, kind: input, shape index: {}]
  %s2 = inlined_call_operand.vmem [shape: f32[4,640], index: 2, kind: output, shape index: {0}]
  %s3 = inlined_call_operand.vmem [shape: s32[4,640], index: 3, kind: output, shape index: {1}]
  %4 = xla_tuple %s2, %s3
  %s5 = sld [smem:[#allocation0]]
  $region26: #{vae_forward.14} parent=0
    _
  %s7 = ssub.s32 1, %s5
  %s8 = scalar_select 0, %s7, %s5
  // Predicated region
  $region2: #{vae_forward.14} parent=0 // pred_check
    _
  $region3: #{vae_forward.14} parent=0 // pred_check_branch
    %10 = sbr.rel (0) target = $region5
  $region4: #{vae_forward.14} parent=0 // pred_region
    _
  $region5: #{vae_forward.14} parent=0 // pred_fallthru
    _
  // Predicated region
  $region6: #{vae_forward.14} parent=0 // pred_check
    _
  $region7: #{vae_forward.14} parent=0 // pred_check_branch
    %12 = sbr.rel (0) target = $region9
  $region8: #{vae_forward.14} parent=0 // pred_region
    _
  $region9: #{vae_forward.14} parent=0 // pred_fallthru
    _
  %v13 = vld [vmem:[%s0] sm:$0xff]
  %v14 = vld [vmem:[%s0 + $0x8] sm:$0xff]
  %v15 = vld [vmem:[%s0 + $0x10] sm:$0xf]
  %s16 = scalar_lea.vmem %s0, 20
  %v17 = vld [vmem:[%s16] sm:$0xff]
  %v18 = vld [vmem:[%s16 + $0x8] sm:$0xff]
  %v19 = vld [vmem:[%s16 + $0x10] sm:$0xf]
  %vm20 = vcmp.gt.f32.partialorder %v17, %v13
  %vm21 = vcmp.gt.f32.partialorder %v18, %v14
  %vm22 = vcmp.gt.f32.partialorder %v19, %v15
  %v23 = vsel %vm20, %v17, %v13
  %v24 = vsel %vm21, %v18, %v14
  %v25 = vsel %vm22, %v19, %v15
  %v26 = vsel %vm20, 1, 0
  %v27 = vsel %vm21, 1, 0
  %v28 = vsel %vm22, 1, 0
  %s29 = scalar_lea.vmem %s0, 40
  %v30 = vld [vmem:[%s29] sm:$0xff]
  %v31 = vld [vmem:[%s29 + $0x8] sm:$0xff]
  %v32 = vld [vmem:[%s29 + $0x10] sm:$0xf]
  %vm33 = vcmp.gt.f32.partialorder %v30, %v23
  %vm34 = vcmp.gt.f32.partialorder %v31, %v24
  %vm35 = vcmp.gt.f32.partialorder %v32, %v25
  %v36 = vsel %vm33, %v30, %v23
  %v37 = vsel %vm34, %v31, %v24
  %v38 = vsel %vm35, %v32, %v25
  %v39 = vsel %vm33, 16, %v26
  %v40 = vsel %vm34, 16, %v27
  %v41 = vsel %vm35, 16, %v28
  %s42 = scalar_lea.vmem %s0, 60
  %v43 = vld [vmem:[%s42] sm:$0xff]
  %v44 = vld [vmem:[%s42 + $0x8] sm:$0xff]
  %v45 = vld [vmem:[%s42 + $0x10] sm:$0xf]
  %vm46 = vcmp.gt.f32.partialorder %v43, %v36
  %vm47 = vcmp.gt.f32.partialorder %v44, %v37
  %vm48 = vcmp.gt.f32.partialorder %v45, %v38
  %v49 = vsel %vm46, %v43, %v36
  %v50 = vsel %vm47, %v44, %v37
  %v51 = vsel %vm48, %v45, %v38
  %v52 = vsel %vm46, 17, %v39
  %v53 = vsel %vm47, 17, %v40
  %v54 = vsel %vm48, 17, %v41
  %s55 = scalar_lea.vmem %s0, 80
  %v56 = vld [vmem:[%s55] sm:$0xff]
  %v57 = vld [vmem:[%s55 + $0x8] sm:$0xff]
  %v58 = vld [vmem:[%s55 + $0x10] sm:$0xf]
  %vm59 = vcmp.gt.f32.partialorder %v56, %v49
  %vm60 = vcmp.gt.f32.partialorder %v57, %v50
  %vm61 = vcmp.gt.f32.partialorder %v58, %v51
  %v62 = vsel %vm59, %v56, %v49
  %v63 = vsel %vm60, %v57, %v50
  %v64 = vsel %vm61, %v58, %v51
  %v65 = vsel %vm59, 256, %v52
  %v66 = vsel %vm60, 256, %v53
  %v67 = vsel %vm61, 256, %v54
  %s68 = scalar_lea.vmem %s0, 100
  %v69 = vld [vmem:[%s68] sm:$0xff]
  %v70 = vld [vmem:[%s68 + $0x8] sm:$0xff]
  %v71 = vld [vmem:[%s68 + $0x10] sm:$0xf]
  %vm72 = vcmp.gt.f32.partialorder %v69, %v62
  %vm73 = vcmp.gt.f32.partialorder %v70, %v63
  %vm74 = vcmp.gt.f32.partialorder %v71, %v64
  %v75 = vsel %vm72, %v69, %v62
  %v76 = vsel %vm73, %v70, %v63
  %v77 = vsel %vm74, %v71, %v64
  %v78 = vsel %vm72, 257, %v65
  %v79 = vsel %vm73, 257, %v66
  %v80 = vsel %vm74, 257, %v67
  %s81 = scalar_lea.vmem %s0, 120
  %v82 = vld [vmem:[%s81] sm:$0xff]
  %v83 = vld [vmem:[%s81 + $0x8] sm:$0xff]
  %v84 = vld [vmem:[%s81 + $0x10] sm:$0xf]
  %vm85 = vcmp.gt.f32.partialorder %v82, %v75
  %vm86 = vcmp.gt.f32.partialorder %v83, %v76
  %vm87 = vcmp.gt.f32.partialorder %v84, %v77
  %v88 = vsel %vm85, %v82, %v75
  %v89 = vsel %vm86, %v83, %v76
  %v90 = vsel %vm87, %v84, %v77
  %v91 = vsel %vm85, 272, %v78
  %v92 = vsel %vm86, 272, %v79
  %v93 = vsel %vm87, 272, %v80
  %s94 = scalar_lea.vmem %s0, 140
  %v95 = vld [vmem:[%s94] sm:$0xff]
  %v96 = vld [vmem:[%s94 + $0x8] sm:$0xff]
  %v97 = vld [vmem:[%s94 + $0x10] sm:$0xf]
  %vm98 = vcmp.gt.f32.partialorder %v95, %v88
  %vm99 = vcmp.gt.f32.partialorder %v96, %v89
  %vm100 = vcmp.gt.f32.partialorder %v97, %v90
  %v101 = vsel %vm98, %v95, %v88
  %v102 = vsel %vm99, %v96, %v89
  %v103 = vsel %vm100, %v97, %v90
  %v104 = vsel %vm98, 273, %v91
  %v105 = vsel %vm99, 273, %v92
  %v106 = vsel %vm100, 273, %v93
  %s107 = scalar_lea.vmem %s0, 160
  %v108 = vld [vmem:[%s107] sm:$0xff]
  %v109 = vld [vmem:[%s107 + $0x8] sm:$0xff]
  %v110 = vld [vmem:[%s107 + $0x10] sm:$0xf]
  %vm111 = vcmp.gt.f32.partialorder %v108, %v101
  %vm112 = vcmp.gt.f32.partialorder %v109, %v102
  %vm113 = vcmp.gt.f32.partialorder %v110, %v103
  %v114 = vsel %vm111, %v108, %v101
  %v115 = vsel %vm112, %v109, %v102
  %v116 = vsel %vm113, %v110, %v103
  %v117 = vsel %vm111, 512, %v104
  %v118 = vsel %vm112, 512, %v105
  %v119 = vsel %vm113, 512, %v106
  %s120 = scalar_lea.vmem %s0, 180
  %v121 = vld [vmem:[%s120] sm:$0xff]
  %v122 = vld [vmem:[%s120 + $0x8] sm:$0xff]
  %v123 = vld [vmem:[%s120 + $0x10] sm:$0xf]
  %vm124 = vcmp.gt.f32.partialorder %v121, %v114
  %vm125 = vcmp.gt.f32.partialorder %v122, %v115
  %vm126 = vcmp.gt.f32.partialorder %v123, %v116
  %v127 = vsel %vm124, %v121, %v114
  %v128 = vsel %vm125, %v122, %v115
  %v129 = vsel %vm126, %v123, %v116
  %v130 = vsel %vm124, 513, %v117
  %v131 = vsel %vm125, 513, %v118
  %v132 = vsel %vm126, 513, %v119
  %s133 = scalar_lea.vmem %s0, 200
  %v134 = vld [vmem:[%s133] sm:$0xff]
  %v135 = vld [vmem:[%s133 + $0x8] sm:$0xff]
  %v136 = vld [vmem:[%s133 + $0x10] sm:$0xf]
  %vm137 = vcmp.gt.f32.partialorder %v134, %v127
  %vm138 = vcmp.gt.f32.partialorder %v135, %v128
  %vm139 = vcmp.gt.f32.partialorder %v136, %v129
  %v140 = vsel %vm137, %v134, %v127
  %v141 = vsel %vm138, %v135, %v128
  %v142 = vsel %vm139, %v136, %v129
  %v143 = vsel %vm137, 528, %v130
  %v144 = vsel %vm138, 528, %v131
  %v145 = vsel %vm139, 528, %v132
  %s146 = scalar_lea.vmem %s0, 220
  %v147 = vld [vmem:[%s146] sm:$0xff]
  %v148 = vld [vmem:[%s146 + $0x8] sm:$0xff]
  %v149 = vld [vmem:[%s146 + $0x10] sm:$0xf]
  %vm150 = vcmp.gt.f32.partialorder %v147, %v140
  %vm151 = vcmp.gt.f32.partialorder %v148, %v141
  %vm152 = vcmp.gt.f32.partialorder %v149, %v142
  %v153 = vsel %vm150, %v147, %v140
  %v154 = vsel %vm151, %v148, %v141
  %v155 = vsel %vm152, %v149, %v142
  %v156 = vsel %vm150, 529, %v143
  %v157 = vsel %vm151, 529, %v144
  %v158 = vsel %vm152, 529, %v145
  %159 = vst [vmem:[%s2] sm:$0xff] %v153
  %160 = vst [vmem:[%s2 + $0x8] sm:$0xff] %v154
  %161 = vst [vmem:[%s2 + $0x10] sm:$0xf] %v155
  %v162 = vld [vmem:[%s1] sm:$0x1f]
  %v163 = vlaneseq
  %v164 = vshrl.u32 %v163, 7
  %v165 = vsub.s32 0, %v164
  %v166 = vrot.slane %v162, %v165
  %v167 = vlaneseq
  %v168 = vshrl.u32 %v167, 7
  %v169 = vsub.s32 1, %v168
  %v170 = vrot.slane %v162, %v169
  %v171 = vlaneseq
  %v172 = vshrl.u32 %v171, 7
  %v173 = vsub.s32 2, %v172
  %v174 = vrot.slane %v162, %v173
  %v175 = vlaneseq
  %v176 = vshrl.u32 %v175, 7
  %v177 = vsub.s32 3, %v176
  %v178 = vrot.slane %v162, %v177
  %v179 = vlaneseq
  %v180 = vshrl.u32 %v179, 7
  %v181 = vsub.s32 4, %v180
  %v182 = vrot.slane %v162, %v181
  %v183 = vcombine.high %v156, %v156
  %v184 = vcombine.high %v157, %v157
  %v185 = vadd.s32 %v166, %v156
  %v186 = vadd.s32 %v170, %v183
  %v187 = vadd.s32 %v174, %v157
  %v188 = vadd.s32 %v178, %v184
  %v189 = vadd.s32 %v182, %v158
  %v190 = vcombine.low %v185, %v186
  %v191 = vcombine.low %v187, %v188
  %192 = vst [vmem:[%s3] sm:$0xff] %v190
  %193 = vst [vmem:[%s3 + $0x8] sm:$0xff] %v191
  %194 = vst [vmem:[%s3 + $0x10] sm:$0xf] %v189
  // Predicated region
  $region10: #{vae_forward.14} parent=0 // pred_check
    _
  $region11: #{vae_forward.14} parent=0 // pred_check_branch
    %196 = sbr.rel (0) target = $region13
  $region12: #{vae_forward.14} parent=0 // pred_region
    _
  $region13: #{vae_forward.14} parent=0 // pred_fallthru
    _
  // Predicated region
  $region14: #{vae_forward.14} parent=0 // pred_check
    _
  $region15: #{vae_forward.14} parent=0 // pred_check_branch
    %198 = sbr.rel (0) target = $region17
  $region16: #{vae_forward.14} parent=0 // pred_region
    _
  $region17: #{vae_forward.14} parent=0 // pred_fallthru
    _
  // Predicated region
  $region18: #{vae_forward.14} parent=0 // pred_check
    _
  $region19: #{vae_forward.14} parent=0 // pred_check_branch
    %200 = sbr.rel (0) target = $region21
  $region20: #{vae_forward.14} parent=0 // pred_region
    _
  $region21: #{vae_forward.14} parent=0 // pred_fallthru
    _
  // Predicated region
  $region22: #{vae_forward.14} parent=0 // pred_check
    _
  $region23: #{vae_forward.14} parent=0 // pred_check_branch
    %202 = sbr.rel (0) target = $region25
  $region24: #{vae_forward.14} parent=0 // pred_region
    _
  $region25: #{vae_forward.14} parent=0 // pred_fallthru
    _

// kernel: vae_forward.15
$region0: #{vae_forward.15}
  #allocation0 [shape = 'u32[]', space=smem, size = 0x4, offset = 0x4, fixed_abs, tag = 'smem constant byte address 0x4 - core index']
  #allocation1 [shape = 'u32[144,128]{1,0:T(1,128)}', space=vmem, size = 0x12000, scoped, tag = 'internal scratch']
  %s0 = inlined_call_operand.vmem [shape: bf16[54,1280], index: 0, kind: input, shape index: {}]
  %s1 = inlined_call_operand.vmem [shape: bf16[4,54], index: 1, kind: input, shape index: {}]
  %s2 = inlined_call_operand.vmem [shape: f32[4,1], index: 2, kind: input, shape index: {}]
  %s3 = inlined_call_operand.vmem [shape: f32[4,1], index: 3, kind: input, shape index: {}]
  %s4 = inlined_call_operand.vmem [shape: f32[4,1], index: 4, kind: input, shape index: {}]
  %s5 = inlined_call_operand.vmem [shape: f32[4,1280], index: 5, kind: output, shape index: {}]
  %s6 = sld [smem:[#allocation0]]
  $region30: #{vae_forward.15} parent=0
    _
  %s8 = ssub.s32 1, %s6
  %s9 = scalar_select 0, %s8, %s6
  // Predicated region
  $region2: #{vae_forward.15} parent=0 // pred_check
    _
  $region3: #{vae_forward.15} parent=0 // pred_check_branch
    %11 = sbr.rel (0) target = $region5
  $region4: #{vae_forward.15} parent=0 // pred_region
    _
  $region5: #{vae_forward.15} parent=0 // pred_fallthru
    _
  // Predicated region
  $region6: #{vae_forward.15} parent=0 // pred_check
    _
  $region7: #{vae_forward.15} parent=0 // pred_check_branch
    %13 = sbr.rel (0) target = $region9
  $region8: #{vae_forward.15} parent=0 // pred_region
    _
  $region9: #{vae_forward.15} parent=0 // pred_fallthru
    _
  // Predicated region
  $region10: #{vae_forward.15} parent=0 // pred_check
    _
  $region11: #{vae_forward.15} parent=0 // pred_check_branch
    %15 = sbr.rel (0) target = $region13
  $region12: #{vae_forward.15} parent=0 // pred_region
    _
  $region13: #{vae_forward.15} parent=0 // pred_fallthru
    _
  // Predicated region
  $region14: #{vae_forward.15} parent=0 // pred_check
    _
  $region15: #{vae_forward.15} parent=0 // pred_check_branch
    %17 = sbr.rel (0) target = $region17
  $region16: #{vae_forward.15} parent=0 // pred_region
    _
  $region17: #{vae_forward.15} parent=0 // pred_fallthru
    _
  // Predicated region
  $region18: #{vae_forward.15} parent=0 // pred_check
    _
  $region19: #{vae_forward.15} parent=0 // pred_check_branch
    %19 = sbr.rel (0) target = $region21
  $region20: #{vae_forward.15} parent=0 // pred_region
    _
  $region21: #{vae_forward.15} parent=0 // pred_fallthru
    _
  %v21 = vld [vmem:[%s1] sm:$0x3]
  %v22 = vld [vmem:[%s0] sm:$0xff]
  %v23 = vld [vmem:[%s0 + $0x8] sm:$0xff]
  %v24 = vld [vmem:[%s0 + $0x10] sm:$0xff]
  %v25 = vld [vmem:[%s0 + $0x18] sm:$0xff]
  %v26 = vld [vmem:[%s0 + $0x20] sm:$0xff]
  %v27 = vld [vmem:[%s0 + $0x28] sm:$0xff]
  %v28 = vld [vmem:[%s0 + $0x30] sm:$0xff]
  %v29 = vld [vmem:[%s0 + $0x38] sm:$0xff]
  %v30 = vld [vmem:[%s0 + $0x40] sm:$0xff]
  %v31 = vld [vmem:[%s0 + $0x48] sm:$0xff]
  %v32 = vld [vmem:[%s0 + $0x50] sm:$0xff]
  %v33 = vld [vmem:[%s0 + $0x58] sm:$0xff]
  %v34 = vld [vmem:[%s0 + $0x60] sm:$0xff]
  %v35 = vld [vmem:[%s0 + $0x68] sm:$0xff]
  %v36 = vld [vmem:[%s0 + $0x70] sm:$0xff]
  %v37 = vld [vmem:[%s0 + $0x78] sm:$0xff]
  %v38 = vld [vmem:[%s0 + $0x80] sm:$0xff]
  %v39 = vld [vmem:[%s0 + $0x88] sm:$0xff]
  %v40 = vld [vmem:[%s0 + $0x90] sm:$0xff]
  %v41 = vld [vmem:[%s0 + $0x98] sm:$0xff]
  %v42 = vld [vmem:[%s0 + $0xa0] sm:$0xff]
  %v43 = vld [vmem:[%s0 + $0xa8] sm:$0xff]
  %v44 = vld [vmem:[%s0 + $0xb0] sm:$0xff]
  %v45 = vld [vmem:[%s0 + $0xb8] sm:$0xff]
  %v46 = vld [vmem:[%s0 + $0xc0] sm:$0xff]
  %v47 = vld [vmem:[%s0 + $0xc8] sm:$0xff]
  %v48 = vld [vmem:[%s0 + $0xd0] sm:$0xff]
  %v49 = vld [vmem:[%s0 + $0xd8] sm:$0xff]
  %v50 = vld [vmem:[%s0 + $0xe0] sm:$0xff]
  %v51 = vld [vmem:[%s0 + $0xe8] sm:$0xff]
  %v52 = vld [vmem:[%s0 + $0xf0] sm:$0x77]
  %v53 = vld [vmem:[%s0 + $0xf8] sm:$0x77]
  %v54 = vld [vmem:[%s0 + $0x100] sm:$0x77]
  %v55 = vld [vmem:[%s0 + $0x108] sm:$0x77]
  %v56 = vld [vmem:[%s0 + $0x110] sm:$0x77]
  %v57 = vld [vmem:[%s2] sm:$0xf]
  %59 = vset.pattern.permute.xlu0 0
  %60 = vperm.xlu0 %59, %v57
  %v61 = vpop.permute.xlu0 %60
  %v98 = vunpack.c.l.b16 %v22
  %v99 = vunpack.c.h.b16 %v22
  %v100 = vunpack.c.l.b16 %v23
  %v101 = vunpack.c.h.b16 %v23
  %v102 = vunpack.c.l.b16 %v24
  %v103 = vunpack.c.h.b16 %v24
  %v104 = vunpack.c.l.b16 %v25
  %v105 = vunpack.c.h.b16 %v25
  %v106 = vunpack.c.l.b16 %v26
  %v107 = vunpack.c.h.b16 %v26
  %v108 = vunpack.c.l.b16 %v27
  %v109 = vunpack.c.h.b16 %v27
  %v110 = vunpack.c.l.b16 %v28
  %v111 = vunpack.c.h.b16 %v28
  %v112 = vunpack.c.l.b16 %v29
  %v113 = vunpack.c.h.b16 %v29
  %v114 = vunpack.c.l.b16 %v30
  %v115 = vunpack.c.h.b16 %v30
  %v116 = vunpack.c.l.b16 %v31
  %v117 = vunpack.c.h.b16 %v31
  %v118 = vunpack.c.l.b16 %v32
  %v119 = vunpack.c.h.b16 %v32
  %v120 = vunpack.c.l.b16 %v33
  %v121 = vunpack.c.h.b16 %v33
  %v122 = vunpack.c.l.b16 %v34
  %v123 = vunpack.c.h.b16 %v34
  %v124 = vunpack.c.l.b16 %v35
  %v125 = vunpack.c.h.b16 %v35
  %v126 = vunpack.c.l.b16 %v36
  %v127 = vunpack.c.h.b16 %v36
  %v128 = vunpack.c.l.b16 %v37
  %v129 = vunpack.c.h.b16 %v37
  %v130 = vunpack.c.l.b16 %v38
  %v131 = vunpack.c.h.b16 %v38
  %v132 = vunpack.c.l.b16 %v39
  %v133 = vunpack.c.h.b16 %v39
  %v134 = vunpack.c.l.b16 %v40
  %v135 = vunpack.c.h.b16 %v40
  %v136 = vunpack.c.l.b16 %v41
  %v137 = vunpack.c.h.b16 %v41
  %v138 = vunpack.c.l.b16 %v42
  %v139 = vunpack.c.h.b16 %v42
  %v140 = vunpack.c.l.b16 %v43
  %v141 = vunpack.c.h.b16 %v43
  %v142 = vunpack.c.l.b16 %v44
  %v143 = vunpack.c.h.b16 %v44
  %v144 = vunpack.c.l.b16 %v45
  %v145 = vunpack.c.h.b16 %v45
  %v146 = vunpack.c.l.b16 %v46
  %v147 = vunpack.c.h.b16 %v46
  %v148 = vunpack.c.l.b16 %v47
  %v149 = vunpack.c.h.b16 %v47
  %v150 = vunpack.c.l.b16 %v48
  %v151 = vunpack.c.h.b16 %v48
  %v152 = vunpack.c.l.b16 %v49
  %v153 = vunpack.c.h.b16 %v49
  %v154 = vunpack.c.l.b16 %v50
  %v155 = vunpack.c.h.b16 %v50
  %v156 = vunpack.c.l.b16 %v51
  %v157 = vunpack.c.h.b16 %v51
  %v158 = vunpack.c.l.b16 %v52
  %v159 = vunpack.c.h.b16 %v52
  %v160 = vunpack.c.l.b16 %v53
  %v161 = vunpack.c.h.b16 %v53
  %v162 = vunpack.c.l.b16 %v54
  %v163 = vunpack.c.h.b16 %v54
  %v164 = vunpack.c.l.b16 %v55
  %v165 = vunpack.c.h.b16 %v55
  %v166 = vunpack.c.l.b16 %v56
  %v167 = vunpack.c.h.b16 %v56
  %v168 = vpack.c.b16 %v108, %v98
  %v169 = vpack.c.b16 %v109, %v99
  %v170 = vpack.c.b16 %v110, %v100
  %v171 = vpack.c.b16 %v111, %v101
  %v172 = vpack.c.b16 %v112, %v102
  %v173 = vpack.c.b16 %v113, %v103
  %v174 = vpack.c.b16 %v114, %v104
  %v175 = vpack.c.b16 %v115, %v105
  %v176 = vpack.c.b16 %v116, %v106
  %v177 = vpack.c.b16 %v117, %v107
  %v178 = vpack.c.b16 %v128, %v118
  %v179 = vpack.c.b16 %v129, %v119
  %v180 = vpack.c.b16 %v130, %v120
  %v181 = vpack.c.b16 %v131, %v121
  %v182 = vpack.c.b16 %v132, %v122
  %v183 = vpack.c.b16 %v133, %v123
  %v184 = vpack.c.b16 %v134, %v124
  %v185 = vpack.c.b16 %v135, %v125
  %v186 = vpack.c.b16 %v136, %v126
  %v187 = vpack.c.b16 %v137, %v127
  %v188 = vpack.c.b16 %v148, %v138
  %v189 = vpack.c.b16 %v149, %v139
  %v190 = vpack.c.b16 %v150, %v140
  %v191 = vpack.c.b16 %v151, %v141
  %v192 = vpack.c.b16 %v152, %v142
  %v193 = vpack.c.b16 %v153, %v143
  %v194 = vpack.c.b16 %v154, %v144
  %v195 = vpack.c.b16 %v155, %v145
  %v196 = vpack.c.b16 %v156, %v146
  %v197 = vpack.c.b16 %v157, %v147
  %v198 = vpack.c.b16 %v158, %v158
  %v199 = vpack.c.b16 %v159, %v159
  %v200 = vpack.c.b16 %v160, %v160
  %v201 = vpack.c.b16 %v161, %v161
  %v202 = vpack.c.b16 %v162, %v162
  %v203 = vpack.c.b16 %v163, %v163
  %v204 = vpack.c.b16 %v164, %v164
  %v205 = vpack.c.b16 %v165, %v165
  %v206 = vpack.c.b16 %v166, %v166
  %v207 = vpack.c.b16 %v167, %v167
  %vm238 = vcmask 441344
  %v240 = vsel %vm238, %v21, 0
  %vm242 = vcmask 1042432
  %v244 = vsel %vm242, %v198, 0
  %v247 = vsel %vm242, %v199, 0
  %v250 = vsel %vm242, %v200, 0
  %v253 = vsel %vm242, %v201, 0
  %v256 = vsel %vm242, %v202, 0
  %v259 = vsel %vm242, %v203, 0
  %v262 = vsel %vm242, %v204, 0
  %v265 = vsel %vm242, %v205, 0
  %v268 = vsel %vm242, %v206, 0
  %v271 = vsel %vm242, %v207, 0
  %273 = vmatprep.subr.bf16.mxu0 %v169
  %274 = vmatpush1.bf16.msra.mxu0 %v168
  %275 = vmatprep.subr.bf16.mxu0 %v179
  %276 = vmatpush1.bf16.msra.mxu0 %v178
  %277 = vmatprep.subr.bf16.mxu0 %v189
  %278 = vmatpush1.bf16.msra.mxu0 %v188
  %279 = vmatprep.subr.bf16.mxu0 %v247
  %280 = vmatpush1.bf16.msra.mxu0 %v244
  %281 = vmatprep.subr.bf16.mxu0 0
  %282 = vmatpush1.bf16.msra.mxu0 0
  %283 = vmatprep.subr.bf16.mxu0 0
  %284 = vmatpush1.bf16.msra.mxu0 0
  %285 = vmatprep.subr.bf16.mxu0 0
  %286 = vmatpush1.bf16.msra.mxu0 0
  %287 = vmatprep.subr.bf16.mxu0 0
  %288 = vmatpush1.bf16.msra.mxu0 0
  %289 = vmatprep.subr.bf16.mxu0 0
  %290 = vmatpush1.bf16.msra.mxu0 0
  %291 = vmatprep.subr.bf16.mxu0 0
  %292 = vmatpush1.bf16.msra.mxu0 0
  %293 = vmatprep.subr.bf16.mxu0 0
  %294 = vmatpush1.bf16.msra.mxu0 0
  %295 = vmatprep.subr.bf16.mxu0 0
  %296 = vmatpush1.bf16.msra.mxu0 0
  %297 = vmatprep.subr.bf16.mxu0 0
  %298 = vmatpush1.bf16.msra.mxu0 0
  %299 = vmatprep.subr.bf16.mxu0 0
  %300 = vmatpush1.bf16.msra.mxu0 0
  %301 = vmatprep.subr.bf16.mxu0 0
  %302 = vmatpush1.bf16.msra.mxu0 0
  %303 = vmatprep.subr.bf16.mxu0 0
  %304 = vmatpush1.bf16.msra.mxu0 0
  %305 = vmatprep.mubr.bf16.mxu0 0
  %306 = vmatmul.mubr.bf16.gmra.mrb[0].mxu0 %v240
  %v307 = vpop.f32.mrb[0].mxu0
  %v308 = vadd.f32 %v61, %v307
  %v309 = vpop.f32.mrb[0].mxu0
  %v310 = vadd.f32 %v61, %v309
  %v311 = vpop.f32.mrb[0].mxu0
  %v312 = vpop.f32.mrb[0].mxu0
  %313 = vdwg.mxu0
  %314 = vmatprep.subr.bf16.mxu0 %v171
  %315 = vmatpush1.bf16.msra.mxu0 %v170
  %316 = vmatprep.subr.bf16.mxu0 %v181
  %317 = vmatpush1.bf16.msra.mxu0 %v180
  %318 = vmatprep.subr.bf16.mxu0 %v191
  %319 = vmatpush1.bf16.msra.mxu0 %v190
  %320 = vmatprep.subr.bf16.mxu0 %v253
  %321 = vmatpush1.bf16.msra.mxu0 %v250
  %322 = vmatprep.subr.bf16.mxu0 0
  %323 = vmatpush1.bf16.msra.mxu0 0
  %324 = vmatprep.subr.bf16.mxu0 0
  %325 = vmatpush1.bf16.msra.mxu0 0
  %326 = vmatprep.subr.bf16.mxu0 0
  %327 = vmatpush1.bf16.msra.mxu0 0
  %328 = vmatprep.subr.bf16.mxu0 0
  %329 = vmatpush1.bf16.msra.mxu0 0
  %330 = vmatprep.subr.bf16.mxu0 0
  %331 = vmatpush1.bf16.msra.mxu0 0
  %332 = vmatprep.subr.bf16.mxu0 0
  %333 = vmatpush1.bf16.msra.mxu0 0
  %334 = vmatprep.subr.bf16.mxu0 0
  %335 = vmatpush1.bf16.msra.mxu0 0
  %336 = vmatprep.subr.bf16.mxu0 0
  %337 = vmatpush1.bf16.msra.mxu0 0
  %338 = vmatprep.subr.bf16.mxu0 0
  %339 = vmatpush1.bf16.msra.mxu0 0
  %340 = vmatprep.subr.bf16.mxu0 0
  %341 = vmatpush1.bf16.msra.mxu0 0
  %342 = vmatprep.subr.bf16.mxu0 0
  %343 = vmatpush1.bf16.msra.mxu0 0
  %344 = vmatprep.subr.bf16.mxu0 0
  %345 = vmatpush1.bf16.msra.mxu0 0
  %346 = vmatprep.mubr.bf16.mxu0 0
  %347 = vmatmul.mubr.bf16.gmra.mrb[0].mxu0 %v240
  %v348 = vpop.f32.mrb[0].mxu0
  %v349 = vadd.f32 %v61, %v348
  %v350 = vpop.f32.mrb[0].mxu0
  %v351 = vadd.f32 %v61, %v350
  %v352 = vpop.f32.mrb[0].mxu0
  %v353 = vpop.f32.mrb[0].mxu0
  %354 = vdwg.mxu0
  %355 = vmatprep.subr.bf16.mxu0 %v173
  %356 = vmatpush1.bf16.msra.mxu0 %v172
  %357 = vmatprep.subr.bf16.mxu0 %v183
  %358 = vmatpush1.bf16.msra.mxu0 %v182
  %359 = vmatprep.subr.bf16.mxu0 %v193
  %360 = vmatpush1.bf16.msra.mxu0 %v192
  %361 = vmatprep.subr.bf16.mxu0 %v259
  %362 = vmatpush1.bf16.msra.mxu0 %v256
  %363 = vmatprep.subr.bf16.mxu0 0
  %364 = vmatpush1.bf16.msra.mxu0 0
  %365 = vmatprep.subr.bf16.mxu0 0
  %366 = vmatpush1.bf16.msra.mxu0 0
  %367 = vmatprep.subr.bf16.mxu0 0
  %368 = vmatpush1.bf16.msra.mxu0 0
  %369 = vmatprep.subr.bf16.mxu0 0
  %370 = vmatpush1.bf16.msra.mxu0 0
  %371 = vmatprep.subr.bf16.mxu0 0
  %372 = vmatpush1.bf16.msra.mxu0 0
  %373 = vmatprep.subr.bf16.mxu0 0
  %374 = vmatpush1.bf16.msra.mxu0 0
  %375 = vmatprep.subr.bf16.mxu0 0
  %376 = vmatpush1.bf16.msra.mxu0 0
  %377 = vmatprep.subr.bf16.mxu0 0
  %378 = vmatpush1.bf16.msra.mxu0 0
  %379 = vmatprep.subr.bf16.mxu0 0
  %380 = vmatpush1.bf16.msra.mxu0 0
  %381 = vmatprep.subr.bf16.mxu0 0
  %382 = vmatpush1.bf16.msra.mxu0 0
  %383 = vmatprep.subr.bf16.mxu0 0
  %384 = vmatpush1.bf16.msra.mxu0 0
  %385 = vmatprep.subr.bf16.mxu0 0
  %386 = vmatpush1.bf16.msra.mxu0 0
  %387 = vmatprep.mubr.bf16.mxu0 0
  %388 = vmatmul.mubr.bf16.gmra.mrb[0].mxu0 %v240
  %v389 = vpop.f32.mrb[0].mxu0
  %v390 = vadd.f32 %v61, %v389
  %v391 = vpop.f32.mrb[0].mxu0
  %v392 = vadd.f32 %v61, %v391
  %v393 = vpop.f32.mrb[0].mxu0
  %v394 = vpop.f32.mrb[0].mxu0
  %395 = vdwg.mxu0
  %396 = vmatprep.subr.bf16.mxu0 %v175
  %397 = vmatpush1.bf16.msra.mxu0 %v174
  %398 = vmatprep.subr.bf16.mxu0 %v185
  %399 = vmatpush1.bf16.msra.mxu0 %v184
  %400 = vmatprep.subr.bf16.mxu0 %v195
  %401 = vmatpush1.bf16.msra.mxu0 %v194
  %402 = vmatprep.subr.bf16.mxu0 %v265
  %403 = vmatpush1.bf16.msra.mxu0 %v262
  %404 = vmatprep.subr.bf16.mxu0 0
  %405 = vmatpush1.bf16.msra.mxu0 0
  %406 = vmatprep.subr.bf16.mxu0 0
  %407 = vmatpush1.bf16.msra.mxu0 0
  %408 = vmatprep.subr.bf16.mxu0 0
  %409 = vmatpush1.bf16.msra.mxu0 0
  %410 = vmatprep.subr.bf16.mxu0 0
  %411 = vmatpush1.bf16.msra.mxu0 0
  %412 = vmatprep.subr.bf16.mxu0 0
  %413 = vmatpush1.bf16.msra.mxu0 0
  %414 = vmatprep.subr.bf16.mxu0 0
  %415 = vmatpush1.bf16.msra.mxu0 0
  %416 = vmatprep.subr.bf16.mxu0 0
  %417 = vmatpush1.bf16.msra.mxu0 0
  %418 = vmatprep.subr.bf16.mxu0 0
  %419 = vmatpush1.bf16.msra.mxu0 0
  %420 = vmatprep.subr.bf16.mxu0 0
  %421 = vmatpush1.bf16.msra.mxu0 0
  %422 = vmatprep.subr.bf16.mxu0 0
  %423 = vmatpush1.bf16.msra.mxu0 0
  %424 = vmatprep.subr.bf16.mxu0 0
  %425 = vmatpush1.bf16.msra.mxu0 0
  %426 = vmatprep.subr.bf16.mxu0 0
  %427 = vmatpush1.bf16.msra.mxu0 0
  %428 = vmatprep.mubr.bf16.mxu0 0
  %429 = vmatmul.mubr.bf16.gmra.mrb[0].mxu0 %v240
  %v430 = vpop.f32.mrb[0].mxu0
  %v431 = vadd.f32 %v61, %v430
  %v432 = vpop.f32.mrb[0].mxu0
  %v433 = vadd.f32 %v61, %v432
  %v434 = vpop.f32.mrb[0].mxu0
  %v435 = vpop.f32.mrb[0].mxu0
  %436 = vdwg.mxu0
  %437 = vmatprep.subr.bf16.mxu0 %v177
  %438 = vmatpush1.bf16.msra.mxu0 %v176
  %439 = vmatprep.subr.bf16.mxu0 %v187
  %440 = vmatpush1.bf16.msra.mxu0 %v186
  %441 = vmatprep.subr.bf16.mxu0 %v197
  %442 = vmatpush1.bf16.msra.mxu0 %v196
  %443 = vmatprep.subr.bf16.mxu0 %v271
  %444 = vmatpush1.bf16.msra.mxu0 %v268
  %445 = vmatprep.subr.bf16.mxu0 0
  %446 = vmatpush1.bf16.msra.mxu0 0
  %447 = vmatprep.subr.bf16.mxu0 0
  %448 = vmatpush1.bf16.msra.mxu0 0
  %449 = vmatprep.subr.bf16.mxu0 0
  %450 = vmatpush1.bf16.msra.mxu0 0
  %451 = vmatprep.subr.bf16.mxu0 0
  %452 = vmatpush1.bf16.msra.mxu0 0
  %453 = vmatprep.subr.bf16.mxu0 0
  %454 = vmatpush1.bf16.msra.mxu0 0
  %455 = vmatprep.subr.bf16.mxu0 0
  %456 = vmatpush1.bf16.msra.mxu0 0
  %457 = vmatprep.subr.bf16.mxu0 0
  %458 = vmatpush1.bf16.msra.mxu0 0
  %459 = vmatprep.subr.bf16.mxu0 0
  %460 = vmatpush1.bf16.msra.mxu0 0
  %461 = vmatprep.subr.bf16.mxu0 0
  %462 = vmatpush1.bf16.msra.mxu0 0
  %463 = vmatprep.subr.bf16.mxu0 0
  %464 = vmatpush1.bf16.msra.mxu0 0
  %465 = vmatprep.subr.bf16.mxu0 0
  %466 = vmatpush1.bf16.msra.mxu0 0
  %467 = vmatprep.subr.bf16.mxu0 0
  %468 = vmatpush1.bf16.msra.mxu0 0
  %469 = vmatprep.mubr.bf16.mxu0 0
  %470 = vmatmul.mubr.bf16.gmra.mrb[0].mxu0 %v240
  %v471 = vpop.f32.mrb[0].mxu0
  %v472 = vadd.f32 %v61, %v471
  %v473 = vpop.f32.mrb[0].mxu0
  %v474 = vadd.f32 %v61, %v473
  %v475 = vpop.f32.mrb[0].mxu0
  %v476 = vpop.f32.mrb[0].mxu0
  %477 = vdwg.mxu0
  %vm478 = vcmp.gt.f32.partialorder %v308, 0.0
  %vm479 = vcmp.gt.f32.partialorder %v310, 0.0
  %vm480 = vcmp.gt.f32.partialorder %v349, 0.0
  %vm481 = vcmp.gt.f32.partialorder %v351, 0.0
  %vm482 = vcmp.gt.f32.partialorder %v390, 0.0
  %vm483 = vcmp.gt.f32.partialorder %v392, 0.0
  %vm484 = vcmp.gt.f32.partialorder %v431, 0.0
  %vm485 = vcmp.gt.f32.partialorder %v433, 0.0
  %vm486 = vcmp.gt.f32.partialorder %v472, 0.0
  %vm487 = vcmp.gt.f32.partialorder %v474, 0.0
  %v488 = vmul.f32 %v308, 0.01
  %v489 = vmul.f32 %v310, 0.01
  %v490 = vmul.f32 %v349, 0.01
  %v491 = vmul.f32 %v351, 0.01
  %v492 = vmul.f32 %v390, 0.01
  %v493 = vmul.f32 %v392, 0.01
  %v494 = vmul.f32 %v431, 0.01
  %v495 = vmul.f32 %v433, 0.01
  %v496 = vmul.f32 %v472, 0.01
  %v497 = vmul.f32 %v474, 0.01
  %v498 = vsel %vm478, %v308, %v488
  %v499 = vsel %vm479, %v310, %v489
  %v500 = vsel %vm480, %v349, %v490
  %v501 = vsel %vm481, %v351, %v491
  %v502 = vsel %vm482, %v390, %v492
  %v503 = vsel %vm483, %v392, %v493
  %v504 = vsel %vm484, %v431, %v494
  %v505 = vsel %vm485, %v433, %v495
  %v506 = vsel %vm486, %v472, %v496
  %v507 = vsel %vm487, %v474, %v497
  %vm508 = vcmask 1043456
  %v509 = vsel %vm508, %v498, 0.0
  %v510 = vsel %vm508, %v499, 0.0
  %v511 = vadd.f32 %v509, %v510
  %v512 = vsel %vm508, %v500, 0.0
  %v513 = vadd.f32 %v511, %v512
  %v514 = vsel %vm508, %v501, 0.0
  %v515 = vadd.f32 %v513, %v514
  %v516 = vsel %vm508, %v502, 0.0
  %v517 = vadd.f32 %v515, %v516
  %v518 = vsel %vm508, %v503, 0.0
  %v519 = vadd.f32 %v517, %v518
  %v520 = vsel %vm508, %v504, 0.0
  %v521 = vadd.f32 %v519, %v520
  %v522 = vsel %vm508, %v505, 0.0
  %v523 = vadd.f32 %v521, %v522
  %v524 = vsel %vm508, %v506, 0.0
  %v525 = vadd.f32 %v523, %v524
  %v526 = vsel %vm508, %v507, 0.0
  %v527 = vadd.f32 %v525, %v526
  %528 = vadd.xlane.f32.xlu0 %v527
  %v529 = vpop.xlane.xlu0 %528
  %v530 = vrcp.pop 1280.0
  %v531 = vmul.f32 %v529, %v530
  %v532 = vsub.f32 %v498, %v531
  %v533 = vsub.f32 %v499, %v531
  %v534 = vsub.f32 %v500, %v531
  %v535 = vsub.f32 %v501, %v531
  %v536 = vsub.f32 %v502, %v531
  %v537 = vsub.f32 %v503, %v531
  %v538 = vsub.f32 %v504, %v531
  %v539 = vsub.f32 %v505, %v531
  %v540 = vsub.f32 %v506, %v531
  %v541 = vsub.f32 %v507, %v531
  %v542 = vmul.f32 %v532, %v532
  %v543 = vmul.f32 %v533, %v533
  %v544 = vmul.f32 %v534, %v534
  %v545 = vmul.f32 %v535, %v535
  %v546 = vmul.f32 %v536, %v536
  %v547 = vmul.f32 %v537, %v537
  %v548 = vmul.f32 %v538, %v538
  %v549 = vmul.f32 %v539, %v539
  %v550 = vmul.f32 %v540, %v540
  %v551 = vmul.f32 %v541, %v541
  %v552 = vsel %vm508, %v542, 0.0
  %v553 = vsel %vm508, %v543, 0.0
  %v554 = vadd.f32 %v552, %v553
  %v555 = vsel %vm508, %v544, 0.0
  %v556 = vadd.f32 %v554, %v555
  %v557 = vsel %vm508, %v545, 0.0
  %v558 = vadd.f32 %v556, %v557
  %v559 = vsel %vm508, %v546, 0.0
  %v560 = vadd.f32 %v558, %v559
  %v561 = vsel %vm508, %v547, 0.0
  %v562 = vadd.f32 %v560, %v561
  %v563 = vsel %vm508, %v548, 0.0
  %v564 = vadd.f32 %v562, %v563
  %v565 = vsel %vm508, %v549, 0.0
  %v566 = vadd.f32 %v564, %v565
  %v567 = vsel %vm508, %v550, 0.0
  %v568 = vadd.f32 %v566, %v567
  %v569 = vsel %vm508, %v551, 0.0
  %v570 = vadd.f32 %v568, %v569
  %571 = vadd.xlane.f32.xlu0 %v570
  %v572 = vpop.xlane.xlu0 %571
  %v573 = vmul.f32 %v572, %v530
  %v574 = vadd.f32 %v573, 1e-05
  %v575 = vrsqrt.pop %v574
  %v576 = vmul.f32 %v532, %v575
  %v577 = vmul.f32 %v533, %v575
  %v578 = vmul.f32 %v534, %v575
  %v579 = vmul.f32 %v535, %v575
  %v580 = vmul.f32 %v536, %v575
  %v581 = vmul.f32 %v537, %v575
  %v582 = vmul.f32 %v538, %v575
  %v583 = vmul.f32 %v539, %v575
  %v584 = vmul.f32 %v540, %v575
  %v585 = vmul.f32 %v541, %v575
  %v586 = vld [vmem:[%s3] sm:$0xf]
  %588 = vset.pattern.permute.xlu0 0
  %589 = vperm.xlu0 %588, %v586
  %v590 = vpop.permute.xlu0 %589
  %v592 = vmul.f32 %v576, %v590
  %v593 = vmul.f32 %v577, %v590
  %v594 = vmul.f32 %v578, %v590
  %v595 = vmul.f32 %v579, %v590
  %v596 = vmul.f32 %v580, %v590
  %v597 = vmul.f32 %v581, %v590
  %v598 = vmul.f32 %v582, %v590
  %v599 = vmul.f32 %v583, %v590
  %v600 = vmul.f32 %v584, %v590
  %v601 = vmul.f32 %v585, %v590
  %v602 = vld [vmem:[%s4] sm:$0xf]
  %604 = vset.pattern.permute.xlu0 0
  %605 = vperm.xlu0 %604, %v602
  %v606 = vpop.permute.xlu0 %605
  %v608 = vadd.f32 %v592, %v606
  %v609 = vadd.f32 %v593, %v606
  %v610 = vadd.f32 %v594, %v606
  %v611 = vadd.f32 %v595, %v606
  %v612 = vadd.f32 %v596, %v606
  %v613 = vadd.f32 %v597, %v606
  %v614 = vadd.f32 %v598, %v606
  %v615 = vadd.f32 %v599, %v606
  %v616 = vadd.f32 %v600, %v606
  %v617 = vadd.f32 %v601, %v606
  %v628 = vcombine.low %v608, %v609
  %v629 = vcombine.low %v610, %v611
  %v630 = vcombine.low %v612, %v613
  %v631 = vcombine.low %v614, %v615
  %v632 = vcombine.low %v616, %v617
  %638 = vst [vmem:[%s5] sm:$0xff] %v628
  %639 = vst [vmem:[%s5 + $0x8] sm:$0xff] %v629
  %640 = vst [vmem:[%s5 + $0x10] sm:$0xff] %v630
  %641 = vst [vmem:[%s5 + $0x18] sm:$0xff] %v631
  %642 = vst [vmem:[%s5 + $0x20] sm:$0xff] %v632
  // Predicated region
  $region22: #{vae_forward.15} parent=0 // pred_check
    _
  $region23: #{vae_forward.15} parent=0 // pred_check_branch
    %644 = sbr.rel (0) target = $region25
  $region24: #{vae_forward.15} parent=0 // pred_region
    _
  $region25: #{vae_forward.15} parent=0 // pred_fallthru
    _
  // Predicated region
  $region26: #{vae_forward.15} parent=0 // pred_check
    _
  $region27: #{vae_forward.15} parent=0 // pred_check_branch
    %646 = sbr.rel (0) target = $region29
  $region28: #{vae_forward.15} parent=0 // pred_region
    _
  $region29: #{vae_forward.15} parent=0 // pred_fallthru
    _

// kernel: vae_forward.16
$region0: #{vae_forward.16}
  #allocation0 [shape = 'u32[]', space=smem, size = 0x4, offset = 0x4, fixed_abs, tag = 'smem constant byte address 0x4 - core index']
  #allocation1 [shape = 'u32[144,128]{1,0:T(1,128)}', space=vmem, size = 0x12000, scoped, tag = 'internal scratch']
  %s0 = inlined_call_operand.vmem [shape: f32[12,8,128], index: 0, kind: input, shape index: {}]
  %s1 = inlined_call_operand.vmem [shape: s32[1,128], index: 1, kind: input, shape index: {}]
  %s2 = inlined_call_operand.vmem [shape: f32[8,128], index: 2, kind: output, shape index: {0}]
  %s3 = inlined_call_operand.vmem [shape: s32[8,128], index: 3, kind: output, shape index: {1}]
  %4 = xla_tuple %s2, %s3
  %s5 = sld [smem:[#allocation0]]
  $region26: #{vae_forward.16} parent=0
    _
  %s7 = ssub.s32 1, %s5
  %s8 = scalar_select 0, %s7, %s5
  // Predicated region
  $region2: #{vae_forward.16} parent=0 // pred_check
    _
  $region3: #{vae_forward.16} parent=0 // pred_check_branch
    %10 = sbr.rel (0) target = $region5
  $region4: #{vae_forward.16} parent=0 // pred_region
    _
  $region5: #{vae_forward.16} parent=0 // pred_fallthru
    _
  // Predicated region
  $region6: #{vae_forward.16} parent=0 // pred_check
    _
  $region7: #{vae_forward.16} parent=0 // pred_check_branch
    %12 = sbr.rel (0) target = $region9
  $region8: #{vae_forward.16} parent=0 // pred_region
    _
  $region9: #{vae_forward.16} parent=0 // pred_fallthru
    _
  %v13 = vld [vmem:[%s0] sm:$0xff]
  %s14 = scalar_lea.vmem %s0, 8
  %v15 = vld [vmem:[%s14] sm:$0xff]
  %vm16 = vcmp.gt.f32.partialorder %v15, %v13
  %v17 = vsel %vm16, %v15, %v13
  %v18 = vsel %vm16, 1, 0
  %s19 = scalar_lea.vmem %s0, 16
  %v20 = vld [vmem:[%s19] sm:$0xff]
  %vm21 = vcmp.gt.f32.partialorder %v20, %v17
  %v22 = vsel %vm21, %v20, %v17
  %v23 = vsel %vm21, 8, %v18
  %s24 = scalar_lea.vmem %s0, 24
  %v25 = vld [vmem:[%s24] sm:$0xff]
  %vm26 = vcmp.gt.f32.partialorder %v25, %v22
  %v27 = vsel %vm26, %v25, %v22
  %v28 = vsel %vm26, 9, %v23
  %s29 = scalar_lea.vmem %s0, 32
  %v30 = vld [vmem:[%s29] sm:$0xff]
  %vm31 = vcmp.gt.f32.partialorder %v30, %v27
  %v32 = vsel %vm31, %v30, %v27
  %v33 = vsel %vm31, 64, %v28
  %s34 = scalar_lea.vmem %s0, 40
  %v35 = vld [vmem:[%s34] sm:$0xff]
  %vm36 = vcmp.gt.f32.partialorder %v35, %v32
  %v37 = vsel %vm36, %v35, %v32
  %v38 = vsel %vm36, 65, %v33
  %s39 = scalar_lea.vmem %s0, 48
  %v40 = vld [vmem:[%s39] sm:$0xff]
  %vm41 = vcmp.gt.f32.partialorder %v40, %v37
  %v42 = vsel %vm41, %v40, %v37
  %v43 = vsel %vm41, 72, %v38
  %s44 = scalar_lea.vmem %s0, 56
  %v45 = vld [vmem:[%s44] sm:$0xff]
  %vm46 = vcmp.gt.f32.partialorder %v45, %v42
  %v47 = vsel %vm46, %v45, %v42
  %v48 = vsel %vm46, 73, %v43
  %s49 = scalar_lea.vmem %s0, 64
  %v50 = vld [vmem:[%s49] sm:$0xff]
  %vm51 = vcmp.gt.f32.partialorder %v50, %v47
  %v52 = vsel %vm51, %v50, %v47
  %v53 = vsel %vm51, 128, %v48
  %s54 = scalar_lea.vmem %s0, 72
  %v55 = vld [vmem:[%s54] sm:$0xff]
  %vm56 = vcmp.gt.f32.partialorder %v55, %v52
  %v57 = vsel %vm56, %v55, %v52
  %v58 = vsel %vm56, 129, %v53
  %s59 = scalar_lea.vmem %s0, 80
  %v60 = vld [vmem:[%s59] sm:$0xff]
  %vm61 = vcmp.gt.f32.partialorder %v60, %v57
  %v62 = vsel %vm61, %v60, %v57
  %v63 = vsel %vm61, 136, %v58
  %s64 = scalar_lea.vmem %s0, 88
  %v65 = vld [vmem:[%s64] sm:$0xff]
  %vm66 = vcmp.gt.f32.partialorder %v65, %v62
  %v67 = vsel %vm66, %v65, %v62
  %v68 = vsel %vm66, 137, %v63
  %69 = vst [vmem:[%s2] sm:$0xff] %v67
  %v70 = vld [vmem:[%s1] sm:$0x1]
  %v71 = vlaneseq
  %v72 = vshrl.u32 %v71, 7
  %v73 = vsub.s32 0, %v72
  %v74 = vrot.slane %v70, %v73
  %v75 = vadd.s32 %v74, %v68
  %76 = vst [vmem:[%s3] sm:$0xff] %v75
  // Predicated region
  $region10: #{vae_forward.16} parent=0 // pred_check
    _
  $region11: #{vae_forward.16} parent=0 // pred_check_branch
    %78 = sbr.rel (0) target = $region13
  $region12: #{vae_forward.16} parent=0 // pred_region
    _
  $region13: #{vae_forward.16} parent=0 // pred_fallthru
    _
  // Predicated region
  $region14: #{vae_forward.16} parent=0 // pred_check
    _
  $region15: #{vae_forward.16} parent=0 // pred_check_branch
    %80 = sbr.rel (0) target = $region17
  $region16: #{vae_forward.16} parent=0 // pred_region
    _
  $region17: #{vae_forward.16} parent=0 // pred_fallthru
    _
  // Predicated region
  $region18: #{vae_forward.16} parent=0 // pred_check
    _
  $region19: #{vae_forward.16} parent=0 // pred_check_branch
    %82 = sbr.rel (0) target = $region21
  $region20: #{vae_forward.16} parent=0 // pred_region
    _
  $region21: #{vae_forward.16} parent=0 // pred_fallthru
    _
  // Predicated region
  $region22: #{vae_forward.16} parent=0 // pred_check
    _
  $region23: #{vae_forward.16} parent=0 // pred_check_branch
    %84 = sbr.rel (0) target = $region25
  $region24: #{vae_forward.16} parent=0 // pred_region
    _
  $region25: #{vae_forward.16} parent=0 // pred_fallthru
    _

// kernel: vae_forward.17
$region0: #{vae_forward.17}
  #allocation0 [shape = 'u32[]', space=smem, size = 0x4, offset = 0x4, fixed_abs, tag = 'smem constant byte address 0x4 - core index']
  #allocation1 [shape = 'u32[144,128]{1,0:T(1,128)}', space=vmem, size = 0x12000, scoped, tag = 'internal scratch']
  %s0 = inlined_call_operand.vmem [shape: bf16[108,256], index: 0, kind: input, shape index: {}]
  %s1 = inlined_call_operand.vmem [shape: bf16[8,108], index: 1, kind: input, shape index: {}]
  %s2 = inlined_call_operand.vmem [shape: f32[8,1], index: 2, kind: input, shape index: {}]
  %s3 = inlined_call_operand.vmem [shape: f32[8,1], index: 3, kind: input, shape index: {}]
  %s4 = inlined_call_operand.vmem [shape: f32[8,1], index: 4, kind: input, shape index: {}]
  %s5 = inlined_call_operand.vmem [shape: f32[8,256], index: 5, kind: output, shape index: {}]
  %s6 = sld [smem:[#allocation0]]
  $region30: #{vae_forward.17} parent=0
    _
  %s8 = ssub.s32 1, %s6
  %s9 = scalar_select 0, %s8, %s6
  // Predicated region
  $region2: #{vae_forward.17} parent=0 // pred_check
    _
  $region3: #{vae_forward.17} parent=0 // pred_check_branch
    %11 = sbr.rel (0) target = $region5
  $region4: #{vae_forward.17} parent=0 // pred_region
    _
  $region5: #{vae_forward.17} parent=0 // pred_fallthru
    _
  // Predicated region
  $region6: #{vae_forward.17} parent=0 // pred_check
    _
  $region7: #{vae_forward.17} parent=0 // pred_check_branch
    %13 = sbr.rel (0) target = $region9
  $region8: #{vae_forward.17} parent=0 // pred_region
    _
  $region9: #{vae_forward.17} parent=0 // pred_fallthru
    _
  // Predicated region
  $region10: #{vae_forward.17} parent=0 // pred_check
    _
  $region11: #{vae_forward.17} parent=0 // pred_check_branch
    %15 = sbr.rel (0) target = $region13
  $region12: #{vae_forward.17} parent=0 // pred_region
    _
  $region13: #{vae_forward.17} parent=0 // pred_fallthru
    _
  // Predicated region
  $region14: #{vae_forward.17} parent=0 // pred_check
    _
  $region15: #{vae_forward.17} parent=0 // pred_check_branch
    %17 = sbr.rel (0) target = $region17
  $region16: #{vae_forward.17} parent=0 // pred_region
    _
  $region17: #{vae_forward.17} parent=0 // pred_fallthru
    _
  // Predicated region
  $region18: #{vae_forward.17} parent=0 // pred_check
    _
  $region19: #{vae_forward.17} parent=0 // pred_check_branch
    %19 = sbr.rel (0) target = $region21
  $region20: #{vae_forward.17} parent=0 // pred_region
    _
  $region21: #{vae_forward.17} parent=0 // pred_fallthru
    _
  %v21 = vld [vmem:[%s1] sm:$0xf]
  %v22 = vld [vmem:[%s0] sm:$0xff]
  %v23 = vld [vmem:[%s0 + $0x8] sm:$0xff]
  %v24 = vld [vmem:[%s0 + $0x10] sm:$0xff]
  %v25 = vld [vmem:[%s0 + $0x18] sm:$0xff]
  %v26 = vld [vmem:[%s0 + $0x20] sm:$0xff]
  %v27 = vld [vmem:[%s0 + $0x28] sm:$0xff]
  %v28 = vld [vmem:[%s0 + $0x30] sm:$0xff]
  %v29 = vld [vmem:[%s0 + $0x38] sm:$0xff]
  %v30 = vld [vmem:[%s0 + $0x40] sm:$0xff]
  %v31 = vld [vmem:[%s0 + $0x48] sm:$0xff]
  %v32 = vld [vmem:[%s0 + $0x50] sm:$0xff]
  %v33 = vld [vmem:[%s0 + $0x58] sm:$0xff]
  %v34 = vld [vmem:[%s0 + $0x60] sm:$0xff]
  %v35 = vld [vmem:[%s0 + $0x68] sm:$0x33]
  %v36 = vld [vmem:[%s2] sm:$0xff]
  %38 = vset.pattern.permute.xlu0 0
  %39 = vperm.xlu0 %38, %v36
  %v40 = vpop.permute.xlu0 %39
  %v56 = vunpack.c.l.b16 %v22
  %v57 = vunpack.c.h.b16 %v22
  %v58 = vunpack.c.l.b16 %v23
  %v59 = vunpack.c.h.b16 %v23
  %v60 = vunpack.c.l.b16 %v24
  %v61 = vunpack.c.h.b16 %v24
  %v62 = vunpack.c.l.b16 %v25
  %v63 = vunpack.c.h.b16 %v25
  %v64 = vunpack.c.l.b16 %v26
  %v65 = vunpack.c.h.b16 %v26
  %v66 = vunpack.c.l.b16 %v27
  %v67 = vunpack.c.h.b16 %v27
  %v68 = vunpack.c.l.b16 %v28
  %v69 = vunpack.c.h.b16 %v28
  %v70 = vunpack.c.l.b16 %v29
  %v71 = vunpack.c.h.b16 %v29
  %v72 = vunpack.c.l.b16 %v30
  %v73 = vunpack.c.h.b16 %v30
  %v74 = vunpack.c.l.b16 %v31
  %v75 = vunpack.c.h.b16 %v31
  %v76 = vunpack.c.l.b16 %v32
  %v77 = vunpack.c.h.b16 %v32
  %v78 = vunpack.c.l.b16 %v33
  %v79 = vunpack.c.h.b16 %v33
  %v80 = vunpack.c.l.b16 %v34
  %v81 = vunpack.c.h.b16 %v34
  %v82 = vunpack.c.l.b16 %v35
  %v83 = vunpack.c.h.b16 %v35
  %v84 = vpack.c.b16 %v58, %v56
  %v85 = vpack.c.b16 %v59, %v57
  %v86 = vpack.c.b16 %v62, %v60
  %v87 = vpack.c.b16 %v63, %v61
  %v88 = vpack.c.b16 %v66, %v64
  %v89 = vpack.c.b16 %v67, %v65
  %v90 = vpack.c.b16 %v70, %v68
  %v91 = vpack.c.b16 %v71, %v69
  %v92 = vpack.c.b16 %v74, %v72
  %v93 = vpack.c.b16 %v75, %v73
  %v94 = vpack.c.b16 %v78, %v76
  %v95 = vpack.c.b16 %v79, %v77
  %v96 = vpack.c.b16 %v82, %v80
  %v97 = vpack.c.b16 %v83, %v81
  %vm110 = vcmask 883712
  %v112 = vsel %vm110, %v21, 0
  %vm114 = vcmask 1045504
  %v116 = vsel %vm114, %v96, 0
  %v119 = vsel %vm114, %v97, 0
  %121 = vmatprep.subr.bf16.mxu0 %v85
  %122 = vmatpush1.bf16.msra.mxu0 %v84
  %123 = vmatprep.subr.bf16.mxu0 %v87
  %124 = vmatpush1.bf16.msra.mxu0 %v86
  %125 = vmatprep.subr.bf16.mxu0 %v89
  %126 = vmatpush1.bf16.msra.mxu0 %v88
  %127 = vmatprep.subr.bf16.mxu0 %v91
  %128 = vmatpush1.bf16.msra.mxu0 %v90
  %129 = vmatprep.subr.bf16.mxu0 %v93
  %130 = vmatpush1.bf16.msra.mxu0 %v92
  %131 = vmatprep.subr.bf16.mxu0 %v95
  %132 = vmatpush1.bf16.msra.mxu0 %v94
  %133 = vmatprep.subr.bf16.mxu0 %v119
  %134 = vmatpush1.bf16.msra.mxu0 %v116
  %135 = vmatprep.subr.bf16.mxu0 0
  %136 = vmatpush1.bf16.msra.mxu0 0
  %137 = vmatprep.subr.bf16.mxu0 0
  %138 = vmatpush1.bf16.msra.mxu0 0
  %139 = vmatprep.subr.bf16.mxu0 0
  %140 = vmatpush1.bf16.msra.mxu0 0
  %141 = vmatprep.subr.bf16.mxu0 0
  %142 = vmatpush1.bf16.msra.mxu0 0
  %143 = vmatprep.subr.bf16.mxu0 0
  %144 = vmatpush1.bf16.msra.mxu0 0
  %145 = vmatprep.subr.bf16.mxu0 0
  %146 = vmatpush1.bf16.msra.mxu0 0
  %147 = vmatprep.subr.bf16.mxu0 0
  %148 = vmatpush1.bf16.msra.mxu0 0
  %149 = vmatprep.subr.bf16.mxu0 0
  %150 = vmatpush1.bf16.msra.mxu0 0
  %151 = vmatprep.subr.bf16.mxu0 0
  %152 = vmatpush1.bf16.msra.mxu0 0
  %153 = vmatprep.mubr.bf16.mxu0 0
  %154 = vmatmul.mubr.bf16.gmra.mrb[0].mxu0 %v112
  %v155 = vpop.f32.mrb[0].mxu0
  %v156 = vadd.f32 %v40, %v155
  %v157 = vpop.f32.mrb[0].mxu0
  %v158 = vadd.f32 %v40, %v157
  %v159 = vpop.f32.mrb[0].mxu0
  %v160 = vpop.f32.mrb[0].mxu0
  %161 = vdwg.mxu0
  %v162 = vadd.f32 %v156, %v158
  %163 = vadd.xlane.f32.xlu0 %v162
  %v164 = vpop.xlane.xlu0 %163
  %v165 = vrcp.pop 256.0
  %v166 = vmul.f32 %v164, %v165
  %v167 = vsub.f32 %v156, %v166
  %v168 = vsub.f32 %v158, %v166
  %v169 = vmul.f32 %v167, %v167
  %v170 = vmul.f32 %v168, %v168
  %v171 = vadd.f32 %v169, %v170
  %172 = vadd.xlane.f32.xlu0 %v171
  %v173 = vpop.xlane.xlu0 %172
  %v174 = vmul.f32 %v173, %v165
  %v175 = vadd.f32 %v174, 1e-05
  %v176 = vrsqrt.pop %v175
  %v177 = vmul.f32 %v167, %v176
  %v178 = vmul.f32 %v168, %v176
  %v179 = vld [vmem:[%s3] sm:$0xff]
  %181 = vset.pattern.permute.xlu0 0
  %182 = vperm.xlu0 %181, %v179
  %v183 = vpop.permute.xlu0 %182
  %v185 = vmul.f32 %v177, %v183
  %v186 = vmul.f32 %v178, %v183
  %v187 = vld [vmem:[%s4] sm:$0xff]
  %189 = vset.pattern.permute.xlu0 0
  %190 = vperm.xlu0 %189, %v187
  %v191 = vpop.permute.xlu0 %190
  %v193 = vadd.f32 %v185, %v191
  %v194 = vadd.f32 %v186, %v191
  %vm195 = vcmp.gt.f32.partialorder %v193, 0.0
  %vm196 = vcmp.gt.f32.partialorder %v194, 0.0
  %v197 = vmul.f32 %v193, 0.01
  %v198 = vmul.f32 %v194, 0.01
  %v199 = vsel %vm195, %v193, %v197
  %v200 = vsel %vm196, %v194, %v198
  %201 = vst [vmem:[%s5] sm:$0xff] %v199
  %202 = vst [vmem:[%s5 + $0x8] sm:$0xff] %v200
  // Predicated region
  $region22: #{vae_forward.17} parent=0 // pred_check
    _
  $region23: #{vae_forward.17} parent=0 // pred_check_branch
    %204 = sbr.rel (0) target = $region25
  $region24: #{vae_forward.17} parent=0 // pred_region
    _
  $region25: #{vae_forward.17} parent=0 // pred_fallthru
    _
  // Predicated region
  $region26: #{vae_forward.17} parent=0 // pred_check
    _
  $region27: #{vae_forward.17} parent=0 // pred_check_branch
    %206 = sbr.rel (0) target = $region29
  $region28: #{vae_forward.17} parent=0 // pred_region
    _
  $region29: #{vae_forward.17} parent=0 // pred_fallthru
    _

// kernel: vae_forward.18
$region0: #{vae_forward.18}
  #allocation0 [shape = 'u32[]', space=smem, size = 0x4, offset = 0x4, fixed_abs, tag = 'smem constant byte address 0x4 - core index']
  #allocation1 [shape = 'u32[144,128]{1,0:T(1,128)}', space=vmem, size = 0x12000, scoped, tag = 'internal scratch']
  %s0 = inlined_call_operand.vmem [shape: f32[12,16,24], index: 0, kind: input, shape index: {}]
  %s1 = inlined_call_operand.vmem [shape: s32[1,24], index: 1, kind: input, shape index: {}]
  %s2 = inlined_call_operand.vmem [shape: f32[16,24], index: 2, kind: output, shape index: {0}]
  %s3 = inlined_call_operand.vmem [shape: s32[16,24], index: 3, kind: output, shape index: {1}]
  %4 = xla_tuple %s2, %s3
  %s5 = sld [smem:[#allocation0]]
  $region26: #{vae_forward.18} parent=0
    _
  %s7 = ssub.s32 1, %s5
  %s8 = scalar_select 0, %s7, %s5
  // Predicated region
  $region2: #{vae_forward.18} parent=0 // pred_check
    _
  $region3: #{vae_forward.18} parent=0 // pred_check_branch
    %10 = sbr.rel (0) target = $region5
  $region4: #{vae_forward.18} parent=0 // pred_region
    _
  $region5: #{vae_forward.18} parent=0 // pred_fallthru
    _
  // Predicated region
  $region6: #{vae_forward.18} parent=0 // pred_check
    _
  $region7: #{vae_forward.18} parent=0 // pred_check_branch
    %12 = sbr.rel (0) target = $region9
  $region8: #{vae_forward.18} parent=0 // pred_region
    _
  $region9: #{vae_forward.18} parent=0 // pred_fallthru
    _
  %v13 = vld [vmem:[%s0] sm:$0xff]
  %v14 = vld [vmem:[%s0 + $0x8] sm:$0xff]
  %s15 = scalar_lea.vmem %s0, 16
  %v16 = vld [vmem:[%s15] sm:$0xff]
  %v17 = vld [vmem:[%s15 + $0x8] sm:$0xff]
  %vm18 = vcmp.gt.f32.partialorder %v16, %v13
  %vm19 = vcmp.gt.f32.partialorder %v17, %v14
  %v20 = vsel %vm18, %v16, %v13
  %v21 = vsel %vm19, %v17, %v14
  %v22 = vsel %vm18, 1, 0
  %v23 = vsel %vm19, 1, 0
  %s24 = scalar_lea.vmem %s0, 32
  %v25 = vld [vmem:[%s24] sm:$0xff]
  %v26 = vld [vmem:[%s24 + $0x8] sm:$0xff]
  %vm27 = vcmp.gt.f32.partialorder %v25, %v20
  %vm28 = vcmp.gt.f32.partialorder %v26, %v21
  %v29 = vsel %vm27, %v25, %v20
  %v30 = vsel %vm28, %v26, %v21
  %v31 = vsel %vm27, 4, %v22
  %v32 = vsel %vm28, 4, %v23
  %s33 = scalar_lea.vmem %s0, 48
  %v34 = vld [vmem:[%s33] sm:$0xff]
  %v35 = vld [vmem:[%s33 + $0x8] sm:$0xff]
  %vm36 = vcmp.gt.f32.partialorder %v34, %v29
  %vm37 = vcmp.gt.f32.partialorder %v35, %v30
  %v38 = vsel %vm36, %v34, %v29
  %v39 = vsel %vm37, %v35, %v30
  %v40 = vsel %vm36, 5, %v31
  %v41 = vsel %vm37, 5, %v32
  %s42 = scalar_lea.vmem %s0, 64
  %v43 = vld [vmem:[%s42] sm:$0xff]
  %v44 = vld [vmem:[%s42 + $0x8] sm:$0xff]
  %vm45 = vcmp.gt.f32.partialorder %v43, %v38
  %vm46 = vcmp.gt.f32.partialorder %v44, %v39
  %v47 = vsel %vm45, %v43, %v38
  %v48 = vsel %vm46, %v44, %v39
  %v49 = vsel %vm45, 16, %v40
  %v50 = vsel %vm46, 16, %v41
  %s51 = scalar_lea.vmem %s0, 80
  %v52 = vld [vmem:[%s51] sm:$0xff]
  %v53 = vld [vmem:[%s51 + $0x8] sm:$0xff]
  %vm54 = vcmp.gt.f32.partialorder %v52, %v47
  %vm55 = vcmp.gt.f32.partialorder %v53, %v48
  %v56 = vsel %vm54, %v52, %v47
  %v57 = vsel %vm55, %v53, %v48
  %v58 = vsel %vm54, 17, %v49
  %v59 = vsel %vm55, 17, %v50
  %s60 = scalar_lea.vmem %s0, 96
  %v61 = vld [vmem:[%s60] sm:$0xff]
  %v62 = vld [vmem:[%s60 + $0x8] sm:$0xff]
  %vm63 = vcmp.gt.f32.partialorder %v61, %v56
  %vm64 = vcmp.gt.f32.partialorder %v62, %v57
  %v65 = vsel %vm63, %v61, %v56
  %v66 = vsel %vm64, %v62, %v57
  %v67 = vsel %vm63, 20, %v58
  %v68 = vsel %vm64, 20, %v59
  %s69 = scalar_lea.vmem %s0, 112
  %v70 = vld [vmem:[%s69] sm:$0xff]
  %v71 = vld [vmem:[%s69 + $0x8] sm:$0xff]
  %vm72 = vcmp.gt.f32.partialorder %v70, %v65
  %vm73 = vcmp.gt.f32.partialorder %v71, %v66
  %v74 = vsel %vm72, %v70, %v65
  %v75 = vsel %vm73, %v71, %v66
  %v76 = vsel %vm72, 21, %v67
  %v77 = vsel %vm73, 21, %v68
  %s78 = scalar_lea.vmem %s0, 128
  %v79 = vld [vmem:[%s78] sm:$0xff]
  %v80 = vld [vmem:[%s78 + $0x8] sm:$0xff]
  %vm81 = vcmp.gt.f32.partialorder %v79, %v74
  %vm82 = vcmp.gt.f32.partialorder %v80, %v75
  %v83 = vsel %vm81, %v79, %v74
  %v84 = vsel %vm82, %v80, %v75
  %v85 = vsel %vm81, 32, %v76
  %v86 = vsel %vm82, 32, %v77
  %s87 = scalar_lea.vmem %s0, 144
  %v88 = vld [vmem:[%s87] sm:$0xff]
  %v89 = vld [vmem:[%s87 + $0x8] sm:$0xff]
  %vm90 = vcmp.gt.f32.partialorder %v88, %v83
  %vm91 = vcmp.gt.f32.partialorder %v89, %v84
  %v92 = vsel %vm90, %v88, %v83
  %v93 = vsel %vm91, %v89, %v84
  %v94 = vsel %vm90, 33, %v85
  %v95 = vsel %vm91, 33, %v86
  %s96 = scalar_lea.vmem %s0, 160
  %v97 = vld [vmem:[%s96] sm:$0xff]
  %v98 = vld [vmem:[%s96 + $0x8] sm:$0xff]
  %vm99 = vcmp.gt.f32.partialorder %v97, %v92
  %vm100 = vcmp.gt.f32.partialorder %v98, %v93
  %v101 = vsel %vm99, %v97, %v92
  %v102 = vsel %vm100, %v98, %v93
  %v103 = vsel %vm99, 36, %v94
  %v104 = vsel %vm100, 36, %v95
  %s105 = scalar_lea.vmem %s0, 176
  %v106 = vld [vmem:[%s105] sm:$0xff]
  %v107 = vld [vmem:[%s105 + $0x8] sm:$0xff]
  %vm108 = vcmp.gt.f32.partialorder %v106, %v101
  %vm109 = vcmp.gt.f32.partialorder %v107, %v102
  %v110 = vsel %vm108, %v106, %v101
  %v111 = vsel %vm109, %v107, %v102
  %v112 = vsel %vm108, 37, %v103
  %v113 = vsel %vm109, 37, %v104
  %vm114 = vcmask 195584
  %115 = vst.msk [vmem:[%s2] sm:$0xff] %vm114, %v110
  %116 = vst.msk [vmem:[%s2 + $0x8] sm:$0xff] %vm114, %v111
  %v117 = vld [vmem:[%s1] sm:$0x1]
  %v118 = vlaneseq
  %v119 = vshrl.u32 %v118, 7
  %v120 = vsub.s32 0, %v119
  %v121 = vrot.slane %v117, %v120
  %v122 = vadd.s32 %v121, %v112
  %v123 = vadd.s32 %v121, %v113
  %124 = vst.msk [vmem:[%s3] sm:$0xff] %vm114, %v122
  %125 = vst.msk [vmem:[%s3 + $0x8] sm:$0xff] %vm114, %v123
  // Predicated region
  $region10: #{vae_forward.18} parent=0 // pred_check
    _
  $region11: #{vae_forward.18} parent=0 // pred_check_branch
    %127 = sbr.rel (0) target = $region13
  $region12: #{vae_forward.18} parent=0 // pred_region
    _
  $region13: #{vae_forward.18} parent=0 // pred_fallthru
    _
  // Predicated region
  $region14: #{vae_forward.18} parent=0 // pred_check
    _
  $region15: #{vae_forward.18} parent=0 // pred_check_branch
    %129 = sbr.rel (0) target = $region17
  $region16: #{vae_forward.18} parent=0 // pred_region
    _
  $region17: #{vae_forward.18} parent=0 // pred_fallthru
    _
  // Predicated region
  $region18: #{vae_forward.18} parent=0 // pred_check
    _
  $region19: #{vae_forward.18} parent=0 // pred_check_branch
    %131 = sbr.rel (0) target = $region21
  $region20: #{vae_forward.18} parent=0 // pred_region
    _
  $region21: #{vae_forward.18} parent=0 // pred_fallthru
    _
  // Predicated region
  $region22: #{vae_forward.18} parent=0 // pred_check
    _
  $region23: #{vae_forward.18} parent=0 // pred_check_branch
    %133 = sbr.rel (0) target = $region25
  $region24: #{vae_forward.18} parent=0 // pred_region
    _
  $region25: #{vae_forward.18} parent=0 // pred_fallthru
    _

// kernel: vae_forward.19
$region0: #{vae_forward.19}
  #allocation0 [shape = 'u32[]', space=smem, size = 0x4, offset = 0x4, fixed_abs, tag = 'smem constant byte address 0x4 - core index']
  #allocation1 [shape = 'u32[144,128]{1,0:T(1,128)}', space=vmem, size = 0x12000, scoped, tag = 'internal scratch']
  %s0 = inlined_call_operand.vmem [shape: bf16[216,48], index: 0, kind: input, shape index: {}]
  %s1 = inlined_call_operand.vmem [shape: bf16[16,216], index: 1, kind: input, shape index: {}]
  %s2 = inlined_call_operand.vmem [shape: f32[16,1], index: 2, kind: input, shape index: {}]
  %s3 = inlined_call_operand.vmem [shape: f32[16,1], index: 3, kind: input, shape index: {}]
  %s4 = inlined_call_operand.vmem [shape: f32[16,1], index: 4, kind: input, shape index: {}]
  %s5 = inlined_call_operand.vmem [shape: f32[16,48], index: 5, kind: output, shape index: {}]
  %s6 = sld [smem:[#allocation0]]
  $region30: #{vae_forward.19} parent=0
    _
  %s8 = ssub.s32 1, %s6
  %s9 = scalar_select 0, %s8, %s6
  // Predicated region
  $region2: #{vae_forward.19} parent=0 // pred_check
    _
  $region3: #{vae_forward.19} parent=0 // pred_check_branch
    %11 = sbr.rel (0) target = $region5
  $region4: #{vae_forward.19} parent=0 // pred_region
    _
  $region5: #{vae_forward.19} parent=0 // pred_fallthru
    _
  // Predicated region
  $region6: #{vae_forward.19} parent=0 // pred_check
    _
  $region7: #{vae_forward.19} parent=0 // pred_check_branch
    %13 = sbr.rel (0) target = $region9
  $region8: #{vae_forward.19} parent=0 // pred_region
    _
  $region9: #{vae_forward.19} parent=0 // pred_fallthru
    _
  // Predicated region
  $region10: #{vae_forward.19} parent=0 // pred_check
    _
  $region11: #{vae_forward.19} parent=0 // pred_check_branch
    %15 = sbr.rel (0) target = $region13
  $region12: #{vae_forward.19} parent=0 // pred_region
    _
  $region13: #{vae_forward.19} parent=0 // pred_fallthru
    _
  // Predicated region
  $region14: #{vae_forward.19} parent=0 // pred_check
    _
  $region15: #{vae_forward.19} parent=0 // pred_check_branch
    %17 = sbr.rel (0) target = $region17
  $region16: #{vae_forward.19} parent=0 // pred_region
    _
  $region17: #{vae_forward.19} parent=0 // pred_fallthru
    _
  // Predicated region
  $region18: #{vae_forward.19} parent=0 // pred_check
    _
  $region19: #{vae_forward.19} parent=0 // pred_check_branch
    %19 = sbr.rel (0) target = $region21
  $region20: #{vae_forward.19} parent=0 // pred_region
    _
  $region21: #{vae_forward.19} parent=0 // pred_fallthru
    _
  %v21 = vld [vmem:[%s1] sm:$0xff]
  %v22 = vld [vmem:[%s1 + $0x8] sm:$0xff]
  %v23 = vld [vmem:[%s0] sm:$0xf]
  %v24 = vld [vmem:[%s0 + $0x4] sm:$0xf]
  %v25 = vld [vmem:[%s0 + $0x8] sm:$0xf]
  %v26 = vld [vmem:[%s0 + $0xc] sm:$0xf]
  %v27 = vld [vmem:[%s0 + $0x10] sm:$0xf]
  %v28 = vld [vmem:[%s0 + $0x14] sm:$0xf]
  %v29 = vld [vmem:[%s0 + $0x18] sm:$0xf]
  %v30 = vld [vmem:[%s0 + $0x1c] sm:$0xf]
  %v31 = vld [vmem:[%s0 + $0x20] sm:$0xf]
  %v32 = vld [vmem:[%s0 + $0x24] sm:$0xf]
  %v33 = vld [vmem:[%s0 + $0x28] sm:$0xf]
  %v34 = vld [vmem:[%s0 + $0x2c] sm:$0xf]
  %v35 = vld [vmem:[%s0 + $0x30] sm:$0xf]
  %v36 = vld [vmem:[%s0 + $0x34] sm:$0xf]
  %v37 = vld [vmem:[%s0 + $0x38] sm:$0xf]
  %v38 = vld [vmem:[%s0 + $0x3c] sm:$0xf]
  %v39 = vld [vmem:[%s0 + $0x40] sm:$0xf]
  %v40 = vld [vmem:[%s0 + $0x44] sm:$0xf]
  %v41 = vld [vmem:[%s0 + $0x48] sm:$0xf]
  %v42 = vld [vmem:[%s0 + $0x4c] sm:$0xf]
  %v43 = vld [vmem:[%s0 + $0x50] sm:$0xf]
  %v44 = vld [vmem:[%s0 + $0x54] sm:$0xf]
  %v45 = vld [vmem:[%s0 + $0x58] sm:$0xf]
  %v46 = vld [vmem:[%s0 + $0x5c] sm:$0xf]
  %v47 = vld [vmem:[%s0 + $0x60] sm:$0xf]
  %v48 = vld [vmem:[%s0 + $0x64] sm:$0xf]
  %v49 = vld [vmem:[%s0 + $0x68] sm:$0xf]
  %v50 = vld [vmem:[%s2] sm:$0xff]
  %v51 = vld [vmem:[%s2 + $0x8] sm:$0xff]
  %53 = vset.pattern.permute.xlu0 0
  %54 = vperm.xlu0 %53, %v50
  %v55 = vpop.permute.xlu0 %54
  %58 = vset.pattern.permute.xlu0 0
  %59 = vperm.xlu0 %58, %v51
  %v60 = vpop.permute.xlu0 %59
  %v64 = vunpack.c.l.b16 %v21
  %v65 = vunpack.c.h.b16 %v21
  %v66 = vunpack.c.l.b16 %v22
  %v67 = vunpack.c.h.b16 %v22
  %v68 = vpack.c.b16 %v66, %v64
  %v69 = vpack.c.b16 %v67, %v65
  %v98 = vunpack.c.l.b16 %v23
  %v99 = vunpack.c.l.b16 %v24
  %v100 = vunpack.c.l.b16 %v25
  %v101 = vunpack.c.l.b16 %v26
  %v102 = vunpack.c.l.b16 %v27
  %v103 = vunpack.c.l.b16 %v28
  %v104 = vunpack.c.l.b16 %v29
  %v105 = vunpack.c.l.b16 %v30
  %v106 = vunpack.c.l.b16 %v31
  %v107 = vunpack.c.l.b16 %v32
  %v108 = vunpack.c.l.b16 %v33
  %v109 = vunpack.c.l.b16 %v34
  %v110 = vunpack.c.l.b16 %v35
  %v111 = vunpack.c.l.b16 %v36
  %v112 = vunpack.c.l.b16 %v37
  %v113 = vunpack.c.l.b16 %v38
  %v114 = vunpack.c.l.b16 %v39
  %v115 = vunpack.c.l.b16 %v40
  %v116 = vunpack.c.l.b16 %v41
  %v117 = vunpack.c.l.b16 %v42
  %v118 = vunpack.c.l.b16 %v43
  %v119 = vunpack.c.l.b16 %v44
  %v120 = vunpack.c.l.b16 %v45
  %v121 = vunpack.c.l.b16 %v46
  %v122 = vunpack.c.l.b16 %v47
  %v123 = vunpack.c.l.b16 %v48
  %v124 = vunpack.c.l.b16 %v49
  %v125 = vpack.c.b16 %v99, %v98
  %v126 = vpack.c.b16 %v101, %v100
  %v127 = vpack.c.b16 %v103, %v102
  %v128 = vpack.c.b16 %v105, %v104
  %v129 = vpack.c.b16 %v107, %v106
  %v130 = vpack.c.b16 %v109, %v108
  %v131 = vpack.c.b16 %v111, %v110
  %v132 = vpack.c.b16 %v113, %v112
  %v133 = vpack.c.b16 %v115, %v114
  %v134 = vpack.c.b16 %v117, %v116
  %v135 = vpack.c.b16 %v119, %v118
  %v136 = vpack.c.b16 %v121, %v120
  %v137 = vpack.c.b16 %v123, %v122
  %v138 = vpack.c.b16 %v124, %v124
  %vm152 = vcmask 719872
  %v154 = vsel %vm152, %v69, 0
  %vm156 = vcmask 1043456
  %v158 = vsel %vm156, %v138, 0
  %160 = vmatprep.subr.bf16.mxu0 0
  %161 = vmatpush1.bf16.msra.mxu0 %v125
  %162 = vmatprep.subr.bf16.mxu0 0
  %163 = vmatpush1.bf16.msra.mxu0 %v126
  %164 = vmatprep.subr.bf16.mxu0 0
  %165 = vmatpush1.bf16.msra.mxu0 %v127
  %166 = vmatprep.subr.bf16.mxu0 0
  %167 = vmatpush1.bf16.msra.mxu0 %v128
  %168 = vmatprep.subr.bf16.mxu0 0
  %169 = vmatpush1.bf16.msra.mxu0 %v129
  %170 = vmatprep.subr.bf16.mxu0 0
  %171 = vmatpush1.bf16.msra.mxu0 %v130
  %172 = vmatprep.subr.bf16.mxu0 0
  %173 = vmatpush1.bf16.msra.mxu0 %v131
  %174 = vmatprep.subr.bf16.mxu0 0
  %175 = vmatpush1.bf16.msra.mxu0 %v132
  %176 = vmatprep.subr.bf16.mxu0 0
  %177 = vmatpush1.bf16.msra.mxu0 %v133
  %178 = vmatprep.subr.bf16.mxu0 0
  %179 = vmatpush1.bf16.msra.mxu0 %v134
  %180 = vmatprep.subr.bf16.mxu0 0
  %181 = vmatpush1.bf16.msra.mxu0 %v135
  %182 = vmatprep.subr.bf16.mxu0 0
  %183 = vmatpush1.bf16.msra.mxu0 %v136
  %184 = vmatprep.subr.bf16.mxu0 0
  %185 = vmatpush1.bf16.msra.mxu0 %v137
  %186 = vmatprep.subr.bf16.mxu0 0
  %187 = vmatpush1.bf16.msra.mxu0 %v158
  %188 = vmatprep.subr.bf16.mxu0 0
  %189 = vmatpush1.bf16.msra.mxu0 0
  %190 = vmatprep.subr.bf16.mxu0 0
  %191 = vmatpush1.bf16.msra.mxu0 0
  %192 = vmatprep.mubr.bf16.mxu0 %v154
  %193 = vmatmul.mubr.bf16.gmra.mrb[0].mxu0 %v68
  %v194 = vpop.f32.mrb[0].mxu0
  %v195 = vadd.f32 %v55, %v194
  %v196 = vpop.f32.mrb[0].mxu0
  %v197 = vpop.f32.mrb[0].mxu0
  %v198 = vadd.f32 %v60, %v197
  %v199 = vpop.f32.mrb[0].mxu0
  %200 = vdwg.mxu0
  %vm201 = vcmask 392192
  %v202 = vsel %vm201, %v195, 0.0
  %203 = vadd.xlane.f32.xlu0 %v202
  %v204 = vpop.xlane.xlu0 %203
  %v205 = vsel %vm201, %v198, 0.0
  %206 = vadd.xlane.f32.xlu0 %v205
  %v207 = vpop.xlane.xlu0 %206
  %v208 = vrcp.pop 48.0
  %v209 = vmul.f32 %v204, %v208
  %v210 = vmul.f32 %v207, %v208
  %v211 = vsub.f32 %v195, %v209
  %v212 = vsub.f32 %v198, %v210
  %v213 = vmul.f32 %v211, %v211
  %v214 = vmul.f32 %v212, %v212
  %v215 = vsel %vm201, %v213, 0.0
  %216 = vadd.xlane.f32.xlu0 %v215
  %v217 = vpop.xlane.xlu0 %216
  %v218 = vsel %vm201, %v214, 0.0
  %219 = vadd.xlane.f32.xlu0 %v218
  %v220 = vpop.xlane.xlu0 %219
  %v221 = vmul.f32 %v217, %v208
  %v222 = vmul.f32 %v220, %v208
  %v223 = vadd.f32 %v221, 1e-05
  %v224 = vadd.f32 %v222, 1e-05
  %v225 = vrsqrt.pop %v223
  %v226 = vrsqrt.pop %v224
  %v227 = vmul.f32 %v211, %v225
  %v228 = vmul.f32 %v212, %v226
  %v229 = vld [vmem:[%s3] sm:$0xff]
  %v230 = vld [vmem:[%s3 + $0x8] sm:$0xff]
  %232 = vset.pattern.permute.xlu0 0
  %233 = vperm.xlu0 %232, %v229
  %v234 = vpop.permute.xlu0 %233
  %237 = vset.pattern.permute.xlu0 0
  %238 = vperm.xlu0 %237, %v230
  %v239 = vpop.permute.xlu0 %238
  %v241 = vmul.f32 %v227, %v234
  %v242 = vmul.f32 %v228, %v239
  %v243 = vld [vmem:[%s4] sm:$0xff]
  %v244 = vld [vmem:[%s4 + $0x8] sm:$0xff]
  %246 = vset.pattern.permute.xlu0 0
  %247 = vperm.xlu0 %246, %v243
  %v248 = vpop.permute.xlu0 %247
  %251 = vset.pattern.permute.xlu0 0
  %252 = vperm.xlu0 %251, %v244
  %v253 = vpop.permute.xlu0 %252
  %v255 = vadd.f32 %v241, %v248
  %v256 = vadd.f32 %v242, %v253
  %257 = vst.msk [vmem:[%s5] sm:$0xff] %vm201, %v255
  %258 = vst.msk [vmem:[%s5 + $0x8] sm:$0xff] %vm201, %v256
  // Predicated region
  $region22: #{vae_forward.19} parent=0 // pred_check
    _
  $region23: #{vae_forward.19} parent=0 // pred_check_branch
    %260 = sbr.rel (0) target = $region25
  $region24: #{vae_forward.19} parent=0 // pred_region
    _
  $region25: #{vae_forward.19} parent=0 // pred_fallthru
    _
  // Predicated region
  $region26: #{vae_forward.19} parent=0 // pred_check
    _
  $region27: #{vae_forward.19} parent=0 // pred_check_branch
    %262 = sbr.rel (0) target = $region29
  $region28: #{vae_forward.19} parent=0 // pred_region
    _
  $region29: #{vae_forward.19} parent=0 // pred_fallthru
    _

// kernel: vae_forward.20
$region0: #{vae_forward.20}
  #allocation0 [shape = 'u32[]', space=smem, size = 0x4, offset = 0x4, fixed_abs, tag = 'smem constant byte address 0x4 - core index']
  #allocation1 [shape = 'u32[144,128]{1,0:T(1,128)}', space=vmem, size = 0x12000, scoped, tag = 'internal scratch']
  %s0 = inlined_call_operand.vmem [shape: f32[12,32,4], index: 0, kind: input, shape index: {}]
  %s1 = inlined_call_operand.vmem [shape: s32[1,4], index: 1, kind: input, shape index: {}]
  %s2 = inlined_call_operand.vmem [shape: f32[32,4], index: 2, kind: output, shape index: {0}]
  %s3 = inlined_call_operand.vmem [shape: s32[32,4], index: 3, kind: output, shape index: {1}]
  %4 = xla_tuple %s2, %s3
  %s5 = sld [smem:[#allocation0]]
  $region26: #{vae_forward.20} parent=0
    _
  %s7 = ssub.s32 1, %s5
  %s8 = scalar_select 0, %s7, %s5
  // Predicated region
  $region2: #{vae_forward.20} parent=0 // pred_check
    _
  $region3: #{vae_forward.20} parent=0 // pred_check_branch
    %10 = sbr.rel (0) target = $region5
  $region4: #{vae_forward.20} parent=0 // pred_region
    _
  $region5: #{vae_forward.20} parent=0 // pred_fallthru
    _
  // Predicated region
  $region6: #{vae_forward.20} parent=0 // pred_check
    _
  $region7: #{vae_forward.20} parent=0 // pred_check_branch
    %12 = sbr.rel (0) target = $region9
  $region8: #{vae_forward.20} parent=0 // pred_region
    _
  $region9: #{vae_forward.20} parent=0 // pred_fallthru
    _
  %v13 = vld [vmem:[%s0] sm:$0xff]
  %v14 = vld [vmem:[%s0 + $0x8] sm:$0xff]
  %v15 = vld [vmem:[%s0 + $0x10] sm:$0xff]
  %v16 = vld [vmem:[%s0 + $0x18] sm:$0xff]
  %s17 = scalar_lea.vmem %s0, 32
  %v18 = vld [vmem:[%s17] sm:$0xff]
  %v19 = vld [vmem:[%s17 + $0x8] sm:$0xff]
  %v20 = vld [vmem:[%s17 + $0x10] sm:$0xff]
  %v21 = vld [vmem:[%s17 + $0x18] sm:$0xff]
  %vm22 = vcmp.gt.f32.partialorder %v18, %v13
  %vm23 = vcmp.gt.f32.partialorder %v19, %v14
  %vm24 = vcmp.gt.f32.partialorder %v20, %v15
  %vm25 = vcmp.gt.f32.partialorder %v21, %v16
  %v26 = vsel %vm22, %v18, %v13
  %v27 = vsel %vm23, %v19, %v14
  %v28 = vsel %vm24, %v20, %v15
  %v29 = vsel %vm25, %v21, %v16
  %v30 = vsel %vm22, 1, 0
  %v31 = vsel %vm23, 1, 0
  %v32 = vsel %vm24, 1, 0
  %v33 = vsel %vm25, 1, 0
  %s34 = scalar_lea.vmem %s0, 64
  %v35 = vld [vmem:[%s34] sm:$0xff]
  %v36 = vld [vmem:[%s34 + $0x8] sm:$0xff]
  %v37 = vld [vmem:[%s34 + $0x10] sm:$0xff]
  %v38 = vld [vmem:[%s34 + $0x18] sm:$0xff]
  %vm39 = vcmp.gt.f32.partialorder %v35, %v26
  %vm40 = vcmp.gt.f32.partialorder %v36, %v27
  %vm41 = vcmp.gt.f32.partialorder %v37, %v28
  %vm42 = vcmp.gt.f32.partialorder %v38, %v29
  %v43 = vsel %vm39, %v35, %v26
  %v44 = vsel %vm40, %v36, %v27
  %v45 = vsel %vm41, %v37, %v28
  %v46 = vsel %vm42, %v38, %v29
  %v47 = vsel %vm39, 2, %v30
  %v48 = vsel %vm40, 2, %v31
  %v49 = vsel %vm41, 2, %v32
  %v50 = vsel %vm42, 2, %v33
  %s51 = scalar_lea.vmem %s0, 96
  %v52 = vld [vmem:[%s51] sm:$0xff]
  %v53 = vld [vmem:[%s51 + $0x8] sm:$0xff]
  %v54 = vld [vmem:[%s51 + $0x10] sm:$0xff]
  %v55 = vld [vmem:[%s51 + $0x18] sm:$0xff]
  %vm56 = vcmp.gt.f32.partialorder %v52, %v43
  %vm57 = vcmp.gt.f32.partialorder %v53, %v44
  %vm58 = vcmp.gt.f32.partialorder %v54, %v45
  %vm59 = vcmp.gt.f32.partialorder %v55, %v46
  %v60 = vsel %vm56, %v52, %v43
  %v61 = vsel %vm57, %v53, %v44
  %v62 = vsel %vm58, %v54, %v45
  %v63 = vsel %vm59, %v55, %v46
  %v64 = vsel %vm56, 3, %v47
  %v65 = vsel %vm57, 3, %v48
  %v66 = vsel %vm58, 3, %v49
  %v67 = vsel %vm59, 3, %v50
  %s68 = scalar_lea.vmem %s0, 128
  %v69 = vld [vmem:[%s68] sm:$0xff]
  %v70 = vld [vmem:[%s68 + $0x8] sm:$0xff]
  %v71 = vld [vmem:[%s68 + $0x10] sm:$0xff]
  %v72 = vld [vmem:[%s68 + $0x18] sm:$0xff]
  %vm73 = vcmp.gt.f32.partialorder %v69, %v60
  %vm74 = vcmp.gt.f32.partialorder %v70, %v61
  %vm75 = vcmp.gt.f32.partialorder %v71, %v62
  %vm76 = vcmp.gt.f32.partialorder %v72, %v63
  %v77 = vsel %vm73, %v69, %v60
  %v78 = vsel %vm74, %v70, %v61
  %v79 = vsel %vm75, %v71, %v62
  %v80 = vsel %vm76, %v72, %v63
  %v81 = vsel %vm73, 4, %v64
  %v82 = vsel %vm74, 4, %v65
  %v83 = vsel %vm75, 4, %v66
  %v84 = vsel %vm76, 4, %v67
  %s85 = scalar_lea.vmem %s0, 160
  %v86 = vld [vmem:[%s85] sm:$0xff]
  %v87 = vld [vmem:[%s85 + $0x8] sm:$0xff]
  %v88 = vld [vmem:[%s85 + $0x10] sm:$0xff]
  %v89 = vld [vmem:[%s85 + $0x18] sm:$0xff]
  %vm90 = vcmp.gt.f32.partialorder %v86, %v77
  %vm91 = vcmp.gt.f32.partialorder %v87, %v78
  %vm92 = vcmp.gt.f32.partialorder %v88, %v79
  %vm93 = vcmp.gt.f32.partialorder %v89, %v80
  %v94 = vsel %vm90, %v86, %v77
  %v95 = vsel %vm91, %v87, %v78
  %v96 = vsel %vm92, %v88, %v79
  %v97 = vsel %vm93, %v89, %v80
  %v98 = vsel %vm90, 5, %v81
  %v99 = vsel %vm91, 5, %v82
  %v100 = vsel %vm92, 5, %v83
  %v101 = vsel %vm93, 5, %v84
  %s102 = scalar_lea.vmem %s0, 192
  %v103 = vld [vmem:[%s102] sm:$0xff]
  %v104 = vld [vmem:[%s102 + $0x8] sm:$0xff]
  %v105 = vld [vmem:[%s102 + $0x10] sm:$0xff]
  %v106 = vld [vmem:[%s102 + $0x18] sm:$0xff]
  %vm107 = vcmp.gt.f32.partialorder %v103, %v94
  %vm108 = vcmp.gt.f32.partialorder %v104, %v95
  %vm109 = vcmp.gt.f32.partialorder %v105, %v96
  %vm110 = vcmp.gt.f32.partialorder %v106, %v97
  %v111 = vsel %vm107, %v103, %v94
  %v112 = vsel %vm108, %v104, %v95
  %v113 = vsel %vm109, %v105, %v96
  %v114 = vsel %vm110, %v106, %v97
  %v115 = vsel %vm107, 6, %v98
  %v116 = vsel %vm108, 6, %v99
  %v117 = vsel %vm109, 6, %v100
  %v118 = vsel %vm110, 6, %v101
  %s119 = scalar_lea.vmem %s0, 224
  %v120 = vld [vmem:[%s119] sm:$0xff]
  %v121 = vld [vmem:[%s119 + $0x8] sm:$0xff]
  %v122 = vld [vmem:[%s119 + $0x10] sm:$0xff]
  %v123 = vld [vmem:[%s119 + $0x18] sm:$0xff]
  %vm124 = vcmp.gt.f32.partialorder %v120, %v111
  %vm125 = vcmp.gt.f32.partialorder %v121, %v112
  %vm126 = vcmp.gt.f32.partialorder %v122, %v113
  %vm127 = vcmp.gt.f32.partialorder %v123, %v114
  %v128 = vsel %vm124, %v120, %v111
  %v129 = vsel %vm125, %v121, %v112
  %v130 = vsel %vm126, %v122, %v113
  %v131 = vsel %vm127, %v123, %v114
  %v132 = vsel %vm124, 7, %v115
  %v133 = vsel %vm125, 7, %v116
  %v134 = vsel %vm126, 7, %v117
  %v135 = vsel %vm127, 7, %v118
  %s136 = scalar_lea.vmem %s0, 256
  %v137 = vld [vmem:[%s136] sm:$0xff]
  %v138 = vld [vmem:[%s136 + $0x8] sm:$0xff]
  %v139 = vld [vmem:[%s136 + $0x10] sm:$0xff]
  %v140 = vld [vmem:[%s136 + $0x18] sm:$0xff]
  %vm141 = vcmp.gt.f32.partialorder %v137, %v128
  %vm142 = vcmp.gt.f32.partialorder %v138, %v129
  %vm143 = vcmp.gt.f32.partialorder %v139, %v130
  %vm144 = vcmp.gt.f32.partialorder %v140, %v131
  %v145 = vsel %vm141, %v137, %v128
  %v146 = vsel %vm142, %v138, %v129
  %v147 = vsel %vm143, %v139, %v130
  %v148 = vsel %vm144, %v140, %v131
  %v149 = vsel %vm141, 8, %v132
  %v150 = vsel %vm142, 8, %v133
  %v151 = vsel %vm143, 8, %v134
  %v152 = vsel %vm144, 8, %v135
  %s153 = scalar_lea.vmem %s0, 288
  %v154 = vld [vmem:[%s153] sm:$0xff]
  %v155 = vld [vmem:[%s153 + $0x8] sm:$0xff]
  %v156 = vld [vmem:[%s153 + $0x10] sm:$0xff]
  %v157 = vld [vmem:[%s153 + $0x18] sm:$0xff]
  %vm158 = vcmp.gt.f32.partialorder %v154, %v145
  %vm159 = vcmp.gt.f32.partialorder %v155, %v146
  %vm160 = vcmp.gt.f32.partialorder %v156, %v147
  %vm161 = vcmp.gt.f32.partialorder %v157, %v148
  %v162 = vsel %vm158, %v154, %v145
  %v163 = vsel %vm159, %v155, %v146
  %v164 = vsel %vm160, %v156, %v147
  %v165 = vsel %vm161, %v157, %v148
  %v166 = vsel %vm158, 9, %v149
  %v167 = vsel %vm159, 9, %v150
  %v168 = vsel %vm160, 9, %v151
  %v169 = vsel %vm161, 9, %v152
  %s170 = scalar_lea.vmem %s0, 320
  %v171 = vld [vmem:[%s170] sm:$0xff]
  %v172 = vld [vmem:[%s170 + $0x8] sm:$0xff]
  %v173 = vld [vmem:[%s170 + $0x10] sm:$0xff]
  %v174 = vld [vmem:[%s170 + $0x18] sm:$0xff]
  %vm175 = vcmp.gt.f32.partialorder %v171, %v162
  %vm176 = vcmp.gt.f32.partialorder %v172, %v163
  %vm177 = vcmp.gt.f32.partialorder %v173, %v164
  %vm178 = vcmp.gt.f32.partialorder %v174, %v165
  %v179 = vsel %vm175, %v171, %v162
  %v180 = vsel %vm176, %v172, %v163
  %v181 = vsel %vm177, %v173, %v164
  %v182 = vsel %vm178, %v174, %v165
  %v183 = vsel %vm175, 10, %v166
  %v184 = vsel %vm176, 10, %v167
  %v185 = vsel %vm177, 10, %v168
  %v186 = vsel %vm178, 10, %v169
  %s187 = scalar_lea.vmem %s0, 352
  %v188 = vld [vmem:[%s187] sm:$0xff]
  %v189 = vld [vmem:[%s187 + $0x8] sm:$0xff]
  %v190 = vld [vmem:[%s187 + $0x10] sm:$0xff]
  %v191 = vld [vmem:[%s187 + $0x18] sm:$0xff]
  %vm192 = vcmp.gt.f32.partialorder %v188, %v179
  %vm193 = vcmp.gt.f32.partialorder %v189, %v180
  %vm194 = vcmp.gt.f32.partialorder %v190, %v181
  %vm195 = vcmp.gt.f32.partialorder %v191, %v182
  %v196 = vsel %vm192, %v188, %v179
  %v197 = vsel %vm193, %v189, %v180
  %v198 = vsel %vm194, %v190, %v181
  %v199 = vsel %vm195, %v191, %v182
  %v200 = vsel %vm192, 11, %v183
  %v201 = vsel %vm193, 11, %v184
  %v202 = vsel %vm194, 11, %v185
  %v203 = vsel %vm195, 11, %v186
  %vm204 = vcmask 31744
  %205 = vst.msk [vmem:[%s2] sm:$0xff] %vm204, %v196
  %206 = vst.msk [vmem:[%s2 + $0x8] sm:$0xff] %vm204, %v197
  %207 = vst.msk [vmem:[%s2 + $0x10] sm:$0xff] %vm204, %v198
  %208 = vst.msk [vmem:[%s2 + $0x18] sm:$0xff] %vm204, %v199
  %v209 = vld [vmem:[%s1] sm:$0x1]
  %v210 = vlaneseq
  %v211 = vshrl.u32 %v210, 7
  %v212 = vsub.s32 0, %v211
  %v213 = vrot.slane %v209, %v212
  %v214 = vadd.s32 %v213, %v200
  %v215 = vadd.s32 %v213, %v201
  %v216 = vadd.s32 %v213, %v202
  %v217 = vadd.s32 %v213, %v203
  %218 = vst.msk [vmem:[%s3] sm:$0xff] %vm204, %v214
  %219 = vst.msk [vmem:[%s3 + $0x8] sm:$0xff] %vm204, %v215
  %220 = vst.msk [vmem:[%s3 + $0x10] sm:$0xff] %vm204, %v216
  %221 = vst.msk [vmem:[%s3 + $0x18] sm:$0xff] %vm204, %v217
  // Predicated region
  $region10: #{vae_forward.20} parent=0 // pred_check
    _
  $region11: #{vae_forward.20} parent=0 // pred_check_branch
    %223 = sbr.rel (0) target = $region13
  $region12: #{vae_forward.20} parent=0 // pred_region
    _
  $region13: #{vae_forward.20} parent=0 // pred_fallthru
    _
  // Predicated region
  $region14: #{vae_forward.20} parent=0 // pred_check
    _
  $region15: #{vae_forward.20} parent=0 // pred_check_branch
    %225 = sbr.rel (0) target = $region17
  $region16: #{vae_forward.20} parent=0 // pred_region
    _
  $region17: #{vae_forward.20} parent=0 // pred_fallthru
    _
  // Predicated region
  $region18: #{vae_forward.20} parent=0 // pred_check
    _
  $region19: #{vae_forward.20} parent=0 // pred_check_branch
    %227 = sbr.rel (0) target = $region21
  $region20: #{vae_forward.20} parent=0 // pred_region
    _
  $region21: #{vae_forward.20} parent=0 // pred_fallthru
    _
  // Predicated region
  $region22: #{vae_forward.20} parent=0 // pred_check
    _
  $region23: #{vae_forward.20} parent=0 // pred_check_branch
    %229 = sbr.rel (0) target = $region25
  $region24: #{vae_forward.20} parent=0 // pred_region
    _
  $region25: #{vae_forward.20} parent=0 // pred_fallthru
    _

// kernel: vae_forward.21
$region0: #{vae_forward.21}
  #allocation0 [shape = 'u32[]', space=smem, size = 0x4, offset = 0x4, fixed_abs, tag = 'smem constant byte address 0x4 - core index']
  #allocation1 [shape = 'u32[144,128]{1,0:T(1,128)}', space=vmem, size = 0x12000, scoped, tag = 'internal scratch']
  %s0 = inlined_call_operand.vmem [shape: f32[2,64], index: 0, kind: input, shape index: {}]
  %s1 = inlined_call_operand.vmem [shape: f32[64,8], index: 1, kind: input, shape index: {}]
  %s2 = inlined_call_operand.vmem [shape: f32[1,8], index: 2, kind: input, shape index: {}]
  %s3 = inlined_call_operand.vmem [shape: f32[64,8], index: 3, kind: input, shape index: {}]
  %s4 = inlined_call_operand.vmem [shape: f32[1,8], index: 4, kind: input, shape index: {}]
  %s5 = inlined_call_operand.vmem [shape: f32[2,8], index: 5, kind: input, shape index: {}]
  %s6 = inlined_call_operand.vmem [shape: f32[8,64], index: 6, kind: input, shape index: {}]
  %s7 = inlined_call_operand.vmem [shape: f32[1,64], index: 7, kind: input, shape index: {}]
  %s8 = inlined_call_operand.hbm [shape: f32[2,8], index: 8, kind: output, shape index: {0}]
  %s9 = inlined_call_operand.hbm [shape: f32[2,8], index: 9, kind: output, shape index: {1}]
  %s10 = inlined_call_operand.hbm [shape: f32[2,8], index: 10, kind: output, shape index: {2}]
  %s11 = inlined_call_operand.vmem [shape: f32[2,64], index: 11, kind: output, shape index: {3}]
  %12 = xla_tuple %s8, %s9, %s10, %s11
  %s13 = sld [smem:[#allocation0]]
  $region66: #{vae_forward.21} parent=0
    _
  %s15 = ssub.s32 1, %s13
  %s16 = scalar_select 0, %s15, %s13
  $region1: #{vae_forward.21} parent=0
    #allocation2 [shape = 'u8[1024]{0}', space=vmem, size = 0x400, scoped, tag = 'output window, operand 0, single buffered']
    #allocation3 [shape = 's32[1]{0}', space=sflag, size = 0x4, scoped, tag = 'scoped memory for vae_forward.21']
    #allocation4 [shape = 'u8[1024]{0}', space=vmem, size = 0x400, scoped, tag = 'output window, operand 1, single buffered']
    #allocation5 [shape = 's32[1]{0}', space=sflag, size = 0x4, scoped, tag = 'scoped memory for vae_forward.21']
    #allocation6 [shape = 'u8[1024]{0}', space=vmem, size = 0x400, scoped, tag = 'output window, operand 2, single buffered']
    %17 = vsyncpa [#allocation3], 0
    %18 = vsyncpa [#allocation5], 0
    // Predicated region
    $region2: #{vae_forward.21} parent=1 // pred_check
      _
    $region3: #{vae_forward.21} parent=1 // pred_check_branch
      %20 = sbr.rel (0) target = $region5
    $region4: #{vae_forward.21} parent=1 // pred_region
      _
    $region5: #{vae_forward.21} parent=1 // pred_fallthru
      _
    // Predicated region
    $region6: #{vae_forward.21} parent=1 // pred_check
      _
    $region7: #{vae_forward.21} parent=1 // pred_check_branch
      %22 = sbr.rel (0) target = $region9
    $region8: #{vae_forward.21} parent=1 // pred_region
      _
    $region9: #{vae_forward.21} parent=1 // pred_fallthru
      _
    // Predicated region
    $region10: #{vae_forward.21} parent=1 // pred_check
      _
    $region11: #{vae_forward.21} parent=1 // pred_check_branch
      %24 = sbr.rel (0) target = $region13
    $region12: #{vae_forward.21} parent=1 // pred_region
      _
    $region13: #{vae_forward.21} parent=1 // pred_fallthru
      _
    // Predicated region
    $region14: #{vae_forward.21} parent=1 // pred_check
      _
    $region15: #{vae_forward.21} parent=1 // pred_check_branch
      %26 = sbr.rel (0) target = $region17
    $region16: #{vae_forward.21} parent=1 // pred_region
      _
    $region17: #{vae_forward.21} parent=1 // pred_fallthru
      _
    // Predicated region
    $region18: #{vae_forward.21} parent=1 // pred_check
      _
    $region19: #{vae_forward.21} parent=1 // pred_check_branch
      %28 = sbr.rel (0) target = $region21
    $region20: #{vae_forward.21} parent=1 // pred_region
      _
    $region21: #{vae_forward.21} parent=1 // pred_fallthru
      _
    // Predicated region
    $region22: #{vae_forward.21} parent=1 // pred_check
      _
    $region23: #{vae_forward.21} parent=1 // pred_check_branch
      %30 = sbr.rel (0) target = $region25
    $region24: #{vae_forward.21} parent=1 // pred_region
      _
    $region25: #{vae_forward.21} parent=1 // pred_fallthru
      _
    // Predicated region
    $region26: #{vae_forward.21} parent=1 // pred_check
      _
    $region27: #{vae_forward.21} parent=1 // pred_check_branch
      %32 = sbr.rel (0) target = $region29
    $region28: #{vae_forward.21} parent=1 // pred_region
      _
    $region29: #{vae_forward.21} parent=1 // pred_fallthru
      _
    // Predicated region
    $region30: #{vae_forward.21} parent=1 // pred_check
      _
    $region31: #{vae_forward.21} parent=1 // pred_check_branch
      %34 = sbr.rel (0) target = $region33
    $region32: #{vae_forward.21} parent=1 // pred_region
      _
    $region33: #{vae_forward.21} parent=1 // pred_fallthru
      _
    %v35 = vld [vmem:[%s0] sm:$0x3]
    %v36 = vld [vmem:[%s1] sm:$0xff]
    %v37 = vld [vmem:[%s1 + $0x8] sm:$0xff]
    %v38 = vld [vmem:[%s1 + $0x10] sm:$0xff]
    %v39 = vld [vmem:[%s1 + $0x18] sm:$0xff]
    %v40 = vld [vmem:[%s1 + $0x20] sm:$0xff]
    %v41 = vld [vmem:[%s1 + $0x28] sm:$0xff]
    %v42 = vld [vmem:[%s1 + $0x30] sm:$0xff]
    %v43 = vld [vmem:[%s1 + $0x38] sm:$0xff]
    %v44 = vld [vmem:[%s2] sm:$0x1]
    %v46 = vlaneseq
    %v47 = vshrl.u32 %v46, 7
    %v48 = vsub.s32 0, %v47
    %v49 = vrot.slane %v44, %v48
    %vm51 = vcmask 523264
    %v53 = vsel %vm51, %v35, 0
    %55 = vmatprep.subr.mxu0 0.0
    %56 = vmatpush1.msra.mxu0 %v36
    %57 = vmatprep.subr.mxu0 0.0
    %58 = vmatpush1.msra.mxu0 %v37
    %59 = vmatprep.subr.mxu0 0.0
    %60 = vmatpush1.msra.mxu0 %v38
    %61 = vmatprep.subr.mxu0 0.0
    %62 = vmatpush1.msra.mxu0 %v39
    %63 = vmatprep.subr.mxu0 0.0
    %64 = vmatpush1.msra.mxu0 %v40
    %65 = vmatprep.subr.mxu0 0.0
    %66 = vmatpush1.msra.mxu0 %v41
    %67 = vmatprep.subr.mxu0 0.0
    %68 = vmatpush1.msra.mxu0 %v42
    %69 = vmatprep.subr.mxu0 0.0
    %70 = vmatpush1.msra.mxu0 %v43
    %71 = vmatprep.subr.mxu0 0.0
    %72 = vmatpush1.msra.mxu0 0.0
    %73 = vmatprep.subr.mxu0 0.0
    %74 = vmatpush1.msra.mxu0 0.0
    %75 = vmatprep.subr.mxu0 0.0
    %76 = vmatpush1.msra.mxu0 0.0
    %77 = vmatprep.subr.mxu0 0.0
    %78 = vmatpush1.msra.mxu0 0.0
    %79 = vmatprep.subr.mxu0 0.0
    %80 = vmatpush1.msra.mxu0 0.0
    %81 = vmatprep.subr.mxu0 0.0
    %82 = vmatpush1.msra.mxu0 0.0
    %83 = vmatprep.subr.mxu0 0.0
    %84 = vmatpush1.msra.mxu0 0.0
    %85 = vmatprep.subr.mxu0 0.0
    %86 = vmatpush1.msra.mxu0 0.0
    %87 = vmatprep.subr.mxu0 0.0
    %88 = vmatpush1.msra.mxu0 0.0
    %89 = vmatprep.subr.mxu0 0.0
    %90 = vmatpush1.msra.mxu0 0.0
    %91 = vmatprep.subr.mxu0 0.0
    %92 = vmatpush1.msra.mxu0 0.0
    %93 = vmatprep.subr.mxu0 0.0
    %94 = vmatpush1.msra.mxu0 0.0
    %95 = vmatprep.subr.mxu0 0.0
    %96 = vmatpush1.msra.mxu0 0.0
    %97 = vmatprep.subr.mxu0 0.0
    %98 = vmatpush1.msra.mxu0 0.0
    %99 = vmatprep.subr.mxu0 0.0
    %100 = vmatpush1.msra.mxu0 0.0
    %101 = vmatprep.subr.mxu0 0.0
    %102 = vmatpush1.msra.mxu0 0.0
    %103 = vmatprep.subr.mxu0 0.0
    %104 = vmatpush1.msra.mxu0 0.0
    %105 = vmatprep.subr.mxu0 0.0
    %106 = vmatpush1.msra.mxu0 0.0
    %107 = vmatprep.subr.mxu0 0.0
    %108 = vmatpush1.msra.mxu0 0.0
    %109 = vmatprep.subr.mxu0 0.0
    %110 = vmatpush1.msra.mxu0 0.0
    %111 = vmatprep.subr.mxu0 0.0
    %112 = vmatpush1.msra.mxu0 0.0
    %113 = vmatprep.subr.mxu0 0.0
    %114 = vmatpush1.msra.mxu0 0.0
    %115 = vmatprep.subr.mxu0 0.0
    %116 = vmatpush1.msra.mxu0 0.0
    %117 = vmatprep.subr.mxu0 0.0
    %118 = vmatpush1.msra.mxu0 0.0
    %119 = vmatprep.mubr.f32.mxu0 0.0
    %120 = vmatmul.mubr.f32.gmra.mrb[0].mxu0 %v53
    %v121 = vpop.f32.mrb[0].mxu0
    %v122 = vadd.f32 %v49, %v121
    %v123 = vpop.f32.mrb[0].mxu0
    %124 = vdwg.mxu0
    %v125 = vld [vmem:[%s3] sm:$0xff]
    %v126 = vld [vmem:[%s3 + $0x8] sm:$0xff]
    %v127 = vld [vmem:[%s3 + $0x10] sm:$0xff]
    %v128 = vld [vmem:[%s3 + $0x18] sm:$0xff]
    %v129 = vld [vmem:[%s3 + $0x20] sm:$0xff]
    %v130 = vld [vmem:[%s3 + $0x28] sm:$0xff]
    %v131 = vld [vmem:[%s3 + $0x30] sm:$0xff]
    %v132 = vld [vmem:[%s3 + $0x38] sm:$0xff]
    %v133 = vld [vmem:[%s4] sm:$0x1]
    %v135 = vlaneseq
    %v136 = vshrl.u32 %v135, 7
    %v137 = vsub.s32 0, %v136
    %v138 = vrot.slane %v133, %v137
    %140 = vmatprep.subr.mxu0 0.0
    %141 = vmatpush1.msra.mxu0 %v125
    %142 = vmatprep.subr.mxu0 0.0
    %143 = vmatpush1.msra.mxu0 %v126
    %144 = vmatprep.subr.mxu0 0.0
    %145 = vmatpush1.msra.mxu0 %v127
    %146 = vmatprep.subr.mxu0 0.0
    %147 = vmatpush1.msra.mxu0 %v128
    %148 = vmatprep.subr.mxu0 0.0
    %149 = vmatpush1.msra.mxu0 %v129
    %150 = vmatprep.subr.mxu0 0.0
    %151 = vmatpush1.msra.mxu0 %v130
    %152 = vmatprep.subr.mxu0 0.0
    %153 = vmatpush1.msra.mxu0 %v131
    %154 = vmatprep.subr.mxu0 0.0
    %155 = vmatpush1.msra.mxu0 %v132
    %156 = vmatprep.subr.mxu0 0.0
    %157 = vmatpush1.msra.mxu0 0.0
    %158 = vmatprep.subr.mxu0 0.0
    %159 = vmatpush1.msra.mxu0 0.0
    %160 = vmatprep.subr.mxu0 0.0
    %161 = vmatpush1.msra.mxu0 0.0
    %162 = vmatprep.subr.mxu0 0.0
    %163 = vmatpush1.msra.mxu0 0.0
    %164 = vmatprep.subr.mxu0 0.0
    %165 = vmatpush1.msra.mxu0 0.0
    %166 = vmatprep.subr.mxu0 0.0
    %167 = vmatpush1.msra.mxu0 0.0
    %168 = vmatprep.subr.mxu0 0.0
    %169 = vmatpush1.msra.mxu0 0.0
    %170 = vmatprep.subr.mxu0 0.0
    %171 = vmatpush1.msra.mxu0 0.0
    %172 = vmatprep.subr.mxu0 0.0
    %173 = vmatpush1.msra.mxu0 0.0
    %174 = vmatprep.subr.mxu0 0.0
    %175 = vmatpush1.msra.mxu0 0.0
    %176 = vmatprep.subr.mxu0 0.0
    %177 = vmatpush1.msra.mxu0 0.0
    %178 = vmatprep.subr.mxu0 0.0
    %179 = vmatpush1.msra.mxu0 0.0
    %180 = vmatprep.subr.mxu0 0.0
    %181 = vmatpush1.msra.mxu0 0.0
    %182 = vmatprep.subr.mxu0 0.0
    %183 = vmatpush1.msra.mxu0 0.0
    %184 = vmatprep.subr.mxu0 0.0
    %185 = vmatpush1.msra.mxu0 0.0
    %186 = vmatprep.subr.mxu0 0.0
    %187 = vmatpush1.msra.mxu0 0.0
    %188 = vmatprep.subr.mxu0 0.0
    %189 = vmatpush1.msra.mxu0 0.0
    %190 = vmatprep.subr.mxu0 0.0
    %191 = vmatpush1.msra.mxu0 0.0
    %192 = vmatprep.subr.mxu0 0.0
    %193 = vmatpush1.msra.mxu0 0.0
    %194 = vmatprep.subr.mxu0 0.0
    %195 = vmatpush1.msra.mxu0 0.0
    %196 = vmatprep.subr.mxu0 0.0
    %197 = vmatpush1.msra.mxu0 0.0
    %198 = vmatprep.subr.mxu0 0.0
    %199 = vmatpush1.msra.mxu0 0.0
    %200 = vmatprep.subr.mxu0 0.0
    %201 = vmatpush1.msra.mxu0 0.0
    %202 = vmatprep.subr.mxu0 0.0
    %203 = vmatpush1.msra.mxu0 0.0
    %204 = vmatprep.mubr.f32.mxu0 0.0
    %205 = vmatmul.mubr.f32.gmra.mrb[0].mxu0 %v53
    %v206 = vpop.f32.mrb[0].mxu0
    %v207 = vadd.f32 %v138, %v206
    %v208 = vpop.f32.mrb[0].mxu0
    %209 = vdwg.mxu0
    %v210 = vmax.f32 %v207, -10.0
    %v211 = vmin.f32 %v210, 10.0
    %v212 = vmul.f32 %v211, 1.442695
    %v213 = vpow.pop %v212
    %v214 = vmax.f32 %v213, 1e-06
    %v215 = vrsqrt.pop %v214
    %v216 = vmul.f32 %v214, %v215
    %vm217 = vcmp.eq.f32.partialorder %v214, inf
    %v218 = vsel %vm217, %v214, %v216
    %vm219 = vcmp.eq.f32.partialorder %v214, 0.0
    %v220 = vand.u32 %v214, 2147483648
    %v221 = vsel %vm219, %v220, %v218
    %v222 = vld [vmem:[%s5] sm:$0x3]
    %v223 = vmul.f32 %v222, %v221
    %v224 = vadd.f32 %v223, %v122
    %v225 = vld [vmem:[%s6] sm:$0xff]
    %v226 = vld [vmem:[%s7] sm:$0x1]
    %v228 = vlaneseq
    %v229 = vshrl.u32 %v228, 7
    %v230 = vsub.s32 0, %v229
    %v231 = vrot.slane %v226, %v230
    %vm233 = vcmask 64512
    %v235 = vsel %vm233, %v224, 0
    %237 = vmatprep.subr.mxu0 0.0
    %238 = vmatpush1.msra.mxu0 %v225
    %239 = vmatprep.subr.mxu0 0.0
    %240 = vmatpush1.msra.mxu0 0.0
    %241 = vmatprep.subr.mxu0 0.0
    %242 = vmatpush1.msra.mxu0 0.0
    %243 = vmatprep.subr.mxu0 0.0
    %244 = vmatpush1.msra.mxu0 0.0
    %245 = vmatprep.subr.mxu0 0.0
    %246 = vmatpush1.msra.mxu0 0.0
    %247 = vmatprep.subr.mxu0 0.0
    %248 = vmatpush1.msra.mxu0 0.0
    %249 = vmatprep.subr.mxu0 0.0
    %250 = vmatpush1.msra.mxu0 0.0
    %251 = vmatprep.subr.mxu0 0.0
    %252 = vmatpush1.msra.mxu0 0.0
    %253 = vmatprep.subr.mxu0 0.0
    %254 = vmatpush1.msra.mxu0 0.0
    %255 = vmatprep.subr.mxu0 0.0
    %256 = vmatpush1.msra.mxu0 0.0
    %257 = vmatprep.subr.mxu0 0.0
    %258 = vmatpush1.msra.mxu0 0.0
    %259 = vmatprep.subr.mxu0 0.0
    %260 = vmatpush1.msra.mxu0 0.0
    %261 = vmatprep.subr.mxu0 0.0
    %262 = vmatpush1.msra.mxu0 0.0
    %263 = vmatprep.subr.mxu0 0.0
    %264 = vmatpush1.msra.mxu0 0.0
    %265 = vmatprep.subr.mxu0 0.0
    %266 = vmatpush1.msra.mxu0 0.0
    %267 = vmatprep.subr.mxu0 0.0
    %268 = vmatpush1.msra.mxu0 0.0
    %269 = vmatprep.subr.mxu0 0.0
    %270 = vmatpush1.msra.mxu0 0.0
    %271 = vmatprep.subr.mxu0 0.0
    %272 = vmatpush1.msra.mxu0 0.0
    %273 = vmatprep.subr.mxu0 0.0
    %274 = vmatpush1.msra.mxu0 0.0
    %275 = vmatprep.subr.mxu0 0.0
    %276 = vmatpush1.msra.mxu0 0.0
    %277 = vmatprep.subr.mxu0 0.0
    %278 = vmatpush1.msra.mxu0 0.0
    %279 = vmatprep.subr.mxu0 0.0
    %280 = vmatpush1.msra.mxu0 0.0
    %281 = vmatprep.subr.mxu0 0.0
    %282 = vmatpush1.msra.mxu0 0.0
    %283 = vmatprep.subr.mxu0 0.0
    %284 = vmatpush1.msra.mxu0 0.0
    %285 = vmatprep.subr.mxu0 0.0
    %286 = vmatpush1.msra.mxu0 0.0
    %287 = vmatprep.subr.mxu0 0.0
    %288 = vmatpush1.msra.mxu0 0.0
    %289 = vmatprep.subr.mxu0 0.0
    %290 = vmatpush1.msra.mxu0 0.0
    %291 = vmatprep.subr.mxu0 0.0
    %292 = vmatpush1.msra.mxu0 0.0
    %293 = vmatprep.subr.mxu0 0.0
    %294 = vmatpush1.msra.mxu0 0.0
    %295 = vmatprep.subr.mxu0 0.0
    %296 = vmatpush1.msra.mxu0 0.0
    %297 = vmatprep.subr.mxu0 0.0
    %298 = vmatpush1.msra.mxu0 0.0
    %299 = vmatprep.subr.mxu0 0.0
    %300 = vmatpush1.msra.mxu0 0.0
    %301 = vmatprep.mubr.f32.mxu0 0.0
    %302 = vmatmul.mubr.f32.gmra.mrb[0].mxu0 %v235
    %v303 = vpop.f32.mrb[0].mxu0
    %v304 = vadd.f32 %v231, %v303
    %v305 = vpop.f32.mrb[0].mxu0
    %306 = vdwg.mxu0
    %vm307 = vcmask 58368
    %308 = vst.msk [vmem:[#allocation2] sm:$0x3] %vm307, %v122
    %309 = vst.msk [vmem:[#allocation4] sm:$0x3] %vm307, %v211
    %310 = vst.msk [vmem:[#allocation6] sm:$0x3] %vm307, %v224
    %vm311 = vcmask 517120
    %312 = vst.msk [vmem:[%s11] sm:$0x3] %vm311, %v304
    // Predicated region
    $region34: #{vae_forward.21} parent=1 // pred_check
      _
    $region35: #{vae_forward.21} parent=1 // pred_check_branch
      %314 = sbr.rel (0) target = $region37
    $region36: #{vae_forward.21} parent=1 // pred_region
      %s316 = ssub.s32 32, 32
      %317 = vsyncadd [#allocation3], %s316
      %s319 = sshll.u32 [#allocation2], 4
      %s320 = int_to_ptr.vmem [resolvable:$true] %s319
      %322 = dma.vmem_to_hbm [thread:$0]  %s320, 32, %s8, [#allocation3]
    $region37: #{vae_forward.21} parent=1 // pred_fallthru
      _
    // Predicated region
    $region38: #{vae_forward.21} parent=1 // pred_check
      _
    $region39: #{vae_forward.21} parent=1 // pred_check_branch
      %324 = sbr.rel (0) target = $region41
    $region40: #{vae_forward.21} parent=1 // pred_region
      %s326 = ssub.s32 32, 32
      %327 = vsyncadd [#allocation5], %s326
      %s329 = sshll.u32 [#allocation4], 4
      %s330 = int_to_ptr.vmem [resolvable:$true] %s329
      %332 = dma.vmem_to_hbm [thread:$0]  %s330, 32, %s9, [#allocation5]
    $region41: #{vae_forward.21} parent=1 // pred_fallthru
      _
    // Predicated region
    $region42: #{vae_forward.21} parent=1 // pred_check
      _
    $region43: #{vae_forward.21} parent=1 // pred_check_branch
      %334 = sbr.rel (0) target = $region45
    $region44: #{vae_forward.21} parent=1 // pred_region
      %s336 = ssub.s32 32, 32
      %337 = vsyncadd [#allocation5], %s336
      %s339 = sshll.u32 [#allocation6], 4
      %s340 = int_to_ptr.vmem [resolvable:$true] %s339
      %342 = dma.vmem_to_hbm [thread:$0]  %s340, 32, %s10, [#allocation5]
    $region45: #{vae_forward.21} parent=1 // pred_fallthru
      _
    // Predicated region
    $region46: #{vae_forward.21} parent=1 // pred_check
      _
    $region47: #{vae_forward.21} parent=1 // pred_check_branch
      %344 = sbr.rel (0) target = $region49
    $region48: #{vae_forward.21} parent=1 // pred_region
      _
    $region49: #{vae_forward.21} parent=1 // pred_fallthru
      _
    // Predicated region
    $region50: #{vae_forward.21} parent=1 // pred_check
      _
    $region51: #{vae_forward.21} parent=1 // pred_check_branch
      %346 = sbr.rel (0) target = $region53
    $region52: #{vae_forward.21} parent=1 // pred_region
      %347 = dma.done [#allocation3], 32
    $region53: #{vae_forward.21} parent=1 // pred_fallthru
      _
    // Predicated region
    $region54: #{vae_forward.21} parent=1 // pred_check
      _
    $region55: #{vae_forward.21} parent=1 // pred_check_branch
      %349 = sbr.rel (0) target = $region57
    $region56: #{vae_forward.21} parent=1 // pred_region
      %350 = dma.done [#allocation5], 32
    $region57: #{vae_forward.21} parent=1 // pred_fallthru
      _
    // Predicated region
    $region58: #{vae_forward.21} parent=1 // pred_check
      _
    $region59: #{vae_forward.21} parent=1 // pred_check_branch
      %352 = sbr.rel (0) target = $region61
    $region60: #{vae_forward.21} parent=1 // pred_region
      %353 = dma.done [#allocation5], 32
    $region61: #{vae_forward.21} parent=1 // pred_fallthru
      _
    // Predicated region
    $region62: #{vae_forward.21} parent=1 // pred_check
      _
    $region63: #{vae_forward.21} parent=1 // pred_check_branch
      %355 = sbr.rel (0) target = $region65
    $region64: #{vae_forward.21} parent=1 // pred_region
      _
    $region65: #{vae_forward.21} parent=1 // pred_fallthru
      _
    %356 = vsyncpa [#allocation3], 1
    %357 = vsyncpa [#allocation5], 1

// kernel: vae_forward.22
$region0: #{vae_forward.22}
  #allocation0 [shape = 'u32[]', space=smem, size = 0x4, offset = 0x4, fixed_abs, tag = 'smem constant byte address 0x4 - core index']
  #allocation1 [shape = 'u32[144,128]{1,0:T(1,128)}', space=vmem, size = 0x12000, scoped, tag = 'internal scratch']
  %s0 = inlined_call_operand.vmem [shape: bf16[432,48], index: 0, kind: input, shape index: {}]
  %s1 = inlined_call_operand.vmem [shape: bf16[8,432], index: 1, kind: input, shape index: {}]
  %s2 = inlined_call_operand.vmem [shape: f32[8,1], index: 2, kind: input, shape index: {}]
  %s3 = inlined_call_operand.vmem [shape: f32[8,1], index: 3, kind: input, shape index: {}]
  %s4 = inlined_call_operand.vmem [shape: f32[8,1], index: 4, kind: input, shape index: {}]
  %s5 = inlined_call_operand.vmem [shape: f32[8,48], index: 5, kind: output, shape index: {}]
  %s6 = sld [smem:[#allocation0]]
  $region30: #{vae_forward.22} parent=0
    _
  %s8 = ssub.s32 1, %s6
  %s9 = scalar_select 0, %s8, %s6
  // Predicated region
  $region2: #{vae_forward.22} parent=0 // pred_check
    _
  $region3: #{vae_forward.22} parent=0 // pred_check_branch
    %11 = sbr.rel (0) target = $region5
  $region4: #{vae_forward.22} parent=0 // pred_region
    _
  $region5: #{vae_forward.22} parent=0 // pred_fallthru
    _
  // Predicated region
  $region6: #{vae_forward.22} parent=0 // pred_check
    _
  $region7: #{vae_forward.22} parent=0 // pred_check_branch
    %13 = sbr.rel (0) target = $region9
  $region8: #{vae_forward.22} parent=0 // pred_region
    _
  $region9: #{vae_forward.22} parent=0 // pred_fallthru
    _
  // Predicated region
  $region10: #{vae_forward.22} parent=0 // pred_check
    _
  $region11: #{vae_forward.22} parent=0 // pred_check_branch
    %15 = sbr.rel (0) target = $region13
  $region12: #{vae_forward.22} parent=0 // pred_region
    _
  $region13: #{vae_forward.22} parent=0 // pred_fallthru
    _
  // Predicated region
  $region14: #{vae_forward.22} parent=0 // pred_check
    _
  $region15: #{vae_forward.22} parent=0 // pred_check_branch
    %17 = sbr.rel (0) target = $region17
  $region16: #{vae_forward.22} parent=0 // pred_region
    _
  $region17: #{vae_forward.22} parent=0 // pred_fallthru
    _
  // Predicated region
  $region18: #{vae_forward.22} parent=0 // pred_check
    _
  $region19: #{vae_forward.22} parent=0 // pred_check_branch
    %19 = sbr.rel (0) target = $region21
  $region20: #{vae_forward.22} parent=0 // pred_region
    _
  $region21: #{vae_forward.22} parent=0 // pred_fallthru
    _
  %v21 = vld [vmem:[%s1] sm:$0xff]
  %v22 = vld [vmem:[%s1 + $0x8] sm:$0xff]
  %v23 = vld [vmem:[%s0] sm:$0xf]
  %v24 = vld [vmem:[%s0 + $0x4] sm:$0xf]
  %v25 = vld [vmem:[%s0 + $0x8] sm:$0xf]
  %v26 = vld [vmem:[%s0 + $0xc] sm:$0xf]
  %v27 = vld [vmem:[%s0 + $0x10] sm:$0xf]
  %v28 = vld [vmem:[%s0 + $0x14] sm:$0xf]
  %v29 = vld [vmem:[%s0 + $0x18] sm:$0xf]
  %v30 = vld [vmem:[%s0 + $0x1c] sm:$0xf]
  %v31 = vld [vmem:[%s0 + $0x20] sm:$0xf]
  %v32 = vld [vmem:[%s0 + $0x24] sm:$0xf]
  %v33 = vld [vmem:[%s0 + $0x28] sm:$0xf]
  %v34 = vld [vmem:[%s0 + $0x2c] sm:$0xf]
  %v35 = vld [vmem:[%s0 + $0x30] sm:$0xf]
  %v36 = vld [vmem:[%s0 + $0x34] sm:$0xf]
  %v37 = vld [vmem:[%s0 + $0x38] sm:$0xf]
  %v38 = vld [vmem:[%s0 + $0x3c] sm:$0xf]
  %v39 = vld [vmem:[%s0 + $0x40] sm:$0xf]
  %v40 = vld [vmem:[%s0 + $0x44] sm:$0xf]
  %v41 = vld [vmem:[%s0 + $0x48] sm:$0xf]
  %v42 = vld [vmem:[%s0 + $0x4c] sm:$0xf]
  %v43 = vld [vmem:[%s0 + $0x50] sm:$0xf]
  %v44 = vld [vmem:[%s0 + $0x54] sm:$0xf]
  %v45 = vld [vmem:[%s0 + $0x58] sm:$0xf]
  %v46 = vld [vmem:[%s0 + $0x5c] sm:$0xf]
  %v47 = vld [vmem:[%s0 + $0x60] sm:$0xf]
  %v48 = vld [vmem:[%s0 + $0x64] sm:$0xf]
  %v49 = vld [vmem:[%s0 + $0x68] sm:$0xf]
  %v50 = vld [vmem:[%s0 + $0x6c] sm:$0xf]
  %v51 = vld [vmem:[%s0 + $0x70] sm:$0xf]
  %v52 = vld [vmem:[%s0 + $0x74] sm:$0xf]
  %v53 = vld [vmem:[%s0 + $0x78] sm:$0xf]
  %v54 = vld [vmem:[%s0 + $0x7c] sm:$0xf]
  %v55 = vld [vmem:[%s0 + $0x80] sm:$0xf]
  %v56 = vld [vmem:[%s0 + $0x84] sm:$0xf]
  %v57 = vld [vmem:[%s0 + $0x88] sm:$0xf]
  %v58 = vld [vmem:[%s0 + $0x8c] sm:$0xf]
  %v59 = vld [vmem:[%s0 + $0x90] sm:$0xf]
  %v60 = vld [vmem:[%s0 + $0x94] sm:$0xf]
  %v61 = vld [vmem:[%s0 + $0x98] sm:$0xf]
  %v62 = vld [vmem:[%s0 + $0x9c] sm:$0xf]
  %v63 = vld [vmem:[%s0 + $0xa0] sm:$0xf]
  %v64 = vld [vmem:[%s0 + $0xa4] sm:$0xf]
  %v65 = vld [vmem:[%s0 + $0xa8] sm:$0xf]
  %v66 = vld [vmem:[%s0 + $0xac] sm:$0xf]
  %v67 = vld [vmem:[%s0 + $0xb0] sm:$0xf]
  %v68 = vld [vmem:[%s0 + $0xb4] sm:$0xf]
  %v69 = vld [vmem:[%s0 + $0xb8] sm:$0xf]
  %v70 = vld [vmem:[%s0 + $0xbc] sm:$0xf]
  %v71 = vld [vmem:[%s0 + $0xc0] sm:$0xf]
  %v72 = vld [vmem:[%s0 + $0xc4] sm:$0xf]
  %v73 = vld [vmem:[%s0 + $0xc8] sm:$0xf]
  %v74 = vld [vmem:[%s0 + $0xcc] sm:$0xf]
  %v75 = vld [vmem:[%s0 + $0xd0] sm:$0xf]
  %v76 = vld [vmem:[%s0 + $0xd4] sm:$0xf]
  %v77 = vld [vmem:[%s2] sm:$0xff]
  %79 = vset.pattern.permute.xlu0 0
  %80 = vperm.xlu0 %79, %v77
  %v81 = vpop.permute.xlu0 %80
  %v85 = vunpack.c.l.b16 %v21
  %v86 = vunpack.c.h.b16 %v21
  %v87 = vunpack.c.l.b16 %v22
  %v88 = vunpack.c.h.b16 %v22
  %v89 = vpack.c.b16 %v85, %v85
  %v90 = vpack.c.b16 %v86, %v86
  %v91 = vpack.c.b16 %v87, %v87
  %v92 = vpack.c.b16 %v88, %v88
  %v150 = vunpack.c.l.b16 %v23
  %v151 = vunpack.c.l.b16 %v24
  %v152 = vunpack.c.l.b16 %v25
  %v153 = vunpack.c.l.b16 %v26
  %v154 = vunpack.c.l.b16 %v27
  %v155 = vunpack.c.l.b16 %v28
  %v156 = vunpack.c.l.b16 %v29
  %v157 = vunpack.c.l.b16 %v30
  %v158 = vunpack.c.l.b16 %v31
  %v159 = vunpack.c.l.b16 %v32
  %v160 = vunpack.c.l.b16 %v33
  %v161 = vunpack.c.l.b16 %v34
  %v162 = vunpack.c.l.b16 %v35
  %v163 = vunpack.c.l.b16 %v36
  %v164 = vunpack.c.l.b16 %v37
  %v165 = vunpack.c.l.b16 %v38
  %v166 = vunpack.c.l.b16 %v39
  %v167 = vunpack.c.l.b16 %v40
  %v168 = vunpack.c.l.b16 %v41
  %v169 = vunpack.c.l.b16 %v42
  %v170 = vunpack.c.l.b16 %v43
  %v171 = vunpack.c.l.b16 %v44
  %v172 = vunpack.c.l.b16 %v45
  %v173 = vunpack.c.l.b16 %v46
  %v174 = vunpack.c.l.b16 %v47
  %v175 = vunpack.c.l.b16 %v48
  %v176 = vunpack.c.l.b16 %v49
  %v177 = vunpack.c.l.b16 %v50
  %v178 = vunpack.c.l.b16 %v51
  %v179 = vunpack.c.l.b16 %v52
  %v180 = vunpack.c.l.b16 %v53
  %v181 = vunpack.c.l.b16 %v54
  %v182 = vunpack.c.l.b16 %v55
  %v183 = vunpack.c.l.b16 %v56
  %v184 = vunpack.c.l.b16 %v57
  %v185 = vunpack.c.l.b16 %v58
  %v186 = vunpack.c.l.b16 %v59
  %v187 = vunpack.c.l.b16 %v60
  %v188 = vunpack.c.l.b16 %v61
  %v189 = vunpack.c.l.b16 %v62
  %v190 = vunpack.c.l.b16 %v63
  %v191 = vunpack.c.l.b16 %v64
  %v192 = vunpack.c.l.b16 %v65
  %v193 = vunpack.c.l.b16 %v66
  %v194 = vunpack.c.l.b16 %v67
  %v195 = vunpack.c.l.b16 %v68
  %v196 = vunpack.c.l.b16 %v69
  %v197 = vunpack.c.l.b16 %v70
  %v198 = vunpack.c.l.b16 %v71
  %v199 = vunpack.c.l.b16 %v72
  %v200 = vunpack.c.l.b16 %v73
  %v201 = vunpack.c.l.b16 %v74
  %v202 = vunpack.c.l.b16 %v75
  %v203 = vunpack.c.l.b16 %v76
  %v204 = vpack.c.b16 %v151, %v150
  %v205 = vpack.c.b16 %v153, %v152
  %v206 = vpack.c.b16 %v155, %v154
  %v207 = vpack.c.b16 %v157, %v156
  %v208 = vpack.c.b16 %v159, %v158
  %v209 = vpack.c.b16 %v161, %v160
  %v210 = vpack.c.b16 %v163, %v162
  %v211 = vpack.c.b16 %v165, %v164
  %v212 = vpack.c.b16 %v167, %v166
  %v213 = vpack.c.b16 %v169, %v168
  %v214 = vpack.c.b16 %v171, %v170
  %v215 = vpack.c.b16 %v173, %v172
  %v216 = vpack.c.b16 %v175, %v174
  %v217 = vpack.c.b16 %v177, %v176
  %v218 = vpack.c.b16 %v179, %v178
  %v219 = vpack.c.b16 %v181, %v180
  %v220 = vpack.c.b16 %v183, %v182
  %v221 = vpack.c.b16 %v185, %v184
  %v222 = vpack.c.b16 %v187, %v186
  %v223 = vpack.c.b16 %v189, %v188
  %v224 = vpack.c.b16 %v191, %v190
  %v225 = vpack.c.b16 %v193, %v192
  %v226 = vpack.c.b16 %v195, %v194
  %v227 = vpack.c.b16 %v197, %v196
  %v228 = vpack.c.b16 %v199, %v198
  %v229 = vpack.c.b16 %v201, %v200
  %v230 = vpack.c.b16 %v203, %v202
  %vm258 = vcmask 392192
  %v260 = vsel %vm258, %v92, 0
  %262 = vmatprep.subr.bf16.mxu0 0
  %263 = vmatpush1.bf16.msra.mxu0 %v204
  %264 = vmatprep.subr.bf16.mxu0 0
  %265 = vmatpush1.bf16.msra.mxu0 %v205
  %266 = vmatprep.subr.bf16.mxu0 0
  %267 = vmatpush1.bf16.msra.mxu0 %v206
  %268 = vmatprep.subr.bf16.mxu0 0
  %269 = vmatpush1.bf16.msra.mxu0 %v207
  %270 = vmatprep.subr.bf16.mxu0 0
  %271 = vmatpush1.bf16.msra.mxu0 %v208
  %272 = vmatprep.subr.bf16.mxu0 0
  %273 = vmatpush1.bf16.msra.mxu0 %v209
  %274 = vmatprep.subr.bf16.mxu0 0
  %275 = vmatpush1.bf16.msra.mxu0 %v210
  %276 = vmatprep.subr.bf16.mxu0 0
  %277 = vmatpush1.bf16.msra.mxu0 %v211
  %278 = vmatprep.subr.bf16.mxu0 0
  %279 = vmatpush1.bf16.msra.mxu0 %v212
  %280 = vmatprep.subr.bf16.mxu0 0
  %281 = vmatpush1.bf16.msra.mxu0 %v213
  %282 = vmatprep.subr.bf16.mxu0 0
  %283 = vmatpush1.bf16.msra.mxu0 %v214
  %284 = vmatprep.subr.bf16.mxu0 0
  %285 = vmatpush1.bf16.msra.mxu0 %v215
  %286 = vmatprep.subr.bf16.mxu0 0
  %287 = vmatpush1.bf16.msra.mxu0 %v216
  %288 = vmatprep.subr.bf16.mxu0 0
  %289 = vmatpush1.bf16.msra.mxu0 %v217
  %290 = vmatprep.subr.bf16.mxu0 0
  %291 = vmatpush1.bf16.msra.mxu0 %v218
  %292 = vmatprep.subr.bf16.mxu0 0
  %293 = vmatpush1.bf16.msra.mxu0 %v219
  %294 = vmatprep.mubr.bf16.mxu0 %v90
  %295 = vmatmul.mubr.bf16.gmra.mrb[0].mxu0 %v89
  %v296 = vpop.f32.mrb[0].mxu0
  %v297 = vadd.f32 %v81, %v296
  %v298 = vpop.f32.mrb[0].mxu0
  %v299 = vpop.f32.mrb[0].mxu0
  %v300 = vpop.f32.mrb[0].mxu0
  %301 = vdwg.mxu0
  %302 = vmatprep.subr.bf16.mxu0 0
  %303 = vmatpush1.bf16.msra.mxu0 %v220
  %304 = vmatprep.subr.bf16.mxu0 0
  %305 = vmatpush1.bf16.msra.mxu0 %v221
  %306 = vmatprep.subr.bf16.mxu0 0
  %307 = vmatpush1.bf16.msra.mxu0 %v222
  %308 = vmatprep.subr.bf16.mxu0 0
  %309 = vmatpush1.bf16.msra.mxu0 %v223
  %310 = vmatprep.subr.bf16.mxu0 0
  %311 = vmatpush1.bf16.msra.mxu0 %v224
  %312 = vmatprep.subr.bf16.mxu0 0
  %313 = vmatpush1.bf16.msra.mxu0 %v225
  %314 = vmatprep.subr.bf16.mxu0 0
  %315 = vmatpush1.bf16.msra.mxu0 %v226
  %316 = vmatprep.subr.bf16.mxu0 0
  %317 = vmatpush1.bf16.msra.mxu0 %v227
  %318 = vmatprep.subr.bf16.mxu0 0
  %319 = vmatpush1.bf16.msra.mxu0 %v228
  %320 = vmatprep.subr.bf16.mxu0 0
  %321 = vmatpush1.bf16.msra.mxu0 %v229
  %322 = vmatprep.subr.bf16.mxu0 0
  %323 = vmatpush1.bf16.msra.mxu0 %v230
  %324 = vmatprep.subr.bf16.mxu0 0
  %325 = vmatpush1.bf16.msra.mxu0 0
  %326 = vmatprep.subr.bf16.mxu0 0
  %327 = vmatpush1.bf16.msra.mxu0 0
  %328 = vmatprep.subr.bf16.mxu0 0
  %329 = vmatpush1.bf16.msra.mxu0 0
  %330 = vmatprep.subr.bf16.mxu0 0
  %331 = vmatpush1.bf16.msra.mxu0 0
  %332 = vmatprep.subr.bf16.mxu0 0
  %333 = vmatpush1.bf16.msra.mxu0 0
  %334 = vmatprep.mubr.bf16.mxu0 %v260
  %335 = vmatmul.mubr.bf16.gmra.mrb[0].mxu0 %v91
  %v336 = vpop.f32.mrb[0].mxu0
  %v337 = vadd.f32 %v297, %v336
  %v338 = vpop.f32.mrb[0].mxu0
  %v339 = vpop.f32.mrb[0].mxu0
  %v340 = vpop.f32.mrb[0].mxu0
  %341 = vdwg.mxu0
  %v342 = vsel %vm258, %v337, 0.0
  %343 = vadd.xlane.f32.xlu0 %v342
  %v344 = vpop.xlane.xlu0 %343
  %v345 = vrcp.pop 48.0
  %v346 = vmul.f32 %v344, %v345
  %v347 = vsub.f32 %v337, %v346
  %v348 = vmul.f32 %v347, %v347
  %v349 = vsel %vm258, %v348, 0.0
  %350 = vadd.xlane.f32.xlu0 %v349
  %v351 = vpop.xlane.xlu0 %350
  %v352 = vmul.f32 %v351, %v345
  %v353 = vadd.f32 %v352, 1e-05
  %v354 = vrsqrt.pop %v353
  %v355 = vmul.f32 %v347, %v354
  %v356 = vld [vmem:[%s3] sm:$0xff]
  %358 = vset.pattern.permute.xlu0 0
  %359 = vperm.xlu0 %358, %v356
  %v360 = vpop.permute.xlu0 %359
  %v362 = vmul.f32 %v355, %v360
  %v363 = vld [vmem:[%s4] sm:$0xff]
  %365 = vset.pattern.permute.xlu0 0
  %366 = vperm.xlu0 %365, %v363
  %v367 = vpop.permute.xlu0 %366
  %v369 = vadd.f32 %v362, %v367
  %vm370 = vcmp.gt.f32.partialorder %v369, 0.0
  %v371 = vmul.f32 %v369, 0.01
  %v372 = vsel %vm370, %v369, %v371
  %373 = vst.msk [vmem:[%s5] sm:$0xff] %vm258, %v372
  // Predicated region
  $region22: #{vae_forward.22} parent=0 // pred_check
    _
  $region23: #{vae_forward.22} parent=0 // pred_check_branch
    %375 = sbr.rel (0) target = $region25
  $region24: #{vae_forward.22} parent=0 // pred_region
    _
  $region25: #{vae_forward.22} parent=0 // pred_fallthru
    _
  // Predicated region
  $region26: #{vae_forward.22} parent=0 // pred_check
    _
  $region27: #{vae_forward.22} parent=0 // pred_check_branch
    %377 = sbr.rel (0) target = $region29
  $region28: #{vae_forward.22} parent=0 // pred_region
    _
  $region29: #{vae_forward.22} parent=0 // pred_fallthru
    _

// kernel: vae_forward.23
$region0: #{vae_forward.23}
  #allocation0 [shape = 'u32[]', space=smem, size = 0x4, offset = 0x4, fixed_abs, tag = 'smem constant byte address 0x4 - core index']
  #allocation1 [shape = 'u32[144,128]{1,0:T(1,128)}', space=vmem, size = 0x12000, scoped, tag = 'internal scratch']
  %s0 = inlined_call_operand.vmem [shape: bf16[216,256], index: 0, kind: input, shape index: {}]
  %s1 = inlined_call_operand.vmem [shape: bf16[4,216], index: 1, kind: input, shape index: {}]
  %s2 = inlined_call_operand.vmem [shape: f32[4,1], index: 2, kind: input, shape index: {}]
  %s3 = inlined_call_operand.vmem [shape: f32[4,1], index: 3, kind: input, shape index: {}]
  %s4 = inlined_call_operand.vmem [shape: f32[4,1], index: 4, kind: input, shape index: {}]
  %s5 = inlined_call_operand.vmem [shape: f32[4,256], index: 5, kind: output, shape index: {}]
  %s6 = sld [smem:[#allocation0]]
  $region30: #{vae_forward.23} parent=0
    _
  %s8 = ssub.s32 1, %s6
  %s9 = scalar_select 0, %s8, %s6
  // Predicated region
  $region2: #{vae_forward.23} parent=0 // pred_check
    _
  $region3: #{vae_forward.23} parent=0 // pred_check_branch
    %11 = sbr.rel (0) target = $region5
  $region4: #{vae_forward.23} parent=0 // pred_region
    _
  $region5: #{vae_forward.23} parent=0 // pred_fallthru
    _
  // Predicated region
  $region6: #{vae_forward.23} parent=0 // pred_check
    _
  $region7: #{vae_forward.23} parent=0 // pred_check_branch
    %13 = sbr.rel (0) target = $region9
  $region8: #{vae_forward.23} parent=0 // pred_region
    _
  $region9: #{vae_forward.23} parent=0 // pred_fallthru
    _
  // Predicated region
  $region10: #{vae_forward.23} parent=0 // pred_check
    _
  $region11: #{vae_forward.23} parent=0 // pred_check_branch
    %15 = sbr.rel (0) target = $region13
  $region12: #{vae_forward.23} parent=0 // pred_region
    _
  $region13: #{vae_forward.23} parent=0 // pred_fallthru
    _
  // Predicated region
  $region14: #{vae_forward.23} parent=0 // pred_check
    _
  $region15: #{vae_forward.23} parent=0 // pred_check_branch
    %17 = sbr.rel (0) target = $region17
  $region16: #{vae_forward.23} parent=0 // pred_region
    _
  $region17: #{vae_forward.23} parent=0 // pred_fallthru
    _
  // Predicated region
  $region18: #{vae_forward.23} parent=0 // pred_check
    _
  $region19: #{vae_forward.23} parent=0 // pred_check_branch
    %19 = sbr.rel (0) target = $region21
  $region20: #{vae_forward.23} parent=0 // pred_region
    _
  $region21: #{vae_forward.23} parent=0 // pred_fallthru
    _
  %v21 = vld [vmem:[%s1] sm:$0xf]
  %v22 = vld [vmem:[%s0] sm:$0xff]
  %v23 = vld [vmem:[%s0 + $0x8] sm:$0xff]
  %v24 = vld [vmem:[%s0 + $0x10] sm:$0xff]
  %v25 = vld [vmem:[%s0 + $0x18] sm:$0xff]
  %v26 = vld [vmem:[%s0 + $0x20] sm:$0xff]
  %v27 = vld [vmem:[%s0 + $0x28] sm:$0xff]
  %v28 = vld [vmem:[%s0 + $0x30] sm:$0xff]
  %v29 = vld [vmem:[%s0 + $0x38] sm:$0xff]
  %v30 = vld [vmem:[%s0 + $0x40] sm:$0xff]
  %v31 = vld [vmem:[%s0 + $0x48] sm:$0xff]
  %v32 = vld [vmem:[%s0 + $0x50] sm:$0xff]
  %v33 = vld [vmem:[%s0 + $0x58] sm:$0xff]
  %v34 = vld [vmem:[%s0 + $0x60] sm:$0xff]
  %v35 = vld [vmem:[%s0 + $0x68] sm:$0xff]
  %v36 = vld [vmem:[%s0 + $0x70] sm:$0xff]
  %v37 = vld [vmem:[%s0 + $0x78] sm:$0xff]
  %v38 = vld [vmem:[%s0 + $0x80] sm:$0xff]
  %v39 = vld [vmem:[%s0 + $0x88] sm:$0xff]
  %v40 = vld [vmem:[%s0 + $0x90] sm:$0xff]
  %v41 = vld [vmem:[%s0 + $0x98] sm:$0xff]
  %v42 = vld [vmem:[%s0 + $0xa0] sm:$0xff]
  %v43 = vld [vmem:[%s0 + $0xa8] sm:$0xff]
  %v44 = vld [vmem:[%s0 + $0xb0] sm:$0xff]
  %v45 = vld [vmem:[%s0 + $0xb8] sm:$0xff]
  %v46 = vld [vmem:[%s0 + $0xc0] sm:$0xff]
  %v47 = vld [vmem:[%s0 + $0xc8] sm:$0xff]
  %v48 = vld [vmem:[%s0 + $0xd0] sm:$0xff]
  %v49 = vld [vmem:[%s2] sm:$0xf]
  %51 = vset.pattern.permute.xlu0 0
  %52 = vperm.xlu0 %51, %v49
  %v53 = vpop.permute.xlu0 %52
  %v57 = vunpack.c.l.s4 1983009808
  %v58 = vunpack.c.0.s8 %v57
  %v59 = vlaneseq
  %v60 = vshrl.u32 %v59, 7
  %v61 = vsub.s32 %v58, %v60
  %v62 = vrot.slane %v21, %v61
  %v63 = vcombine.high %v62, %v62
  %v92 = vunpack.c.l.b16 %v22
  %v93 = vunpack.c.h.b16 %v22
  %v94 = vunpack.c.l.b16 %v23
  %v95 = vunpack.c.h.b16 %v23
  %v96 = vunpack.c.l.b16 %v24
  %v97 = vunpack.c.h.b16 %v24
  %v98 = vunpack.c.l.b16 %v25
  %v99 = vunpack.c.h.b16 %v25
  %v100 = vunpack.c.l.b16 %v26
  %v101 = vunpack.c.h.b16 %v26
  %v102 = vunpack.c.l.b16 %v27
  %v103 = vunpack.c.h.b16 %v27
  %v104 = vunpack.c.l.b16 %v28
  %v105 = vunpack.c.h.b16 %v28
  %v106 = vunpack.c.l.b16 %v29
  %v107 = vunpack.c.h.b16 %v29
  %v108 = vunpack.c.l.b16 %v30
  %v109 = vunpack.c.h.b16 %v30
  %v110 = vunpack.c.l.b16 %v31
  %v111 = vunpack.c.h.b16 %v31
  %v112 = vunpack.c.l.b16 %v32
  %v113 = vunpack.c.h.b16 %v32
  %v114 = vunpack.c.l.b16 %v33
  %v115 = vunpack.c.h.b16 %v33
  %v116 = vunpack.c.l.b16 %v34
  %v117 = vunpack.c.h.b16 %v34
  %v118 = vunpack.c.l.b16 %v35
  %v119 = vunpack.c.h.b16 %v35
  %v120 = vunpack.c.l.b16 %v36
  %v121 = vunpack.c.h.b16 %v36
  %v122 = vunpack.c.l.b16 %v37
  %v123 = vunpack.c.h.b16 %v37
  %v124 = vunpack.c.l.b16 %v38
  %v125 = vunpack.c.h.b16 %v38
  %v126 = vunpack.c.l.b16 %v39
  %v127 = vunpack.c.h.b16 %v39
  %v128 = vunpack.c.l.b16 %v40
  %v129 = vunpack.c.h.b16 %v40
  %v130 = vunpack.c.l.b16 %v41
  %v131 = vunpack.c.h.b16 %v41
  %v132 = vunpack.c.l.b16 %v42
  %v133 = vunpack.c.h.b16 %v42
  %v134 = vunpack.c.l.b16 %v43
  %v135 = vunpack.c.h.b16 %v43
  %v136 = vunpack.c.l.b16 %v44
  %v137 = vunpack.c.h.b16 %v44
  %v138 = vunpack.c.l.b16 %v45
  %v139 = vunpack.c.h.b16 %v45
  %v140 = vunpack.c.l.b16 %v46
  %v141 = vunpack.c.h.b16 %v46
  %v142 = vunpack.c.l.b16 %v47
  %v143 = vunpack.c.h.b16 %v47
  %v144 = vunpack.c.l.b16 %v48
  %v145 = vunpack.c.h.b16 %v48
  %v146 = vpack.c.b16 %v94, %v92
  %v147 = vpack.c.b16 %v95, %v93
  %v148 = vpack.c.b16 %v98, %v96
  %v149 = vpack.c.b16 %v99, %v97
  %v150 = vpack.c.b16 %v102, %v100
  %v151 = vpack.c.b16 %v103, %v101
  %v152 = vpack.c.b16 %v106, %v104
  %v153 = vpack.c.b16 %v107, %v105
  %v154 = vpack.c.b16 %v110, %v108
  %v155 = vpack.c.b16 %v111, %v109
  %v156 = vpack.c.b16 %v114, %v112
  %v157 = vpack.c.b16 %v115, %v113
  %v158 = vpack.c.b16 %v118, %v116
  %v159 = vpack.c.b16 %v119, %v117
  %v160 = vpack.c.b16 %v122, %v120
  %v161 = vpack.c.b16 %v123, %v121
  %v162 = vpack.c.b16 %v126, %v124
  %v163 = vpack.c.b16 %v127, %v125
  %v164 = vpack.c.b16 %v130, %v128
  %v165 = vpack.c.b16 %v131, %v129
  %v166 = vpack.c.b16 %v134, %v132
  %v167 = vpack.c.b16 %v135, %v133
  %v168 = vpack.c.b16 %v138, %v136
  %v169 = vpack.c.b16 %v139, %v137
  %v170 = vpack.c.b16 %v142, %v140
  %v171 = vpack.c.b16 %v143, %v141
  %v172 = vpack.c.b16 %v144, %v144
  %v173 = vpack.c.b16 %v145, %v145
  %vm200 = vcmask 719872
  %v202 = vsel %vm200, %v63, 0
  %vm204 = vcmask 1043456
  %v206 = vsel %vm204, %v172, 0
  %v209 = vsel %vm204, %v173, 0
  %211 = vmatprep.subr.bf16.mxu0 %v147
  %212 = vmatpush1.bf16.msra.mxu0 %v146
  %213 = vmatprep.subr.bf16.mxu0 %v149
  %214 = vmatpush1.bf16.msra.mxu0 %v148
  %215 = vmatprep.subr.bf16.mxu0 %v151
  %216 = vmatpush1.bf16.msra.mxu0 %v150
  %217 = vmatprep.subr.bf16.mxu0 %v153
  %218 = vmatpush1.bf16.msra.mxu0 %v152
  %219 = vmatprep.subr.bf16.mxu0 %v155
  %220 = vmatpush1.bf16.msra.mxu0 %v154
  %221 = vmatprep.subr.bf16.mxu0 %v157
  %222 = vmatpush1.bf16.msra.mxu0 %v156
  %223 = vmatprep.subr.bf16.mxu0 %v159
  %224 = vmatpush1.bf16.msra.mxu0 %v158
  %225 = vmatprep.subr.bf16.mxu0 %v161
  %226 = vmatpush1.bf16.msra.mxu0 %v160
  %227 = vmatprep.subr.bf16.mxu0 %v163
  %228 = vmatpush1.bf16.msra.mxu0 %v162
  %229 = vmatprep.subr.bf16.mxu0 %v165
  %230 = vmatpush1.bf16.msra.mxu0 %v164
  %231 = vmatprep.subr.bf16.mxu0 %v167
  %232 = vmatpush1.bf16.msra.mxu0 %v166
  %233 = vmatprep.subr.bf16.mxu0 %v169
  %234 = vmatpush1.bf16.msra.mxu0 %v168
  %235 = vmatprep.subr.bf16.mxu0 %v171
  %236 = vmatpush1.bf16.msra.mxu0 %v170
  %237 = vmatprep.subr.bf16.mxu0 %v209
  %238 = vmatpush1.bf16.msra.mxu0 %v206
  %239 = vmatprep.subr.bf16.mxu0 0
  %240 = vmatpush1.bf16.msra.mxu0 0
  %241 = vmatprep.subr.bf16.mxu0 0
  %242 = vmatpush1.bf16.msra.mxu0 0
  %243 = vmatprep.mubr.bf16.mxu0 %v202
  %244 = vmatmul.mubr.bf16.gmra.mrb[0].mxu0 %v62
  %v245 = vpop.f32.mrb[0].mxu0
  %v246 = vadd.f32 %v53, %v245
  %v247 = vpop.f32.mrb[0].mxu0
  %v248 = vadd.f32 %v53, %v247
  %v249 = vpop.f32.mrb[0].mxu0
  %v250 = vpop.f32.mrb[0].mxu0
  %251 = vdwg.mxu0
  %v252 = vsel %vm204, %v246, 0.0
  %v253 = vsel %vm204, %v248, 0.0
  %v254 = vadd.f32 %v252, %v253
  %255 = vadd.xlane.f32.xlu0 %v254
  %v256 = vpop.xlane.xlu0 %255
  %v257 = vrcp.pop 256.0
  %v258 = vmul.f32 %v256, %v257
  %v259 = vsub.f32 %v246, %v258
  %v260 = vsub.f32 %v248, %v258
  %v261 = vmul.f32 %v259, %v259
  %v262 = vmul.f32 %v260, %v260
  %v263 = vsel %vm204, %v261, 0.0
  %v264 = vsel %vm204, %v262, 0.0
  %v265 = vadd.f32 %v263, %v264
  %266 = vadd.xlane.f32.xlu0 %v265
  %v267 = vpop.xlane.xlu0 %266
  %v268 = vmul.f32 %v267, %v257
  %v269 = vadd.f32 %v268, 1e-05
  %v270 = vrsqrt.pop %v269
  %v271 = vmul.f32 %v259, %v270
  %v272 = vmul.f32 %v260, %v270
  %v273 = vld [vmem:[%s3] sm:$0xf]
  %275 = vset.pattern.permute.xlu0 0
  %276 = vperm.xlu0 %275, %v273
  %v277 = vpop.permute.xlu0 %276
  %v279 = vmul.f32 %v271, %v277
  %v280 = vmul.f32 %v272, %v277
  %v281 = vld [vmem:[%s4] sm:$0xf]
  %283 = vset.pattern.permute.xlu0 0
  %284 = vperm.xlu0 %283, %v281
  %v285 = vpop.permute.xlu0 %284
  %v287 = vadd.f32 %v279, %v285
  %v288 = vadd.f32 %v280, %v285
  %vm289 = vcmp.gt.f32.partialorder %v287, 0.0
  %vm290 = vcmp.gt.f32.partialorder %v288, 0.0
  %v291 = vmul.f32 %v287, 0.01
  %v292 = vmul.f32 %v288, 0.01
  %v293 = vsel %vm289, %v287, %v291
  %v294 = vsel %vm290, %v288, %v292
  %v297 = vcombine.low %v293, %v294
  %299 = vst [vmem:[%s5] sm:$0xff] %v297
  // Predicated region
  $region22: #{vae_forward.23} parent=0 // pred_check
    _
  $region23: #{vae_forward.23} parent=0 // pred_check_branch
    %301 = sbr.rel (0) target = $region25
  $region24: #{vae_forward.23} parent=0 // pred_region
    _
  $region25: #{vae_forward.23} parent=0 // pred_fallthru
    _
  // Predicated region
  $region26: #{vae_forward.23} parent=0 // pred_check
    _
  $region27: #{vae_forward.23} parent=0 // pred_check_branch
    %303 = sbr.rel (0) target = $region29
  $region28: #{vae_forward.23} parent=0 // pred_region
    _
  $region29: #{vae_forward.23} parent=0 // pred_fallthru
    _

// kernel: vae_forward.24
$region0: #{vae_forward.24}
  #allocation0 [shape = 'u32[]', space=smem, size = 0x4, offset = 0x4, fixed_abs, tag = 'smem constant byte address 0x4 - core index']
  #allocation1 [shape = 'u32[144,128]{1,0:T(1,128)}', space=vmem, size = 0x12000, scoped, tag = 'internal scratch']
  %s0 = inlined_call_operand.vmem [shape: bf16[108,1280], index: 0, kind: input, shape index: {}]
  %s1 = inlined_call_operand.vmem [shape: bf16[2,108], index: 1, kind: input, shape index: {}]
  %s2 = inlined_call_operand.vmem [shape: f32[2,1], index: 2, kind: input, shape index: {}]
  %s3 = inlined_call_operand.vmem [shape: f32[2,1], index: 3, kind: input, shape index: {}]
  %s4 = inlined_call_operand.vmem [shape: f32[2,1], index: 4, kind: input, shape index: {}]
  %s5 = inlined_call_operand.vmem [shape: f32[2,1280], index: 5, kind: output, shape index: {}]
  %s6 = sld [smem:[#allocation0]]
  $region30: #{vae_forward.24} parent=0
    _
  %s8 = ssub.s32 1, %s6
  %s9 = scalar_select 0, %s8, %s6
  // Predicated region
  $region2: #{vae_forward.24} parent=0 // pred_check
    _
  $region3: #{vae_forward.24} parent=0 // pred_check_branch
    %11 = sbr.rel (0) target = $region5
  $region4: #{vae_forward.24} parent=0 // pred_region
    _
  $region5: #{vae_forward.24} parent=0 // pred_fallthru
    _
  // Predicated region
  $region6: #{vae_forward.24} parent=0 // pred_check
    _
  $region7: #{vae_forward.24} parent=0 // pred_check_branch
    %13 = sbr.rel (0) target = $region9
  $region8: #{vae_forward.24} parent=0 // pred_region
    _
  $region9: #{vae_forward.24} parent=0 // pred_fallthru
    _
  // Predicated region
  $region10: #{vae_forward.24} parent=0 // pred_check
    _
  $region11: #{vae_forward.24} parent=0 // pred_check_branch
    %15 = sbr.rel (0) target = $region13
  $region12: #{vae_forward.24} parent=0 // pred_region
    _
  $region13: #{vae_forward.24} parent=0 // pred_fallthru
    _
  // Predicated region
  $region14: #{vae_forward.24} parent=0 // pred_check
    _
  $region15: #{vae_forward.24} parent=0 // pred_check_branch
    %17 = sbr.rel (0) target = $region17
  $region16: #{vae_forward.24} parent=0 // pred_region
    _
  $region17: #{vae_forward.24} parent=0 // pred_fallthru
    _
  // Predicated region
  $region18: #{vae_forward.24} parent=0 // pred_check
    _
  $region19: #{vae_forward.24} parent=0 // pred_check_branch
    %19 = sbr.rel (0) target = $region21
  $region20: #{vae_forward.24} parent=0 // pred_region
    _
  $region21: #{vae_forward.24} parent=0 // pred_fallthru
    _
  %v21 = vld [vmem:[%s1] sm:$0x1]
  %v22 = vld [vmem:[%s0] sm:$0xff]
  %v23 = vld [vmem:[%s0 + $0x8] sm:$0xff]
  %v24 = vld [vmem:[%s0 + $0x10] sm:$0xff]
  %v25 = vld [vmem:[%s0 + $0x18] sm:$0xff]
  %v26 = vld [vmem:[%s0 + $0x20] sm:$0xff]
  %v27 = vld [vmem:[%s0 + $0x28] sm:$0xff]
  %v28 = vld [vmem:[%s0 + $0x30] sm:$0xff]
  %v29 = vld [vmem:[%s0 + $0x38] sm:$0xff]
  %v30 = vld [vmem:[%s0 + $0x40] sm:$0xff]
  %v31 = vld [vmem:[%s0 + $0x48] sm:$0xff]
  %v32 = vld [vmem:[%s0 + $0x50] sm:$0xff]
  %v33 = vld [vmem:[%s0 + $0x58] sm:$0xff]
  %v34 = vld [vmem:[%s0 + $0x60] sm:$0xff]
  %v35 = vld [vmem:[%s0 + $0x68] sm:$0xff]
  %v36 = vld [vmem:[%s0 + $0x70] sm:$0xff]
  %v37 = vld [vmem:[%s0 + $0x78] sm:$0xff]
  %v38 = vld [vmem:[%s0 + $0x80] sm:$0xff]
  %v39 = vld [vmem:[%s0 + $0x88] sm:$0xff]
  %v40 = vld [vmem:[%s0 + $0x90] sm:$0xff]
  %v41 = vld [vmem:[%s0 + $0x98] sm:$0xff]
  %v42 = vld [vmem:[%s0 + $0xa0] sm:$0xff]
  %v43 = vld [vmem:[%s0 + $0xa8] sm:$0xff]
  %v44 = vld [vmem:[%s0 + $0xb0] sm:$0xff]
  %v45 = vld [vmem:[%s0 + $0xb8] sm:$0xff]
  %v46 = vld [vmem:[%s0 + $0xc0] sm:$0xff]
  %v47 = vld [vmem:[%s0 + $0xc8] sm:$0xff]
  %v48 = vld [vmem:[%s0 + $0xd0] sm:$0xff]
  %v49 = vld [vmem:[%s0 + $0xd8] sm:$0xff]
  %v50 = vld [vmem:[%s0 + $0xe0] sm:$0xff]
  %v51 = vld [vmem:[%s0 + $0xe8] sm:$0xff]
  %v52 = vld [vmem:[%s0 + $0xf0] sm:$0xff]
  %v53 = vld [vmem:[%s0 + $0xf8] sm:$0xff]
  %v54 = vld [vmem:[%s0 + $0x100] sm:$0xff]
  %v55 = vld [vmem:[%s0 + $0x108] sm:$0xff]
  %v56 = vld [vmem:[%s0 + $0x110] sm:$0xff]
  %v57 = vld [vmem:[%s0 + $0x118] sm:$0xff]
  %v58 = vld [vmem:[%s0 + $0x120] sm:$0xff]
  %v59 = vld [vmem:[%s0 + $0x128] sm:$0xff]
  %v60 = vld [vmem:[%s0 + $0x130] sm:$0xff]
  %v61 = vld [vmem:[%s0 + $0x138] sm:$0xff]
  %v62 = vld [vmem:[%s0 + $0x140] sm:$0xff]
  %v63 = vld [vmem:[%s0 + $0x148] sm:$0xff]
  %v64 = vld [vmem:[%s0 + $0x150] sm:$0xff]
  %v65 = vld [vmem:[%s0 + $0x158] sm:$0xff]
  %v66 = vld [vmem:[%s0 + $0x160] sm:$0xff]
  %v67 = vld [vmem:[%s0 + $0x168] sm:$0xff]
  %v68 = vld [vmem:[%s0 + $0x170] sm:$0xff]
  %v69 = vld [vmem:[%s0 + $0x178] sm:$0xff]
  %v70 = vld [vmem:[%s0 + $0x180] sm:$0xff]
  %v71 = vld [vmem:[%s0 + $0x188] sm:$0xff]
  %v72 = vld [vmem:[%s0 + $0x190] sm:$0xff]
  %v73 = vld [vmem:[%s0 + $0x198] sm:$0xff]
  %v74 = vld [vmem:[%s0 + $0x1a0] sm:$0xff]
  %v75 = vld [vmem:[%s0 + $0x1a8] sm:$0xff]
  %v76 = vld [vmem:[%s0 + $0x1b0] sm:$0xff]
  %v77 = vld [vmem:[%s0 + $0x1b8] sm:$0xff]
  %v78 = vld [vmem:[%s0 + $0x1c0] sm:$0xff]
  %v79 = vld [vmem:[%s0 + $0x1c8] sm:$0xff]
  %v80 = vld [vmem:[%s0 + $0x1d0] sm:$0xff]
  %v81 = vld [vmem:[%s0 + $0x1d8] sm:$0xff]
  %v82 = vld [vmem:[%s0 + $0x1e0] sm:$0xff]
  %v83 = vld [vmem:[%s0 + $0x1e8] sm:$0xff]
  %v84 = vld [vmem:[%s0 + $0x1f0] sm:$0xff]
  %v85 = vld [vmem:[%s0 + $0x1f8] sm:$0xff]
  %v86 = vld [vmem:[%s0 + $0x200] sm:$0xff]
  %v87 = vld [vmem:[%s0 + $0x208] sm:$0x33]
  %v88 = vld [vmem:[%s0 + $0x210] sm:$0x33]
  %v89 = vld [vmem:[%s0 + $0x218] sm:$0x33]
  %v90 = vld [vmem:[%s0 + $0x220] sm:$0x33]
  %v91 = vld [vmem:[%s0 + $0x228] sm:$0x33]
  %v92 = vld [vmem:[%s2] sm:$0x3]
  %94 = vset.pattern.permute.xlu0 0
  %95 = vperm.xlu0 %94, %v92
  %v96 = vpop.permute.xlu0 %95
  %v168 = vunpack.c.l.b16 %v22
  %v169 = vunpack.c.h.b16 %v22
  %v170 = vunpack.c.l.b16 %v23
  %v171 = vunpack.c.h.b16 %v23
  %v172 = vunpack.c.l.b16 %v24
  %v173 = vunpack.c.h.b16 %v24
  %v174 = vunpack.c.l.b16 %v25
  %v175 = vunpack.c.h.b16 %v25
  %v176 = vunpack.c.l.b16 %v26
  %v177 = vunpack.c.h.b16 %v26
  %v178 = vunpack.c.l.b16 %v27
  %v179 = vunpack.c.h.b16 %v27
  %v180 = vunpack.c.l.b16 %v28
  %v181 = vunpack.c.h.b16 %v28
  %v182 = vunpack.c.l.b16 %v29
  %v183 = vunpack.c.h.b16 %v29
  %v184 = vunpack.c.l.b16 %v30
  %v185 = vunpack.c.h.b16 %v30
  %v186 = vunpack.c.l.b16 %v31
  %v187 = vunpack.c.h.b16 %v31
  %v188 = vunpack.c.l.b16 %v32
  %v189 = vunpack.c.h.b16 %v32
  %v190 = vunpack.c.l.b16 %v33
  %v191 = vunpack.c.h.b16 %v33
  %v192 = vunpack.c.l.b16 %v34
  %v193 = vunpack.c.h.b16 %v34
  %v194 = vunpack.c.l.b16 %v35
  %v195 = vunpack.c.h.b16 %v35
  %v196 = vunpack.c.l.b16 %v36
  %v197 = vunpack.c.h.b16 %v36
  %v198 = vunpack.c.l.b16 %v37
  %v199 = vunpack.c.h.b16 %v37
  %v200 = vunpack.c.l.b16 %v38
  %v201 = vunpack.c.h.b16 %v38
  %v202 = vunpack.c.l.b16 %v39
  %v203 = vunpack.c.h.b16 %v39
  %v204 = vunpack.c.l.b16 %v40
  %v205 = vunpack.c.h.b16 %v40
  %v206 = vunpack.c.l.b16 %v41
  %v207 = vunpack.c.h.b16 %v41
  %v208 = vunpack.c.l.b16 %v42
  %v209 = vunpack.c.h.b16 %v42
  %v210 = vunpack.c.l.b16 %v43
  %v211 = vunpack.c.h.b16 %v43
  %v212 = vunpack.c.l.b16 %v44
  %v213 = vunpack.c.h.b16 %v44
  %v214 = vunpack.c.l.b16 %v45
  %v215 = vunpack.c.h.b16 %v45
  %v216 = vunpack.c.l.b16 %v46
  %v217 = vunpack.c.h.b16 %v46
  %v218 = vunpack.c.l.b16 %v47
  %v219 = vunpack.c.h.b16 %v47
  %v220 = vunpack.c.l.b16 %v48
  %v221 = vunpack.c.h.b16 %v48
  %v222 = vunpack.c.l.b16 %v49
  %v223 = vunpack.c.h.b16 %v49
  %v224 = vunpack.c.l.b16 %v50
  %v225 = vunpack.c.h.b16 %v50
  %v226 = vunpack.c.l.b16 %v51
  %v227 = vunpack.c.h.b16 %v51
  %v228 = vunpack.c.l.b16 %v52
  %v229 = vunpack.c.h.b16 %v52
  %v230 = vunpack.c.l.b16 %v53
  %v231 = vunpack.c.h.b16 %v53
  %v232 = vunpack.c.l.b16 %v54
  %v233 = vunpack.c.h.b16 %v54
  %v234 = vunpack.c.l.b16 %v55
  %v235 = vunpack.c.h.b16 %v55
  %v236 = vunpack.c.l.b16 %v56
  %v237 = vunpack.c.h.b16 %v56
  %v238 = vunpack.c.l.b16 %v57
  %v239 = vunpack.c.h.b16 %v57
  %v240 = vunpack.c.l.b16 %v58
  %v241 = vunpack.c.h.b16 %v58
  %v242 = vunpack.c.l.b16 %v59
  %v243 = vunpack.c.h.b16 %v59
  %v244 = vunpack.c.l.b16 %v60
  %v245 = vunpack.c.h.b16 %v60
  %v246 = vunpack.c.l.b16 %v61
  %v247 = vunpack.c.h.b16 %v61
  %v248 = vunpack.c.l.b16 %v62
  %v249 = vunpack.c.h.b16 %v62
  %v250 = vunpack.c.l.b16 %v63
  %v251 = vunpack.c.h.b16 %v63
  %v252 = vunpack.c.l.b16 %v64
  %v253 = vunpack.c.h.b16 %v64
  %v254 = vunpack.c.l.b16 %v65
  %v255 = vunpack.c.h.b16 %v65
  %v256 = vunpack.c.l.b16 %v66
  %v257 = vunpack.c.h.b16 %v66
  %v258 = vunpack.c.l.b16 %v67
  %v259 = vunpack.c.h.b16 %v67
  %v260 = vunpack.c.l.b16 %v68
  %v261 = vunpack.c.h.b16 %v68
  %v262 = vunpack.c.l.b16 %v69
  %v263 = vunpack.c.h.b16 %v69
  %v264 = vunpack.c.l.b16 %v70
  %v265 = vunpack.c.h.b16 %v70
  %v266 = vunpack.c.l.b16 %v71
  %v267 = vunpack.c.h.b16 %v71
  %v268 = vunpack.c.l.b16 %v72
  %v269 = vunpack.c.h.b16 %v72
  %v270 = vunpack.c.l.b16 %v73
  %v271 = vunpack.c.h.b16 %v73
  %v272 = vunpack.c.l.b16 %v74
  %v273 = vunpack.c.h.b16 %v74
  %v274 = vunpack.c.l.b16 %v75
  %v275 = vunpack.c.h.b16 %v75
  %v276 = vunpack.c.l.b16 %v76
  %v277 = vunpack.c.h.b16 %v76
  %v278 = vunpack.c.l.b16 %v77
  %v279 = vunpack.c.h.b16 %v77
  %v280 = vunpack.c.l.b16 %v78
  %v281 = vunpack.c.h.b16 %v78
  %v282 = vunpack.c.l.b16 %v79
  %v283 = vunpack.c.h.b16 %v79
  %v284 = vunpack.c.l.b16 %v80
  %v285 = vunpack.c.h.b16 %v80
  %v286 = vunpack.c.l.b16 %v81
  %v287 = vunpack.c.h.b16 %v81
  %v288 = vunpack.c.l.b16 %v82
  %v289 = vunpack.c.h.b16 %v82
  %v290 = vunpack.c.l.b16 %v83
  %v291 = vunpack.c.h.b16 %v83
  %v292 = vunpack.c.l.b16 %v84
  %v293 = vunpack.c.h.b16 %v84
  %v294 = vunpack.c.l.b16 %v85
  %v295 = vunpack.c.h.b16 %v85
  %v296 = vunpack.c.l.b16 %v86
  %v297 = vunpack.c.h.b16 %v86
  %v298 = vunpack.c.l.b16 %v87
  %v299 = vunpack.c.h.b16 %v87
  %v300 = vunpack.c.l.b16 %v88
  %v301 = vunpack.c.h.b16 %v88
  %v302 = vunpack.c.l.b16 %v89
  %v303 = vunpack.c.h.b16 %v89
  %v304 = vunpack.c.l.b16 %v90
  %v305 = vunpack.c.h.b16 %v90
  %v306 = vunpack.c.l.b16 %v91
  %v307 = vunpack.c.h.b16 %v91
  %v308 = vpack.c.b16 %v178, %v168
  %v309 = vpack.c.b16 %v179, %v169
  %v310 = vpack.c.b16 %v180, %v170
  %v311 = vpack.c.b16 %v181, %v171
  %v312 = vpack.c.b16 %v182, %v172
  %v313 = vpack.c.b16 %v183, %v173
  %v314 = vpack.c.b16 %v184, %v174
  %v315 = vpack.c.b16 %v185, %v175
  %v316 = vpack.c.b16 %v186, %v176
  %v317 = vpack.c.b16 %v187, %v177
  %v318 = vpack.c.b16 %v198, %v188
  %v319 = vpack.c.b16 %v199, %v189
  %v320 = vpack.c.b16 %v200, %v190
  %v321 = vpack.c.b16 %v201, %v191
  %v322 = vpack.c.b16 %v202, %v192
  %v323 = vpack.c.b16 %v203, %v193
  %v324 = vpack.c.b16 %v204, %v194
  %v325 = vpack.c.b16 %v205, %v195
  %v326 = vpack.c.b16 %v206, %v196
  %v327 = vpack.c.b16 %v207, %v197
  %v328 = vpack.c.b16 %v218, %v208
  %v329 = vpack.c.b16 %v219, %v209
  %v330 = vpack.c.b16 %v220, %v210
  %v331 = vpack.c.b16 %v221, %v211
  %v332 = vpack.c.b16 %v222, %v212
  %v333 = vpack.c.b16 %v223, %v213
  %v334 = vpack.c.b16 %v224, %v214
  %v335 = vpack.c.b16 %v225, %v215
  %v336 = vpack.c.b16 %v226, %v216
  %v337 = vpack.c.b16 %v227, %v217
  %v338 = vpack.c.b16 %v238, %v228
  %v339 = vpack.c.b16 %v239, %v229
  %v340 = vpack.c.b16 %v240, %v230
  %v341 = vpack.c.b16 %v241, %v231
  %v342 = vpack.c.b16 %v242, %v232
  %v343 = vpack.c.b16 %v243, %v233
  %v344 = vpack.c.b16 %v244, %v234
  %v345 = vpack.c.b16 %v245, %v235
  %v346 = vpack.c.b16 %v246, %v236
  %v347 = vpack.c.b16 %v247, %v237
  %v348 = vpack.c.b16 %v258, %v248
  %v349 = vpack.c.b16 %v259, %v249
  %v350 = vpack.c.b16 %v260, %v250
  %v351 = vpack.c.b16 %v261, %v251
  %v352 = vpack.c.b16 %v262, %v252
  %v353 = vpack.c.b16 %v263, %v253
  %v354 = vpack.c.b16 %v264, %v254
  %v355 = vpack.c.b16 %v265, %v255
  %v356 = vpack.c.b16 %v266, %v256
  %v357 = vpack.c.b16 %v267, %v257
  %v358 = vpack.c.b16 %v278, %v268
  %v359 = vpack.c.b16 %v279, %v269
  %v360 = vpack.c.b16 %v280, %v270
  %v361 = vpack.c.b16 %v281, %v271
  %v362 = vpack.c.b16 %v282, %v272
  %v363 = vpack.c.b16 %v283, %v273
  %v364 = vpack.c.b16 %v284, %v274
  %v365 = vpack.c.b16 %v285, %v275
  %v366 = vpack.c.b16 %v286, %v276
  %v367 = vpack.c.b16 %v287, %v277
  %v368 = vpack.c.b16 %v298, %v288
  %v369 = vpack.c.b16 %v299, %v289
  %v370 = vpack.c.b16 %v300, %v290
  %v371 = vpack.c.b16 %v301, %v291
  %v372 = vpack.c.b16 %v302, %v292
  %v373 = vpack.c.b16 %v303, %v293
  %v374 = vpack.c.b16 %v304, %v294
  %v375 = vpack.c.b16 %v305, %v295
  %v376 = vpack.c.b16 %v306, %v296
  %v377 = vpack.c.b16 %v307, %v297
  %vm438 = vcmask 883712
  %v440 = vsel %vm438, %v21, 0
  %vm442 = vcmask 1045504
  %v444 = vsel %vm442, %v368, 0
  %v447 = vsel %vm442, %v369, 0
  %v450 = vsel %vm442, %v370, 0
  %v453 = vsel %vm442, %v371, 0
  %v456 = vsel %vm442, %v372, 0
  %v459 = vsel %vm442, %v373, 0
  %v462 = vsel %vm442, %v374, 0
  %v465 = vsel %vm442, %v375, 0
  %v468 = vsel %vm442, %v376, 0
  %v471 = vsel %vm442, %v377, 0
  %473 = vmatprep.subr.bf16.mxu0 %v309
  %474 = vmatpush1.bf16.msra.mxu0 %v308
  %475 = vmatprep.subr.bf16.mxu0 %v319
  %476 = vmatpush1.bf16.msra.mxu0 %v318
  %477 = vmatprep.subr.bf16.mxu0 %v329
  %478 = vmatpush1.bf16.msra.mxu0 %v328
  %479 = vmatprep.subr.bf16.mxu0 %v339
  %480 = vmatpush1.bf16.msra.mxu0 %v338
  %481 = vmatprep.subr.bf16.mxu0 %v349
  %482 = vmatpush1.bf16.msra.mxu0 %v348
  %483 = vmatprep.subr.bf16.mxu0 %v359
  %484 = vmatpush1.bf16.msra.mxu0 %v358
  %485 = vmatprep.subr.bf16.mxu0 %v447
  %486 = vmatpush1.bf16.msra.mxu0 %v444
  %487 = vmatprep.subr.bf16.mxu0 0
  %488 = vmatpush1.bf16.msra.mxu0 0
  %489 = vmatprep.subr.bf16.mxu0 0
  %490 = vmatpush1.bf16.msra.mxu0 0
  %491 = vmatprep.subr.bf16.mxu0 0
  %492 = vmatpush1.bf16.msra.mxu0 0
  %493 = vmatprep.subr.bf16.mxu0 0
  %494 = vmatpush1.bf16.msra.mxu0 0
  %495 = vmatprep.subr.bf16.mxu0 0
  %496 = vmatpush1.bf16.msra.mxu0 0
  %497 = vmatprep.subr.bf16.mxu0 0
  %498 = vmatpush1.bf16.msra.mxu0 0
  %499 = vmatprep.subr.bf16.mxu0 0
  %500 = vmatpush1.bf16.msra.mxu0 0
  %501 = vmatprep.subr.bf16.mxu0 0
  %502 = vmatpush1.bf16.msra.mxu0 0
  %503 = vmatprep.subr.bf16.mxu0 0
  %504 = vmatpush1.bf16.msra.mxu0 0
  %505 = vmatprep.mubr.bf16.mxu0 0
  %506 = vmatmul.mubr.bf16.gmra.mrb[0].mxu0 %v440
  %v507 = vpop.f32.mrb[0].mxu0
  %v508 = vadd.f32 %v96, %v507
  %v509 = vpop.f32.mrb[0].mxu0
  %v510 = vadd.f32 %v96, %v509
  %v511 = vpop.f32.mrb[0].mxu0
  %v512 = vpop.f32.mrb[0].mxu0
  %513 = vdwg.mxu0
  %514 = vmatprep.subr.bf16.mxu0 %v311
  %515 = vmatpush1.bf16.msra.mxu0 %v310
  %516 = vmatprep.subr.bf16.mxu0 %v321
  %517 = vmatpush1.bf16.msra.mxu0 %v320
  %518 = vmatprep.subr.bf16.mxu0 %v331
  %519 = vmatpush1.bf16.msra.mxu0 %v330
  %520 = vmatprep.subr.bf16.mxu0 %v341
  %521 = vmatpush1.bf16.msra.mxu0 %v340
  %522 = vmatprep.subr.bf16.mxu0 %v351
  %523 = vmatpush1.bf16.msra.mxu0 %v350
  %524 = vmatprep.subr.bf16.mxu0 %v361
  %525 = vmatpush1.bf16.msra.mxu0 %v360
  %526 = vmatprep.subr.bf16.mxu0 %v453
  %527 = vmatpush1.bf16.msra.mxu0 %v450
  %528 = vmatprep.subr.bf16.mxu0 0
  %529 = vmatpush1.bf16.msra.mxu0 0
  %530 = vmatprep.subr.bf16.mxu0 0
  %531 = vmatpush1.bf16.msra.mxu0 0
  %532 = vmatprep.subr.bf16.mxu0 0
  %533 = vmatpush1.bf16.msra.mxu0 0
  %534 = vmatprep.subr.bf16.mxu0 0
  %535 = vmatpush1.bf16.msra.mxu0 0
  %536 = vmatprep.subr.bf16.mxu0 0
  %537 = vmatpush1.bf16.msra.mxu0 0
  %538 = vmatprep.subr.bf16.mxu0 0
  %539 = vmatpush1.bf16.msra.mxu0 0
  %540 = vmatprep.subr.bf16.mxu0 0
  %541 = vmatpush1.bf16.msra.mxu0 0
  %542 = vmatprep.subr.bf16.mxu0 0
  %543 = vmatpush1.bf16.msra.mxu0 0
  %544 = vmatprep.subr.bf16.mxu0 0
  %545 = vmatpush1.bf16.msra.mxu0 0
  %546 = vmatprep.mubr.bf16.mxu0 0
  %547 = vmatmul.mubr.bf16.gmra.mrb[0].mxu0 %v440
  %v548 = vpop.f32.mrb[0].mxu0
  %v549 = vadd.f32 %v96, %v548
  %v550 = vpop.f32.mrb[0].mxu0
  %v551 = vadd.f32 %v96, %v550
  %v552 = vpop.f32.mrb[0].mxu0
  %v553 = vpop.f32.mrb[0].mxu0
  %554 = vdwg.mxu0
  %555 = vmatprep.subr.bf16.mxu0 %v313
  %556 = vmatpush1.bf16.msra.mxu0 %v312
  %557 = vmatprep.subr.bf16.mxu0 %v323
  %558 = vmatpush1.bf16.msra.mxu0 %v322
  %559 = vmatprep.subr.bf16.mxu0 %v333
  %560 = vmatpush1.bf16.msra.mxu0 %v332
  %561 = vmatprep.subr.bf16.mxu0 %v343
  %562 = vmatpush1.bf16.msra.mxu0 %v342
  %563 = vmatprep.subr.bf16.mxu0 %v353
  %564 = vmatpush1.bf16.msra.mxu0 %v352
  %565 = vmatprep.subr.bf16.mxu0 %v363
  %566 = vmatpush1.bf16.msra.mxu0 %v362
  %567 = vmatprep.subr.bf16.mxu0 %v459
  %568 = vmatpush1.bf16.msra.mxu0 %v456
  %569 = vmatprep.subr.bf16.mxu0 0
  %570 = vmatpush1.bf16.msra.mxu0 0
  %571 = vmatprep.subr.bf16.mxu0 0
  %572 = vmatpush1.bf16.msra.mxu0 0
  %573 = vmatprep.subr.bf16.mxu0 0
  %574 = vmatpush1.bf16.msra.mxu0 0
  %575 = vmatprep.subr.bf16.mxu0 0
  %576 = vmatpush1.bf16.msra.mxu0 0
  %577 = vmatprep.subr.bf16.mxu0 0
  %578 = vmatpush1.bf16.msra.mxu0 0
  %579 = vmatprep.subr.bf16.mxu0 0
  %580 = vmatpush1.bf16.msra.mxu0 0
  %581 = vmatprep.subr.bf16.mxu0 0
  %582 = vmatpush1.bf16.msra.mxu0 0
  %583 = vmatprep.subr.bf16.mxu0 0
  %584 = vmatpush1.bf16.msra.mxu0 0
  %585 = vmatprep.subr.bf16.mxu0 0
  %586 = vmatpush1.bf16.msra.mxu0 0
  %587 = vmatprep.mubr.bf16.mxu0 0
  %588 = vmatmul.mubr.bf16.gmra.mrb[0].mxu0 %v440
  %v589 = vpop.f32.mrb[0].mxu0
  %v590 = vadd.f32 %v96, %v589
  %v591 = vpop.f32.mrb[0].mxu0
  %v592 = vadd.f32 %v96, %v591
  %v593 = vpop.f32.mrb[0].mxu0
  %v594 = vpop.f32.mrb[0].mxu0
  %595 = vdwg.mxu0
  %596 = vmatprep.subr.bf16.mxu0 %v315
  %597 = vmatpush1.bf16.msra.mxu0 %v314
  %598 = vmatprep.subr.bf16.mxu0 %v325
  %599 = vmatpush1.bf16.msra.mxu0 %v324
  %600 = vmatprep.subr.bf16.mxu0 %v335
  %601 = vmatpush1.bf16.msra.mxu0 %v334
  %602 = vmatprep.subr.bf16.mxu0 %v345
  %603 = vmatpush1.bf16.msra.mxu0 %v344
  %604 = vmatprep.subr.bf16.mxu0 %v355
  %605 = vmatpush1.bf16.msra.mxu0 %v354
  %606 = vmatprep.subr.bf16.mxu0 %v365
  %607 = vmatpush1.bf16.msra.mxu0 %v364
  %608 = vmatprep.subr.bf16.mxu0 %v465
  %609 = vmatpush1.bf16.msra.mxu0 %v462
  %610 = vmatprep.subr.bf16.mxu0 0
  %611 = vmatpush1.bf16.msra.mxu0 0
  %612 = vmatprep.subr.bf16.mxu0 0
  %613 = vmatpush1.bf16.msra.mxu0 0
  %614 = vmatprep.subr.bf16.mxu0 0
  %615 = vmatpush1.bf16.msra.mxu0 0
  %616 = vmatprep.subr.bf16.mxu0 0
  %617 = vmatpush1.bf16.msra.mxu0 0
  %618 = vmatprep.subr.bf16.mxu0 0
  %619 = vmatpush1.bf16.msra.mxu0 0
  %620 = vmatprep.subr.bf16.mxu0 0
  %621 = vmatpush1.bf16.msra.mxu0 0
  %622 = vmatprep.subr.bf16.mxu0 0
  %623 = vmatpush1.bf16.msra.mxu0 0
  %624 = vmatprep.subr.bf16.mxu0 0
  %625 = vmatpush1.bf16.msra.mxu0 0
  %626 = vmatprep.subr.bf16.mxu0 0
  %627 = vmatpush1.bf16.msra.mxu0 0
  %628 = vmatprep.mubr.bf16.mxu0 0
  %629 = vmatmul.mubr.bf16.gmra.mrb[0].mxu0 %v440
  %v630 = vpop.f32.mrb[0].mxu0
  %v631 = vadd.f32 %v96, %v630
  %v632 = vpop.f32.mrb[0].mxu0
  %v633 = vadd.f32 %v96, %v632
  %v634 = vpop.f32.mrb[0].mxu0
  %v635 = vpop.f32.mrb[0].mxu0
  %636 = vdwg.mxu0
  %637 = vmatprep.subr.bf16.mxu0 %v317
  %638 = vmatpush1.bf16.msra.mxu0 %v316
  %639 = vmatprep.subr.bf16.mxu0 %v327
  %640 = vmatpush1.bf16.msra.mxu0 %v326
  %641 = vmatprep.subr.bf16.mxu0 %v337
  %642 = vmatpush1.bf16.msra.mxu0 %v336
  %643 = vmatprep.subr.bf16.mxu0 %v347
  %644 = vmatpush1.bf16.msra.mxu0 %v346
  %645 = vmatprep.subr.bf16.mxu0 %v357
  %646 = vmatpush1.bf16.msra.mxu0 %v356
  %647 = vmatprep.subr.bf16.mxu0 %v367
  %648 = vmatpush1.bf16.msra.mxu0 %v366
  %649 = vmatprep.subr.bf16.mxu0 %v471
  %650 = vmatpush1.bf16.msra.mxu0 %v468
  %651 = vmatprep.subr.bf16.mxu0 0
  %652 = vmatpush1.bf16.msra.mxu0 0
  %653 = vmatprep.subr.bf16.mxu0 0
  %654 = vmatpush1.bf16.msra.mxu0 0
  %655 = vmatprep.subr.bf16.mxu0 0
  %656 = vmatpush1.bf16.msra.mxu0 0
  %657 = vmatprep.subr.bf16.mxu0 0
  %658 = vmatpush1.bf16.msra.mxu0 0
  %659 = vmatprep.subr.bf16.mxu0 0
  %660 = vmatpush1.bf16.msra.mxu0 0
  %661 = vmatprep.subr.bf16.mxu0 0
  %662 = vmatpush1.bf16.msra.mxu0 0
  %663 = vmatprep.subr.bf16.mxu0 0
  %664 = vmatpush1.bf16.msra.mxu0 0
  %665 = vmatprep.subr.bf16.mxu0 0
  %666 = vmatpush1.bf16.msra.mxu0 0
  %667 = vmatprep.subr.bf16.mxu0 0
  %668 = vmatpush1.bf16.msra.mxu0 0
  %669 = vmatprep.mubr.bf16.mxu0 0
  %670 = vmatmul.mubr.bf16.gmra.mrb[0].mxu0 %v440
  %v671 = vpop.f32.mrb[0].mxu0
  %v672 = vadd.f32 %v96, %v671
  %v673 = vpop.f32.mrb[0].mxu0
  %v674 = vadd.f32 %v96, %v673
  %v675 = vpop.f32.mrb[0].mxu0
  %v676 = vpop.f32.mrb[0].mxu0
  %677 = vdwg.mxu0
  %vm678 = vcmask 1041408
  %v679 = vsel %vm678, %v508, 0.0
  %v680 = vsel %vm678, %v510, 0.0
  %v681 = vadd.f32 %v679, %v680
  %v682 = vsel %vm678, %v549, 0.0
  %v683 = vadd.f32 %v681, %v682
  %v684 = vsel %vm678, %v551, 0.0
  %v685 = vadd.f32 %v683, %v684
  %v686 = vsel %vm678, %v590, 0.0
  %v687 = vadd.f32 %v685, %v686
  %v688 = vsel %vm678, %v592, 0.0
  %v689 = vadd.f32 %v687, %v688
  %v690 = vsel %vm678, %v631, 0.0
  %v691 = vadd.f32 %v689, %v690
  %v692 = vsel %vm678, %v633, 0.0
  %v693 = vadd.f32 %v691, %v692
  %v694 = vsel %vm678, %v672, 0.0
  %v695 = vadd.f32 %v693, %v694
  %v696 = vsel %vm678, %v674, 0.0
  %v697 = vadd.f32 %v695, %v696
  %698 = vadd.xlane.f32.xlu0 %v697
  %v699 = vpop.xlane.xlu0 %698
  %v700 = vrcp.pop 1280.0
  %v701 = vmul.f32 %v699, %v700
  %v702 = vsub.f32 %v508, %v701
  %v703 = vsub.f32 %v510, %v701
  %v704 = vsub.f32 %v549, %v701
  %v705 = vsub.f32 %v551, %v701
  %v706 = vsub.f32 %v590, %v701
  %v707 = vsub.f32 %v592, %v701
  %v708 = vsub.f32 %v631, %v701
  %v709 = vsub.f32 %v633, %v701
  %v710 = vsub.f32 %v672, %v701
  %v711 = vsub.f32 %v674, %v701
  %v712 = vmul.f32 %v702, %v702
  %v713 = vmul.f32 %v703, %v703
  %v714 = vmul.f32 %v704, %v704
  %v715 = vmul.f32 %v705, %v705
  %v716 = vmul.f32 %v706, %v706
  %v717 = vmul.f32 %v707, %v707
  %v718 = vmul.f32 %v708, %v708
  %v719 = vmul.f32 %v709, %v709
  %v720 = vmul.f32 %v710, %v710
  %v721 = vmul.f32 %v711, %v711
  %v722 = vsel %vm678, %v712, 0.0
  %v723 = vsel %vm678, %v713, 0.0
  %v724 = vadd.f32 %v722, %v723
  %v725 = vsel %vm678, %v714, 0.0
  %v726 = vadd.f32 %v724, %v725
  %v727 = vsel %vm678, %v715, 0.0
  %v728 = vadd.f32 %v726, %v727
  %v729 = vsel %vm678, %v716, 0.0
  %v730 = vadd.f32 %v728, %v729
  %v731 = vsel %vm678, %v717, 0.0
  %v732 = vadd.f32 %v730, %v731
  %v733 = vsel %vm678, %v718, 0.0
  %v734 = vadd.f32 %v732, %v733
  %v735 = vsel %vm678, %v719, 0.0
  %v736 = vadd.f32 %v734, %v735
  %v737 = vsel %vm678, %v720, 0.0
  %v738 = vadd.f32 %v736, %v737
  %v739 = vsel %vm678, %v721, 0.0
  %v740 = vadd.f32 %v738, %v739
  %741 = vadd.xlane.f32.xlu0 %v740
  %v742 = vpop.xlane.xlu0 %741
  %v743 = vmul.f32 %v742, %v700
  %v744 = vadd.f32 %v743, 1e-05
  %v745 = vrsqrt.pop %v744
  %v746 = vmul.f32 %v702, %v745
  %v747 = vmul.f32 %v703, %v745
  %v748 = vmul.f32 %v704, %v745
  %v749 = vmul.f32 %v705, %v745
  %v750 = vmul.f32 %v706, %v745
  %v751 = vmul.f32 %v707, %v745
  %v752 = vmul.f32 %v708, %v745
  %v753 = vmul.f32 %v709, %v745
  %v754 = vmul.f32 %v710, %v745
  %v755 = vmul.f32 %v711, %v745
  %v756 = vld [vmem:[%s3] sm:$0x3]
  %758 = vset.pattern.permute.xlu0 0
  %759 = vperm.xlu0 %758, %v756
  %v760 = vpop.permute.xlu0 %759
  %v762 = vmul.f32 %v746, %v760
  %v763 = vmul.f32 %v747, %v760
  %v764 = vmul.f32 %v748, %v760
  %v765 = vmul.f32 %v749, %v760
  %v766 = vmul.f32 %v750, %v760
  %v767 = vmul.f32 %v751, %v760
  %v768 = vmul.f32 %v752, %v760
  %v769 = vmul.f32 %v753, %v760
  %v770 = vmul.f32 %v754, %v760
  %v771 = vmul.f32 %v755, %v760
  %v772 = vld [vmem:[%s4] sm:$0x3]
  %774 = vset.pattern.permute.xlu0 0
  %775 = vperm.xlu0 %774, %v772
  %v776 = vpop.permute.xlu0 %775
  %v778 = vadd.f32 %v762, %v776
  %v779 = vadd.f32 %v763, %v776
  %v780 = vadd.f32 %v764, %v776
  %v781 = vadd.f32 %v765, %v776
  %v782 = vadd.f32 %v766, %v776
  %v783 = vadd.f32 %v767, %v776
  %v784 = vadd.f32 %v768, %v776
  %v785 = vadd.f32 %v769, %v776
  %v786 = vadd.f32 %v770, %v776
  %v787 = vadd.f32 %v771, %v776
  %vm788 = vcmp.gt.f32.partialorder %v778, 0.0
  %vm789 = vcmp.gt.f32.partialorder %v779, 0.0
  %vm790 = vcmp.gt.f32.partialorder %v780, 0.0
  %vm791 = vcmp.gt.f32.partialorder %v781, 0.0
  %vm792 = vcmp.gt.f32.partialorder %v782, 0.0
  %vm793 = vcmp.gt.f32.partialorder %v783, 0.0
  %vm794 = vcmp.gt.f32.partialorder %v784, 0.0
  %vm795 = vcmp.gt.f32.partialorder %v785, 0.0
  %vm796 = vcmp.gt.f32.partialorder %v786, 0.0
  %vm797 = vcmp.gt.f32.partialorder %v787, 0.0
  %v798 = vmul.f32 %v778, 0.01
  %v799 = vmul.f32 %v779, 0.01
  %v800 = vmul.f32 %v780, 0.01
  %v801 = vmul.f32 %v781, 0.01
  %v802 = vmul.f32 %v782, 0.01
  %v803 = vmul.f32 %v783, 0.01
  %v804 = vmul.f32 %v784, 0.01
  %v805 = vmul.f32 %v785, 0.01
  %v806 = vmul.f32 %v786, 0.01
  %v807 = vmul.f32 %v787, 0.01
  %v808 = vsel %vm788, %v778, %v798
  %v809 = vsel %vm789, %v779, %v799
  %v810 = vsel %vm790, %v780, %v800
  %v811 = vsel %vm791, %v781, %v801
  %v812 = vsel %vm792, %v782, %v802
  %v813 = vsel %vm793, %v783, %v803
  %v814 = vsel %vm794, %v784, %v804
  %v815 = vsel %vm795, %v785, %v805
  %v816 = vsel %vm796, %v786, %v806
  %v817 = vsel %vm797, %v787, %v807
  %v828 = vcombine.low %v808, %v809
  %v829 = vcombine.low %v810, %v811
  %v831 = vunpack.c.l.s4 1983009808
  %v832 = vunpack.c.0.s8 %v831
  %v833 = vlaneseq
  %v834 = vshrl.u32 %v833, 7
  %v835 = vsub.s32 %v832, %v834
  %v836 = vrot.slane %v828, %v835
  %v838 = vunpack.c.l.s4 1983009808
  %v839 = vunpack.c.0.s8 %v838
  %v840 = vlaneseq
  %v841 = vshrl.u32 %v840, 7
  %v842 = vsub.s32 %v839, %v841
  %v843 = vrot.slane %v829, %v842
  %v844 = vcombine.low %v836, %v843
  %v845 = vcombine.low %v812, %v813
  %v846 = vcombine.low %v814, %v815
  %v848 = vunpack.c.l.s4 1983009808
  %v849 = vunpack.c.0.s8 %v848
  %v850 = vlaneseq
  %v851 = vshrl.u32 %v850, 7
  %v852 = vsub.s32 %v849, %v851
  %v853 = vrot.slane %v845, %v852
  %v855 = vunpack.c.l.s4 1983009808
  %v856 = vunpack.c.0.s8 %v855
  %v857 = vlaneseq
  %v858 = vshrl.u32 %v857, 7
  %v859 = vsub.s32 %v856, %v858
  %v860 = vrot.slane %v846, %v859
  %v861 = vcombine.low %v853, %v860
  %v862 = vcombine.low %v816, %v817
  %v864 = vunpack.c.l.s4 1983009808
  %v865 = vunpack.c.0.s8 %v864
  %v866 = vlaneseq
  %v867 = vshrl.u32 %v866, 7
  %v868 = vsub.s32 %v865, %v867
  %v869 = vrot.slane %v862, %v868
  %873 = vst [vmem:[%s5] sm:$0xff] %v844
  %874 = vst [vmem:[%s5 + $0x8] sm:$0xff] %v861
  %875 = vst [vmem:[%s5 + $0x10] sm:$0xf] %v869
  // Predicated region
  $region22: #{vae_forward.24} parent=0 // pred_check
    _
  $region23: #{vae_forward.24} parent=0 // pred_check_branch
    %877 = sbr.rel (0) target = $region25
  $region24: #{vae_forward.24} parent=0 // pred_region
    _
  $region25: #{vae_forward.24} parent=0 // pred_fallthru
    _
  // Predicated region
  $region26: #{vae_forward.24} parent=0 // pred_check
    _
  $region27: #{vae_forward.24} parent=0 // pred_check_branch
    %879 = sbr.rel (0) target = $region29
  $region28: #{vae_forward.24} parent=0 // pred_region
    _
  $region29: #{vae_forward.24} parent=0 // pred_fallthru
    _

// kernel: vae_forward.25
$region0: #{vae_forward.25}
  #allocation0 [shape = 'u32[]', space=smem, size = 0x4, offset = 0x4, fixed_abs, tag = 'smem constant byte address 0x4 - core index']
  #allocation1 [shape = 'u32[144,128]{1,0:T(1,128)}', space=vmem, size = 0x12000, scoped, tag = 'internal scratch']
  #allocation2 [shape = 'f32[1,1]{1,0:T(1,128)S(1)}', space=vmem, size = 0x200, scoped, tag = 'scoped memory for vae_forward.25']
  #allocation3 [shape = 'f32[1,1]{1,0:T(1,128)S(1)}', space=vmem, size = 0x200, scoped, tag = 'scoped memory for vae_forward.25']
  #allocation4 [shape = 'f32[1,1]{1,0:T(1,128)S(1)}', space=vmem, size = 0x200, scoped, tag = 'scoped memory for vae_forward.25']
  %s0 = inlined_call_operand.vmem [shape: bf16[54,6144], index: 0, kind: input, shape index: {}]
  %s1 = inlined_call_operand.vmem [shape: bf16[1,54], index: 1, kind: input, shape index: {}]
  %s2 = inlined_call_operand.<no memory space> [shape: f32[1,1], index: 2, kind: input, shape index: {}]
  %s3 = inlined_call_operand.<no memory space> [shape: f32[1,1], index: 3, kind: input, shape index: {}]
  %s4 = inlined_call_operand.<no memory space> [shape: f32[1,1], index: 4, kind: input, shape index: {}]
  %s5 = inlined_call_operand.vmem [shape: f32[1,6144], index: 5, kind: output, shape index: {}]
  %s6 = sld [smem:[#allocation0]]
  $region30: #{vae_forward.25} parent=0
    _
  %s8 = ssub.s32 1, %s6
  %s9 = scalar_select 0, %s8, %s6
  %v10 = vstv %s2
  %11 = vst [vmem:[#allocation2] sm:$0x1] %v10
  %v12 = vstv %s3
  %13 = vst [vmem:[#allocation3] sm:$0x1] %v12
  %v14 = vstv %s4
  %15 = vst [vmem:[#allocation4] sm:$0x1] %v14
  // Predicated region
  $region2: #{vae_forward.25} parent=0 // pred_check
    _
  $region3: #{vae_forward.25} parent=0 // pred_check_branch
    %17 = sbr.rel (0) target = $region5
  $region4: #{vae_forward.25} parent=0 // pred_region
    _
  $region5: #{vae_forward.25} parent=0 // pred_fallthru
    _
  // Predicated region
  $region6: #{vae_forward.25} parent=0 // pred_check
    _
  $region7: #{vae_forward.25} parent=0 // pred_check_branch
    %19 = sbr.rel (0) target = $region9
  $region8: #{vae_forward.25} parent=0 // pred_region
    _
  $region9: #{vae_forward.25} parent=0 // pred_fallthru
    _
  // Predicated region
  $region10: #{vae_forward.25} parent=0 // pred_check
    _
  $region11: #{vae_forward.25} parent=0 // pred_check_branch
    %21 = sbr.rel (0) target = $region13
  $region12: #{vae_forward.25} parent=0 // pred_region
    _
  $region13: #{vae_forward.25} parent=0 // pred_fallthru
    _
  // Predicated region
  $region14: #{vae_forward.25} parent=0 // pred_check
    _
  $region15: #{vae_forward.25} parent=0 // pred_check_branch
    %23 = sbr.rel (0) target = $region17
  $region16: #{vae_forward.25} parent=0 // pred_region
    _
  $region17: #{vae_forward.25} parent=0 // pred_fallthru
    _
  // Predicated region
  $region18: #{vae_forward.25} parent=0 // pred_check
    _
  $region19: #{vae_forward.25} parent=0 // pred_check_branch
    %25 = sbr.rel (0) target = $region21
  $region20: #{vae_forward.25} parent=0 // pred_region
    _
  $region21: #{vae_forward.25} parent=0 // pred_fallthru
    _
  %v27 = vld [vmem:[%s1] sm:$0x1]
  %v28 = vld [vmem:[%s0] sm:$0xff]
  %v29 = vld [vmem:[%s0 + $0x8] sm:$0xff]
  %v30 = vld [vmem:[%s0 + $0x10] sm:$0xff]
  %v31 = vld [vmem:[%s0 + $0x18] sm:$0xff]
  %v32 = vld [vmem:[%s0 + $0x20] sm:$0xff]
  %v33 = vld [vmem:[%s0 + $0x28] sm:$0xff]
  %v34 = vld [vmem:[%s0 + $0x30] sm:$0xff]
  %v35 = vld [vmem:[%s0 + $0x38] sm:$0xff]
  %v36 = vld [vmem:[%s0 + $0x40] sm:$0xff]
  %v37 = vld [vmem:[%s0 + $0x48] sm:$0xff]
  %v38 = vld [vmem:[%s0 + $0x50] sm:$0xff]
  %v39 = vld [vmem:[%s0 + $0x58] sm:$0xff]
  %v40 = vld [vmem:[%s0 + $0x60] sm:$0xff]
  %v41 = vld [vmem:[%s0 + $0x68] sm:$0xff]
  %v42 = vld [vmem:[%s0 + $0x70] sm:$0xff]
  %v43 = vld [vmem:[%s0 + $0x78] sm:$0xff]
  %v44 = vld [vmem:[%s0 + $0x80] sm:$0xff]
  %v45 = vld [vmem:[%s0 + $0x88] sm:$0xff]
  %v46 = vld [vmem:[%s0 + $0x90] sm:$0xff]
  %v47 = vld [vmem:[%s0 + $0x98] sm:$0xff]
  %v48 = vld [vmem:[%s0 + $0xa0] sm:$0xff]
  %v49 = vld [vmem:[%s0 + $0xa8] sm:$0xff]
  %v50 = vld [vmem:[%s0 + $0xb0] sm:$0xff]
  %v51 = vld [vmem:[%s0 + $0xb8] sm:$0xff]
  %v52 = vld [vmem:[%s0 + $0xc0] sm:$0xff]
  %v53 = vld [vmem:[%s0 + $0xc8] sm:$0xff]
  %v54 = vld [vmem:[%s0 + $0xd0] sm:$0xff]
  %v55 = vld [vmem:[%s0 + $0xd8] sm:$0xff]
  %v56 = vld [vmem:[%s0 + $0xe0] sm:$0xff]
  %v57 = vld [vmem:[%s0 + $0xe8] sm:$0xff]
  %v58 = vld [vmem:[%s0 + $0xf0] sm:$0xff]
  %v59 = vld [vmem:[%s0 + $0xf8] sm:$0xff]
  %v60 = vld [vmem:[%s0 + $0x100] sm:$0xff]
  %v61 = vld [vmem:[%s0 + $0x108] sm:$0xff]
  %v62 = vld [vmem:[%s0 + $0x110] sm:$0xff]
  %v63 = vld [vmem:[%s0 + $0x118] sm:$0xff]
  %v64 = vld [vmem:[%s0 + $0x120] sm:$0xff]
  %v65 = vld [vmem:[%s0 + $0x128] sm:$0xff]
  %v66 = vld [vmem:[%s0 + $0x130] sm:$0xff]
  %v67 = vld [vmem:[%s0 + $0x138] sm:$0xff]
  %v68 = vld [vmem:[%s0 + $0x140] sm:$0xff]
  %v69 = vld [vmem:[%s0 + $0x148] sm:$0xff]
  %v70 = vld [vmem:[%s0 + $0x150] sm:$0xff]
  %v71 = vld [vmem:[%s0 + $0x158] sm:$0xff]
  %v72 = vld [vmem:[%s0 + $0x160] sm:$0xff]
  %v73 = vld [vmem:[%s0 + $0x168] sm:$0xff]
  %v74 = vld [vmem:[%s0 + $0x170] sm:$0xff]
  %v75 = vld [vmem:[%s0 + $0x178] sm:$0xff]
  %v76 = vld [vmem:[%s0 + $0x180] sm:$0xff]
  %v77 = vld [vmem:[%s0 + $0x188] sm:$0xff]
  %v78 = vld [vmem:[%s0 + $0x190] sm:$0xff]
  %v79 = vld [vmem:[%s0 + $0x198] sm:$0xff]
  %v80 = vld [vmem:[%s0 + $0x1a0] sm:$0xff]
  %v81 = vld [vmem:[%s0 + $0x1a8] sm:$0xff]
  %v82 = vld [vmem:[%s0 + $0x1b0] sm:$0xff]
  %v83 = vld [vmem:[%s0 + $0x1b8] sm:$0xff]
  %v84 = vld [vmem:[%s0 + $0x1c0] sm:$0xff]
  %v85 = vld [vmem:[%s0 + $0x1c8] sm:$0xff]
  %v86 = vld [vmem:[%s0 + $0x1d0] sm:$0xff]
  %v87 = vld [vmem:[%s0 + $0x1d8] sm:$0xff]
  %v88 = vld [vmem:[%s0 + $0x1e0] sm:$0xff]
  %v89 = vld [vmem:[%s0 + $0x1e8] sm:$0xff]
  %v90 = vld [vmem:[%s0 + $0x1f0] sm:$0xff]
  %v91 = vld [vmem:[%s0 + $0x1f8] sm:$0xff]
  %v92 = vld [vmem:[%s0 + $0x200] sm:$0xff]
  %v93 = vld [vmem:[%s0 + $0x208] sm:$0xff]
  %v94 = vld [vmem:[%s0 + $0x210] sm:$0xff]
  %v95 = vld [vmem:[%s0 + $0x218] sm:$0xff]
  %v96 = vld [vmem:[%s0 + $0x220] sm:$0xff]
  %v97 = vld [vmem:[%s0 + $0x228] sm:$0xff]
  %v98 = vld [vmem:[%s0 + $0x230] sm:$0xff]
  %v99 = vld [vmem:[%s0 + $0x238] sm:$0xff]
  %v100 = vld [vmem:[%s0 + $0x240] sm:$0xff]
  %v101 = vld [vmem:[%s0 + $0x248] sm:$0xff]
  %v102 = vld [vmem:[%s0 + $0x250] sm:$0xff]
  %v103 = vld [vmem:[%s0 + $0x258] sm:$0xff]
  %v104 = vld [vmem:[%s0 + $0x260] sm:$0xff]
  %v105 = vld [vmem:[%s0 + $0x268] sm:$0xff]
  %v106 = vld [vmem:[%s0 + $0x270] sm:$0xff]
  %v107 = vld [vmem:[%s0 + $0x278] sm:$0xff]
  %v108 = vld [vmem:[%s0 + $0x280] sm:$0xff]
  %v109 = vld [vmem:[%s0 + $0x288] sm:$0xff]
  %v110 = vld [vmem:[%s0 + $0x290] sm:$0xff]
  %v111 = vld [vmem:[%s0 + $0x298] sm:$0xff]
  %v112 = vld [vmem:[%s0 + $0x2a0] sm:$0xff]
  %v113 = vld [vmem:[%s0 + $0x2a8] sm:$0xff]
  %v114 = vld [vmem:[%s0 + $0x2b0] sm:$0xff]
  %v115 = vld [vmem:[%s0 + $0x2b8] sm:$0xff]
  %v116 = vld [vmem:[%s0 + $0x2c0] sm:$0xff]
  %v117 = vld [vmem:[%s0 + $0x2c8] sm:$0xff]
  %v118 = vld [vmem:[%s0 + $0x2d0] sm:$0xff]
  %v119 = vld [vmem:[%s0 + $0x2d8] sm:$0xff]
  %v120 = vld [vmem:[%s0 + $0x2e0] sm:$0xff]
  %v121 = vld [vmem:[%s0 + $0x2e8] sm:$0xff]
  %v122 = vld [vmem:[%s0 + $0x2f0] sm:$0xff]
  %v123 = vld [vmem:[%s0 + $0x2f8] sm:$0xff]
  %v124 = vld [vmem:[%s0 + $0x300] sm:$0xff]
  %v125 = vld [vmem:[%s0 + $0x308] sm:$0xff]
  %v126 = vld [vmem:[%s0 + $0x310] sm:$0xff]
  %v127 = vld [vmem:[%s0 + $0x318] sm:$0xff]
  %v128 = vld [vmem:[%s0 + $0x320] sm:$0xff]
  %v129 = vld [vmem:[%s0 + $0x328] sm:$0xff]
  %v130 = vld [vmem:[%s0 + $0x330] sm:$0xff]
  %v131 = vld [vmem:[%s0 + $0x338] sm:$0xff]
  %v132 = vld [vmem:[%s0 + $0x340] sm:$0xff]
  %v133 = vld [vmem:[%s0 + $0x348] sm:$0xff]
  %v134 = vld [vmem:[%s0 + $0x350] sm:$0xff]
  %v135 = vld [vmem:[%s0 + $0x358] sm:$0xff]
  %v136 = vld [vmem:[%s0 + $0x360] sm:$0xff]
  %v137 = vld [vmem:[%s0 + $0x368] sm:$0xff]
  %v138 = vld [vmem:[%s0 + $0x370] sm:$0xff]
  %v139 = vld [vmem:[%s0 + $0x378] sm:$0xff]
  %v140 = vld [vmem:[%s0 + $0x380] sm:$0xff]
  %v141 = vld [vmem:[%s0 + $0x388] sm:$0xff]
  %v142 = vld [vmem:[%s0 + $0x390] sm:$0xff]
  %v143 = vld [vmem:[%s0 + $0x398] sm:$0xff]
  %v144 = vld [vmem:[%s0 + $0x3a0] sm:$0xff]
  %v145 = vld [vmem:[%s0 + $0x3a8] sm:$0xff]
  %v146 = vld [vmem:[%s0 + $0x3b0] sm:$0xff]
  %v147 = vld [vmem:[%s0 + $0x3b8] sm:$0xff]
  %v148 = vld [vmem:[%s0 + $0x3c0] sm:$0xff]
  %v149 = vld [vmem:[%s0 + $0x3c8] sm:$0xff]
  %v150 = vld [vmem:[%s0 + $0x3d0] sm:$0xff]
  %v151 = vld [vmem:[%s0 + $0x3d8] sm:$0xff]
  %v152 = vld [vmem:[%s0 + $0x3e0] sm:$0xff]
  %v153 = vld [vmem:[%s0 + $0x3e8] sm:$0xff]
  %v154 = vld [vmem:[%s0 + $0x3f0] sm:$0xff]
  %v155 = vld [vmem:[%s0 + $0x3f8] sm:$0xff]
  %v156 = vld [vmem:[%s0 + $0x400] sm:$0xff]
  %v157 = vld [vmem:[%s0 + $0x408] sm:$0xff]
  %v158 = vld [vmem:[%s0 + $0x410] sm:$0xff]
  %v159 = vld [vmem:[%s0 + $0x418] sm:$0xff]
  %v160 = vld [vmem:[%s0 + $0x420] sm:$0xff]
  %v161 = vld [vmem:[%s0 + $0x428] sm:$0xff]
  %v162 = vld [vmem:[%s0 + $0x430] sm:$0xff]
  %v163 = vld [vmem:[%s0 + $0x438] sm:$0xff]
  %v164 = vld [vmem:[%s0 + $0x440] sm:$0xff]
  %v165 = vld [vmem:[%s0 + $0x448] sm:$0xff]
  %v166 = vld [vmem:[%s0 + $0x450] sm:$0xff]
  %v167 = vld [vmem:[%s0 + $0x458] sm:$0xff]
  %v168 = vld [vmem:[%s0 + $0x460] sm:$0xff]
  %v169 = vld [vmem:[%s0 + $0x468] sm:$0xff]
  %v170 = vld [vmem:[%s0 + $0x470] sm:$0xff]
  %v171 = vld [vmem:[%s0 + $0x478] sm:$0xff]
  %v172 = vld [vmem:[%s0 + $0x480] sm:$0x77]
  %v173 = vld [vmem:[%s0 + $0x488] sm:$0x77]
  %v174 = vld [vmem:[%s0 + $0x490] sm:$0x77]
  %v175 = vld [vmem:[%s0 + $0x498] sm:$0x77]
  %v176 = vld [vmem:[%s0 + $0x4a0] sm:$0x77]
  %v177 = vld [vmem:[%s0 + $0x4a8] sm:$0x77]
  %v178 = vld [vmem:[%s0 + $0x4b0] sm:$0x77]
  %v179 = vld [vmem:[%s0 + $0x4b8] sm:$0x77]
  %v180 = vld [vmem:[%s0 + $0x4c0] sm:$0x77]
  %v181 = vld [vmem:[%s0 + $0x4c8] sm:$0x77]
  %v182 = vld [vmem:[%s0 + $0x4d0] sm:$0x77]
  %v183 = vld [vmem:[%s0 + $0x4d8] sm:$0x77]
  %v184 = vld [vmem:[%s0 + $0x4e0] sm:$0x77]
  %v185 = vld [vmem:[%s0 + $0x4e8] sm:$0x77]
  %v186 = vld [vmem:[%s0 + $0x4f0] sm:$0x77]
  %v187 = vld [vmem:[%s0 + $0x4f8] sm:$0x77]
  %v188 = vld [vmem:[%s0 + $0x500] sm:$0x77]
  %v189 = vld [vmem:[%s0 + $0x508] sm:$0x77]
  %v190 = vld [vmem:[%s0 + $0x510] sm:$0x77]
  %v191 = vld [vmem:[%s0 + $0x518] sm:$0x77]
  %v192 = vld [vmem:[%s0 + $0x520] sm:$0x77]
  %v193 = vld [vmem:[%s0 + $0x528] sm:$0x77]
  %v194 = vld [vmem:[%s0 + $0x530] sm:$0x77]
  %v195 = vld [vmem:[%s0 + $0x538] sm:$0x77]
  %v196 = vld [vmem:[#allocation2] sm:$0x1]
  %198 = vset.pattern.permute.xlu0 0
  %199 = vperm.xlu0 %198, %v196
  %v200 = vpop.permute.xlu0 %199
  %v202 = vlaneseq
  %v203 = vshrl.u32 %v202, 7
  %v204 = vsub.s32 0, %v203
  %v205 = vrot.slane %v200, %v204
  %v374 = vunpack.c.l.b16 %v28
  %v375 = vunpack.c.h.b16 %v28
  %v376 = vunpack.c.l.b16 %v29
  %v377 = vunpack.c.h.b16 %v29
  %v378 = vunpack.c.l.b16 %v30
  %v379 = vunpack.c.h.b16 %v30
  %v380 = vunpack.c.l.b16 %v31
  %v381 = vunpack.c.h.b16 %v31
  %v382 = vunpack.c.l.b16 %v32
  %v383 = vunpack.c.h.b16 %v32
  %v384 = vunpack.c.l.b16 %v33
  %v385 = vunpack.c.h.b16 %v33
  %v386 = vunpack.c.l.b16 %v34
  %v387 = vunpack.c.h.b16 %v34
  %v388 = vunpack.c.l.b16 %v35
  %v389 = vunpack.c.h.b16 %v35
  %v390 = vunpack.c.l.b16 %v36
  %v391 = vunpack.c.h.b16 %v36
  %v392 = vunpack.c.l.b16 %v37
  %v393 = vunpack.c.h.b16 %v37
  %v394 = vunpack.c.l.b16 %v38
  %v395 = vunpack.c.h.b16 %v38
  %v396 = vunpack.c.l.b16 %v39
  %v397 = vunpack.c.h.b16 %v39
  %v398 = vunpack.c.l.b16 %v40
  %v399 = vunpack.c.h.b16 %v40
  %v400 = vunpack.c.l.b16 %v41
  %v401 = vunpack.c.h.b16 %v41
  %v402 = vunpack.c.l.b16 %v42
  %v403 = vunpack.c.h.b16 %v42
  %v404 = vunpack.c.l.b16 %v43
  %v405 = vunpack.c.h.b16 %v43
  %v406 = vunpack.c.l.b16 %v44
  %v407 = vunpack.c.h.b16 %v44
  %v408 = vunpack.c.l.b16 %v45
  %v409 = vunpack.c.h.b16 %v45
  %v410 = vunpack.c.l.b16 %v46
  %v411 = vunpack.c.h.b16 %v46
  %v412 = vunpack.c.l.b16 %v47
  %v413 = vunpack.c.h.b16 %v47
  %v414 = vunpack.c.l.b16 %v48
  %v415 = vunpack.c.h.b16 %v48
  %v416 = vunpack.c.l.b16 %v49
  %v417 = vunpack.c.h.b16 %v49
  %v418 = vunpack.c.l.b16 %v50
  %v419 = vunpack.c.h.b16 %v50
  %v420 = vunpack.c.l.b16 %v51
  %v421 = vunpack.c.h.b16 %v51
  %v422 = vunpack.c.l.b16 %v52
  %v423 = vunpack.c.h.b16 %v52
  %v424 = vunpack.c.l.b16 %v53
  %v425 = vunpack.c.h.b16 %v53
  %v426 = vunpack.c.l.b16 %v54
  %v427 = vunpack.c.h.b16 %v54
  %v428 = vunpack.c.l.b16 %v55
  %v429 = vunpack.c.h.b16 %v55
  %v430 = vunpack.c.l.b16 %v56
  %v431 = vunpack.c.h.b16 %v56
  %v432 = vunpack.c.l.b16 %v57
  %v433 = vunpack.c.h.b16 %v57
  %v434 = vunpack.c.l.b16 %v58
  %v435 = vunpack.c.h.b16 %v58
  %v436 = vunpack.c.l.b16 %v59
  %v437 = vunpack.c.h.b16 %v59
  %v438 = vunpack.c.l.b16 %v60
  %v439 = vunpack.c.h.b16 %v60
  %v440 = vunpack.c.l.b16 %v61
  %v441 = vunpack.c.h.b16 %v61
  %v442 = vunpack.c.l.b16 %v62
  %v443 = vunpack.c.h.b16 %v62
  %v444 = vunpack.c.l.b16 %v63
  %v445 = vunpack.c.h.b16 %v63
  %v446 = vunpack.c.l.b16 %v64
  %v447 = vunpack.c.h.b16 %v64
  %v448 = vunpack.c.l.b16 %v65
  %v449 = vunpack.c.h.b16 %v65
  %v450 = vunpack.c.l.b16 %v66
  %v451 = vunpack.c.h.b16 %v66
  %v452 = vunpack.c.l.b16 %v67
  %v453 = vunpack.c.h.b16 %v67
  %v454 = vunpack.c.l.b16 %v68
  %v455 = vunpack.c.h.b16 %v68
  %v456 = vunpack.c.l.b16 %v69
  %v457 = vunpack.c.h.b16 %v69
  %v458 = vunpack.c.l.b16 %v70
  %v459 = vunpack.c.h.b16 %v70
  %v460 = vunpack.c.l.b16 %v71
  %v461 = vunpack.c.h.b16 %v71
  %v462 = vunpack.c.l.b16 %v72
  %v463 = vunpack.c.h.b16 %v72
  %v464 = vunpack.c.l.b16 %v73
  %v465 = vunpack.c.h.b16 %v73
  %v466 = vunpack.c.l.b16 %v74
  %v467 = vunpack.c.h.b16 %v74
  %v468 = vunpack.c.l.b16 %v75
  %v469 = vunpack.c.h.b16 %v75
  %v470 = vunpack.c.l.b16 %v76
  %v471 = vunpack.c.h.b16 %v76
  %v472 = vunpack.c.l.b16 %v77
  %v473 = vunpack.c.h.b16 %v77
  %v474 = vunpack.c.l.b16 %v78
  %v475 = vunpack.c.h.b16 %v78
  %v476 = vunpack.c.l.b16 %v79
  %v477 = vunpack.c.h.b16 %v79
  %v478 = vunpack.c.l.b16 %v80
  %v479 = vunpack.c.h.b16 %v80
  %v480 = vunpack.c.l.b16 %v81
  %v481 = vunpack.c.h.b16 %v81
  %v482 = vunpack.c.l.b16 %v82
  %v483 = vunpack.c.h.b16 %v82
  %v484 = vunpack.c.l.b16 %v83
  %v485 = vunpack.c.h.b16 %v83
  %v486 = vunpack.c.l.b16 %v84
  %v487 = vunpack.c.h.b16 %v84
  %v488 = vunpack.c.l.b16 %v85
  %v489 = vunpack.c.h.b16 %v85
  %v490 = vunpack.c.l.b16 %v86
  %v491 = vunpack.c.h.b16 %v86
  %v492 = vunpack.c.l.b16 %v87
  %v493 = vunpack.c.h.b16 %v87
  %v494 = vunpack.c.l.b16 %v88
  %v495 = vunpack.c.h.b16 %v88
  %v496 = vunpack.c.l.b16 %v89
  %v497 = vunpack.c.h.b16 %v89
  %v498 = vunpack.c.l.b16 %v90
  %v499 = vunpack.c.h.b16 %v90
  %v500 = vunpack.c.l.b16 %v91
  %v501 = vunpack.c.h.b16 %v91
  %v502 = vunpack.c.l.b16 %v92
  %v503 = vunpack.c.h.b16 %v92
  %v504 = vunpack.c.l.b16 %v93
  %v505 = vunpack.c.h.b16 %v93
  %v506 = vunpack.c.l.b16 %v94
  %v507 = vunpack.c.h.b16 %v94
  %v508 = vunpack.c.l.b16 %v95
  %v509 = vunpack.c.h.b16 %v95
  %v510 = vunpack.c.l.b16 %v96
  %v511 = vunpack.c.h.b16 %v96
  %v512 = vunpack.c.l.b16 %v97
  %v513 = vunpack.c.h.b16 %v97
  %v514 = vunpack.c.l.b16 %v98
  %v515 = vunpack.c.h.b16 %v98
  %v516 = vunpack.c.l.b16 %v99
  %v517 = vunpack.c.h.b16 %v99
  %v518 = vunpack.c.l.b16 %v100
  %v519 = vunpack.c.h.b16 %v100
  %v520 = vunpack.c.l.b16 %v101
  %v521 = vunpack.c.h.b16 %v101
  %v522 = vunpack.c.l.b16 %v102
  %v523 = vunpack.c.h.b16 %v102
  %v524 = vunpack.c.l.b16 %v103
  %v525 = vunpack.c.h.b16 %v103
  %v526 = vunpack.c.l.b16 %v104
  %v527 = vunpack.c.h.b16 %v104
  %v528 = vunpack.c.l.b16 %v105
  %v529 = vunpack.c.h.b16 %v105
  %v530 = vunpack.c.l.b16 %v106
  %v531 = vunpack.c.h.b16 %v106
  %v532 = vunpack.c.l.b16 %v107
  %v533 = vunpack.c.h.b16 %v107
  %v534 = vunpack.c.l.b16 %v108
  %v535 = vunpack.c.h.b16 %v108
  %v536 = vunpack.c.l.b16 %v109
  %v537 = vunpack.c.h.b16 %v109
  %v538 = vunpack.c.l.b16 %v110
  %v539 = vunpack.c.h.b16 %v110
  %v540 = vunpack.c.l.b16 %v111
  %v541 = vunpack.c.h.b16 %v111
  %v542 = vunpack.c.l.b16 %v112
  %v543 = vunpack.c.h.b16 %v112
  %v544 = vunpack.c.l.b16 %v113
  %v545 = vunpack.c.h.b16 %v113
  %v546 = vunpack.c.l.b16 %v114
  %v547 = vunpack.c.h.b16 %v114
  %v548 = vunpack.c.l.b16 %v115
  %v549 = vunpack.c.h.b16 %v115
  %v550 = vunpack.c.l.b16 %v116
  %v551 = vunpack.c.h.b16 %v116
  %v552 = vunpack.c.l.b16 %v117
  %v553 = vunpack.c.h.b16 %v117
  %v554 = vunpack.c.l.b16 %v118
  %v555 = vunpack.c.h.b16 %v118
  %v556 = vunpack.c.l.b16 %v119
  %v557 = vunpack.c.h.b16 %v119
  %v558 = vunpack.c.l.b16 %v120
  %v559 = vunpack.c.h.b16 %v120
  %v560 = vunpack.c.l.b16 %v121
  %v561 = vunpack.c.h.b16 %v121
  %v562 = vunpack.c.l.b16 %v122
  %v563 = vunpack.c.h.b16 %v122
  %v564 = vunpack.c.l.b16 %v123
  %v565 = vunpack.c.h.b16 %v123
  %v566 = vunpack.c.l.b16 %v124
  %v567 = vunpack.c.h.b16 %v124
  %v568 = vunpack.c.l.b16 %v125
  %v569 = vunpack.c.h.b16 %v125
  %v570 = vunpack.c.l.b16 %v126
  %v571 = vunpack.c.h.b16 %v126
  %v572 = vunpack.c.l.b16 %v127
  %v573 = vunpack.c.h.b16 %v127
  %v574 = vunpack.c.l.b16 %v128
  %v575 = vunpack.c.h.b16 %v128
  %v576 = vunpack.c.l.b16 %v129
  %v577 = vunpack.c.h.b16 %v129
  %v578 = vunpack.c.l.b16 %v130
  %v579 = vunpack.c.h.b16 %v130
  %v580 = vunpack.c.l.b16 %v131
  %v581 = vunpack.c.h.b16 %v131
  %v582 = vunpack.c.l.b16 %v132
  %v583 = vunpack.c.h.b16 %v132
  %v584 = vunpack.c.l.b16 %v133
  %v585 = vunpack.c.h.b16 %v133
  %v586 = vunpack.c.l.b16 %v134
  %v587 = vunpack.c.h.b16 %v134
  %v588 = vunpack.c.l.b16 %v135
  %v589 = vunpack.c.h.b16 %v135
  %v590 = vunpack.c.l.b16 %v136
  %v591 = vunpack.c.h.b16 %v136
  %v592 = vunpack.c.l.b16 %v137
  %v593 = vunpack.c.h.b16 %v137
  %v594 = vunpack.c.l.b16 %v138
  %v595 = vunpack.c.h.b16 %v138
  %v596 = vunpack.c.l.b16 %v139
  %v597 = vunpack.c.h.b16 %v139
  %v598 = vunpack.c.l.b16 %v140
  %v599 = vunpack.c.h.b16 %v140
  %v600 = vunpack.c.l.b16 %v141
  %v601 = vunpack.c.h.b16 %v141
  %v602 = vunpack.c.l.b16 %v142
  %v603 = vunpack.c.h.b16 %v142
  %v604 = vunpack.c.l.b16 %v143
  %v605 = vunpack.c.h.b16 %v143
  %v606 = vunpack.c.l.b16 %v144
  %v607 = vunpack.c.h.b16 %v144
  %v608 = vunpack.c.l.b16 %v145
  %v609 = vunpack.c.h.b16 %v145
  %v610 = vunpack.c.l.b16 %v146
  %v611 = vunpack.c.h.b16 %v146
  %v612 = vunpack.c.l.b16 %v147
  %v613 = vunpack.c.h.b16 %v147
  %v614 = vunpack.c.l.b16 %v148
  %v615 = vunpack.c.h.b16 %v148
  %v616 = vunpack.c.l.b16 %v149
  %v617 = vunpack.c.h.b16 %v149
  %v618 = vunpack.c.l.b16 %v150
  %v619 = vunpack.c.h.b16 %v150
  %v620 = vunpack.c.l.b16 %v151
  %v621 = vunpack.c.h.b16 %v151
  %v622 = vunpack.c.l.b16 %v152
  %v623 = vunpack.c.h.b16 %v152
  %v624 = vunpack.c.l.b16 %v153
  %v625 = vunpack.c.h.b16 %v153
  %v626 = vunpack.c.l.b16 %v154
  %v627 = vunpack.c.h.b16 %v154
  %v628 = vunpack.c.l.b16 %v155
  %v629 = vunpack.c.h.b16 %v155
  %v630 = vunpack.c.l.b16 %v156
  %v631 = vunpack.c.h.b16 %v156
  %v632 = vunpack.c.l.b16 %v157
  %v633 = vunpack.c.h.b16 %v157
  %v634 = vunpack.c.l.b16 %v158
  %v635 = vunpack.c.h.b16 %v158
  %v636 = vunpack.c.l.b16 %v159
  %v637 = vunpack.c.h.b16 %v159
  %v638 = vunpack.c.l.b16 %v160
  %v639 = vunpack.c.h.b16 %v160
  %v640 = vunpack.c.l.b16 %v161
  %v641 = vunpack.c.h.b16 %v161
  %v642 = vunpack.c.l.b16 %v162
  %v643 = vunpack.c.h.b16 %v162
  %v644 = vunpack.c.l.b16 %v163
  %v645 = vunpack.c.h.b16 %v163
  %v646 = vunpack.c.l.b16 %v164
  %v647 = vunpack.c.h.b16 %v164
  %v648 = vunpack.c.l.b16 %v165
  %v649 = vunpack.c.h.b16 %v165
  %v650 = vunpack.c.l.b16 %v166
  %v651 = vunpack.c.h.b16 %v166
  %v652 = vunpack.c.l.b16 %v167
  %v653 = vunpack.c.h.b16 %v167
  %v654 = vunpack.c.l.b16 %v168
  %v655 = vunpack.c.h.b16 %v168
  %v656 = vunpack.c.l.b16 %v169
  %v657 = vunpack.c.h.b16 %v169
  %v658 = vunpack.c.l.b16 %v170
  %v659 = vunpack.c.h.b16 %v170
  %v660 = vunpack.c.l.b16 %v171
  %v661 = vunpack.c.h.b16 %v171
  %v662 = vunpack.c.l.b16 %v172
  %v663 = vunpack.c.h.b16 %v172
  %v664 = vunpack.c.l.b16 %v173
  %v665 = vunpack.c.h.b16 %v173
  %v666 = vunpack.c.l.b16 %v174
  %v667 = vunpack.c.h.b16 %v174
  %v668 = vunpack.c.l.b16 %v175
  %v669 = vunpack.c.h.b16 %v175
  %v670 = vunpack.c.l.b16 %v176
  %v671 = vunpack.c.h.b16 %v176
  %v672 = vunpack.c.l.b16 %v177
  %v673 = vunpack.c.h.b16 %v177
  %v674 = vunpack.c.l.b16 %v178
  %v675 = vunpack.c.h.b16 %v178
  %v676 = vunpack.c.l.b16 %v179
  %v677 = vunpack.c.h.b16 %v179
  %v678 = vunpack.c.l.b16 %v180
  %v679 = vunpack.c.h.b16 %v180
  %v680 = vunpack.c.l.b16 %v181
  %v681 = vunpack.c.h.b16 %v181
  %v682 = vunpack.c.l.b16 %v182
  %v683 = vunpack.c.h.b16 %v182
  %v684 = vunpack.c.l.b16 %v183
  %v685 = vunpack.c.h.b16 %v183
  %v686 = vunpack.c.l.b16 %v184
  %v687 = vunpack.c.h.b16 %v184
  %v688 = vunpack.c.l.b16 %v185
  %v689 = vunpack.c.h.b16 %v185
  %v690 = vunpack.c.l.b16 %v186
  %v691 = vunpack.c.h.b16 %v186
  %v692 = vunpack.c.l.b16 %v187
  %v693 = vunpack.c.h.b16 %v187
  %v694 = vunpack.c.l.b16 %v188
  %v695 = vunpack.c.h.b16 %v188
  %v696 = vunpack.c.l.b16 %v189
  %v697 = vunpack.c.h.b16 %v189
  %v698 = vunpack.c.l.b16 %v190
  %v699 = vunpack.c.h.b16 %v190
  %v700 = vunpack.c.l.b16 %v191
  %v701 = vunpack.c.h.b16 %v191
  %v702 = vunpack.c.l.b16 %v192
  %v703 = vunpack.c.h.b16 %v192
  %v704 = vunpack.c.l.b16 %v193
  %v705 = vunpack.c.h.b16 %v193
  %v706 = vunpack.c.l.b16 %v194
  %v707 = vunpack.c.h.b16 %v194
  %v708 = vunpack.c.l.b16 %v195
  %v709 = vunpack.c.h.b16 %v195
  %v710 = vpack.c.b16 %v422, %v374
  %v711 = vpack.c.b16 %v423, %v375
  %v712 = vpack.c.b16 %v424, %v376
  %v713 = vpack.c.b16 %v425, %v377
  %v714 = vpack.c.b16 %v426, %v378
  %v715 = vpack.c.b16 %v427, %v379
  %v716 = vpack.c.b16 %v428, %v380
  %v717 = vpack.c.b16 %v429, %v381
  %v718 = vpack.c.b16 %v430, %v382
  %v719 = vpack.c.b16 %v431, %v383
  %v720 = vpack.c.b16 %v432, %v384
  %v721 = vpack.c.b16 %v433, %v385
  %v722 = vpack.c.b16 %v434, %v386
  %v723 = vpack.c.b16 %v435, %v387
  %v724 = vpack.c.b16 %v436, %v388
  %v725 = vpack.c.b16 %v437, %v389
  %v726 = vpack.c.b16 %v438, %v390
  %v727 = vpack.c.b16 %v439, %v391
  %v728 = vpack.c.b16 %v440, %v392
  %v729 = vpack.c.b16 %v441, %v393
  %v730 = vpack.c.b16 %v442, %v394
  %v731 = vpack.c.b16 %v443, %v395
  %v732 = vpack.c.b16 %v444, %v396
  %v733 = vpack.c.b16 %v445, %v397
  %v734 = vpack.c.b16 %v446, %v398
  %v735 = vpack.c.b16 %v447, %v399
  %v736 = vpack.c.b16 %v448, %v400
  %v737 = vpack.c.b16 %v449, %v401
  %v738 = vpack.c.b16 %v450, %v402
  %v739 = vpack.c.b16 %v451, %v403
  %v740 = vpack.c.b16 %v452, %v404
  %v741 = vpack.c.b16 %v453, %v405
  %v742 = vpack.c.b16 %v454, %v406
  %v743 = vpack.c.b16 %v455, %v407
  %v744 = vpack.c.b16 %v456, %v408
  %v745 = vpack.c.b16 %v457, %v409
  %v746 = vpack.c.b16 %v458, %v410
  %v747 = vpack.c.b16 %v459, %v411
  %v748 = vpack.c.b16 %v460, %v412
  %v749 = vpack.c.b16 %v461, %v413
  %v750 = vpack.c.b16 %v462, %v414
  %v751 = vpack.c.b16 %v463, %v415
  %v752 = vpack.c.b16 %v464, %v416
  %v753 = vpack.c.b16 %v465, %v417
  %v754 = vpack.c.b16 %v466, %v418
  %v755 = vpack.c.b16 %v467, %v419
  %v756 = vpack.c.b16 %v468, %v420
  %v757 = vpack.c.b16 %v469, %v421
  %v758 = vpack.c.b16 %v518, %v470
  %v759 = vpack.c.b16 %v519, %v471
  %v760 = vpack.c.b16 %v520, %v472
  %v761 = vpack.c.b16 %v521, %v473
  %v762 = vpack.c.b16 %v522, %v474
  %v763 = vpack.c.b16 %v523, %v475
  %v764 = vpack.c.b16 %v524, %v476
  %v765 = vpack.c.b16 %v525, %v477
  %v766 = vpack.c.b16 %v526, %v478
  %v767 = vpack.c.b16 %v527, %v479
  %v768 = vpack.c.b16 %v528, %v480
  %v769 = vpack.c.b16 %v529, %v481
  %v770 = vpack.c.b16 %v530, %v482
  %v771 = vpack.c.b16 %v531, %v483
  %v772 = vpack.c.b16 %v532, %v484
  %v773 = vpack.c.b16 %v533, %v485
  %v774 = vpack.c.b16 %v534, %v486
  %v775 = vpack.c.b16 %v535, %v487
  %v776 = vpack.c.b16 %v536, %v488
  %v777 = vpack.c.b16 %v537, %v489
  %v778 = vpack.c.b16 %v538, %v490
  %v779 = vpack.c.b16 %v539, %v491
  %v780 = vpack.c.b16 %v540, %v492
  %v781 = vpack.c.b16 %v541, %v493
  %v782 = vpack.c.b16 %v542, %v494
  %v783 = vpack.c.b16 %v543, %v495
  %v784 = vpack.c.b16 %v544, %v496
  %v785 = vpack.c.b16 %v545, %v497
  %v786 = vpack.c.b16 %v546, %v498
  %v787 = vpack.c.b16 %v547, %v499
  %v788 = vpack.c.b16 %v548, %v500
  %v789 = vpack.c.b16 %v549, %v501
  %v790 = vpack.c.b16 %v550, %v502
  %v791 = vpack.c.b16 %v551, %v503
  %v792 = vpack.c.b16 %v552, %v504
  %v793 = vpack.c.b16 %v553, %v505
  %v794 = vpack.c.b16 %v554, %v506
  %v795 = vpack.c.b16 %v555, %v507
  %v796 = vpack.c.b16 %v556, %v508
  %v797 = vpack.c.b16 %v557, %v509
  %v798 = vpack.c.b16 %v558, %v510
  %v799 = vpack.c.b16 %v559, %v511
  %v800 = vpack.c.b16 %v560, %v512
  %v801 = vpack.c.b16 %v561, %v513
  %v802 = vpack.c.b16 %v562, %v514
  %v803 = vpack.c.b16 %v563, %v515
  %v804 = vpack.c.b16 %v564, %v516
  %v805 = vpack.c.b16 %v565, %v517
  %v806 = vpack.c.b16 %v614, %v566
  %v807 = vpack.c.b16 %v615, %v567
  %v808 = vpack.c.b16 %v616, %v568
  %v809 = vpack.c.b16 %v617, %v569
  %v810 = vpack.c.b16 %v618, %v570
  %v811 = vpack.c.b16 %v619, %v571
  %v812 = vpack.c.b16 %v620, %v572
  %v813 = vpack.c.b16 %v621, %v573
  %v814 = vpack.c.b16 %v622, %v574
  %v815 = vpack.c.b16 %v623, %v575
  %v816 = vpack.c.b16 %v624, %v576
  %v817 = vpack.c.b16 %v625, %v577
  %v818 = vpack.c.b16 %v626, %v578
  %v819 = vpack.c.b16 %v627, %v579
  %v820 = vpack.c.b16 %v628, %v580
  %v821 = vpack.c.b16 %v629, %v581
  %v822 = vpack.c.b16 %v630, %v582
  %v823 = vpack.c.b16 %v631, %v583
  %v824 = vpack.c.b16 %v632, %v584
  %v825 = vpack.c.b16 %v633, %v585
  %v826 = vpack.c.b16 %v634, %v586
  %v827 = vpack.c.b16 %v635, %v587
  %v828 = vpack.c.b16 %v636, %v588
  %v829 = vpack.c.b16 %v637, %v589
  %v830 = vpack.c.b16 %v638, %v590
  %v831 = vpack.c.b16 %v639, %v591
  %v832 = vpack.c.b16 %v640, %v592
  %v833 = vpack.c.b16 %v641, %v593
  %v834 = vpack.c.b16 %v642, %v594
  %v835 = vpack.c.b16 %v643, %v595
  %v836 = vpack.c.b16 %v644, %v596
  %v837 = vpack.c.b16 %v645, %v597
  %v838 = vpack.c.b16 %v646, %v598
  %v839 = vpack.c.b16 %v647, %v599
  %v840 = vpack.c.b16 %v648, %v600
  %v841 = vpack.c.b16 %v649, %v601
  %v842 = vpack.c.b16 %v650, %v602
  %v843 = vpack.c.b16 %v651, %v603
  %v844 = vpack.c.b16 %v652, %v604
  %v845 = vpack.c.b16 %v653, %v605
  %v846 = vpack.c.b16 %v654, %v606
  %v847 = vpack.c.b16 %v655, %v607
  %v848 = vpack.c.b16 %v656, %v608
  %v849 = vpack.c.b16 %v657, %v609
  %v850 = vpack.c.b16 %v658, %v610
  %v851 = vpack.c.b16 %v659, %v611
  %v852 = vpack.c.b16 %v660, %v612
  %v853 = vpack.c.b16 %v661, %v613
  %v854 = vpack.c.b16 %v662, %v662
  %v855 = vpack.c.b16 %v663, %v663
  %v856 = vpack.c.b16 %v664, %v664
  %v857 = vpack.c.b16 %v665, %v665
  %v858 = vpack.c.b16 %v666, %v666
  %v859 = vpack.c.b16 %v667, %v667
  %v860 = vpack.c.b16 %v668, %v668
  %v861 = vpack.c.b16 %v669, %v669
  %v862 = vpack.c.b16 %v670, %v670
  %v863 = vpack.c.b16 %v671, %v671
  %v864 = vpack.c.b16 %v672, %v672
  %v865 = vpack.c.b16 %v673, %v673
  %v866 = vpack.c.b16 %v674, %v674
  %v867 = vpack.c.b16 %v675, %v675
  %v868 = vpack.c.b16 %v676, %v676
  %v869 = vpack.c.b16 %v677, %v677
  %v870 = vpack.c.b16 %v678, %v678
  %v871 = vpack.c.b16 %v679, %v679
  %v872 = vpack.c.b16 %v680, %v680
  %v873 = vpack.c.b16 %v681, %v681
  %v874 = vpack.c.b16 %v682, %v682
  %v875 = vpack.c.b16 %v683, %v683
  %v876 = vpack.c.b16 %v684, %v684
  %v877 = vpack.c.b16 %v685, %v685
  %v878 = vpack.c.b16 %v686, %v686
  %v879 = vpack.c.b16 %v687, %v687
  %v880 = vpack.c.b16 %v688, %v688
  %v881 = vpack.c.b16 %v689, %v689
  %v882 = vpack.c.b16 %v690, %v690
  %v883 = vpack.c.b16 %v691, %v691
  %v884 = vpack.c.b16 %v692, %v692
  %v885 = vpack.c.b16 %v693, %v693
  %v886 = vpack.c.b16 %v694, %v694
  %v887 = vpack.c.b16 %v695, %v695
  %v888 = vpack.c.b16 %v696, %v696
  %v889 = vpack.c.b16 %v697, %v697
  %v890 = vpack.c.b16 %v698, %v698
  %v891 = vpack.c.b16 %v699, %v699
  %v892 = vpack.c.b16 %v700, %v700
  %v893 = vpack.c.b16 %v701, %v701
  %v894 = vpack.c.b16 %v702, %v702
  %v895 = vpack.c.b16 %v703, %v703
  %v896 = vpack.c.b16 %v704, %v704
  %v897 = vpack.c.b16 %v705, %v705
  %v898 = vpack.c.b16 %v706, %v706
  %v899 = vpack.c.b16 %v707, %v707
  %v900 = vpack.c.b16 %v708, %v708
  %v901 = vpack.c.b16 %v709, %v709
  %vm1046 = vcmask 441344
  %v1048 = vsel %vm1046, %v27, 0
  %vm1050 = vcmask 1042432
  %v1052 = vsel %vm1050, %v854, 0
  %v1055 = vsel %vm1050, %v855, 0
  %v1058 = vsel %vm1050, %v856, 0
  %v1061 = vsel %vm1050, %v857, 0
  %v1064 = vsel %vm1050, %v858, 0
  %v1067 = vsel %vm1050, %v859, 0
  %v1070 = vsel %vm1050, %v860, 0
  %v1073 = vsel %vm1050, %v861, 0
  %v1076 = vsel %vm1050, %v862, 0
  %v1079 = vsel %vm1050, %v863, 0
  %v1082 = vsel %vm1050, %v864, 0
  %v1085 = vsel %vm1050, %v865, 0
  %v1088 = vsel %vm1050, %v866, 0
  %v1091 = vsel %vm1050, %v867, 0
  %v1094 = vsel %vm1050, %v868, 0
  %v1097 = vsel %vm1050, %v869, 0
  %v1100 = vsel %vm1050, %v870, 0
  %v1103 = vsel %vm1050, %v871, 0
  %v1106 = vsel %vm1050, %v872, 0
  %v1109 = vsel %vm1050, %v873, 0
  %v1112 = vsel %vm1050, %v874, 0
  %v1115 = vsel %vm1050, %v875, 0
  %v1118 = vsel %vm1050, %v876, 0
  %v1121 = vsel %vm1050, %v877, 0
  %v1124 = vsel %vm1050, %v878, 0
  %v1127 = vsel %vm1050, %v879, 0
  %v1130 = vsel %vm1050, %v880, 0
  %v1133 = vsel %vm1050, %v881, 0
  %v1136 = vsel %vm1050, %v882, 0
  %v1139 = vsel %vm1050, %v883, 0
  %v1142 = vsel %vm1050, %v884, 0
  %v1145 = vsel %vm1050, %v885, 0
  %v1148 = vsel %vm1050, %v886, 0
  %v1151 = vsel %vm1050, %v887, 0
  %v1154 = vsel %vm1050, %v888, 0
  %v1157 = vsel %vm1050, %v889, 0
  %v1160 = vsel %vm1050, %v890, 0
  %v1163 = vsel %vm1050, %v891, 0
  %v1166 = vsel %vm1050, %v892, 0
  %v1169 = vsel %vm1050, %v893, 0
  %v1172 = vsel %vm1050, %v894, 0
  %v1175 = vsel %vm1050, %v895, 0
  %v1178 = vsel %vm1050, %v896, 0
  %v1181 = vsel %vm1050, %v897, 0
  %v1184 = vsel %vm1050, %v898, 0
  %v1187 = vsel %vm1050, %v899, 0
  %v1190 = vsel %vm1050, %v900, 0
  %v1193 = vsel %vm1050, %v901, 0
  %1195 = vmatprep.subr.bf16.mxu0 %v711
  %1196 = vmatpush1.bf16.msra.mxu0 %v710
  %1197 = vmatprep.subr.bf16.mxu0 %v759
  %1198 = vmatpush1.bf16.msra.mxu0 %v758
  %1199 = vmatprep.subr.bf16.mxu0 %v807
  %1200 = vmatpush1.bf16.msra.mxu0 %v806
  %1201 = vmatprep.subr.bf16.mxu0 %v1055
  %1202 = vmatpush1.bf16.msra.mxu0 %v1052
  %1203 = vmatprep.subr.bf16.mxu0 0
  %1204 = vmatpush1.bf16.msra.mxu0 0
  %1205 = vmatprep.subr.bf16.mxu0 0
  %1206 = vmatpush1.bf16.msra.mxu0 0
  %1207 = vmatprep.subr.bf16.mxu0 0
  %1208 = vmatpush1.bf16.msra.mxu0 0
  %1209 = vmatprep.subr.bf16.mxu0 0
  %1210 = vmatpush1.bf16.msra.mxu0 0
  %1211 = vmatprep.subr.bf16.mxu0 0
  %1212 = vmatpush1.bf16.msra.mxu0 0
  %1213 = vmatprep.subr.bf16.mxu0 0
  %1214 = vmatpush1.bf16.msra.mxu0 0
  %1215 = vmatprep.subr.bf16.mxu0 0
  %1216 = vmatpush1.bf16.msra.mxu0 0
  %1217 = vmatprep.subr.bf16.mxu0 0
  %1218 = vmatpush1.bf16.msra.mxu0 0
  %1219 = vmatprep.subr.bf16.mxu0 0
  %1220 = vmatpush1.bf16.msra.mxu0 0
  %1221 = vmatprep.subr.bf16.mxu0 0
  %1222 = vmatpush1.bf16.msra.mxu0 0
  %1223 = vmatprep.subr.bf16.mxu0 0
  %1224 = vmatpush1.bf16.msra.mxu0 0
  %1225 = vmatprep.subr.bf16.mxu0 0
  %1226 = vmatpush1.bf16.msra.mxu0 0
  %1227 = vmatprep.mubr.bf16.mxu0 0
  %1228 = vmatmul.mubr.bf16.gmra.mrb[0].mxu0 %v1048
  %v1229 = vpop.f32.mrb[0].mxu0
  %v1230 = vadd.f32 %v205, %v1229
  %v1231 = vpop.f32.mrb[0].mxu0
  %v1232 = vadd.f32 %v205, %v1231
  %v1233 = vpop.f32.mrb[0].mxu0
  %v1234 = vpop.f32.mrb[0].mxu0
  %1235 = vdwg.mxu0
  %1236 = vmatprep.subr.bf16.mxu0 %v713
  %1237 = vmatpush1.bf16.msra.mxu0 %v712
  %1238 = vmatprep.subr.bf16.mxu0 %v761
  %1239 = vmatpush1.bf16.msra.mxu0 %v760
  %1240 = vmatprep.subr.bf16.mxu0 %v809
  %1241 = vmatpush1.bf16.msra.mxu0 %v808
  %1242 = vmatprep.subr.bf16.mxu0 %v1061
  %1243 = vmatpush1.bf16.msra.mxu0 %v1058
  %1244 = vmatprep.subr.bf16.mxu0 0
  %1245 = vmatpush1.bf16.msra.mxu0 0
  %1246 = vmatprep.subr.bf16.mxu0 0
  %1247 = vmatpush1.bf16.msra.mxu0 0
  %1248 = vmatprep.subr.bf16.mxu0 0
  %1249 = vmatpush1.bf16.msra.mxu0 0
  %1250 = vmatprep.subr.bf16.mxu0 0
  %1251 = vmatpush1.bf16.msra.mxu0 0
  %1252 = vmatprep.subr.bf16.mxu0 0
  %1253 = vmatpush1.bf16.msra.mxu0 0
  %1254 = vmatprep.subr.bf16.mxu0 0
  %1255 = vmatpush1.bf16.msra.mxu0 0
  %1256 = vmatprep.subr.bf16.mxu0 0
  %1257 = vmatpush1.bf16.msra.mxu0 0
  %1258 = vmatprep.subr.bf16.mxu0 0
  %1259 = vmatpush1.bf16.msra.mxu0 0
  %1260 = vmatprep.subr.bf16.mxu0 0
  %1261 = vmatpush1.bf16.msra.mxu0 0
  %1262 = vmatprep.subr.bf16.mxu0 0
  %1263 = vmatpush1.bf16.msra.mxu0 0
  %1264 = vmatprep.subr.bf16.mxu0 0
  %1265 = vmatpush1.bf16.msra.mxu0 0
  %1266 = vmatprep.subr.bf16.mxu0 0
  %1267 = vmatpush1.bf16.msra.mxu0 0
  %1268 = vmatprep.mubr.bf16.mxu0 0
  %1269 = vmatmul.mubr.bf16.gmra.mrb[0].mxu0 %v1048
  %v1270 = vpop.f32.mrb[0].mxu0
  %v1271 = vadd.f32 %v205, %v1270
  %v1272 = vpop.f32.mrb[0].mxu0
  %v1273 = vadd.f32 %v205, %v1272
  %v1274 = vpop.f32.mrb[0].mxu0
  %v1275 = vpop.f32.mrb[0].mxu0
  %1276 = vdwg.mxu0
  %1277 = vmatprep.subr.bf16.mxu0 %v715
  %1278 = vmatpush1.bf16.msra.mxu0 %v714
  %1279 = vmatprep.subr.bf16.mxu0 %v763
  %1280 = vmatpush1.bf16.msra.mxu0 %v762
  %1281 = vmatprep.subr.bf16.mxu0 %v811
  %1282 = vmatpush1.bf16.msra.mxu0 %v810
  %1283 = vmatprep.subr.bf16.mxu0 %v1067
  %1284 = vmatpush1.bf16.msra.mxu0 %v1064
  %1285 = vmatprep.subr.bf16.mxu0 0
  %1286 = vmatpush1.bf16.msra.mxu0 0
  %1287 = vmatprep.subr.bf16.mxu0 0
  %1288 = vmatpush1.bf16.msra.mxu0 0
  %1289 = vmatprep.subr.bf16.mxu0 0
  %1290 = vmatpush1.bf16.msra.mxu0 0
  %1291 = vmatprep.subr.bf16.mxu0 0
  %1292 = vmatpush1.bf16.msra.mxu0 0
  %1293 = vmatprep.subr.bf16.mxu0 0
  %1294 = vmatpush1.bf16.msra.mxu0 0
  %1295 = vmatprep.subr.bf16.mxu0 0
  %1296 = vmatpush1.bf16.msra.mxu0 0
  %1297 = vmatprep.subr.bf16.mxu0 0
  %1298 = vmatpush1.bf16.msra.mxu0 0
  %1299 = vmatprep.subr.bf16.mxu0 0
  %1300 = vmatpush1.bf16.msra.mxu0 0
  %1301 = vmatprep.subr.bf16.mxu0 0
  %1302 = vmatpush1.bf16.msra.mxu0 0
  %1303 = vmatprep.subr.bf16.mxu0 0
  %1304 = vmatpush1.bf16.msra.mxu0 0
  %1305 = vmatprep.subr.bf16.mxu0 0
  %1306 = vmatpush1.bf16.msra.mxu0 0
  %1307 = vmatprep.subr.bf16.mxu0 0
  %1308 = vmatpush1.bf16.msra.mxu0 0
  %1309 = vmatprep.mubr.bf16.mxu0 0
  %1310 = vmatmul.mubr.bf16.gmra.mrb[0].mxu0 %v1048
  %v1311 = vpop.f32.mrb[0].mxu0
  %v1312 = vadd.f32 %v205, %v1311
  %v1313 = vpop.f32.mrb[0].mxu0
  %v1314 = vadd.f32 %v205, %v1313
  %v1315 = vpop.f32.mrb[0].mxu0
  %v1316 = vpop.f32.mrb[0].mxu0
  %1317 = vdwg.mxu0
  %1318 = vmatprep.subr.bf16.mxu0 %v717
  %1319 = vmatpush1.bf16.msra.mxu0 %v716
  %1320 = vmatprep.subr.bf16.mxu0 %v765
  %1321 = vmatpush1.bf16.msra.mxu0 %v764
  %1322 = vmatprep.subr.bf16.mxu0 %v813
  %1323 = vmatpush1.bf16.msra.mxu0 %v812
  %1324 = vmatprep.subr.bf16.mxu0 %v1073
  %1325 = vmatpush1.bf16.msra.mxu0 %v1070
  %1326 = vmatprep.subr.bf16.mxu0 0
  %1327 = vmatpush1.bf16.msra.mxu0 0
  %1328 = vmatprep.subr.bf16.mxu0 0
  %1329 = vmatpush1.bf16.msra.mxu0 0
  %1330 = vmatprep.subr.bf16.mxu0 0
  %1331 = vmatpush1.bf16.msra.mxu0 0
  %1332 = vmatprep.subr.bf16.mxu0 0
  %1333 = vmatpush1.bf16.msra.mxu0 0
  %1334 = vmatprep.subr.bf16.mxu0 0
  %1335 = vmatpush1.bf16.msra.mxu0 0
  %1336 = vmatprep.subr.bf16.mxu0 0
  %1337 = vmatpush1.bf16.msra.mxu0 0
  %1338 = vmatprep.subr.bf16.mxu0 0
  %1339 = vmatpush1.bf16.msra.mxu0 0
  %1340 = vmatprep.subr.bf16.mxu0 0
  %1341 = vmatpush1.bf16.msra.mxu0 0
  %1342 = vmatprep.subr.bf16.mxu0 0
  %1343 = vmatpush1.bf16.msra.mxu0 0
  %1344 = vmatprep.subr.bf16.mxu0 0
  %1345 = vmatpush1.bf16.msra.mxu0 0
  %1346 = vmatprep.subr.bf16.mxu0 0
  %1347 = vmatpush1.bf16.msra.mxu0 0
  %1348 = vmatprep.subr.bf16.mxu0 0
  %1349 = vmatpush1.bf16.msra.mxu0 0
  %1350 = vmatprep.mubr.bf16.mxu0 0
  %1351 = vmatmul.mubr.bf16.gmra.mrb[0].mxu0 %v1048
  %v1352 = vpop.f32.mrb[0].mxu0
  %v1353 = vadd.f32 %v205, %v1352
  %v1354 = vpop.f32.mrb[0].mxu0
  %v1355 = vadd.f32 %v205, %v1354
  %v1356 = vpop.f32.mrb[0].mxu0
  %v1357 = vpop.f32.mrb[0].mxu0
  %1358 = vdwg.mxu0
  %1359 = vmatprep.subr.bf16.mxu0 %v719
  %1360 = vmatpush1.bf16.msra.mxu0 %v718
  %1361 = vmatprep.subr.bf16.mxu0 %v767
  %1362 = vmatpush1.bf16.msra.mxu0 %v766
  %1363 = vmatprep.subr.bf16.mxu0 %v815
  %1364 = vmatpush1.bf16.msra.mxu0 %v814
  %1365 = vmatprep.subr.bf16.mxu0 %v1079
  %1366 = vmatpush1.bf16.msra.mxu0 %v1076
  %1367 = vmatprep.subr.bf16.mxu0 0
  %1368 = vmatpush1.bf16.msra.mxu0 0
  %1369 = vmatprep.subr.bf16.mxu0 0
  %1370 = vmatpush1.bf16.msra.mxu0 0
  %1371 = vmatprep.subr.bf16.mxu0 0
  %1372 = vmatpush1.bf16.msra.mxu0 0
  %1373 = vmatprep.subr.bf16.mxu0 0
  %1374 = vmatpush1.bf16.msra.mxu0 0
  %1375 = vmatprep.subr.bf16.mxu0 0
  %1376 = vmatpush1.bf16.msra.mxu0 0
  %1377 = vmatprep.subr.bf16.mxu0 0
  %1378 = vmatpush1.bf16.msra.mxu0 0
  %1379 = vmatprep.subr.bf16.mxu0 0
  %1380 = vmatpush1.bf16.msra.mxu0 0
  %1381 = vmatprep.subr.bf16.mxu0 0
  %1382 = vmatpush1.bf16.msra.mxu0 0
  %1383 = vmatprep.subr.bf16.mxu0 0
  %1384 = vmatpush1.bf16.msra.mxu0 0
  %1385 = vmatprep.subr.bf16.mxu0 0
  %1386 = vmatpush1.bf16.msra.mxu0 0
  %1387 = vmatprep.subr.bf16.mxu0 0
  %1388 = vmatpush1.bf16.msra.mxu0 0
  %1389 = vmatprep.subr.bf16.mxu0 0
  %1390 = vmatpush1.bf16.msra.mxu0 0
  %1391 = vmatprep.mubr.bf16.mxu0 0
  %1392 = vmatmul.mubr.bf16.gmra.mrb[0].mxu0 %v1048
  %v1393 = vpop.f32.mrb[0].mxu0
  %v1394 = vadd.f32 %v205, %v1393
  %v1395 = vpop.f32.mrb[0].mxu0
  %v1396 = vadd.f32 %v205, %v1395
  %v1397 = vpop.f32.mrb[0].mxu0
  %v1398 = vpop.f32.mrb[0].mxu0
  %1399 = vdwg.mxu0
  %1400 = vmatprep.subr.bf16.mxu0 %v721
  %1401 = vmatpush1.bf16.msra.mxu0 %v720
  %1402 = vmatprep.subr.bf16.mxu0 %v769
  %1403 = vmatpush1.bf16.msra.mxu0 %v768
  %1404 = vmatprep.subr.bf16.mxu0 %v817
  %1405 = vmatpush1.bf16.msra.mxu0 %v816
  %1406 = vmatprep.subr.bf16.mxu0 %v1085
  %1407 = vmatpush1.bf16.msra.mxu0 %v1082
  %1408 = vmatprep.subr.bf16.mxu0 0
  %1409 = vmatpush1.bf16.msra.mxu0 0
  %1410 = vmatprep.subr.bf16.mxu0 0
  %1411 = vmatpush1.bf16.msra.mxu0 0
  %1412 = vmatprep.subr.bf16.mxu0 0
  %1413 = vmatpush1.bf16.msra.mxu0 0
  %1414 = vmatprep.subr.bf16.mxu0 0
  %1415 = vmatpush1.bf16.msra.mxu0 0
  %1416 = vmatprep.subr.bf16.mxu0 0
  %1417 = vmatpush1.bf16.msra.mxu0 0
  %1418 = vmatprep.subr.bf16.mxu0 0
  %1419 = vmatpush1.bf16.msra.mxu0 0
  %1420 = vmatprep.subr.bf16.mxu0 0
  %1421 = vmatpush1.bf16.msra.mxu0 0
  %1422 = vmatprep.subr.bf16.mxu0 0
  %1423 = vmatpush1.bf16.msra.mxu0 0
  %1424 = vmatprep.subr.bf16.mxu0 0
  %1425 = vmatpush1.bf16.msra.mxu0 0
  %1426 = vmatprep.subr.bf16.mxu0 0
  %1427 = vmatpush1.bf16.msra.mxu0 0
  %1428 = vmatprep.subr.bf16.mxu0 0
  %1429 = vmatpush1.bf16.msra.mxu0 0
  %1430 = vmatprep.subr.bf16.mxu0 0
  %1431 = vmatpush1.bf16.msra.mxu0 0
  %1432 = vmatprep.mubr.bf16.mxu0 0
  %1433 = vmatmul.mubr.bf16.gmra.mrb[0].mxu0 %v1048
  %v1434 = vpop.f32.mrb[0].mxu0
  %v1435 = vadd.f32 %v205, %v1434
  %v1436 = vpop.f32.mrb[0].mxu0
  %v1437 = vadd.f32 %v205, %v1436
  %v1438 = vpop.f32.mrb[0].mxu0
  %v1439 = vpop.f32.mrb[0].mxu0
  %1440 = vdwg.mxu0
  %1441 = vmatprep.subr.bf16.mxu0 %v723
  %1442 = vmatpush1.bf16.msra.mxu0 %v722
  %1443 = vmatprep.subr.bf16.mxu0 %v771
  %1444 = vmatpush1.bf16.msra.mxu0 %v770
  %1445 = vmatprep.subr.bf16.mxu0 %v819
  %1446 = vmatpush1.bf16.msra.mxu0 %v818
  %1447 = vmatprep.subr.bf16.mxu0 %v1091
  %1448 = vmatpush1.bf16.msra.mxu0 %v1088
  %1449 = vmatprep.subr.bf16.mxu0 0
  %1450 = vmatpush1.bf16.msra.mxu0 0
  %1451 = vmatprep.subr.bf16.mxu0 0
  %1452 = vmatpush1.bf16.msra.mxu0 0
  %1453 = vmatprep.subr.bf16.mxu0 0
  %1454 = vmatpush1.bf16.msra.mxu0 0
  %1455 = vmatprep.subr.bf16.mxu0 0
  %1456 = vmatpush1.bf16.msra.mxu0 0
  %1457 = vmatprep.subr.bf16.mxu0 0
  %1458 = vmatpush1.bf16.msra.mxu0 0
  %1459 = vmatprep.subr.bf16.mxu0 0
  %1460 = vmatpush1.bf16.msra.mxu0 0
  %1461 = vmatprep.subr.bf16.mxu0 0
  %1462 = vmatpush1.bf16.msra.mxu0 0
  %1463 = vmatprep.subr.bf16.mxu0 0
  %1464 = vmatpush1.bf16.msra.mxu0 0
  %1465 = vmatprep.subr.bf16.mxu0 0
  %1466 = vmatpush1.bf16.msra.mxu0 0
  %1467 = vmatprep.subr.bf16.mxu0 0
  %1468 = vmatpush1.bf16.msra.mxu0 0
  %1469 = vmatprep.subr.bf16.mxu0 0
  %1470 = vmatpush1.bf16.msra.mxu0 0
  %1471 = vmatprep.subr.bf16.mxu0 0
  %1472 = vmatpush1.bf16.msra.mxu0 0
  %1473 = vmatprep.mubr.bf16.mxu0 0
  %1474 = vmatmul.mubr.bf16.gmra.mrb[0].mxu0 %v1048
  %v1475 = vpop.f32.mrb[0].mxu0
  %v1476 = vadd.f32 %v205, %v1475
  %v1477 = vpop.f32.mrb[0].mxu0
  %v1478 = vadd.f32 %v205, %v1477
  %v1479 = vpop.f32.mrb[0].mxu0
  %v1480 = vpop.f32.mrb[0].mxu0
  %1481 = vdwg.mxu0
  %1482 = vmatprep.subr.bf16.mxu0 %v725
  %1483 = vmatpush1.bf16.msra.mxu0 %v724
  %1484 = vmatprep.subr.bf16.mxu0 %v773
  %1485 = vmatpush1.bf16.msra.mxu0 %v772
  %1486 = vmatprep.subr.bf16.mxu0 %v821
  %1487 = vmatpush1.bf16.msra.mxu0 %v820
  %1488 = vmatprep.subr.bf16.mxu0 %v1097
  %1489 = vmatpush1.bf16.msra.mxu0 %v1094
  %1490 = vmatprep.subr.bf16.mxu0 0
  %1491 = vmatpush1.bf16.msra.mxu0 0
  %1492 = vmatprep.subr.bf16.mxu0 0
  %1493 = vmatpush1.bf16.msra.mxu0 0
  %1494 = vmatprep.subr.bf16.mxu0 0
  %1495 = vmatpush1.bf16.msra.mxu0 0
  %1496 = vmatprep.subr.bf16.mxu0 0
  %1497 = vmatpush1.bf16.msra.mxu0 0
  %1498 = vmatprep.subr.bf16.mxu0 0
  %1499 = vmatpush1.bf16.msra.mxu0 0
  %1500 = vmatprep.subr.bf16.mxu0 0
  %1501 = vmatpush1.bf16.msra.mxu0 0
  %1502 = vmatprep.subr.bf16.mxu0 0
  %1503 = vmatpush1.bf16.msra.mxu0 0
  %1504 = vmatprep.subr.bf16.mxu0 0
  %1505 = vmatpush1.bf16.msra.mxu0 0
  %1506 = vmatprep.subr.bf16.mxu0 0
  %1507 = vmatpush1.bf16.msra.mxu0 0
  %1508 = vmatprep.subr.bf16.mxu0 0
  %1509 = vmatpush1.bf16.msra.mxu0 0
  %1510 = vmatprep.subr.bf16.mxu0 0
  %1511 = vmatpush1.bf16.msra.mxu0 0
  %1512 = vmatprep.subr.bf16.mxu0 0
  %1513 = vmatpush1.bf16.msra.mxu0 0
  %1514 = vmatprep.mubr.bf16.mxu0 0
  %1515 = vmatmul.mubr.bf16.gmra.mrb[0].mxu0 %v1048
  %v1516 = vpop.f32.mrb[0].mxu0
  %v1517 = vadd.f32 %v205, %v1516
  %v1518 = vpop.f32.mrb[0].mxu0
  %v1519 = vadd.f32 %v205, %v1518
  %v1520 = vpop.f32.mrb[0].mxu0
  %v1521 = vpop.f32.mrb[0].mxu0
  %1522 = vdwg.mxu0
  %1523 = vmatprep.subr.bf16.mxu0 %v727
  %1524 = vmatpush1.bf16.msra.mxu0 %v726
  %1525 = vmatprep.subr.bf16.mxu0 %v775
  %1526 = vmatpush1.bf16.msra.mxu0 %v774
  %1527 = vmatprep.subr.bf16.mxu0 %v823
  %1528 = vmatpush1.bf16.msra.mxu0 %v822
  %1529 = vmatprep.subr.bf16.mxu0 %v1103
  %1530 = vmatpush1.bf16.msra.mxu0 %v1100
  %1531 = vmatprep.subr.bf16.mxu0 0
  %1532 = vmatpush1.bf16.msra.mxu0 0
  %1533 = vmatprep.subr.bf16.mxu0 0
  %1534 = vmatpush1.bf16.msra.mxu0 0
  %1535 = vmatprep.subr.bf16.mxu0 0
  %1536 = vmatpush1.bf16.msra.mxu0 0
  %1537 = vmatprep.subr.bf16.mxu0 0
  %1538 = vmatpush1.bf16.msra.mxu0 0
  %1539 = vmatprep.subr.bf16.mxu0 0
  %1540 = vmatpush1.bf16.msra.mxu0 0
  %1541 = vmatprep.subr.bf16.mxu0 0
  %1542 = vmatpush1.bf16.msra.mxu0 0
  %1543 = vmatprep.subr.bf16.mxu0 0
  %1544 = vmatpush1.bf16.msra.mxu0 0
  %1545 = vmatprep.subr.bf16.mxu0 0
  %1546 = vmatpush1.bf16.msra.mxu0 0
  %1547 = vmatprep.subr.bf16.mxu0 0
  %1548 = vmatpush1.bf16.msra.mxu0 0
  %1549 = vmatprep.subr.bf16.mxu0 0
  %1550 = vmatpush1.bf16.msra.mxu0 0
  %1551 = vmatprep.subr.bf16.mxu0 0
  %1552 = vmatpush1.bf16.msra.mxu0 0
  %1553 = vmatprep.subr.bf16.mxu0 0
  %1554 = vmatpush1.bf16.msra.mxu0 0
  %1555 = vmatprep.mubr.bf16.mxu0 0
  %1556 = vmatmul.mubr.bf16.gmra.mrb[0].mxu0 %v1048
  %v1557 = vpop.f32.mrb[0].mxu0
  %v1558 = vadd.f32 %v205, %v1557
  %v1559 = vpop.f32.mrb[0].mxu0
  %v1560 = vadd.f32 %v205, %v1559
  %v1561 = vpop.f32.mrb[0].mxu0
  %v1562 = vpop.f32.mrb[0].mxu0
  %1563 = vdwg.mxu0
  %1564 = vmatprep.subr.bf16.mxu0 %v729
  %1565 = vmatpush1.bf16.msra.mxu0 %v728
  %1566 = vmatprep.subr.bf16.mxu0 %v777
  %1567 = vmatpush1.bf16.msra.mxu0 %v776
  %1568 = vmatprep.subr.bf16.mxu0 %v825
  %1569 = vmatpush1.bf16.msra.mxu0 %v824
  %1570 = vmatprep.subr.bf16.mxu0 %v1109
  %1571 = vmatpush1.bf16.msra.mxu0 %v1106
  %1572 = vmatprep.subr.bf16.mxu0 0
  %1573 = vmatpush1.bf16.msra.mxu0 0
  %1574 = vmatprep.subr.bf16.mxu0 0
  %1575 = vmatpush1.bf16.msra.mxu0 0
  %1576 = vmatprep.subr.bf16.mxu0 0
  %1577 = vmatpush1.bf16.msra.mxu0 0
  %1578 = vmatprep.subr.bf16.mxu0 0
  %1579 = vmatpush1.bf16.msra.mxu0 0
  %1580 = vmatprep.subr.bf16.mxu0 0
  %1581 = vmatpush1.bf16.msra.mxu0 0
  %1582 = vmatprep.subr.bf16.mxu0 0
  %1583 = vmatpush1.bf16.msra.mxu0 0
  %1584 = vmatprep.subr.bf16.mxu0 0
  %1585 = vmatpush1.bf16.msra.mxu0 0
  %1586 = vmatprep.subr.bf16.mxu0 0
  %1587 = vmatpush1.bf16.msra.mxu0 0
  %1588 = vmatprep.subr.bf16.mxu0 0
  %1589 = vmatpush1.bf16.msra.mxu0 0
  %1590 = vmatprep.subr.bf16.mxu0 0
  %1591 = vmatpush1.bf16.msra.mxu0 0
  %1592 = vmatprep.subr.bf16.mxu0 0
  %1593 = vmatpush1.bf16.msra.mxu0 0
  %1594 = vmatprep.subr.bf16.mxu0 0
  %1595 = vmatpush1.bf16.msra.mxu0 0
  %1596 = vmatprep.mubr.bf16.mxu0 0
  %1597 = vmatmul.mubr.bf16.gmra.mrb[0].mxu0 %v1048
  %v1598 = vpop.f32.mrb[0].mxu0
  %v1599 = vadd.f32 %v205, %v1598
  %v1600 = vpop.f32.mrb[0].mxu0
  %v1601 = vadd.f32 %v205, %v1600
  %v1602 = vpop.f32.mrb[0].mxu0
  %v1603 = vpop.f32.mrb[0].mxu0
  %1604 = vdwg.mxu0
  %1605 = vmatprep.subr.bf16.mxu0 %v731
  %1606 = vmatpush1.bf16.msra.mxu0 %v730
  %1607 = vmatprep.subr.bf16.mxu0 %v779
  %1608 = vmatpush1.bf16.msra.mxu0 %v778
  %1609 = vmatprep.subr.bf16.mxu0 %v827
  %1610 = vmatpush1.bf16.msra.mxu0 %v826
  %1611 = vmatprep.subr.bf16.mxu0 %v1115
  %1612 = vmatpush1.bf16.msra.mxu0 %v1112
  %1613 = vmatprep.subr.bf16.mxu0 0
  %1614 = vmatpush1.bf16.msra.mxu0 0
  %1615 = vmatprep.subr.bf16.mxu0 0
  %1616 = vmatpush1.bf16.msra.mxu0 0
  %1617 = vmatprep.subr.bf16.mxu0 0
  %1618 = vmatpush1.bf16.msra.mxu0 0
  %1619 = vmatprep.subr.bf16.mxu0 0
  %1620 = vmatpush1.bf16.msra.mxu0 0
  %1621 = vmatprep.subr.bf16.mxu0 0
  %1622 = vmatpush1.bf16.msra.mxu0 0
  %1623 = vmatprep.subr.bf16.mxu0 0
  %1624 = vmatpush1.bf16.msra.mxu0 0
  %1625 = vmatprep.subr.bf16.mxu0 0
  %1626 = vmatpush1.bf16.msra.mxu0 0
  %1627 = vmatprep.subr.bf16.mxu0 0
  %1628 = vmatpush1.bf16.msra.mxu0 0
  %1629 = vmatprep.subr.bf16.mxu0 0
  %1630 = vmatpush1.bf16.msra.mxu0 0
  %1631 = vmatprep.subr.bf16.mxu0 0
  %1632 = vmatpush1.bf16.msra.mxu0 0
  %1633 = vmatprep.subr.bf16.mxu0 0
  %1634 = vmatpush1.bf16.msra.mxu0 0
  %1635 = vmatprep.subr.bf16.mxu0 0
  %1636 = vmatpush1.bf16.msra.mxu0 0
  %1637 = vmatprep.mubr.bf16.mxu0 0
  %1638 = vmatmul.mubr.bf16.gmra.mrb[0].mxu0 %v1048
  %v1639 = vpop.f32.mrb[0].mxu0
  %v1640 = vadd.f32 %v205, %v1639
  %v1641 = vpop.f32.mrb[0].mxu0
  %v1642 = vadd.f32 %v205, %v1641
  %v1643 = vpop.f32.mrb[0].mxu0
  %v1644 = vpop.f32.mrb[0].mxu0
  %1645 = vdwg.mxu0
  %1646 = vmatprep.subr.bf16.mxu0 %v733
  %1647 = vmatpush1.bf16.msra.mxu0 %v732
  %1648 = vmatprep.subr.bf16.mxu0 %v781
  %1649 = vmatpush1.bf16.msra.mxu0 %v780
  %1650 = vmatprep.subr.bf16.mxu0 %v829
  %1651 = vmatpush1.bf16.msra.mxu0 %v828
  %1652 = vmatprep.subr.bf16.mxu0 %v1121
  %1653 = vmatpush1.bf16.msra.mxu0 %v1118
  %1654 = vmatprep.subr.bf16.mxu0 0
  %1655 = vmatpush1.bf16.msra.mxu0 0
  %1656 = vmatprep.subr.bf16.mxu0 0
  %1657 = vmatpush1.bf16.msra.mxu0 0
  %1658 = vmatprep.subr.bf16.mxu0 0
  %1659 = vmatpush1.bf16.msra.mxu0 0
  %1660 = vmatprep.subr.bf16.mxu0 0
  %1661 = vmatpush1.bf16.msra.mxu0 0
  %1662 = vmatprep.subr.bf16.mxu0 0
  %1663 = vmatpush1.bf16.msra.mxu0 0
  %1664 = vmatprep.subr.bf16.mxu0 0
  %1665 = vmatpush1.bf16.msra.mxu0 0
  %1666 = vmatprep.subr.bf16.mxu0 0
  %1667 = vmatpush1.bf16.msra.mxu0 0
  %1668 = vmatprep.subr.bf16.mxu0 0
  %1669 = vmatpush1.bf16.msra.mxu0 0
  %1670 = vmatprep.subr.bf16.mxu0 0
  %1671 = vmatpush1.bf16.msra.mxu0 0
  %1672 = vmatprep.subr.bf16.mxu0 0
  %1673 = vmatpush1.bf16.msra.mxu0 0
  %1674 = vmatprep.subr.bf16.mxu0 0
  %1675 = vmatpush1.bf16.msra.mxu0 0
  %1676 = vmatprep.subr.bf16.mxu0 0
  %1677 = vmatpush1.bf16.msra.mxu0 0
  %1678 = vmatprep.mubr.bf16.mxu0 0
  %1679 = vmatmul.mubr.bf16.gmra.mrb[0].mxu0 %v1048
  %v1680 = vpop.f32.mrb[0].mxu0
  %v1681 = vadd.f32 %v205, %v1680
  %v1682 = vpop.f32.mrb[0].mxu0
  %v1683 = vadd.f32 %v205, %v1682
  %v1684 = vpop.f32.mrb[0].mxu0
  %v1685 = vpop.f32.mrb[0].mxu0
  %1686 = vdwg.mxu0
  %1687 = vmatprep.subr.bf16.mxu0 %v735
  %1688 = vmatpush1.bf16.msra.mxu0 %v734
  %1689 = vmatprep.subr.bf16.mxu0 %v783
  %1690 = vmatpush1.bf16.msra.mxu0 %v782
  %1691 = vmatprep.subr.bf16.mxu0 %v831
  %1692 = vmatpush1.bf16.msra.mxu0 %v830
  %1693 = vmatprep.subr.bf16.mxu0 %v1127
  %1694 = vmatpush1.bf16.msra.mxu0 %v1124
  %1695 = vmatprep.subr.bf16.mxu0 0
  %1696 = vmatpush1.bf16.msra.mxu0 0
  %1697 = vmatprep.subr.bf16.mxu0 0
  %1698 = vmatpush1.bf16.msra.mxu0 0
  %1699 = vmatprep.subr.bf16.mxu0 0
  %1700 = vmatpush1.bf16.msra.mxu0 0
  %1701 = vmatprep.subr.bf16.mxu0 0
  %1702 = vmatpush1.bf16.msra.mxu0 0
  %1703 = vmatprep.subr.bf16.mxu0 0
  %1704 = vmatpush1.bf16.msra.mxu0 0
  %1705 = vmatprep.subr.bf16.mxu0 0
  %1706 = vmatpush1.bf16.msra.mxu0 0
  %1707 = vmatprep.subr.bf16.mxu0 0
  %1708 = vmatpush1.bf16.msra.mxu0 0
  %1709 = vmatprep.subr.bf16.mxu0 0
  %1710 = vmatpush1.bf16.msra.mxu0 0
  %1711 = vmatprep.subr.bf16.mxu0 0
  %1712 = vmatpush1.bf16.msra.mxu0 0
  %1713 = vmatprep.subr.bf16.mxu0 0
  %1714 = vmatpush1.bf16.msra.mxu0 0
  %1715 = vmatprep.subr.bf16.mxu0 0
  %1716 = vmatpush1.bf16.msra.mxu0 0
  %1717 = vmatprep.subr.bf16.mxu0 0
  %1718 = vmatpush1.bf16.msra.mxu0 0
  %1719 = vmatprep.mubr.bf16.mxu0 0
  %1720 = vmatmul.mubr.bf16.gmra.mrb[0].mxu0 %v1048
  %v1721 = vpop.f32.mrb[0].mxu0
  %v1722 = vadd.f32 %v205, %v1721
  %v1723 = vpop.f32.mrb[0].mxu0
  %v1724 = vadd.f32 %v205, %v1723
  %v1725 = vpop.f32.mrb[0].mxu0
  %v1726 = vpop.f32.mrb[0].mxu0
  %1727 = vdwg.mxu0
  %1728 = vmatprep.subr.bf16.mxu0 %v737
  %1729 = vmatpush1.bf16.msra.mxu0 %v736
  %1730 = vmatprep.subr.bf16.mxu0 %v785
  %1731 = vmatpush1.bf16.msra.mxu0 %v784
  %1732 = vmatprep.subr.bf16.mxu0 %v833
  %1733 = vmatpush1.bf16.msra.mxu0 %v832
  %1734 = vmatprep.subr.bf16.mxu0 %v1133
  %1735 = vmatpush1.bf16.msra.mxu0 %v1130
  %1736 = vmatprep.subr.bf16.mxu0 0
  %1737 = vmatpush1.bf16.msra.mxu0 0
  %1738 = vmatprep.subr.bf16.mxu0 0
  %1739 = vmatpush1.bf16.msra.mxu0 0
  %1740 = vmatprep.subr.bf16.mxu0 0
  %1741 = vmatpush1.bf16.msra.mxu0 0
  %1742 = vmatprep.subr.bf16.mxu0 0
  %1743 = vmatpush1.bf16.msra.mxu0 0
  %1744 = vmatprep.subr.bf16.mxu0 0
  %1745 = vmatpush1.bf16.msra.mxu0 0
  %1746 = vmatprep.subr.bf16.mxu0 0
  %1747 = vmatpush1.bf16.msra.mxu0 0
  %1748 = vmatprep.subr.bf16.mxu0 0
  %1749 = vmatpush1.bf16.msra.mxu0 0
  %1750 = vmatprep.subr.bf16.mxu0 0
  %1751 = vmatpush1.bf16.msra.mxu0 0
  %1752 = vmatprep.subr.bf16.mxu0 0
  %1753 = vmatpush1.bf16.msra.mxu0 0
  %1754 = vmatprep.subr.bf16.mxu0 0
  %1755 = vmatpush1.bf16.msra.mxu0 0
  %1756 = vmatprep.subr.bf16.mxu0 0
  %1757 = vmatpush1.bf16.msra.mxu0 0
  %1758 = vmatprep.subr.bf16.mxu0 0
  %1759 = vmatpush1.bf16.msra.mxu0 0
  %1760 = vmatprep.mubr.bf16.mxu0 0
  %1761 = vmatmul.mubr.bf16.gmra.mrb[0].mxu0 %v1048
  %v1762 = vpop.f32.mrb[0].mxu0
  %v1763 = vadd.f32 %v205, %v1762
  %v1764 = vpop.f32.mrb[0].mxu0
  %v1765 = vadd.f32 %v205, %v1764
  %v1766 = vpop.f32.mrb[0].mxu0
  %v1767 = vpop.f32.mrb[0].mxu0
  %1768 = vdwg.mxu0
  %1769 = vmatprep.subr.bf16.mxu0 %v739
  %1770 = vmatpush1.bf16.msra.mxu0 %v738
  %1771 = vmatprep.subr.bf16.mxu0 %v787
  %1772 = vmatpush1.bf16.msra.mxu0 %v786
  %1773 = vmatprep.subr.bf16.mxu0 %v835
  %1774 = vmatpush1.bf16.msra.mxu0 %v834
  %1775 = vmatprep.subr.bf16.mxu0 %v1139
  %1776 = vmatpush1.bf16.msra.mxu0 %v1136
  %1777 = vmatprep.subr.bf16.mxu0 0
  %1778 = vmatpush1.bf16.msra.mxu0 0
  %1779 = vmatprep.subr.bf16.mxu0 0
  %1780 = vmatpush1.bf16.msra.mxu0 0
  %1781 = vmatprep.subr.bf16.mxu0 0
  %1782 = vmatpush1.bf16.msra.mxu0 0
  %1783 = vmatprep.subr.bf16.mxu0 0
  %1784 = vmatpush1.bf16.msra.mxu0 0
  %1785 = vmatprep.subr.bf16.mxu0 0
  %1786 = vmatpush1.bf16.msra.mxu0 0
  %1787 = vmatprep.subr.bf16.mxu0 0
  %1788 = vmatpush1.bf16.msra.mxu0 0
  %1789 = vmatprep.subr.bf16.mxu0 0
  %1790 = vmatpush1.bf16.msra.mxu0 0
  %1791 = vmatprep.subr.bf16.mxu0 0
  %1792 = vmatpush1.bf16.msra.mxu0 0
  %1793 = vmatprep.subr.bf16.mxu0 0
  %1794 = vmatpush1.bf16.msra.mxu0 0
  %1795 = vmatprep.subr.bf16.mxu0 0
  %1796 = vmatpush1.bf16.msra.mxu0 0
  %1797 = vmatprep.subr.bf16.mxu0 0
  %1798 = vmatpush1.bf16.msra.mxu0 0
  %1799 = vmatprep.subr.bf16.mxu0 0
  %1800 = vmatpush1.bf16.msra.mxu0 0
  %1801 = vmatprep.mubr.bf16.mxu0 0
  %1802 = vmatmul.mubr.bf16.gmra.mrb[0].mxu0 %v1048
  %v1803 = vpop.f32.mrb[0].mxu0
  %v1804 = vadd.f32 %v205, %v1803
  %v1805 = vpop.f32.mrb[0].mxu0
  %v1806 = vadd.f32 %v205, %v1805
  %v1807 = vpop.f32.mrb[0].mxu0
  %v1808 = vpop.f32.mrb[0].mxu0
  %1809 = vdwg.mxu0
  %1810 = vmatprep.subr.bf16.mxu0 %v741
  %1811 = vmatpush1.bf16.msra.mxu0 %v740
  %1812 = vmatprep.subr.bf16.mxu0 %v789
  %1813 = vmatpush1.bf16.msra.mxu0 %v788
  %1814 = vmatprep.subr.bf16.mxu0 %v837
  %1815 = vmatpush1.bf16.msra.mxu0 %v836
  %1816 = vmatprep.subr.bf16.mxu0 %v1145
  %1817 = vmatpush1.bf16.msra.mxu0 %v1142
  %1818 = vmatprep.subr.bf16.mxu0 0
  %1819 = vmatpush1.bf16.msra.mxu0 0
  %1820 = vmatprep.subr.bf16.mxu0 0
  %1821 = vmatpush1.bf16.msra.mxu0 0
  %1822 = vmatprep.subr.bf16.mxu0 0
  %1823 = vmatpush1.bf16.msra.mxu0 0
  %1824 = vmatprep.subr.bf16.mxu0 0
  %1825 = vmatpush1.bf16.msra.mxu0 0
  %1826 = vmatprep.subr.bf16.mxu0 0
  %1827 = vmatpush1.bf16.msra.mxu0 0
  %1828 = vmatprep.subr.bf16.mxu0 0
  %1829 = vmatpush1.bf16.msra.mxu0 0
  %1830 = vmatprep.subr.bf16.mxu0 0
  %1831 = vmatpush1.bf16.msra.mxu0 0
  %1832 = vmatprep.subr.bf16.mxu0 0
  %1833 = vmatpush1.bf16.msra.mxu0 0
  %1834 = vmatprep.subr.bf16.mxu0 0
  %1835 = vmatpush1.bf16.msra.mxu0 0
  %1836 = vmatprep.subr.bf16.mxu0 0
  %1837 = vmatpush1.bf16.msra.mxu0 0
  %1838 = vmatprep.subr.bf16.mxu0 0
  %1839 = vmatpush1.bf16.msra.mxu0 0
  %1840 = vmatprep.subr.bf16.mxu0 0
  %1841 = vmatpush1.bf16.msra.mxu0 0
  %1842 = vmatprep.mubr.bf16.mxu0 0
  %1843 = vmatmul.mubr.bf16.gmra.mrb[0].mxu0 %v1048
  %v1844 = vpop.f32.mrb[0].mxu0
  %v1845 = vadd.f32 %v205, %v1844
  %v1846 = vpop.f32.mrb[0].mxu0
  %v1847 = vadd.f32 %v205, %v1846
  %v1848 = vpop.f32.mrb[0].mxu0
  %v1849 = vpop.f32.mrb[0].mxu0
  %1850 = vdwg.mxu0
  %1851 = vmatprep.subr.bf16.mxu0 %v743
  %1852 = vmatpush1.bf16.msra.mxu0 %v742
  %1853 = vmatprep.subr.bf16.mxu0 %v791
  %1854 = vmatpush1.bf16.msra.mxu0 %v790
  %1855 = vmatprep.subr.bf16.mxu0 %v839
  %1856 = vmatpush1.bf16.msra.mxu0 %v838
  %1857 = vmatprep.subr.bf16.mxu0 %v1151
  %1858 = vmatpush1.bf16.msra.mxu0 %v1148
  %1859 = vmatprep.subr.bf16.mxu0 0
  %1860 = vmatpush1.bf16.msra.mxu0 0
  %1861 = vmatprep.subr.bf16.mxu0 0
  %1862 = vmatpush1.bf16.msra.mxu0 0
  %1863 = vmatprep.subr.bf16.mxu0 0
  %1864 = vmatpush1.bf16.msra.mxu0 0
  %1865 = vmatprep.subr.bf16.mxu0 0
  %1866 = vmatpush1.bf16.msra.mxu0 0
  %1867 = vmatprep.subr.bf16.mxu0 0
  %1868 = vmatpush1.bf16.msra.mxu0 0
  %1869 = vmatprep.subr.bf16.mxu0 0
  %1870 = vmatpush1.bf16.msra.mxu0 0
  %1871 = vmatprep.subr.bf16.mxu0 0
  %1872 = vmatpush1.bf16.msra.mxu0 0
  %1873 = vmatprep.subr.bf16.mxu0 0
  %1874 = vmatpush1.bf16.msra.mxu0 0
  %1875 = vmatprep.subr.bf16.mxu0 0
  %1876 = vmatpush1.bf16.msra.mxu0 0
  %1877 = vmatprep.subr.bf16.mxu0 0
  %1878 = vmatpush1.bf16.msra.mxu0 0
  %1879 = vmatprep.subr.bf16.mxu0 0
  %1880 = vmatpush1.bf16.msra.mxu0 0
  %1881 = vmatprep.subr.bf16.mxu0 0
  %1882 = vmatpush1.bf16.msra.mxu0 0
  %1883 = vmatprep.mubr.bf16.mxu0 0
  %1884 = vmatmul.mubr.bf16.gmra.mrb[0].mxu0 %v1048
  %v1885 = vpop.f32.mrb[0].mxu0
  %v1886 = vadd.f32 %v205, %v1885
  %v1887 = vpop.f32.mrb[0].mxu0
  %v1888 = vadd.f32 %v205, %v1887
  %v1889 = vpop.f32.mrb[0].mxu0
  %v1890 = vpop.f32.mrb[0].mxu0
  %1891 = vdwg.mxu0
  %1892 = vmatprep.subr.bf16.mxu0 %v745
  %1893 = vmatpush1.bf16.msra.mxu0 %v744
  %1894 = vmatprep.subr.bf16.mxu0 %v793
  %1895 = vmatpush1.bf16.msra.mxu0 %v792
  %1896 = vmatprep.subr.bf16.mxu0 %v841
  %1897 = vmatpush1.bf16.msra.mxu0 %v840
  %1898 = vmatprep.subr.bf16.mxu0 %v1157
  %1899 = vmatpush1.bf16.msra.mxu0 %v1154
  %1900 = vmatprep.subr.bf16.mxu0 0
  %1901 = vmatpush1.bf16.msra.mxu0 0
  %1902 = vmatprep.subr.bf16.mxu0 0
  %1903 = vmatpush1.bf16.msra.mxu0 0
  %1904 = vmatprep.subr.bf16.mxu0 0
  %1905 = vmatpush1.bf16.msra.mxu0 0
  %1906 = vmatprep.subr.bf16.mxu0 0
  %1907 = vmatpush1.bf16.msra.mxu0 0
  %1908 = vmatprep.subr.bf16.mxu0 0
  %1909 = vmatpush1.bf16.msra.mxu0 0
  %1910 = vmatprep.subr.bf16.mxu0 0
  %1911 = vmatpush1.bf16.msra.mxu0 0
  %1912 = vmatprep.subr.bf16.mxu0 0
  %1913 = vmatpush1.bf16.msra.mxu0 0
  %1914 = vmatprep.subr.bf16.mxu0 0
  %1915 = vmatpush1.bf16.msra.mxu0 0
  %1916 = vmatprep.subr.bf16.mxu0 0
  %1917 = vmatpush1.bf16.msra.mxu0 0
  %1918 = vmatprep.subr.bf16.mxu0 0
  %1919 = vmatpush1.bf16.msra.mxu0 0
  %1920 = vmatprep.subr.bf16.mxu0 0
  %1921 = vmatpush1.bf16.msra.mxu0 0
  %1922 = vmatprep.subr.bf16.mxu0 0
  %1923 = vmatpush1.bf16.msra.mxu0 0
  %1924 = vmatprep.mubr.bf16.mxu0 0
  %1925 = vmatmul.mubr.bf16.gmra.mrb[0].mxu0 %v1048
  %v1926 = vpop.f32.mrb[0].mxu0
  %v1927 = vadd.f32 %v205, %v1926
  %v1928 = vpop.f32.mrb[0].mxu0
  %v1929 = vadd.f32 %v205, %v1928
  %v1930 = vpop.f32.mrb[0].mxu0
  %v1931 = vpop.f32.mrb[0].mxu0
  %1932 = vdwg.mxu0
  %1933 = vmatprep.subr.bf16.mxu0 %v747
  %1934 = vmatpush1.bf16.msra.mxu0 %v746
  %1935 = vmatprep.subr.bf16.mxu0 %v795
  %1936 = vmatpush1.bf16.msra.mxu0 %v794
  %1937 = vmatprep.subr.bf16.mxu0 %v843
  %1938 = vmatpush1.bf16.msra.mxu0 %v842
  %1939 = vmatprep.subr.bf16.mxu0 %v1163
  %1940 = vmatpush1.bf16.msra.mxu0 %v1160
  %1941 = vmatprep.subr.bf16.mxu0 0
  %1942 = vmatpush1.bf16.msra.mxu0 0
  %1943 = vmatprep.subr.bf16.mxu0 0
  %1944 = vmatpush1.bf16.msra.mxu0 0
  %1945 = vmatprep.subr.bf16.mxu0 0
  %1946 = vmatpush1.bf16.msra.mxu0 0
  %1947 = vmatprep.subr.bf16.mxu0 0
  %1948 = vmatpush1.bf16.msra.mxu0 0
  %1949 = vmatprep.subr.bf16.mxu0 0
  %1950 = vmatpush1.bf16.msra.mxu0 0
  %1951 = vmatprep.subr.bf16.mxu0 0
  %1952 = vmatpush1.bf16.msra.mxu0 0
  %1953 = vmatprep.subr.bf16.mxu0 0
  %1954 = vmatpush1.bf16.msra.mxu0 0
  %1955 = vmatprep.subr.bf16.mxu0 0
  %1956 = vmatpush1.bf16.msra.mxu0 0
  %1957 = vmatprep.subr.bf16.mxu0 0
  %1958 = vmatpush1.bf16.msra.mxu0 0
  %1959 = vmatprep.subr.bf16.mxu0 0
  %1960 = vmatpush1.bf16.msra.mxu0 0
  %1961 = vmatprep.subr.bf16.mxu0 0
  %1962 = vmatpush1.bf16.msra.mxu0 0
  %1963 = vmatprep.subr.bf16.mxu0 0
  %1964 = vmatpush1.bf16.msra.mxu0 0
  %1965 = vmatprep.mubr.bf16.mxu0 0
  %1966 = vmatmul.mubr.bf16.gmra.mrb[0].mxu0 %v1048
  %v1967 = vpop.f32.mrb[0].mxu0
  %v1968 = vadd.f32 %v205, %v1967
  %v1969 = vpop.f32.mrb[0].mxu0
  %v1970 = vadd.f32 %v205, %v1969
  %v1971 = vpop.f32.mrb[0].mxu0
  %v1972 = vpop.f32.mrb[0].mxu0
  %1973 = vdwg.mxu0
  %1974 = vmatprep.subr.bf16.mxu0 %v749
  %1975 = vmatpush1.bf16.msra.mxu0 %v748
  %1976 = vmatprep.subr.bf16.mxu0 %v797
  %1977 = vmatpush1.bf16.msra.mxu0 %v796
  %1978 = vmatprep.subr.bf16.mxu0 %v845
  %1979 = vmatpush1.bf16.msra.mxu0 %v844
  %1980 = vmatprep.subr.bf16.mxu0 %v1169
  %1981 = vmatpush1.bf16.msra.mxu0 %v1166
  %1982 = vmatprep.subr.bf16.mxu0 0
  %1983 = vmatpush1.bf16.msra.mxu0 0
  %1984 = vmatprep.subr.bf16.mxu0 0
  %1985 = vmatpush1.bf16.msra.mxu0 0
  %1986 = vmatprep.subr.bf16.mxu0 0
  %1987 = vmatpush1.bf16.msra.mxu0 0
  %1988 = vmatprep.subr.bf16.mxu0 0
  %1989 = vmatpush1.bf16.msra.mxu0 0
  %1990 = vmatprep.subr.bf16.mxu0 0
  %1991 = vmatpush1.bf16.msra.mxu0 0
  %1992 = vmatprep.subr.bf16.mxu0 0
  %1993 = vmatpush1.bf16.msra.mxu0 0
  %1994 = vmatprep.subr.bf16.mxu0 0
  %1995 = vmatpush1.bf16.msra.mxu0 0
  %1996 = vmatprep.subr.bf16.mxu0 0
  %1997 = vmatpush1.bf16.msra.mxu0 0
  %1998 = vmatprep.subr.bf16.mxu0 0
  %1999 = vmatpush1.bf16.msra.mxu0 0
  %2000 = vmatprep.subr.bf16.mxu0 0
  %2001 = vmatpush1.bf16.msra.mxu0 0
  %2002 = vmatprep.subr.bf16.mxu0 0
  %2003 = vmatpush1.bf16.msra.mxu0 0
  %2004 = vmatprep.subr.bf16.mxu0 0
  %2005 = vmatpush1.bf16.msra.mxu0 0
  %2006 = vmatprep.mubr.bf16.mxu0 0
  %2007 = vmatmul.mubr.bf16.gmra.mrb[0].mxu0 %v1048
  %v2008 = vpop.f32.mrb[0].mxu0
  %v2009 = vadd.f32 %v205, %v2008
  %v2010 = vpop.f32.mrb[0].mxu0
  %v2011 = vadd.f32 %v205, %v2010
  %v2012 = vpop.f32.mrb[0].mxu0
  %v2013 = vpop.f32.mrb[0].mxu0
  %2014 = vdwg.mxu0
  %2015 = vmatprep.subr.bf16.mxu0 %v751
  %2016 = vmatpush1.bf16.msra.mxu0 %v750
  %2017 = vmatprep.subr.bf16.mxu0 %v799
  %2018 = vmatpush1.bf16.msra.mxu0 %v798
  %2019 = vmatprep.subr.bf16.mxu0 %v847
  %2020 = vmatpush1.bf16.msra.mxu0 %v846
  %2021 = vmatprep.subr.bf16.mxu0 %v1175
  %2022 = vmatpush1.bf16.msra.mxu0 %v1172
  %2023 = vmatprep.subr.bf16.mxu0 0
  %2024 = vmatpush1.bf16.msra.mxu0 0
  %2025 = vmatprep.subr.bf16.mxu0 0
  %2026 = vmatpush1.bf16.msra.mxu0 0
  %2027 = vmatprep.subr.bf16.mxu0 0
  %2028 = vmatpush1.bf16.msra.mxu0 0
  %2029 = vmatprep.subr.bf16.mxu0 0
  %2030 = vmatpush1.bf16.msra.mxu0 0
  %2031 = vmatprep.subr.bf16.mxu0 0
  %2032 = vmatpush1.bf16.msra.mxu0 0
  %2033 = vmatprep.subr.bf16.mxu0 0
  %2034 = vmatpush1.bf16.msra.mxu0 0
  %2035 = vmatprep.subr.bf16.mxu0 0
  %2036 = vmatpush1.bf16.msra.mxu0 0
  %2037 = vmatprep.subr.bf16.mxu0 0
  %2038 = vmatpush1.bf16.msra.mxu0 0
  %2039 = vmatprep.subr.bf16.mxu0 0
  %2040 = vmatpush1.bf16.msra.mxu0 0
  %2041 = vmatprep.subr.bf16.mxu0 0
  %2042 = vmatpush1.bf16.msra.mxu0 0
  %2043 = vmatprep.subr.bf16.mxu0 0
  %2044 = vmatpush1.bf16.msra.mxu0 0
  %2045 = vmatprep.subr.bf16.mxu0 0
  %2046 = vmatpush1.bf16.msra.mxu0 0
  %2047 = vmatprep.mubr.bf16.mxu0 0
  %2048 = vmatmul.mubr.bf16.gmra.mrb[0].mxu0 %v1048
  %v2049 = vpop.f32.mrb[0].mxu0
  %v2050 = vadd.f32 %v205, %v2049
  %v2051 = vpop.f32.mrb[0].mxu0
  %v2052 = vadd.f32 %v205, %v2051
  %v2053 = vpop.f32.mrb[0].mxu0
  %v2054 = vpop.f32.mrb[0].mxu0
  %2055 = vdwg.mxu0
  %2056 = vmatprep.subr.bf16.mxu0 %v753
  %2057 = vmatpush1.bf16.msra.mxu0 %v752
  %2058 = vmatprep.subr.bf16.mxu0 %v801
  %2059 = vmatpush1.bf16.msra.mxu0 %v800
  %2060 = vmatprep.subr.bf16.mxu0 %v849
  %2061 = vmatpush1.bf16.msra.mxu0 %v848
  %2062 = vmatprep.subr.bf16.mxu0 %v1181
  %2063 = vmatpush1.bf16.msra.mxu0 %v1178
  %2064 = vmatprep.subr.bf16.mxu0 0
  %2065 = vmatpush1.bf16.msra.mxu0 0
  %2066 = vmatprep.subr.bf16.mxu0 0
  %2067 = vmatpush1.bf16.msra.mxu0 0
  %2068 = vmatprep.subr.bf16.mxu0 0
  %2069 = vmatpush1.bf16.msra.mxu0 0
  %2070 = vmatprep.subr.bf16.mxu0 0
  %2071 = vmatpush1.bf16.msra.mxu0 0
  %2072 = vmatprep.subr.bf16.mxu0 0
  %2073 = vmatpush1.bf16.msra.mxu0 0
  %2074 = vmatprep.subr.bf16.mxu0 0
  %2075 = vmatpush1.bf16.msra.mxu0 0
  %2076 = vmatprep.subr.bf16.mxu0 0
  %2077 = vmatpush1.bf16.msra.mxu0 0
  %2078 = vmatprep.subr.bf16.mxu0 0
  %2079 = vmatpush1.bf16.msra.mxu0 0
  %2080 = vmatprep.subr.bf16.mxu0 0
  %2081 = vmatpush1.bf16.msra.mxu0 0
  %2082 = vmatprep.subr.bf16.mxu0 0
  %2083 = vmatpush1.bf16.msra.mxu0 0
  %2084 = vmatprep.subr.bf16.mxu0 0
  %2085 = vmatpush1.bf16.msra.mxu0 0
  %2086 = vmatprep.subr.bf16.mxu0 0
  %2087 = vmatpush1.bf16.msra.mxu0 0
  %2088 = vmatprep.mubr.bf16.mxu0 0
  %2089 = vmatmul.mubr.bf16.gmra.mrb[0].mxu0 %v1048
  %v2090 = vpop.f32.mrb[0].mxu0
  %v2091 = vadd.f32 %v205, %v2090
  %v2092 = vpop.f32.mrb[0].mxu0
  %v2093 = vadd.f32 %v205, %v2092
  %v2094 = vpop.f32.mrb[0].mxu0
  %v2095 = vpop.f32.mrb[0].mxu0
  %2096 = vdwg.mxu0
  %2097 = vmatprep.subr.bf16.mxu0 %v755
  %2098 = vmatpush1.bf16.msra.mxu0 %v754
  %2099 = vmatprep.subr.bf16.mxu0 %v803
  %2100 = vmatpush1.bf16.msra.mxu0 %v802
  %2101 = vmatprep.subr.bf16.mxu0 %v851
  %2102 = vmatpush1.bf16.msra.mxu0 %v850
  %2103 = vmatprep.subr.bf16.mxu0 %v1187
  %2104 = vmatpush1.bf16.msra.mxu0 %v1184
  %2105 = vmatprep.subr.bf16.mxu0 0
  %2106 = vmatpush1.bf16.msra.mxu0 0
  %2107 = vmatprep.subr.bf16.mxu0 0
  %2108 = vmatpush1.bf16.msra.mxu0 0
  %2109 = vmatprep.subr.bf16.mxu0 0
  %2110 = vmatpush1.bf16.msra.mxu0 0
  %2111 = vmatprep.subr.bf16.mxu0 0
  %2112 = vmatpush1.bf16.msra.mxu0 0
  %2113 = vmatprep.subr.bf16.mxu0 0
  %2114 = vmatpush1.bf16.msra.mxu0 0
  %2115 = vmatprep.subr.bf16.mxu0 0
  %2116 = vmatpush1.bf16.msra.mxu0 0
  %2117 = vmatprep.subr.bf16.mxu0 0
  %2118 = vmatpush1.bf16.msra.mxu0 0
  %2119 = vmatprep.subr.bf16.mxu0 0
  %2120 = vmatpush1.bf16.msra.mxu0 0
  %2121 = vmatprep.subr.bf16.mxu0 0
  %2122 = vmatpush1.bf16.msra.mxu0 0
  %2123 = vmatprep.subr.bf16.mxu0 0
  %2124 = vmatpush1.bf16.msra.mxu0 0
  %2125 = vmatprep.subr.bf16.mxu0 0
  %2126 = vmatpush1.bf16.msra.mxu0 0
  %2127 = vmatprep.subr.bf16.mxu0 0
  %2128 = vmatpush1.bf16.msra.mxu0 0
  %2129 = vmatprep.mubr.bf16.mxu0 0
  %2130 = vmatmul.mubr.bf16.gmra.mrb[0].mxu0 %v1048
  %v2131 = vpop.f32.mrb[0].mxu0
  %v2132 = vadd.f32 %v205, %v2131
  %v2133 = vpop.f32.mrb[0].mxu0
  %v2134 = vadd.f32 %v205, %v2133
  %v2135 = vpop.f32.mrb[0].mxu0
  %v2136 = vpop.f32.mrb[0].mxu0
  %2137 = vdwg.mxu0
  %2138 = vmatprep.subr.bf16.mxu0 %v757
  %2139 = vmatpush1.bf16.msra.mxu0 %v756
  %2140 = vmatprep.subr.bf16.mxu0 %v805
  %2141 = vmatpush1.bf16.msra.mxu0 %v804
  %2142 = vmatprep.subr.bf16.mxu0 %v853
  %2143 = vmatpush1.bf16.msra.mxu0 %v852
  %2144 = vmatprep.subr.bf16.mxu0 %v1193
  %2145 = vmatpush1.bf16.msra.mxu0 %v1190
  %2146 = vmatprep.subr.bf16.mxu0 0
  %2147 = vmatpush1.bf16.msra.mxu0 0
  %2148 = vmatprep.subr.bf16.mxu0 0
  %2149 = vmatpush1.bf16.msra.mxu0 0
  %2150 = vmatprep.subr.bf16.mxu0 0
  %2151 = vmatpush1.bf16.msra.mxu0 0
  %2152 = vmatprep.subr.bf16.mxu0 0
  %2153 = vmatpush1.bf16.msra.mxu0 0
  %2154 = vmatprep.subr.bf16.mxu0 0
  %2155 = vmatpush1.bf16.msra.mxu0 0
  %2156 = vmatprep.subr.bf16.mxu0 0
  %2157 = vmatpush1.bf16.msra.mxu0 0
  %2158 = vmatprep.subr.bf16.mxu0 0
  %2159 = vmatpush1.bf16.msra.mxu0 0
  %2160 = vmatprep.subr.bf16.mxu0 0
  %2161 = vmatpush1.bf16.msra.mxu0 0
  %2162 = vmatprep.subr.bf16.mxu0 0
  %2163 = vmatpush1.bf16.msra.mxu0 0
  %2164 = vmatprep.subr.bf16.mxu0 0
  %2165 = vmatpush1.bf16.msra.mxu0 0
  %2166 = vmatprep.subr.bf16.mxu0 0
  %2167 = vmatpush1.bf16.msra.mxu0 0
  %2168 = vmatprep.subr.bf16.mxu0 0
  %2169 = vmatpush1.bf16.msra.mxu0 0
  %2170 = vmatprep.mubr.bf16.mxu0 0
  %2171 = vmatmul.mubr.bf16.gmra.mrb[0].mxu0 %v1048
  %v2172 = vpop.f32.mrb[0].mxu0
  %v2173 = vadd.f32 %v205, %v2172
  %v2174 = vpop.f32.mrb[0].mxu0
  %v2175 = vadd.f32 %v205, %v2174
  %v2176 = vpop.f32.mrb[0].mxu0
  %v2177 = vpop.f32.mrb[0].mxu0
  %2178 = vdwg.mxu0
  %vm2179 = vcmask 1040384
  %v2180 = vsel %vm2179, %v1230, 0.0
  %v2181 = vsel %vm2179, %v1232, 0.0
  %v2182 = vadd.f32 %v2180, %v2181
  %v2183 = vsel %vm2179, %v1271, 0.0
  %v2184 = vadd.f32 %v2182, %v2183
  %v2185 = vsel %vm2179, %v1273, 0.0
  %v2186 = vadd.f32 %v2184, %v2185
  %v2187 = vsel %vm2179, %v1312, 0.0
  %v2188 = vadd.f32 %v2186, %v2187
  %v2189 = vsel %vm2179, %v1314, 0.0
  %v2190 = vadd.f32 %v2188, %v2189
  %v2191 = vsel %vm2179, %v1353, 0.0
  %v2192 = vadd.f32 %v2190, %v2191
  %v2193 = vsel %vm2179, %v1355, 0.0
  %v2194 = vadd.f32 %v2192, %v2193
  %v2195 = vsel %vm2179, %v1394, 0.0
  %v2196 = vadd.f32 %v2194, %v2195
  %v2197 = vsel %vm2179, %v1396, 0.0
  %v2198 = vadd.f32 %v2196, %v2197
  %v2199 = vsel %vm2179, %v1435, 0.0
  %v2200 = vadd.f32 %v2198, %v2199
  %v2201 = vsel %vm2179, %v1437, 0.0
  %v2202 = vadd.f32 %v2200, %v2201
  %v2203 = vsel %vm2179, %v1476, 0.0
  %v2204 = vadd.f32 %v2202, %v2203
  %v2205 = vsel %vm2179, %v1478, 0.0
  %v2206 = vadd.f32 %v2204, %v2205
  %v2207 = vsel %vm2179, %v1517, 0.0
  %v2208 = vadd.f32 %v2206, %v2207
  %v2209 = vsel %vm2179, %v1519, 0.0
  %v2210 = vadd.f32 %v2208, %v2209
  %v2211 = vsel %vm2179, %v1558, 0.0
  %v2212 = vadd.f32 %v2210, %v2211
  %v2213 = vsel %vm2179, %v1560, 0.0
  %v2214 = vadd.f32 %v2212, %v2213
  %v2215 = vsel %vm2179, %v1599, 0.0
  %v2216 = vadd.f32 %v2214, %v2215
  %v2217 = vsel %vm2179, %v1601, 0.0
  %v2218 = vadd.f32 %v2216, %v2217
  %v2219 = vsel %vm2179, %v1640, 0.0
  %v2220 = vadd.f32 %v2218, %v2219
  %v2221 = vsel %vm2179, %v1642, 0.0
  %v2222 = vadd.f32 %v2220, %v2221
  %v2223 = vsel %vm2179, %v1681, 0.0
  %v2224 = vadd.f32 %v2222, %v2223
  %v2225 = vsel %vm2179, %v1683, 0.0
  %v2226 = vadd.f32 %v2224, %v2225
  %v2227 = vsel %vm2179, %v1722, 0.0
  %v2228 = vadd.f32 %v2226, %v2227
  %v2229 = vsel %vm2179, %v1724, 0.0
  %v2230 = vadd.f32 %v2228, %v2229
  %v2231 = vsel %vm2179, %v1763, 0.0
  %v2232 = vadd.f32 %v2230, %v2231
  %v2233 = vsel %vm2179, %v1765, 0.0
  %v2234 = vadd.f32 %v2232, %v2233
  %v2235 = vsel %vm2179, %v1804, 0.0
  %v2236 = vadd.f32 %v2234, %v2235
  %v2237 = vsel %vm2179, %v1806, 0.0
  %v2238 = vadd.f32 %v2236, %v2237
  %v2239 = vsel %vm2179, %v1845, 0.0
  %v2240 = vadd.f32 %v2238, %v2239
  %v2241 = vsel %vm2179, %v1847, 0.0
  %v2242 = vadd.f32 %v2240, %v2241
  %v2243 = vsel %vm2179, %v1886, 0.0
  %v2244 = vadd.f32 %v2242, %v2243
  %v2245 = vsel %vm2179, %v1888, 0.0
  %v2246 = vadd.f32 %v2244, %v2245
  %v2247 = vsel %vm2179, %v1927, 0.0
  %v2248 = vadd.f32 %v2246, %v2247
  %v2249 = vsel %vm2179, %v1929, 0.0
  %v2250 = vadd.f32 %v2248, %v2249
  %v2251 = vsel %vm2179, %v1968, 0.0
  %v2252 = vadd.f32 %v2250, %v2251
  %v2253 = vsel %vm2179, %v1970, 0.0
  %v2254 = vadd.f32 %v2252, %v2253
  %v2255 = vsel %vm2179, %v2009, 0.0
  %v2256 = vadd.f32 %v2254, %v2255
  %v2257 = vsel %vm2179, %v2011, 0.0
  %v2258 = vadd.f32 %v2256, %v2257
  %v2259 = vsel %vm2179, %v2050, 0.0
  %v2260 = vadd.f32 %v2258, %v2259
  %v2261 = vsel %vm2179, %v2052, 0.0
  %v2262 = vadd.f32 %v2260, %v2261
  %v2263 = vsel %vm2179, %v2091, 0.0
  %v2264 = vadd.f32 %v2262, %v2263
  %v2265 = vsel %vm2179, %v2093, 0.0
  %v2266 = vadd.f32 %v2264, %v2265
  %v2267 = vsel %vm2179, %v2132, 0.0
  %v2268 = vadd.f32 %v2266, %v2267
  %v2269 = vsel %vm2179, %v2134, 0.0
  %v2270 = vadd.f32 %v2268, %v2269
  %v2271 = vsel %vm2179, %v2173, 0.0
  %v2272 = vadd.f32 %v2270, %v2271
  %v2273 = vsel %vm2179, %v2175, 0.0
  %v2274 = vadd.f32 %v2272, %v2273
  %2275 = vadd.xlane.f32.xlu0 %v2274
  %v2276 = vpop.xlane.xlu0 %2275
  %v2277 = vrcp.pop 6144.0
  %v2278 = vmul.f32 %v2276, %v2277
  %v2279 = vsub.f32 %v1230, %v2278
  %v2280 = vsub.f32 %v1232, %v2278
  %v2281 = vsub.f32 %v1271, %v2278
  %v2282 = vsub.f32 %v1273, %v2278
  %v2283 = vsub.f32 %v1312, %v2278
  %v2284 = vsub.f32 %v1314, %v2278
  %v2285 = vsub.f32 %v1353, %v2278
  %v2286 = vsub.f32 %v1355, %v2278
  %v2287 = vsub.f32 %v1394, %v2278
  %v2288 = vsub.f32 %v1396, %v2278
  %v2289 = vsub.f32 %v1435, %v2278
  %v2290 = vsub.f32 %v1437, %v2278
  %v2291 = vsub.f32 %v1476, %v2278
  %v2292 = vsub.f32 %v1478, %v2278
  %v2293 = vsub.f32 %v1517, %v2278
  %v2294 = vsub.f32 %v1519, %v2278
  %v2295 = vsub.f32 %v1558, %v2278
  %v2296 = vsub.f32 %v1560, %v2278
  %v2297 = vsub.f32 %v1599, %v2278
  %v2298 = vsub.f32 %v1601, %v2278
  %v2299 = vsub.f32 %v1640, %v2278
  %v2300 = vsub.f32 %v1642, %v2278
  %v2301 = vsub.f32 %v1681, %v2278
  %v2302 = vsub.f32 %v1683, %v2278
  %v2303 = vsub.f32 %v1722, %v2278
  %v2304 = vsub.f32 %v1724, %v2278
  %v2305 = vsub.f32 %v1763, %v2278
  %v2306 = vsub.f32 %v1765, %v2278
  %v2307 = vsub.f32 %v1804, %v2278
  %v2308 = vsub.f32 %v1806, %v2278
  %v2309 = vsub.f32 %v1845, %v2278
  %v2310 = vsub.f32 %v1847, %v2278
  %v2311 = vsub.f32 %v1886, %v2278
  %v2312 = vsub.f32 %v1888, %v2278
  %v2313 = vsub.f32 %v1927, %v2278
  %v2314 = vsub.f32 %v1929, %v2278
  %v2315 = vsub.f32 %v1968, %v2278
  %v2316 = vsub.f32 %v1970, %v2278
  %v2317 = vsub.f32 %v2009, %v2278
  %v2318 = vsub.f32 %v2011, %v2278
  %v2319 = vsub.f32 %v2050, %v2278
  %v2320 = vsub.f32 %v2052, %v2278
  %v2321 = vsub.f32 %v2091, %v2278
  %v2322 = vsub.f32 %v2093, %v2278
  %v2323 = vsub.f32 %v2132, %v2278
  %v2324 = vsub.f32 %v2134, %v2278
  %v2325 = vsub.f32 %v2173, %v2278
  %v2326 = vsub.f32 %v2175, %v2278
  %v2327 = vmul.f32 %v2279, %v2279
  %v2328 = vmul.f32 %v2280, %v2280
  %v2329 = vmul.f32 %v2281, %v2281
  %v2330 = vmul.f32 %v2282, %v2282
  %v2331 = vmul.f32 %v2283, %v2283
  %v2332 = vmul.f32 %v2284, %v2284
  %v2333 = vmul.f32 %v2285, %v2285
  %v2334 = vmul.f32 %v2286, %v2286
  %v2335 = vmul.f32 %v2287, %v2287
  %v2336 = vmul.f32 %v2288, %v2288
  %v2337 = vmul.f32 %v2289, %v2289
  %v2338 = vmul.f32 %v2290, %v2290
  %v2339 = vmul.f32 %v2291, %v2291
  %v2340 = vmul.f32 %v2292, %v2292
  %v2341 = vmul.f32 %v2293, %v2293
  %v2342 = vmul.f32 %v2294, %v2294
  %v2343 = vmul.f32 %v2295, %v2295
  %v2344 = vmul.f32 %v2296, %v2296
  %v2345 = vmul.f32 %v2297, %v2297
  %v2346 = vmul.f32 %v2298, %v2298
  %v2347 = vmul.f32 %v2299, %v2299
  %v2348 = vmul.f32 %v2300, %v2300
  %v2349 = vmul.f32 %v2301, %v2301
  %v2350 = vmul.f32 %v2302, %v2302
  %v2351 = vmul.f32 %v2303, %v2303
  %v2352 = vmul.f32 %v2304, %v2304
  %v2353 = vmul.f32 %v2305, %v2305
  %v2354 = vmul.f32 %v2306, %v2306
  %v2355 = vmul.f32 %v2307, %v2307
  %v2356 = vmul.f32 %v2308, %v2308
  %v2357 = vmul.f32 %v2309, %v2309
  %v2358 = vmul.f32 %v2310, %v2310
  %v2359 = vmul.f32 %v2311, %v2311
  %v2360 = vmul.f32 %v2312, %v2312
  %v2361 = vmul.f32 %v2313, %v2313
  %v2362 = vmul.f32 %v2314, %v2314
  %v2363 = vmul.f32 %v2315, %v2315
  %v2364 = vmul.f32 %v2316, %v2316
  %v2365 = vmul.f32 %v2317, %v2317
  %v2366 = vmul.f32 %v2318, %v2318
  %v2367 = vmul.f32 %v2319, %v2319
  %v2368 = vmul.f32 %v2320, %v2320
  %v2369 = vmul.f32 %v2321, %v2321
  %v2370 = vmul.f32 %v2322, %v2322
  %v2371 = vmul.f32 %v2323, %v2323
  %v2372 = vmul.f32 %v2324, %v2324
  %v2373 = vmul.f32 %v2325, %v2325
  %v2374 = vmul.f32 %v2326, %v2326
  %v2375 = vsel %vm2179, %v2327, 0.0
  %v2376 = vsel %vm2179, %v2328, 0.0
  %v2377 = vadd.f32 %v2375, %v2376
  %v2378 = vsel %vm2179, %v2329, 0.0
  %v2379 = vadd.f32 %v2377, %v2378
  %v2380 = vsel %vm2179, %v2330, 0.0
  %v2381 = vadd.f32 %v2379, %v2380
  %v2382 = vsel %vm2179, %v2331, 0.0
  %v2383 = vadd.f32 %v2381, %v2382
  %v2384 = vsel %vm2179, %v2332, 0.0
  %v2385 = vadd.f32 %v2383, %v2384
  %v2386 = vsel %vm2179, %v2333, 0.0
  %v2387 = vadd.f32 %v2385, %v2386
  %v2388 = vsel %vm2179, %v2334, 0.0
  %v2389 = vadd.f32 %v2387, %v2388
  %v2390 = vsel %vm2179, %v2335, 0.0
  %v2391 = vadd.f32 %v2389, %v2390
  %v2392 = vsel %vm2179, %v2336, 0.0
  %v2393 = vadd.f32 %v2391, %v2392
  %v2394 = vsel %vm2179, %v2337, 0.0
  %v2395 = vadd.f32 %v2393, %v2394
  %v2396 = vsel %vm2179, %v2338, 0.0
  %v2397 = vadd.f32 %v2395, %v2396
  %v2398 = vsel %vm2179, %v2339, 0.0
  %v2399 = vadd.f32 %v2397, %v2398
  %v2400 = vsel %vm2179, %v2340, 0.0
  %v2401 = vadd.f32 %v2399, %v2400
  %v2402 = vsel %vm2179, %v2341, 0.0
  %v2403 = vadd.f32 %v2401, %v2402
  %v2404 = vsel %vm2179, %v2342, 0.0
  %v2405 = vadd.f32 %v2403, %v2404
  %v2406 = vsel %vm2179, %v2343, 0.0
  %v2407 = vadd.f32 %v2405, %v2406
  %v2408 = vsel %vm2179, %v2344, 0.0
  %v2409 = vadd.f32 %v2407, %v2408
  %v2410 = vsel %vm2179, %v2345, 0.0
  %v2411 = vadd.f32 %v2409, %v2410
  %v2412 = vsel %vm2179, %v2346, 0.0
  %v2413 = vadd.f32 %v2411, %v2412
  %v2414 = vsel %vm2179, %v2347, 0.0
  %v2415 = vadd.f32 %v2413, %v2414
  %v2416 = vsel %vm2179, %v2348, 0.0
  %v2417 = vadd.f32 %v2415, %v2416
  %v2418 = vsel %vm2179, %v2349, 0.0
  %v2419 = vadd.f32 %v2417, %v2418
  %v2420 = vsel %vm2179, %v2350, 0.0
  %v2421 = vadd.f32 %v2419, %v2420
  %v2422 = vsel %vm2179, %v2351, 0.0
  %v2423 = vadd.f32 %v2421, %v2422
  %v2424 = vsel %vm2179, %v2352, 0.0
  %v2425 = vadd.f32 %v2423, %v2424
  %v2426 = vsel %vm2179, %v2353, 0.0
  %v2427 = vadd.f32 %v2425, %v2426
  %v2428 = vsel %vm2179, %v2354, 0.0
  %v2429 = vadd.f32 %v2427, %v2428
  %v2430 = vsel %vm2179, %v2355, 0.0
  %v2431 = vadd.f32 %v2429, %v2430
  %v2432 = vsel %vm2179, %v2356, 0.0
  %v2433 = vadd.f32 %v2431, %v2432
  %v2434 = vsel %vm2179, %v2357, 0.0
  %v2435 = vadd.f32 %v2433, %v2434
  %v2436 = vsel %vm2179, %v2358, 0.0
  %v2437 = vadd.f32 %v2435, %v2436
  %v2438 = vsel %vm2179, %v2359, 0.0
  %v2439 = vadd.f32 %v2437, %v2438
  %v2440 = vsel %vm2179, %v2360, 0.0
  %v2441 = vadd.f32 %v2439, %v2440
  %v2442 = vsel %vm2179, %v2361, 0.0
  %v2443 = vadd.f32 %v2441, %v2442
  %v2444 = vsel %vm2179, %v2362, 0.0
  %v2445 = vadd.f32 %v2443, %v2444
  %v2446 = vsel %vm2179, %v2363, 0.0
  %v2447 = vadd.f32 %v2445, %v2446
  %v2448 = vsel %vm2179, %v2364, 0.0
  %v2449 = vadd.f32 %v2447, %v2448
  %v2450 = vsel %vm2179, %v2365, 0.0
  %v2451 = vadd.f32 %v2449, %v2450
  %v2452 = vsel %vm2179, %v2366, 0.0
  %v2453 = vadd.f32 %v2451, %v2452
  %v2454 = vsel %vm2179, %v2367, 0.0
  %v2455 = vadd.f32 %v2453, %v2454
  %v2456 = vsel %vm2179, %v2368, 0.0
  %v2457 = vadd.f32 %v2455, %v2456
  %v2458 = vsel %vm2179, %v2369, 0.0
  %v2459 = vadd.f32 %v2457, %v2458
  %v2460 = vsel %vm2179, %v2370, 0.0
  %v2461 = vadd.f32 %v2459, %v2460
  %v2462 = vsel %vm2179, %v2371, 0.0
  %v2463 = vadd.f32 %v2461, %v2462
  %v2464 = vsel %vm2179, %v2372, 0.0
  %v2465 = vadd.f32 %v2463, %v2464
  %v2466 = vsel %vm2179, %v2373, 0.0
  %v2467 = vadd.f32 %v2465, %v2466
  %v2468 = vsel %vm2179, %v2374, 0.0
  %v2469 = vadd.f32 %v2467, %v2468
  %2470 = vadd.xlane.f32.xlu0 %v2469
  %v2471 = vpop.xlane.xlu0 %2470
  %v2472 = vmul.f32 %v2471, %v2277
  %v2473 = vadd.f32 %v2472, 1e-05
  %v2474 = vrsqrt.pop %v2473
  %v2475 = vmul.f32 %v2279, %v2474
  %v2476 = vmul.f32 %v2280, %v2474
  %v2477 = vmul.f32 %v2281, %v2474
  %v2478 = vmul.f32 %v2282, %v2474
  %v2479 = vmul.f32 %v2283, %v2474
  %v2480 = vmul.f32 %v2284, %v2474
  %v2481 = vmul.f32 %v2285, %v2474
  %v2482 = vmul.f32 %v2286, %v2474
  %v2483 = vmul.f32 %v2287, %v2474
  %v2484 = vmul.f32 %v2288, %v2474
  %v2485 = vmul.f32 %v2289, %v2474
  %v2486 = vmul.f32 %v2290, %v2474
  %v2487 = vmul.f32 %v2291, %v2474
  %v2488 = vmul.f32 %v2292, %v2474
  %v2489 = vmul.f32 %v2293, %v2474
  %v2490 = vmul.f32 %v2294, %v2474
  %v2491 = vmul.f32 %v2295, %v2474
  %v2492 = vmul.f32 %v2296, %v2474
  %v2493 = vmul.f32 %v2297, %v2474
  %v2494 = vmul.f32 %v2298, %v2474
  %v2495 = vmul.f32 %v2299, %v2474
  %v2496 = vmul.f32 %v2300, %v2474
  %v2497 = vmul.f32 %v2301, %v2474
  %v2498 = vmul.f32 %v2302, %v2474
  %v2499 = vmul.f32 %v2303, %v2474
  %v2500 = vmul.f32 %v2304, %v2474
  %v2501 = vmul.f32 %v2305, %v2474
  %v2502 = vmul.f32 %v2306, %v2474
  %v2503 = vmul.f32 %v2307, %v2474
  %v2504 = vmul.f32 %v2308, %v2474
  %v2505 = vmul.f32 %v2309, %v2474
  %v2506 = vmul.f32 %v2310, %v2474
  %v2507 = vmul.f32 %v2311, %v2474
  %v2508 = vmul.f32 %v2312, %v2474
  %v2509 = vmul.f32 %v2313, %v2474
  %v2510 = vmul.f32 %v2314, %v2474
  %v2511 = vmul.f32 %v2315, %v2474
  %v2512 = vmul.f32 %v2316, %v2474
  %v2513 = vmul.f32 %v2317, %v2474
  %v2514 = vmul.f32 %v2318, %v2474
  %v2515 = vmul.f32 %v2319, %v2474
  %v2516 = vmul.f32 %v2320, %v2474
  %v2517 = vmul.f32 %v2321, %v2474
  %v2518 = vmul.f32 %v2322, %v2474
  %v2519 = vmul.f32 %v2323, %v2474
  %v2520 = vmul.f32 %v2324, %v2474
  %v2521 = vmul.f32 %v2325, %v2474
  %v2522 = vmul.f32 %v2326, %v2474
  %v2523 = vld [vmem:[#allocation3] sm:$0x1]
  %2525 = vset.pattern.permute.xlu0 0
  %2526 = vperm.xlu0 %2525, %v2523
  %v2527 = vpop.permute.xlu0 %2526
  %v2529 = vlaneseq
  %v2530 = vshrl.u32 %v2529, 7
  %v2531 = vsub.s32 0, %v2530
  %v2532 = vrot.slane %v2527, %v2531
  %v2533 = vmul.f32 %v2475, %v2532
  %v2534 = vmul.f32 %v2476, %v2532
  %v2535 = vmul.f32 %v2477, %v2532
  %v2536 = vmul.f32 %v2478, %v2532
  %v2537 = vmul.f32 %v2479, %v2532
  %v2538 = vmul.f32 %v2480, %v2532
  %v2539 = vmul.f32 %v2481, %v2532
  %v2540 = vmul.f32 %v2482, %v2532
  %v2541 = vmul.f32 %v2483, %v2532
  %v2542 = vmul.f32 %v2484, %v2532
  %v2543 = vmul.f32 %v2485, %v2532
  %v2544 = vmul.f32 %v2486, %v2532
  %v2545 = vmul.f32 %v2487, %v2532
  %v2546 = vmul.f32 %v2488, %v2532
  %v2547 = vmul.f32 %v2489, %v2532
  %v2548 = vmul.f32 %v2490, %v2532
  %v2549 = vmul.f32 %v2491, %v2532
  %v2550 = vmul.f32 %v2492, %v2532
  %v2551 = vmul.f32 %v2493, %v2532
  %v2552 = vmul.f32 %v2494, %v2532
  %v2553 = vmul.f32 %v2495, %v2532
  %v2554 = vmul.f32 %v2496, %v2532
  %v2555 = vmul.f32 %v2497, %v2532
  %v2556 = vmul.f32 %v2498, %v2532
  %v2557 = vmul.f32 %v2499, %v2532
  %v2558 = vmul.f32 %v2500, %v2532
  %v2559 = vmul.f32 %v2501, %v2532
  %v2560 = vmul.f32 %v2502, %v2532
  %v2561 = vmul.f32 %v2503, %v2532
  %v2562 = vmul.f32 %v2504, %v2532
  %v2563 = vmul.f32 %v2505, %v2532
  %v2564 = vmul.f32 %v2506, %v2532
  %v2565 = vmul.f32 %v2507, %v2532
  %v2566 = vmul.f32 %v2508, %v2532
  %v2567 = vmul.f32 %v2509, %v2532
  %v2568 = vmul.f32 %v2510, %v2532
  %v2569 = vmul.f32 %v2511, %v2532
  %v2570 = vmul.f32 %v2512, %v2532
  %v2571 = vmul.f32 %v2513, %v2532
  %v2572 = vmul.f32 %v2514, %v2532
  %v2573 = vmul.f32 %v2515, %v2532
  %v2574 = vmul.f32 %v2516, %v2532
  %v2575 = vmul.f32 %v2517, %v2532
  %v2576 = vmul.f32 %v2518, %v2532
  %v2577 = vmul.f32 %v2519, %v2532
  %v2578 = vmul.f32 %v2520, %v2532
  %v2579 = vmul.f32 %v2521, %v2532
  %v2580 = vmul.f32 %v2522, %v2532
  %v2581 = vld [vmem:[#allocation4] sm:$0x1]
  %2583 = vset.pattern.permute.xlu0 0
  %2584 = vperm.xlu0 %2583, %v2581
  %v2585 = vpop.permute.xlu0 %2584
  %v2587 = vlaneseq
  %v2588 = vshrl.u32 %v2587, 7
  %v2589 = vsub.s32 0, %v2588
  %v2590 = vrot.slane %v2585, %v2589
  %v2591 = vadd.f32 %v2533, %v2590
  %v2592 = vadd.f32 %v2534, %v2590
  %v2593 = vadd.f32 %v2535, %v2590
  %v2594 = vadd.f32 %v2536, %v2590
  %v2595 = vadd.f32 %v2537, %v2590
  %v2596 = vadd.f32 %v2538, %v2590
  %v2597 = vadd.f32 %v2539, %v2590
  %v2598 = vadd.f32 %v2540, %v2590
  %v2599 = vadd.f32 %v2541, %v2590
  %v2600 = vadd.f32 %v2542, %v2590
  %v2601 = vadd.f32 %v2543, %v2590
  %v2602 = vadd.f32 %v2544, %v2590
  %v2603 = vadd.f32 %v2545, %v2590
  %v2604 = vadd.f32 %v2546, %v2590
  %v2605 = vadd.f32 %v2547, %v2590
  %v2606 = vadd.f32 %v2548, %v2590
  %v2607 = vadd.f32 %v2549, %v2590
  %v2608 = vadd.f32 %v2550, %v2590
  %v2609 = vadd.f32 %v2551, %v2590
  %v2610 = vadd.f32 %v2552, %v2590
  %v2611 = vadd.f32 %v2553, %v2590
  %v2612 = vadd.f32 %v2554, %v2590
  %v2613 = vadd.f32 %v2555, %v2590
  %v2614 = vadd.f32 %v2556, %v2590
  %v2615 = vadd.f32 %v2557, %v2590
  %v2616 = vadd.f32 %v2558, %v2590
  %v2617 = vadd.f32 %v2559, %v2590
  %v2618 = vadd.f32 %v2560, %v2590
  %v2619 = vadd.f32 %v2561, %v2590
  %v2620 = vadd.f32 %v2562, %v2590
  %v2621 = vadd.f32 %v2563, %v2590
  %v2622 = vadd.f32 %v2564, %v2590
  %v2623 = vadd.f32 %v2565, %v2590
  %v2624 = vadd.f32 %v2566, %v2590
  %v2625 = vadd.f32 %v2567, %v2590
  %v2626 = vadd.f32 %v2568, %v2590
  %v2627 = vadd.f32 %v2569, %v2590
  %v2628 = vadd.f32 %v2570, %v2590
  %v2629 = vadd.f32 %v2571, %v2590
  %v2630 = vadd.f32 %v2572, %v2590
  %v2631 = vadd.f32 %v2573, %v2590
  %v2632 = vadd.f32 %v2574, %v2590
  %v2633 = vadd.f32 %v2575, %v2590
  %v2634 = vadd.f32 %v2576, %v2590
  %v2635 = vadd.f32 %v2577, %v2590
  %v2636 = vadd.f32 %v2578, %v2590
  %v2637 = vadd.f32 %v2579, %v2590
  %v2638 = vadd.f32 %v2580, %v2590
  %v2687 = vcombine.low %v2591, %v2592
  %v2688 = vcombine.low %v2593, %v2594
  %v2689 = vcombine.low %v2595, %v2596
  %v2690 = vcombine.low %v2597, %v2598
  %v2692 = vunpack.c.l.s4 1966171168
  %v2693 = vunpack.c.0.s8 %v2692
  %v2694 = vlaneseq
  %v2695 = vshrl.u32 %v2694, 7
  %v2696 = vsub.s32 %v2693, %v2695
  %v2697 = vrot.slane %v2687, %v2696
  %v2699 = vunpack.c.l.s4 1966171168
  %v2700 = vunpack.c.0.s8 %v2699
  %v2701 = vlaneseq
  %v2702 = vshrl.u32 %v2701, 7
  %v2703 = vsub.s32 %v2700, %v2702
  %v2704 = vrot.slane %v2688, %v2703
  %v2706 = vunpack.c.l.s4 1966171168
  %v2707 = vunpack.c.0.s8 %v2706
  %v2708 = vlaneseq
  %v2709 = vshrl.u32 %v2708, 7
  %v2710 = vsub.s32 %v2707, %v2709
  %v2711 = vrot.slane %v2689, %v2710
  %v2713 = vunpack.c.l.s4 1966171168
  %v2714 = vunpack.c.0.s8 %v2713
  %v2715 = vlaneseq
  %v2716 = vshrl.u32 %v2715, 7
  %v2717 = vsub.s32 %v2714, %v2716
  %v2718 = vrot.slane %v2690, %v2717
  %v2719 = vcombine.low %v2697, %v2704
  %v2720 = vcombine.low %v2711, %v2718
  %v2722 = vunpack.c.l.s4 1966171168
  %v2723 = vunpack.c.0.s8 %v2722
  %v2724 = vlaneseq
  %v2725 = vshrl.u32 %v2724, 7
  %v2726 = vsub.s32 %v2723, %v2725
  %v2727 = vrot.slane %v2719, %v2726
  %v2729 = vunpack.c.l.s4 1966171168
  %v2730 = vunpack.c.0.s8 %v2729
  %v2731 = vlaneseq
  %v2732 = vshrl.u32 %v2731, 7
  %v2733 = vsub.s32 %v2730, %v2732
  %v2734 = vrot.slane %v2720, %v2733
  %v2735 = vcombine.low %v2727, %v2734
  %v2736 = vcombine.low %v2599, %v2600
  %v2737 = vcombine.low %v2601, %v2602
  %v2738 = vcombine.low %v2603, %v2604
  %v2739 = vcombine.low %v2605, %v2606
  %v2741 = vunpack.c.l.s4 1966171168
  %v2742 = vunpack.c.0.s8 %v2741
  %v2743 = vlaneseq
  %v2744 = vshrl.u32 %v2743, 7
  %v2745 = vsub.s32 %v2742, %v2744
  %v2746 = vrot.slane %v2736, %v2745
  %v2748 = vunpack.c.l.s4 1966171168
  %v2749 = vunpack.c.0.s8 %v2748
  %v2750 = vlaneseq
  %v2751 = vshrl.u32 %v2750, 7
  %v2752 = vsub.s32 %v2749, %v2751
  %v2753 = vrot.slane %v2737, %v2752
  %v2755 = vunpack.c.l.s4 1966171168
  %v2756 = vunpack.c.0.s8 %v2755
  %v2757 = vlaneseq
  %v2758 = vshrl.u32 %v2757, 7
  %v2759 = vsub.s32 %v2756, %v2758
  %v2760 = vrot.slane %v2738, %v2759
  %v2762 = vunpack.c.l.s4 1966171168
  %v2763 = vunpack.c.0.s8 %v2762
  %v2764 = vlaneseq
  %v2765 = vshrl.u32 %v2764, 7
  %v2766 = vsub.s32 %v2763, %v2765
  %v2767 = vrot.slane %v2739, %v2766
  %v2768 = vcombine.low %v2746, %v2753
  %v2769 = vcombine.low %v2760, %v2767
  %v2771 = vunpack.c.l.s4 1966171168
  %v2772 = vunpack.c.0.s8 %v2771
  %v2773 = vlaneseq
  %v2774 = vshrl.u32 %v2773, 7
  %v2775 = vsub.s32 %v2772, %v2774
  %v2776 = vrot.slane %v2768, %v2775
  %v2778 = vunpack.c.l.s4 1966171168
  %v2779 = vunpack.c.0.s8 %v2778
  %v2780 = vlaneseq
  %v2781 = vshrl.u32 %v2780, 7
  %v2782 = vsub.s32 %v2779, %v2781
  %v2783 = vrot.slane %v2769, %v2782
  %v2784 = vcombine.low %v2776, %v2783
  %v2785 = vcombine.low %v2607, %v2608
  %v2786 = vcombine.low %v2609, %v2610
  %v2787 = vcombine.low %v2611, %v2612
  %v2788 = vcombine.low %v2613, %v2614
  %v2790 = vunpack.c.l.s4 1966171168
  %v2791 = vunpack.c.0.s8 %v2790
  %v2792 = vlaneseq
  %v2793 = vshrl.u32 %v2792, 7
  %v2794 = vsub.s32 %v2791, %v2793
  %v2795 = vrot.slane %v2785, %v2794
  %v2797 = vunpack.c.l.s4 1966171168
  %v2798 = vunpack.c.0.s8 %v2797
  %v2799 = vlaneseq
  %v2800 = vshrl.u32 %v2799, 7
  %v2801 = vsub.s32 %v2798, %v2800
  %v2802 = vrot.slane %v2786, %v2801
  %v2804 = vunpack.c.l.s4 1966171168
  %v2805 = vunpack.c.0.s8 %v2804
  %v2806 = vlaneseq
  %v2807 = vshrl.u32 %v2806, 7
  %v2808 = vsub.s32 %v2805, %v2807
  %v2809 = vrot.slane %v2787, %v2808
  %v2811 = vunpack.c.l.s4 1966171168
  %v2812 = vunpack.c.0.s8 %v2811
  %v2813 = vlaneseq
  %v2814 = vshrl.u32 %v2813, 7
  %v2815 = vsub.s32 %v2812, %v2814
  %v2816 = vrot.slane %v2788, %v2815
  %v2817 = vcombine.low %v2795, %v2802
  %v2818 = vcombine.low %v2809, %v2816
  %v2820 = vunpack.c.l.s4 1966171168
  %v2821 = vunpack.c.0.s8 %v2820
  %v2822 = vlaneseq
  %v2823 = vshrl.u32 %v2822, 7
  %v2824 = vsub.s32 %v2821, %v2823
  %v2825 = vrot.slane %v2817, %v2824
  %v2827 = vunpack.c.l.s4 1966171168
  %v2828 = vunpack.c.0.s8 %v2827
  %v2829 = vlaneseq
  %v2830 = vshrl.u32 %v2829, 7
  %v2831 = vsub.s32 %v2828, %v2830
  %v2832 = vrot.slane %v2818, %v2831
  %v2833 = vcombine.low %v2825, %v2832
  %v2834 = vcombine.low %v2615, %v2616
  %v2835 = vcombine.low %v2617, %v2618
  %v2836 = vcombine.low %v2619, %v2620
  %v2837 = vcombine.low %v2621, %v2622
  %v2839 = vunpack.c.l.s4 1966171168
  %v2840 = vunpack.c.0.s8 %v2839
  %v2841 = vlaneseq
  %v2842 = vshrl.u32 %v2841, 7
  %v2843 = vsub.s32 %v2840, %v2842
  %v2844 = vrot.slane %v2834, %v2843
  %v2846 = vunpack.c.l.s4 1966171168
  %v2847 = vunpack.c.0.s8 %v2846
  %v2848 = vlaneseq
  %v2849 = vshrl.u32 %v2848, 7
  %v2850 = vsub.s32 %v2847, %v2849
  %v2851 = vrot.slane %v2835, %v2850
  %v2853 = vunpack.c.l.s4 1966171168
  %v2854 = vunpack.c.0.s8 %v2853
  %v2855 = vlaneseq
  %v2856 = vshrl.u32 %v2855, 7
  %v2857 = vsub.s32 %v2854, %v2856
  %v2858 = vrot.slane %v2836, %v2857
  %v2860 = vunpack.c.l.s4 1966171168
  %v2861 = vunpack.c.0.s8 %v2860
  %v2862 = vlaneseq
  %v2863 = vshrl.u32 %v2862, 7
  %v2864 = vsub.s32 %v2861, %v2863
  %v2865 = vrot.slane %v2837, %v2864
  %v2866 = vcombine.low %v2844, %v2851
  %v2867 = vcombine.low %v2858, %v2865
  %v2869 = vunpack.c.l.s4 1966171168
  %v2870 = vunpack.c.0.s8 %v2869
  %v2871 = vlaneseq
  %v2872 = vshrl.u32 %v2871, 7
  %v2873 = vsub.s32 %v2870, %v2872
  %v2874 = vrot.slane %v2866, %v2873
  %v2876 = vunpack.c.l.s4 1966171168
  %v2877 = vunpack.c.0.s8 %v2876
  %v2878 = vlaneseq
  %v2879 = vshrl.u32 %v2878, 7
  %v2880 = vsub.s32 %v2877, %v2879
  %v2881 = vrot.slane %v2867, %v2880
  %v2882 = vcombine.low %v2874, %v2881
  %v2883 = vcombine.low %v2623, %v2624
  %v2884 = vcombine.low %v2625, %v2626
  %v2885 = vcombine.low %v2627, %v2628
  %v2886 = vcombine.low %v2629, %v2630
  %v2888 = vunpack.c.l.s4 1966171168
  %v2889 = vunpack.c.0.s8 %v2888
  %v2890 = vlaneseq
  %v2891 = vshrl.u32 %v2890, 7
  %v2892 = vsub.s32 %v2889, %v2891
  %v2893 = vrot.slane %v2883, %v2892
  %v2895 = vunpack.c.l.s4 1966171168
  %v2896 = vunpack.c.0.s8 %v2895
  %v2897 = vlaneseq
  %v2898 = vshrl.u32 %v2897, 7
  %v2899 = vsub.s32 %v2896, %v2898
  %v2900 = vrot.slane %v2884, %v2899
  %v2902 = vunpack.c.l.s4 1966171168
  %v2903 = vunpack.c.0.s8 %v2902
  %v2904 = vlaneseq
  %v2905 = vshrl.u32 %v2904, 7
  %v2906 = vsub.s32 %v2903, %v2905
  %v2907 = vrot.slane %v2885, %v2906
  %v2909 = vunpack.c.l.s4 1966171168
  %v2910 = vunpack.c.0.s8 %v2909
  %v2911 = vlaneseq
  %v2912 = vshrl.u32 %v2911, 7
  %v2913 = vsub.s32 %v2910, %v2912
  %v2914 = vrot.slane %v2886, %v2913
  %v2915 = vcombine.low %v2893, %v2900
  %v2916 = vcombine.low %v2907, %v2914
  %v2918 = vunpack.c.l.s4 1966171168
  %v2919 = vunpack.c.0.s8 %v2918
  %v2920 = vlaneseq
  %v2921 = vshrl.u32 %v2920, 7
  %v2922 = vsub.s32 %v2919, %v2921
  %v2923 = vrot.slane %v2915, %v2922
  %v2925 = vunpack.c.l.s4 1966171168
  %v2926 = vunpack.c.0.s8 %v2925
  %v2927 = vlaneseq
  %v2928 = vshrl.u32 %v2927, 7
  %v2929 = vsub.s32 %v2926, %v2928
  %v2930 = vrot.slane %v2916, %v2929
  %v2931 = vcombine.low %v2923, %v2930
  %v2932 = vcombine.low %v2631, %v2632
  %v2933 = vcombine.low %v2633, %v2634
  %v2934 = vcombine.low %v2635, %v2636
  %v2935 = vcombine.low %v2637, %v2638
  %v2937 = vunpack.c.l.s4 1966171168
  %v2938 = vunpack.c.0.s8 %v2937
  %v2939 = vlaneseq
  %v2940 = vshrl.u32 %v2939, 7
  %v2941 = vsub.s32 %v2938, %v2940
  %v2942 = vrot.slane %v2932, %v2941
  %v2944 = vunpack.c.l.s4 1966171168
  %v2945 = vunpack.c.0.s8 %v2944
  %v2946 = vlaneseq
  %v2947 = vshrl.u32 %v2946, 7
  %v2948 = vsub.s32 %v2945, %v2947
  %v2949 = vrot.slane %v2933, %v2948
  %v2951 = vunpack.c.l.s4 1966171168
  %v2952 = vunpack.c.0.s8 %v2951
  %v2953 = vlaneseq
  %v2954 = vshrl.u32 %v2953, 7
  %v2955 = vsub.s32 %v2952, %v2954
  %v2956 = vrot.slane %v2934, %v2955
  %v2958 = vunpack.c.l.s4 1966171168
  %v2959 = vunpack.c.0.s8 %v2958
  %v2960 = vlaneseq
  %v2961 = vshrl.u32 %v2960, 7
  %v2962 = vsub.s32 %v2959, %v2961
  %v2963 = vrot.slane %v2935, %v2962
  %v2964 = vcombine.low %v2942, %v2949
  %v2965 = vcombine.low %v2956, %v2963
  %v2967 = vunpack.c.l.s4 1966171168
  %v2968 = vunpack.c.0.s8 %v2967
  %v2969 = vlaneseq
  %v2970 = vshrl.u32 %v2969, 7
  %v2971 = vsub.s32 %v2968, %v2970
  %v2972 = vrot.slane %v2964, %v2971
  %v2974 = vunpack.c.l.s4 1966171168
  %v2975 = vunpack.c.0.s8 %v2974
  %v2976 = vlaneseq
  %v2977 = vshrl.u32 %v2976, 7
  %v2978 = vsub.s32 %v2975, %v2977
  %v2979 = vrot.slane %v2965, %v2978
  %v2980 = vcombine.low %v2972, %v2979
  %2987 = vst [vmem:[%s5] sm:$0xff] %v2735
  %2988 = vst [vmem:[%s5 + $0x8] sm:$0xff] %v2784
  %2989 = vst [vmem:[%s5 + $0x10] sm:$0xff] %v2833
  %2990 = vst [vmem:[%s5 + $0x18] sm:$0xff] %v2882
  %2991 = vst [vmem:[%s5 + $0x20] sm:$0xff] %v2931
  %2992 = vst [vmem:[%s5 + $0x28] sm:$0xff] %v2980
  // Predicated region
  $region22: #{vae_forward.25} parent=0 // pred_check
    _
  $region23: #{vae_forward.25} parent=0 // pred_check_branch
    %2994 = sbr.rel (0) target = $region25
  $region24: #{vae_forward.25} parent=0 // pred_region
    _
  $region25: #{vae_forward.25} parent=0 // pred_fallthru
    _
  // Predicated region
  $region26: #{vae_forward.25} parent=0 // pred_check
    _
  $region27: #{vae_forward.25} parent=0 // pred_check_branch
    %2996 = sbr.rel (0) target = $region29
  $region28: #{vae_forward.25} parent=0 // pred_region
    _
  $region29: #{vae_forward.25} parent=0 // pred_fallthru
    _

</llo_original>
